<compile_context>
chip_gen: v5e
topology: v5e:2x2
jax: 0.10.0
libtpu: 0.0.40
codegen_flags: <defaults>
</compile_context>

<pallas_src>
import functools
import math

import jax
import jax.numpy as jnp
from jax.experimental import pallas as pl
from jax.experimental.pallas import tpu as pltpu


# Softmax denominators use the EUP approximate reciprocal (~1e-3 rel. error,
# fine for eval).  Set to False for an exact divide.
_USE_APPROX_RECIP = True


def _vmem_limit_bytes():
    """Generation-aware scoped-VMEM limit: 128 MiB/TC on v5e/v6e, 64 MiB on
    v7x.  Cap at 48 MiB but never more than ~60% of physical capacity."""
    cap = 128 * 1024 * 1024
    try:
        cap = int(pltpu.get_tpu_info().vmem_capacity_bytes)
    except Exception:
        pass
    return min(48 * 1024 * 1024, max(16 * 1024 * 1024, int(cap * 0.6)))


_VMEM_LIMIT = _vmem_limit_bytes()


# --------------------------- in-kernel helpers ------------------------------

def _ln(h, g, b, eps):
    """LayerNorm over the last dim; statistics in f32 (v5e: no bf16 VPU/EUP)."""
    mu = jnp.mean(h, axis=-1, keepdims=True)
    var = jnp.mean(jnp.square(h - mu), axis=-1, keepdims=True)
    return (h - mu) * jax.lax.rsqrt(var + eps) * g + b


def _recip(x):
    return pl.reciprocal(x, approx=True) if _USE_APPROX_RECIP else 1.0 / x


def _attn_outproj(q, k, v, o_w, nhead):
    """Multi-head attention fused with the output projection (bias excluded).

    q:(Lq,E) f32 already scaled by 1/sqrt(Dh); k,v:(Lk,E) f32; o_w:(E,E) bf16.
    Heads are static lane-slices of the packed projections and the
    concat + out-proj is rewritten as sum_h (softmax(q_h k_h^T) v_h) @ W_o[h],
    avoiding any in-kernel head transpose / concatenate.  Softmax stats in
    f32; all matmuls feed the MXU in bf16 with f32 accumulation.
    """
    E = q.shape[-1]
    dh = E // nhead
    acc = None
    for h in range(nhead):
        sl = slice(h * dh, (h + 1) * dh)
        qh = q[:, sl].astype(jnp.bfloat16)
        kh = k[:, sl].astype(jnp.bfloat16)
        vh = v[:, sl].astype(jnp.bfloat16)
        s = jnp.dot(qh, kh.T, preferred_element_type=jnp.float32)      # (Lq, Lk)
        m = jnp.max(s, axis=-1, keepdims=True)
        p = jnp.exp(s - m)
        denom = jnp.sum(p, axis=-1, keepdims=True)
        oh = jnp.dot(p.astype(jnp.bfloat16), vh,
                     preferred_element_type=jnp.float32) * _recip(denom)
        contrib = jnp.dot(oh.astype(jnp.bfloat16), o_w[sl, :],
                          preferred_element_type=jnp.float32)          # (Lq, E)
        acc = contrib if acc is None else acc + contrib
    return acc


# ------------------------------ fused kernels -------------------------------

def _encoder_layer_kernel(*refs, nhead, scale, eps, final_ln):
    """One full nn.TransformerEncoderLayer (post-norm, relu, eval dropout=id)
    for a single batch element, entirely in VMEM.  Optionally fuses the final
    encoder LayerNorm (nn.TransformerEncoder's norm) into the epilogue."""
    if final_ln:
        (x_ref, qkv_w, qkv_b, o_w, o_b, ln1_g, ln1_b,
         ff1_w, ff1_b, ff2_w, ff2_b, ln2_g, ln2_b, fn_g, fn_b, o_ref) = refs
    else:
        (x_ref, qkv_w, qkv_b, o_w, o_b, ln1_g, ln1_b,
         ff1_w, ff1_b, ff2_w, ff2_b, ln2_g, ln2_b, o_ref) = refs
    E = x_ref.shape[-1]

    x_bf = x_ref[0]                                        # (S, E) bf16
    x = x_bf.astype(jnp.float32)

    # self-attention + out-proj + residual + LayerNorm
    qkv = jnp.dot(x_bf, qkv_w[...], preferred_element_type=jnp.float32) + qkv_b[...]
    attn = _attn_outproj(qkv[:, :E] * scale, qkv[:, E:2 * E], qkv[:, 2 * E:],
                         o_w[...], nhead)
    x1 = _ln(x + attn + o_b[...], ln1_g[...], ln1_b[...], eps)

    # FFN (linear -> relu -> linear) + residual + LayerNorm
    h = jnp.maximum(jnp.dot(x1.astype(jnp.bfloat16), ff1_w[...],
                            preferred_element_type=jnp.float32) + ff1_b[...], 0.0)
    f = jnp.dot(h.astype(jnp.bfloat16), ff2_w[...],
                preferred_element_type=jnp.float32) + ff2_b[...]
    x2 = _ln(x1 + f, ln2_g[...], ln2_b[...], eps)

    if final_ln:
        x2 = _ln(x2, fn_g[...], fn_b[...], eps)

    o_ref[0] = x2.astype(o_ref.dtype)


def _decoder_layer_kernel(x_ref, mem_ref,
                          sa_qkv_w, sa_qkv_b, sa_o_w, sa_o_b, ln1_g, ln1_b,
                          ca_q_w, ca_q_b, ca_kv_w, ca_kv_b, ca_o_w, ca_o_b,
                          ln2_g, ln2_b,
                          ff1_w, ff1_b, ff2_w, ff2_b, ln3_g, ln3_b,
                          o_ref, *, nhead, scale, eps):
    """One full nn.TransformerDecoderLayer (post-norm, relu, eval dropout=id)
    for a single batch element, entirely in VMEM."""
    E = x_ref.shape[-1]
    x_bf = x_ref[0]                                        # (T, E) bf16
    x = x_bf.astype(jnp.float32)

    # self-attention block
    # TODO(synk): no causal mask (reference forward() passes tgt_mask=None).
    qkv = jnp.dot(x_bf, sa_qkv_w[...],
                  preferred_element_type=jnp.float32) + sa_qkv_b[...]
    attn = _attn_outproj(qkv[:, :E] * scale, qkv[:, E:2 * E], qkv[:, 2 * E:],
                         sa_o_w[...], nhead)
    x1 = _ln(x + attn + sa_o_b[...], ln1_g[...], ln1_b[...], eps)

    # cross-attention block (q from decoder state, k/v from encoder memory)
    mem_bf = mem_ref[0]                                    # (S, E) bf16
    q = jnp.dot(x1.astype(jnp.bfloat16), ca_q_w[...],
                preferred_element_type=jnp.float32) + ca_q_b[...]
    kv = jnp.dot(mem_bf, ca_kv_w[...],
                 preferred_element_type=jnp.float32) + ca_kv_b[...]
    cattn = _attn_outproj(q * scale, kv[:, :E], kv[:, E:], ca_o_w[...], nhead)
    x2 = _ln(x1 + cattn + ca_o_b[...], ln2_g[...], ln2_b[...], eps)

    # FFN block
    h = jnp.maximum(jnp.dot(x2.astype(jnp.bfloat16), ff1_w[...],
                            preferred_element_type=jnp.float32) + ff1_b[...], 0.0)
    f = jnp.dot(h.astype(jnp.bfloat16), ff2_w[...],
                preferred_element_type=jnp.float32) + ff2_b[...]
    x3 = _ln(x2 + f, ln3_g[...], ln3_b[...], eps)

    o_ref[0] = x3.astype(o_ref.dtype)


def _final_ln_logits_kernel(x_ref, g_ref, b_ref, w_ref, bias_ref, o_ref, *, eps):
    """Decoder-final LayerNorm fused as the prologue of the logits matmul.
    Output vocab is padded to a 128-lane multiple (lane-dense stores)."""
    x = x_ref[0].astype(jnp.float32)                       # (T, E)
    xn = _ln(x, g_ref[...], b_ref[...], eps)
    o_ref[0] = (jnp.dot(xn.astype(jnp.bfloat16), w_ref[...],
                        preferred_element_type=jnp.float32) + bias_ref[...]
                ).astype(o_ref.dtype)


# ------------------------------ call wrappers -------------------------------

def _w(r, c):
    """Full-block weight/bias spec (block index constant across the grid)."""
    return pl.BlockSpec((r, c), lambda n: (0, 0))


def encoder_layer(x, p, nhead, final_ln=None, eps=1e-5):
    """x: (N, S, E) bf16 -> (N, S, E) bf16; grid over batch (fills both v7x TCs)."""
    N, S, E = x.shape
    F = p["ff1_w"].shape[1]
    scale = 1.0 / math.sqrt(E // nhead)
    inputs = [x, p["qkv_w"], p["qkv_b"], p["o_w"], p["o_b"],
              p["ln1_g"], p["ln1_b"],
              p["ff1_w"], p["ff1_b"], p["ff2_w"], p["ff2_b"],
              p["ln2_g"], p["ln2_b"]]
    in_specs = [pl.BlockSpec((1, S, E), lambda n: (n, 0, 0)),
                _w(E, 3 * E), _w(1, 3 * E), _w(E, E), _w(1, E),
                _w(1, E), _w(1, E),
                _w(E, F), _w(1, F), _w(F, E), _w(1, E),
                _w(1, E), _w(1, E)]
    if final_ln is not None:
        inputs += [final_ln[0], final_ln[1]]
        in_specs += [_w(1, E), _w(1, E)]
    return pl.pallas_call(
        functools.partial(_encoder_layer_kernel, nhead=nhead, scale=scale,
                          eps=eps, final_ln=final_ln is not None),
        grid=(N,),
        in_specs=in_specs,
        out_specs=pl.BlockSpec((1, S, E), lambda n: (n, 0, 0)),
        out_shape=jax.ShapeDtypeStruct((N, S, E), jnp.bfloat16),
        compiler_params=pltpu.CompilerParams(
            dimension_semantics=("parallel",), vmem_limit_bytes=_VMEM_LIMIT),
    )(*inputs)


def decoder_layer(x, mem, p, nhead, eps=1e-5):
    """x: (N, T, E) bf16, mem: (N, S, E) bf16 -> (N, T, E) bf16."""
    N, T, E = x.shape
    S = mem.shape[1]
    F = p["ff1_w"].shape[1]
    scale = 1.0 / math.sqrt(E // nhead)
    return pl.pallas_call(
        functools.partial(_decoder_layer_kernel, nhead=nhead, scale=scale, eps=eps),
        grid=(N,),
        in_specs=[pl.BlockSpec((1, T, E), lambda n: (n, 0, 0)),
                  pl.BlockSpec((1, S, E), lambda n: (n, 0, 0)),
                  _w(E, 3 * E), _w(1, 3 * E), _w(E, E), _w(1, E), _w(1, E), _w(1, E),
                  _w(E, E), _w(1, E), _w(E, 2 * E), _w(1, 2 * E), _w(E, E), _w(1, E),
                  _w(1, E), _w(1, E),
                  _w(E, F), _w(1, F), _w(F, E), _w(1, E), _w(1, E), _w(1, E)],
        out_specs=pl.BlockSpec((1, T, E), lambda n: (n, 0, 0)),
        out_shape=jax.ShapeDtypeStruct((N, T, E), jnp.bfloat16),
        compiler_params=pltpu.CompilerParams(
            dimension_semantics=("parallel",), vmem_limit_bytes=_VMEM_LIMIT),
    )(x, mem,
      p["sa_qkv_w"], p["sa_qkv_b"], p["sa_o_w"], p["sa_o_b"],
      p["ln1_g"], p["ln1_b"],
      p["ca_q_w"], p["ca_q_b"], p["ca_kv_w"], p["ca_kv_b"],
      p["ca_o_w"], p["ca_o_b"],
      p["ln2_g"], p["ln2_b"],
      p["ff1_w"], p["ff1_b"], p["ff2_w"], p["ff2_b"], p["ln3_g"], p["ln3_b"])


def final_ln_logits(x, g, b, w, bias, eps=1e-5):
    """x: (N, T, E) bf16 -> (N, T, Vpad) f32 with the decoder norm fused in."""
    N, T, E = x.shape
    Vp = w.shape[1]
    return pl.pallas_call(
        functools.partial(_final_ln_logits_kernel, eps=eps),
        grid=(N,),
        in_specs=[pl.BlockSpec((1, T, E), lambda n: (n, 0, 0)),
                  _w(1, E), _w(1, E), _w(E, Vp), _w(1, Vp)],
        out_specs=pl.BlockSpec((1, T, Vp), lambda n: (n, 0, 0)),
        out_shape=jax.ShapeDtypeStruct((N, T, Vp), jnp.float32),
        compiler_params=pltpu.CompilerParams(
            dimension_semantics=("parallel",), vmem_limit_bytes=_VMEM_LIMIT),
    )(x, g, b, w, bias)


# -------------------------------- forward -----------------------------------

def transformer_forward(params, src_ids, tgt_ids, cfg):
    """Mirrors MyTransformer.forward(src, tgt) with all masks None (eval)."""
    if src_ids.shape[1] != tgt_ids.shape[1]:
        raise RuntimeError("the batch number of src and tgt must be equal")
    d_model, nhead, V = cfg["d_model"], cfg["nhead"], cfg["tgt_vocab"]
    S, _ = src_ids.shape
    T = tgt_ids.shape[0]
    emb_scale = math.sqrt(d_model)
    pe = params["pe"]

    # Embedding gather + positional encoding stay in XLA (fused into the gather
    # epilogue — no extra Pallas call / HBM round trip), then flip to
    # (batch, seq, E) bf16 so every kernel boundary is bf16.
    src = jnp.take(params["src_emb"], src_ids, axis=0) * emb_scale + pe[:S]
    src = src.transpose(1, 0, 2).astype(jnp.bfloat16)              # (N, S, E)
    tgt = jnp.take(params["tgt_emb"], tgt_ids, axis=0) * emb_scale + pe[:T]
    tgt = tgt.transpose(1, 0, 2).astype(jnp.bfloat16)              # (N, T, E)

    # encoder: one fused pallas_call per layer; final encoder LayerNorm fused
    # into the last layer's epilogue.
    mem = src
    n_enc = len(params["enc_layers"])
    for li, lp in enumerate(params["enc_layers"]):
        fin = ((params["enc_norm_g"], params["enc_norm_b"])
               if li == n_enc - 1 else None)
        mem = encoder_layer(mem, lp, nhead, final_ln=fin)

    # decoder: one fused pallas_call per layer.
    out = tgt
    for lp in params["dec_layers"]:
        out = decoder_layer(out, mem, lp, nhead)

    # decoder-final LayerNorm fused into the logits projection's prologue.
    logits = final_ln_logits(out, params["dec_norm_g"], params["dec_norm_b"],
                             params["out_w"], params["out_b"])     # (N, T, Vpad)
    return logits[:, :, :V].transpose(1, 0, 2)                     # (T, N, V)


# ------------------------------ initialization ------------------------------

def make_pe(max_len, d_model):
    pos = jnp.arange(max_len, dtype=jnp.float32)[:, None]
    div = jnp.exp(jnp.arange(0, d_model, 2, dtype=jnp.float32)
                  * (-math.log(10000.0) / d_model))
    pe = jnp.zeros((max_len, d_model), jnp.float32)
    pe = pe.at[:, 0::2].set(jnp.sin(pos * div))
    pe = pe.at[:, 1::2].set(jnp.cos(pos * div))
    return pe[:, None, :]                                          # (max_len, 1, E)


def init_params(key, cfg):
    d, dff = cfg["d_model"], cfg["dff"]
    V, Vp = cfg["tgt_vocab"], cfg["tgt_vocab_padded"]
    keys = iter(jax.random.split(key, 512))

    def xw(shape, dtype=jnp.bfloat16):
        # Xavier-uniform; weights stored in bf16 (MXU-native, halved HBM traffic).
        bound = math.sqrt(6.0 / (shape[0] + shape[1]))
        return jax.random.uniform(next(keys), shape, jnp.float32,
                                  -bound, bound).astype(dtype)

    zeros = lambda c: jnp.zeros((1, c), jnp.float32)
    ones = lambda c: jnp.ones((1, c), jnp.float32)

    def enc_layer_params():
        return dict(
            qkv_w=jnp.concatenate([xw((d, d)), xw((d, d)), xw((d, d))], axis=1),
            qkv_b=zeros(3 * d),
            o_w=xw((d, d)), o_b=zeros(d),
            ln1_g=ones(d), ln1_b=zeros(d),
            ff1_w=xw((d, dff)), ff1_b=zeros(dff),
            ff2_w=xw((dff, d)), ff2_b=zeros(d),
            ln2_g=ones(d), ln2_b=zeros(d))

    def dec_layer_params():
        return dict(
            sa_qkv_w=jnp.concatenate([xw((d, d)), xw((d, d)), xw((d, d))], axis=1),
            sa_qkv_b=zeros(3 * d),
            sa_o_w=xw((d, d)), sa_o_b=zeros(d),
            ln1_g=ones(d), ln1_b=zeros(d),
            ca_q_w=xw((d, d)), ca_q_b=zeros(d),
            ca_kv_w=jnp.concatenate([xw((d, d)), xw((d, d))], axis=1),
            ca_kv_b=zeros(2 * d),
            ca_o_w=xw((d, d)), ca_o_b=zeros(d),
            ln2_g=ones(d), ln2_b=zeros(d),
            ff1_w=xw((d, dff)), ff1_b=zeros(dff),
            ff2_w=xw((dff, d)), ff2_b=zeros(d),
            ln3_g=ones(d), ln3_b=zeros(d))

    # Logits weight padded to a 128-lane multiple (lane-dense stores); padding
    # columns are zero and sliced off in the wrapper.
    out_w = jnp.zeros((d, Vp), jnp.float32).at[:, :V].set(
        xw((d, V), jnp.float32)).astype(jnp.bfloat16)

    return dict(
        src_emb=xw((cfg["src_vocab"], d), jnp.float32),
        tgt_emb=xw((cfg["tgt_vocab"], d), jnp.float32),
        pe=make_pe(cfg["max_len"], d),
        enc_layers=[enc_layer_params() for _ in range(cfg["n_enc"])],
        dec_layers=[dec_layer_params() for _ in range(cfg["n_dec"])],
        enc_norm_g=ones(d), enc_norm_b=zeros(d),
        dec_norm_g=ones(d), dec_norm_b=zeros(d),
        out_w=out_w, out_b=jnp.zeros((1, Vp), jnp.float32),
    )


# ----------------------------------- main -----------------------------------

if __name__ == "__main__":
    cfg = dict(d_model=32, nhead=4, dff=64, n_enc=2, n_dec=2,
               src_vocab=120, tgt_vocab=96, max_len=64)
    cfg["tgt_vocab_padded"] = -(-cfg["tgt_vocab"] // 128) * 128    # 96 -> 128

    root = jax.random.PRNGKey(0)
    pkey, skey, tkey = jax.random.split(root, 3)
    params = init_params(pkey, cfg)

    S, T, N = 16, 8, 2                                   # src len, tgt len, batch
    src_ids = jax.random.randint(skey, (S, N), 0, cfg["src_vocab"], dtype=jnp.int32)
    tgt_ids = jax.random.randint(tkey, (T, N), 0, cfg["tgt_vocab"], dtype=jnp.int32)

    fwd = jax.jit(functools.partial(transformer_forward, cfg=cfg))
    logits = jax.block_until_ready(fwd(params, src_ids, tgt_ids))

    assert logits.shape == (T, N, cfg["tgt_vocab"]), logits.shape
    assert bool(jnp.all(jnp.isfinite(logits)))
    print("KERNEL_OK")
</pallas_src>

<mosaic_0001>
module attributes {stable_mosaic.version = 11 : i64} {
  func.func @_encoder_layer_kernel(%arg0: i32, %arg1: memref<1x16x32xbf16, #tpu.memory_space<vmem>>, %arg2: memref<32x96xbf16, #tpu.memory_space<vmem>>, %arg3: memref<1x96xf32, #tpu.memory_space<vmem>>, %arg4: memref<32x32xbf16, #tpu.memory_space<vmem>>, %arg5: memref<1x32xf32, #tpu.memory_space<vmem>>, %arg6: memref<1x32xf32, #tpu.memory_space<vmem>>, %arg7: memref<1x32xf32, #tpu.memory_space<vmem>>, %arg8: memref<32x64xbf16, #tpu.memory_space<vmem>>, %arg9: memref<1x64xf32, #tpu.memory_space<vmem>>, %arg10: memref<64x32xbf16, #tpu.memory_space<vmem>>, %arg11: memref<1x32xf32, #tpu.memory_space<vmem>>, %arg12: memref<1x32xf32, #tpu.memory_space<vmem>>, %arg13: memref<1x32xf32, #tpu.memory_space<vmem>>, %arg14: memref<1x16x32xbf16, #tpu.memory_space<vmem>>) attributes {dimension_semantics = [#tpu.dimension_semantics<parallel>], iteration_bounds = array<i64: 2>, scalar_prefetch = 0 : i64, scratch_operands = 0 : i64, tpu.core_type = #tpu.core_type<tc>, window_params = [{transform_indices = @transform_0, window_bounds = array<i64: 1, 16, 32>}, {pipeline_mode = #tpu.pipeline_mode<synchronous>, transform_indices = @transform_1, window_bounds = array<i64: 32, 96>}, {pipeline_mode = #tpu.pipeline_mode<synchronous>, transform_indices = @transform_2, window_bounds = array<i64: 1, 96>}, {pipeline_mode = #tpu.pipeline_mode<synchronous>, transform_indices = @transform_3, window_bounds = array<i64: 32, 32>}, {pipeline_mode = #tpu.pipeline_mode<synchronous>, transform_indices = @transform_4, window_bounds = array<i64: 1, 32>}, {pipeline_mode = #tpu.pipeline_mode<synchronous>, transform_indices = @transform_5, window_bounds = array<i64: 1, 32>}, {pipeline_mode = #tpu.pipeline_mode<synchronous>, transform_indices = @transform_6, window_bounds = array<i64: 1, 32>}, {pipeline_mode = #tpu.pipeline_mode<synchronous>, transform_indices = @transform_7, window_bounds = array<i64: 32, 64>}, {pipeline_mode = #tpu.pipeline_mode<synchronous>, transform_indices = @transform_8, window_bounds = array<i64: 1, 64>}, {pipeline_mode = #tpu.pipeline_mode<synchronous>, transform_indices = @transform_9, window_bounds = array<i64: 64, 32>}, {pipeline_mode = #tpu.pipeline_mode<synchronous>, transform_indices = @transform_10, window_bounds = array<i64: 1, 32>}, {pipeline_mode = #tpu.pipeline_mode<synchronous>, transform_indices = @transform_11, window_bounds = array<i64: 1, 32>}, {pipeline_mode = #tpu.pipeline_mode<synchronous>, transform_indices = @transform_12, window_bounds = array<i64: 1, 32>}, {transform_indices = @transform_13, window_bounds = array<i64: 1, 16, 32>}]} {
    %c0 = arith.constant 0 : index
    %c0_0 = arith.constant 0 : index
    %c0_1 = arith.constant 0 : index
    %0 = vector.load %arg1[%c0, %c0_0, %c0_1] : memref<1x16x32xbf16, #tpu.memory_space<vmem>>, vector<1x16x32xbf16>
    %1 = vector.shape_cast %0 : vector<1x16x32xbf16> to vector<16x32xbf16>
    %2 = arith.extf %1 : vector<16x32xbf16> to vector<16x32xf32>
    %c0_2 = arith.constant 0 : index
    %c0_3 = arith.constant 0 : index
    %3 = vector.load %arg2[%c0_2, %c0_3] : memref<32x96xbf16, #tpu.memory_space<vmem>>, vector<32x96xbf16>
    %cst = arith.constant dense<0.000000e+00> : vector<16x96xf32>
    %4 = tpu.matmul %1, %3, %cst {dimension_numbers = #tpu.dot_dimension_numbers<[1], [0], [0], [1], [0, 0, 1, 1], [], []>} : vector<16x32xbf16>, vector<32x96xbf16>, vector<16x96xf32> -> vector<16x96xf32>
    %c0_4 = arith.constant 0 : index
    %c0_5 = arith.constant 0 : index
    %5 = vector.load %arg3[%c0_4, %c0_5] : memref<1x96xf32, #tpu.memory_space<vmem>>, vector<1x96xf32>
    %6 = vector.broadcast %5 : vector<1x96xf32> to vector<16x96xf32>
    %7 = arith.addf %4, %6 : vector<16x96xf32>
    %8 = vector.extract_strided_slice %7 {offsets = [0, 0], sizes = [16, 32], strides = [1, 1]} : vector<16x96xf32> to vector<16x32xf32>
    %cst_6 = arith.constant 0.353553385 : f32
    %9 = vector.broadcast %cst_6 : f32 to vector<16x32xf32>
    %10 = arith.mulf %8, %9 : vector<16x32xf32>
    %11 = vector.extract_strided_slice %7 {offsets = [0, 32], sizes = [16, 32], strides = [1, 1]} : vector<16x96xf32> to vector<16x32xf32>
    %12 = vector.extract_strided_slice %7 {offsets = [0, 64], sizes = [16, 32], strides = [1, 1]} : vector<16x96xf32> to vector<16x32xf32>
    %c0_7 = arith.constant 0 : index
    %c0_8 = arith.constant 0 : index
    %13 = vector.load %arg4[%c0_7, %c0_8] : memref<32x32xbf16, #tpu.memory_space<vmem>>, vector<32x32xbf16>
    %14 = vector.extract_strided_slice %10 {offsets = [0, 0], sizes = [16, 8], strides = [1, 1]} : vector<16x32xf32> to vector<16x8xf32>
    %15 = arith.truncf %14 : vector<16x8xf32> to vector<16x8xbf16>
    %16 = vector.extract_strided_slice %11 {offsets = [0, 0], sizes = [16, 8], strides = [1, 1]} : vector<16x32xf32> to vector<16x8xf32>
    %17 = arith.truncf %16 : vector<16x8xf32> to vector<16x8xbf16>
    %18 = vector.extract_strided_slice %12 {offsets = [0, 0], sizes = [16, 8], strides = [1, 1]} : vector<16x32xf32> to vector<16x8xf32>
    %19 = arith.truncf %18 : vector<16x8xf32> to vector<16x8xbf16>
    %20 = tpu.transpose %17, [1, 0] : vector<16x8xbf16> -> vector<8x16xbf16>
    %cst_9 = arith.constant dense<0.000000e+00> : vector<16x16xf32>
    %21 = tpu.matmul %15, %20, %cst_9 {dimension_numbers = #tpu.dot_dimension_numbers<[1], [0], [0], [1], [0, 0, 1, 1], [], []>} : vector<16x8xbf16>, vector<8x16xbf16>, vector<16x16xf32> -> vector<16x16xf32>
    %cst_10 = arith.constant dense<0xFF800000> : vector<16xf32>
    %22 = vector.multi_reduction <maximumf>, %21, %cst_10 [1] : vector<16x16xf32> to vector<16xf32>
    %23 = vector.shape_cast %22 : vector<16xf32> to vector<16x1xf32>
    %24 = vector.broadcast %23 : vector<16x1xf32> to vector<16x16xf32>
    %25 = arith.subf %21, %24 : vector<16x16xf32>
    %26 = math.exp %25 : vector<16x16xf32>
    %cst_11 = arith.constant dense<0.000000e+00> : vector<16xf32>
    %27 = vector.multi_reduction <add>, %26, %cst_11 [1] : vector<16x16xf32> to vector<16xf32>
    %28 = vector.shape_cast %27 : vector<16xf32> to vector<16x1xf32>
    %29 = arith.truncf %26 : vector<16x16xf32> to vector<16x16xbf16>
    %cst_12 = arith.constant dense<0.000000e+00> : vector<16x8xf32>
    %30 = tpu.matmul %29, %19, %cst_12 {dimension_numbers = #tpu.dot_dimension_numbers<[1], [0], [0], [1], [0, 0, 1, 1], [], []>} : vector<16x16xbf16>, vector<16x8xbf16>, vector<16x8xf32> -> vector<16x8xf32>
    %31 = tpu.reciprocal %28 {approx = true} : vector<16x1xf32> -> vector<16x1xf32>
    %32 = vector.broadcast %31 : vector<16x1xf32> to vector<16x8xf32>
    %33 = arith.mulf %30, %32 : vector<16x8xf32>
    %34 = arith.truncf %33 : vector<16x8xf32> to vector<16x8xbf16>
    %35 = vector.extract_strided_slice %13 {offsets = [0, 0], sizes = [8, 32], strides = [1, 1]} : vector<32x32xbf16> to vector<8x32xbf16>
    %cst_13 = arith.constant dense<0.000000e+00> : vector<16x32xf32>
    %36 = tpu.matmul %34, %35, %cst_13 {dimension_numbers = #tpu.dot_dimension_numbers<[1], [0], [0], [1], [0, 0, 1, 1], [], []>} : vector<16x8xbf16>, vector<8x32xbf16>, vector<16x32xf32> -> vector<16x32xf32>
    %37 = vector.extract_strided_slice %10 {offsets = [0, 8], sizes = [16, 8], strides = [1, 1]} : vector<16x32xf32> to vector<16x8xf32>
    %38 = arith.truncf %37 : vector<16x8xf32> to vector<16x8xbf16>
    %39 = vector.extract_strided_slice %11 {offsets = [0, 8], sizes = [16, 8], strides = [1, 1]} : vector<16x32xf32> to vector<16x8xf32>
    %40 = arith.truncf %39 : vector<16x8xf32> to vector<16x8xbf16>
    %41 = vector.extract_strided_slice %12 {offsets = [0, 8], sizes = [16, 8], strides = [1, 1]} : vector<16x32xf32> to vector<16x8xf32>
    %42 = arith.truncf %41 : vector<16x8xf32> to vector<16x8xbf16>
    %43 = tpu.transpose %40, [1, 0] : vector<16x8xbf16> -> vector<8x16xbf16>
    %cst_14 = arith.constant dense<0.000000e+00> : vector<16x16xf32>
    %44 = tpu.matmul %38, %43, %cst_14 {dimension_numbers = #tpu.dot_dimension_numbers<[1], [0], [0], [1], [0, 0, 1, 1], [], []>} : vector<16x8xbf16>, vector<8x16xbf16>, vector<16x16xf32> -> vector<16x16xf32>
    %cst_15 = arith.constant dense<0xFF800000> : vector<16xf32>
    %45 = vector.multi_reduction <maximumf>, %44, %cst_15 [1] : vector<16x16xf32> to vector<16xf32>
    %46 = vector.shape_cast %45 : vector<16xf32> to vector<16x1xf32>
    %47 = vector.broadcast %46 : vector<16x1xf32> to vector<16x16xf32>
    %48 = arith.subf %44, %47 : vector<16x16xf32>
    %49 = math.exp %48 : vector<16x16xf32>
    %cst_16 = arith.constant dense<0.000000e+00> : vector<16xf32>
    %50 = vector.multi_reduction <add>, %49, %cst_16 [1] : vector<16x16xf32> to vector<16xf32>
    %51 = vector.shape_cast %50 : vector<16xf32> to vector<16x1xf32>
    %52 = arith.truncf %49 : vector<16x16xf32> to vector<16x16xbf16>
    %cst_17 = arith.constant dense<0.000000e+00> : vector<16x8xf32>
    %53 = tpu.matmul %52, %42, %cst_17 {dimension_numbers = #tpu.dot_dimension_numbers<[1], [0], [0], [1], [0, 0, 1, 1], [], []>} : vector<16x16xbf16>, vector<16x8xbf16>, vector<16x8xf32> -> vector<16x8xf32>
    %54 = tpu.reciprocal %51 {approx = true} : vector<16x1xf32> -> vector<16x1xf32>
    %55 = vector.broadcast %54 : vector<16x1xf32> to vector<16x8xf32>
    %56 = arith.mulf %53, %55 : vector<16x8xf32>
    %57 = arith.truncf %56 : vector<16x8xf32> to vector<16x8xbf16>
    %58 = vector.extract_strided_slice %13 {offsets = [8, 0], sizes = [8, 32], strides = [1, 1]} : vector<32x32xbf16> to vector<8x32xbf16>
    %cst_18 = arith.constant dense<0.000000e+00> : vector<16x32xf32>
    %59 = tpu.matmul %57, %58, %cst_18 {dimension_numbers = #tpu.dot_dimension_numbers<[1], [0], [0], [1], [0, 0, 1, 1], [], []>} : vector<16x8xbf16>, vector<8x32xbf16>, vector<16x32xf32> -> vector<16x32xf32>
    %60 = arith.addf %36, %59 : vector<16x32xf32>
    %61 = vector.extract_strided_slice %10 {offsets = [0, 16], sizes = [16, 8], strides = [1, 1]} : vector<16x32xf32> to vector<16x8xf32>
    %62 = arith.truncf %61 : vector<16x8xf32> to vector<16x8xbf16>
    %63 = vector.extract_strided_slice %11 {offsets = [0, 16], sizes = [16, 8], strides = [1, 1]} : vector<16x32xf32> to vector<16x8xf32>
    %64 = arith.truncf %63 : vector<16x8xf32> to vector<16x8xbf16>
    %65 = vector.extract_strided_slice %12 {offsets = [0, 16], sizes = [16, 8], strides = [1, 1]} : vector<16x32xf32> to vector<16x8xf32>
    %66 = arith.truncf %65 : vector<16x8xf32> to vector<16x8xbf16>
    %67 = tpu.transpose %64, [1, 0] : vector<16x8xbf16> -> vector<8x16xbf16>
    %cst_19 = arith.constant dense<0.000000e+00> : vector<16x16xf32>
    %68 = tpu.matmul %62, %67, %cst_19 {dimension_numbers = #tpu.dot_dimension_numbers<[1], [0], [0], [1], [0, 0, 1, 1], [], []>} : vector<16x8xbf16>, vector<8x16xbf16>, vector<16x16xf32> -> vector<16x16xf32>
    %cst_20 = arith.constant dense<0xFF800000> : vector<16xf32>
    %69 = vector.multi_reduction <maximumf>, %68, %cst_20 [1] : vector<16x16xf32> to vector<16xf32>
    %70 = vector.shape_cast %69 : vector<16xf32> to vector<16x1xf32>
    %71 = vector.broadcast %70 : vector<16x1xf32> to vector<16x16xf32>
    %72 = arith.subf %68, %71 : vector<16x16xf32>
    %73 = math.exp %72 : vector<16x16xf32>
    %cst_21 = arith.constant dense<0.000000e+00> : vector<16xf32>
    %74 = vector.multi_reduction <add>, %73, %cst_21 [1] : vector<16x16xf32> to vector<16xf32>
    %75 = vector.shape_cast %74 : vector<16xf32> to vector<16x1xf32>
    %76 = arith.truncf %73 : vector<16x16xf32> to vector<16x16xbf16>
    %cst_22 = arith.constant dense<0.000000e+00> : vector<16x8xf32>
    %77 = tpu.matmul %76, %66, %cst_22 {dimension_numbers = #tpu.dot_dimension_numbers<[1], [0], [0], [1], [0, 0, 1, 1], [], []>} : vector<16x16xbf16>, vector<16x8xbf16>, vector<16x8xf32> -> vector<16x8xf32>
    %78 = tpu.reciprocal %75 {approx = true} : vector<16x1xf32> -> vector<16x1xf32>
    %79 = vector.broadcast %78 : vector<16x1xf32> to vector<16x8xf32>
    %80 = arith.mulf %77, %79 : vector<16x8xf32>
    %81 = arith.truncf %80 : vector<16x8xf32> to vector<16x8xbf16>
    %82 = vector.extract_strided_slice %13 {offsets = [16, 0], sizes = [8, 32], strides = [1, 1]} : vector<32x32xbf16> to vector<8x32xbf16>
    %cst_23 = arith.constant dense<0.000000e+00> : vector<16x32xf32>
    %83 = tpu.matmul %81, %82, %cst_23 {dimension_numbers = #tpu.dot_dimension_numbers<[1], [0], [0], [1], [0, 0, 1, 1], [], []>} : vector<16x8xbf16>, vector<8x32xbf16>, vector<16x32xf32> -> vector<16x32xf32>
    %84 = arith.addf %60, %83 : vector<16x32xf32>
    %85 = vector.extract_strided_slice %10 {offsets = [0, 24], sizes = [16, 8], strides = [1, 1]} : vector<16x32xf32> to vector<16x8xf32>
    %86 = arith.truncf %85 : vector<16x8xf32> to vector<16x8xbf16>
    %87 = vector.extract_strided_slice %11 {offsets = [0, 24], sizes = [16, 8], strides = [1, 1]} : vector<16x32xf32> to vector<16x8xf32>
    %88 = arith.truncf %87 : vector<16x8xf32> to vector<16x8xbf16>
    %89 = vector.extract_strided_slice %12 {offsets = [0, 24], sizes = [16, 8], strides = [1, 1]} : vector<16x32xf32> to vector<16x8xf32>
    %90 = arith.truncf %89 : vector<16x8xf32> to vector<16x8xbf16>
    %91 = tpu.transpose %88, [1, 0] : vector<16x8xbf16> -> vector<8x16xbf16>
    %cst_24 = arith.constant dense<0.000000e+00> : vector<16x16xf32>
    %92 = tpu.matmul %86, %91, %cst_24 {dimension_numbers = #tpu.dot_dimension_numbers<[1], [0], [0], [1], [0, 0, 1, 1], [], []>} : vector<16x8xbf16>, vector<8x16xbf16>, vector<16x16xf32> -> vector<16x16xf32>
    %cst_25 = arith.constant dense<0xFF800000> : vector<16xf32>
    %93 = vector.multi_reduction <maximumf>, %92, %cst_25 [1] : vector<16x16xf32> to vector<16xf32>
    %94 = vector.shape_cast %93 : vector<16xf32> to vector<16x1xf32>
    %95 = vector.broadcast %94 : vector<16x1xf32> to vector<16x16xf32>
    %96 = arith.subf %92, %95 : vector<16x16xf32>
    %97 = math.exp %96 : vector<16x16xf32>
    %cst_26 = arith.constant dense<0.000000e+00> : vector<16xf32>
    %98 = vector.multi_reduction <add>, %97, %cst_26 [1] : vector<16x16xf32> to vector<16xf32>
    %99 = vector.shape_cast %98 : vector<16xf32> to vector<16x1xf32>
    %100 = arith.truncf %97 : vector<16x16xf32> to vector<16x16xbf16>
    %cst_27 = arith.constant dense<0.000000e+00> : vector<16x8xf32>
    %101 = tpu.matmul %100, %90, %cst_27 {dimension_numbers = #tpu.dot_dimension_numbers<[1], [0], [0], [1], [0, 0, 1, 1], [], []>} : vector<16x16xbf16>, vector<16x8xbf16>, vector<16x8xf32> -> vector<16x8xf32>
    %102 = tpu.reciprocal %99 {approx = true} : vector<16x1xf32> -> vector<16x1xf32>
    %103 = vector.broadcast %102 : vector<16x1xf32> to vector<16x8xf32>
    %104 = arith.mulf %101, %103 : vector<16x8xf32>
    %105 = arith.truncf %104 : vector<16x8xf32> to vector<16x8xbf16>
    %106 = vector.extract_strided_slice %13 {offsets = [24, 0], sizes = [8, 32], strides = [1, 1]} : vector<32x32xbf16> to vector<8x32xbf16>
    %cst_28 = arith.constant dense<0.000000e+00> : vector<16x32xf32>
    %107 = tpu.matmul %105, %106, %cst_28 {dimension_numbers = #tpu.dot_dimension_numbers<[1], [0], [0], [1], [0, 0, 1, 1], [], []>} : vector<16x8xbf16>, vector<8x32xbf16>, vector<16x32xf32> -> vector<16x32xf32>
    %108 = arith.addf %84, %107 : vector<16x32xf32>
    %109 = arith.addf %2, %108 : vector<16x32xf32>
    %c0_29 = arith.constant 0 : index
    %c0_30 = arith.constant 0 : index
    %110 = vector.load %arg5[%c0_29, %c0_30] : memref<1x32xf32, #tpu.memory_space<vmem>>, vector<1x32xf32>
    %111 = vector.broadcast %110 : vector<1x32xf32> to vector<16x32xf32>
    %112 = arith.addf %109, %111 : vector<16x32xf32>
    %c0_31 = arith.constant 0 : index
    %c0_32 = arith.constant 0 : index
    %113 = vector.load %arg6[%c0_31, %c0_32] : memref<1x32xf32, #tpu.memory_space<vmem>>, vector<1x32xf32>
    %c0_33 = arith.constant 0 : index
    %c0_34 = arith.constant 0 : index
    %114 = vector.load %arg7[%c0_33, %c0_34] : memref<1x32xf32, #tpu.memory_space<vmem>>, vector<1x32xf32>
    %cst_35 = arith.constant dense<0.000000e+00> : vector<16xf32>
    %115 = vector.multi_reduction <add>, %112, %cst_35 [1] : vector<16x32xf32> to vector<16xf32>
    %116 = vector.shape_cast %115 : vector<16xf32> to vector<16x1xf32>
    %cst_36 = arith.constant 3.200000e+01 : f32
    %117 = vector.broadcast %cst_36 : f32 to vector<16x1xf32>
    %118 = arith.divf %116, %117 : vector<16x1xf32>
    %119 = vector.broadcast %118 : vector<16x1xf32> to vector<16x32xf32>
    %120 = arith.subf %112, %119 : vector<16x32xf32>
    %121 = arith.mulf %120, %120 : vector<16x32xf32>
    %cst_37 = arith.constant dense<0.000000e+00> : vector<16xf32>
    %122 = vector.multi_reduction <add>, %121, %cst_37 [1] : vector<16x32xf32> to vector<16xf32>
    %123 = vector.shape_cast %122 : vector<16xf32> to vector<16x1xf32>
    %cst_38 = arith.constant 3.200000e+01 : f32
    %124 = vector.broadcast %cst_38 : f32 to vector<16x1xf32>
    %125 = arith.divf %123, %124 : vector<16x1xf32>
    %126 = vector.broadcast %118 : vector<16x1xf32> to vector<16x32xf32>
    %127 = arith.subf %112, %126 : vector<16x32xf32>
    %cst_39 = arith.constant 9.99999974E-6 : f32
    %128 = vector.broadcast %cst_39 : f32 to vector<16x1xf32>
    %129 = arith.addf %125, %128 : vector<16x1xf32>
    %130 = math.rsqrt %129 : vector<16x1xf32>
    %131 = vector.broadcast %130 : vector<16x1xf32> to vector<16x32xf32>
    %132 = arith.mulf %127, %131 : vector<16x32xf32>
    %133 = vector.broadcast %113 : vector<1x32xf32> to vector<16x32xf32>
    %134 = arith.mulf %132, %133 : vector<16x32xf32>
    %135 = vector.broadcast %114 : vector<1x32xf32> to vector<16x32xf32>
    %136 = arith.addf %134, %135 : vector<16x32xf32>
    %137 = arith.truncf %136 : vector<16x32xf32> to vector<16x32xbf16>
    %c0_40 = arith.constant 0 : index
    %c0_41 = arith.constant 0 : index
    %138 = vector.load %arg8[%c0_40, %c0_41] : memref<32x64xbf16, #tpu.memory_space<vmem>>, vector<32x64xbf16>
    %cst_42 = arith.constant dense<0.000000e+00> : vector<16x64xf32>
    %139 = tpu.matmul %137, %138, %cst_42 {dimension_numbers = #tpu.dot_dimension_numbers<[1], [0], [0], [1], [0, 0, 1, 1], [], []>} : vector<16x32xbf16>, vector<32x64xbf16>, vector<16x64xf32> -> vector<16x64xf32>
    %c0_43 = arith.constant 0 : index
    %c0_44 = arith.constant 0 : index
    %140 = vector.load %arg9[%c0_43, %c0_44] : memref<1x64xf32, #tpu.memory_space<vmem>>, vector<1x64xf32>
    %141 = vector.broadcast %140 : vector<1x64xf32> to vector<16x64xf32>
    %142 = arith.addf %139, %141 : vector<16x64xf32>
    %cst_45 = arith.constant 0.000000e+00 : f32
    %143 = vector.broadcast %cst_45 : f32 to vector<16x64xf32>
    %144 = arith.maximumf %142, %143 : vector<16x64xf32>
    %145 = arith.truncf %144 : vector<16x64xf32> to vector<16x64xbf16>
    %c0_46 = arith.constant 0 : index
    %c0_47 = arith.constant 0 : index
    %146 = vector.load %arg10[%c0_46, %c0_47] : memref<64x32xbf16, #tpu.memory_space<vmem>>, vector<64x32xbf16>
    %cst_48 = arith.constant dense<0.000000e+00> : vector<16x32xf32>
    %147 = tpu.matmul %145, %146, %cst_48 {dimension_numbers = #tpu.dot_dimension_numbers<[1], [0], [0], [1], [0, 0, 1, 1], [], []>} : vector<16x64xbf16>, vector<64x32xbf16>, vector<16x32xf32> -> vector<16x32xf32>
    %c0_49 = arith.constant 0 : index
    %c0_50 = arith.constant 0 : index
    %148 = vector.load %arg11[%c0_49, %c0_50] : memref<1x32xf32, #tpu.memory_space<vmem>>, vector<1x32xf32>
    %149 = vector.broadcast %148 : vector<1x32xf32> to vector<16x32xf32>
    %150 = arith.addf %147, %149 : vector<16x32xf32>
    %151 = arith.addf %136, %150 : vector<16x32xf32>
    %c0_51 = arith.constant 0 : index
    %c0_52 = arith.constant 0 : index
    %152 = vector.load %arg12[%c0_51, %c0_52] : memref<1x32xf32, #tpu.memory_space<vmem>>, vector<1x32xf32>
    %c0_53 = arith.constant 0 : index
    %c0_54 = arith.constant 0 : index
    %153 = vector.load %arg13[%c0_53, %c0_54] : memref<1x32xf32, #tpu.memory_space<vmem>>, vector<1x32xf32>
    %cst_55 = arith.constant dense<0.000000e+00> : vector<16xf32>
    %154 = vector.multi_reduction <add>, %151, %cst_55 [1] : vector<16x32xf32> to vector<16xf32>
    %155 = vector.shape_cast %154 : vector<16xf32> to vector<16x1xf32>
    %cst_56 = arith.constant 3.200000e+01 : f32
    %156 = vector.broadcast %cst_56 : f32 to vector<16x1xf32>
    %157 = arith.divf %155, %156 : vector<16x1xf32>
    %158 = vector.broadcast %157 : vector<16x1xf32> to vector<16x32xf32>
    %159 = arith.subf %151, %158 : vector<16x32xf32>
    %160 = arith.mulf %159, %159 : vector<16x32xf32>
    %cst_57 = arith.constant dense<0.000000e+00> : vector<16xf32>
    %161 = vector.multi_reduction <add>, %160, %cst_57 [1] : vector<16x32xf32> to vector<16xf32>
    %162 = vector.shape_cast %161 : vector<16xf32> to vector<16x1xf32>
    %cst_58 = arith.constant 3.200000e+01 : f32
    %163 = vector.broadcast %cst_58 : f32 to vector<16x1xf32>
    %164 = arith.divf %162, %163 : vector<16x1xf32>
    %165 = vector.broadcast %157 : vector<16x1xf32> to vector<16x32xf32>
    %166 = arith.subf %151, %165 : vector<16x32xf32>
    %cst_59 = arith.constant 9.99999974E-6 : f32
    %167 = vector.broadcast %cst_59 : f32 to vector<16x1xf32>
    %168 = arith.addf %164, %167 : vector<16x1xf32>
    %169 = math.rsqrt %168 : vector<16x1xf32>
    %170 = vector.broadcast %169 : vector<16x1xf32> to vector<16x32xf32>
    %171 = arith.mulf %166, %170 : vector<16x32xf32>
    %172 = vector.broadcast %152 : vector<1x32xf32> to vector<16x32xf32>
    %173 = arith.mulf %171, %172 : vector<16x32xf32>
    %174 = vector.broadcast %153 : vector<1x32xf32> to vector<16x32xf32>
    %175 = arith.addf %173, %174 : vector<16x32xf32>
    %176 = arith.truncf %175 : vector<16x32xf32> to vector<16x32xbf16>
    %c0_60 = arith.constant 0 : index
    %c0_61 = arith.constant 0 : index
    %c0_62 = arith.constant 0 : index
    %177 = vector.load %arg14[%c0_60, %c0_61, %c0_62] : memref<1x16x32xbf16, #tpu.memory_space<vmem>>, vector<1x16x32xbf16>
    %178 = vector.shape_cast %177 : vector<1x16x32xbf16> to vector<16x32xbf16>
    %179 = vector.shape_cast %176 : vector<16x32xbf16> to vector<1x16x32xbf16>
    tpu.vector_store %arg14[%c0_60, %c0_61, %c0_62], %179 {strides = array<i32>} : memref<1x16x32xbf16, #tpu.memory_space<vmem>>, vector<1x16x32xbf16>,
    return
  }
  func.func @transform_0(%arg0: i32) -> (i32, i32, i32) {
    %c0_i32 = arith.constant 0 : i32
    %c0_i32_0 = arith.constant 0 : i32
    %c0_i32_1 = arith.constant 0 : i32
    return %arg0, %c0_i32, %c0_i32_0 : i32, i32, i32
  }
  func.func @transform_1(%arg0: i32) -> (i32, i32) {
    %c0_i32 = arith.constant 0 : i32
    %c0_i32_0 = arith.constant 0 : i32
    %c0_i32_1 = arith.constant 0 : i32
    return %c0_i32, %c0_i32_0 : i32, i32
  }
  func.func @transform_2(%arg0: i32) -> (i32, i32) {
    %c0_i32 = arith.constant 0 : i32
    %c0_i32_0 = arith.constant 0 : i32
    %c0_i32_1 = arith.constant 0 : i32
    return %c0_i32, %c0_i32_0 : i32, i32
  }
  func.func @transform_3(%arg0: i32) -> (i32, i32) {
    %c0_i32 = arith.constant 0 : i32
    %c0_i32_0 = arith.constant 0 : i32
    %c0_i32_1 = arith.constant 0 : i32
    return %c0_i32, %c0_i32_0 : i32, i32
  }
  func.func @transform_4(%arg0: i32) -> (i32, i32) {
    %c0_i32 = arith.constant 0 : i32
    %c0_i32_0 = arith.constant 0 : i32
    %c0_i32_1 = arith.constant 0 : i32
    return %c0_i32, %c0_i32_0 : i32, i32
  }
  func.func @transform_5(%arg0: i32) -> (i32, i32) {
    %c0_i32 = arith.constant 0 : i32
    %c0_i32_0 = arith.constant 0 : i32
    %c0_i32_1 = arith.constant 0 : i32
    return %c0_i32, %c0_i32_0 : i32, i32
  }
  func.func @transform_6(%arg0: i32) -> (i32, i32) {
    %c0_i32 = arith.constant 0 : i32
    %c0_i32_0 = arith.constant 0 : i32
    %c0_i32_1 = arith.constant 0 : i32
    return %c0_i32, %c0_i32_0 : i32, i32
  }
  func.func @transform_7(%arg0: i32) -> (i32, i32) {
    %c0_i32 = arith.constant 0 : i32
    %c0_i32_0 = arith.constant 0 : i32
    %c0_i32_1 = arith.constant 0 : i32
    return %c0_i32, %c0_i32_0 : i32, i32
  }
  func.func @transform_8(%arg0: i32) -> (i32, i32) {
    %c0_i32 = arith.constant 0 : i32
    %c0_i32_0 = arith.constant 0 : i32
    %c0_i32_1 = arith.constant 0 : i32
    return %c0_i32, %c0_i32_0 : i32, i32
  }
  func.func @transform_9(%arg0: i32) -> (i32, i32) {
    %c0_i32 = arith.constant 0 : i32
    %c0_i32_0 = arith.constant 0 : i32
    %c0_i32_1 = arith.constant 0 : i32
    return %c0_i32, %c0_i32_0 : i32, i32
  }
  func.func @transform_10(%arg0: i32) -> (i32, i32) {
    %c0_i32 = arith.constant 0 : i32
    %c0_i32_0 = arith.constant 0 : i32
    %c0_i32_1 = arith.constant 0 : i32
    return %c0_i32, %c0_i32_0 : i32, i32
  }
  func.func @transform_11(%arg0: i32) -> (i32, i32) {
    %c0_i32 = arith.constant 0 : i32
    %c0_i32_0 = arith.constant 0 : i32
    %c0_i32_1 = arith.constant 0 : i32
    return %c0_i32, %c0_i32_0 : i32, i32
  }
  func.func @transform_12(%arg0: i32) -> (i32, i32) {
    %c0_i32 = arith.constant 0 : i32
    %c0_i32_0 = arith.constant 0 : i32
    %c0_i32_1 = arith.constant 0 : i32
    return %c0_i32, %c0_i32_0 : i32, i32
  }
  func.func @transform_13(%arg0: i32) -> (i32, i32, i32) {
    %c0_i32 = arith.constant 0 : i32
    %c0_i32_0 = arith.constant 0 : i32
    %c0_i32_1 = arith.constant 0 : i32
    return %arg0, %c0_i32, %c0_i32_0 : i32, i32, i32
  }
}

module attributes {stable_mosaic.version = 11 : i64} {
  func.func @_encoder_layer_kernel(%arg0: i32, %arg1: memref<1x16x32xbf16, #tpu.memory_space<vmem>>, %arg2: memref<32x96xbf16, #tpu.memory_space<vmem>>, %arg3: memref<1x96xf32, #tpu.memory_space<vmem>>, %arg4: memref<32x32xbf16, #tpu.memory_space<vmem>>, %arg5: memref<1x32xf32, #tpu.memory_space<vmem>>, %arg6: memref<1x32xf32, #tpu.memory_space<vmem>>, %arg7: memref<1x32xf32, #tpu.memory_space<vmem>>, %arg8: memref<32x64xbf16, #tpu.memory_space<vmem>>, %arg9: memref<1x64xf32, #tpu.memory_space<vmem>>, %arg10: memref<64x32xbf16, #tpu.memory_space<vmem>>, %arg11: memref<1x32xf32, #tpu.memory_space<vmem>>, %arg12: memref<1x32xf32, #tpu.memory_space<vmem>>, %arg13: memref<1x32xf32, #tpu.memory_space<vmem>>, %arg14: memref<1x32xf32, #tpu.memory_space<vmem>>, %arg15: memref<1x32xf32, #tpu.memory_space<vmem>>, %arg16: memref<1x16x32xbf16, #tpu.memory_space<vmem>>) attributes {dimension_semantics = [#tpu.dimension_semantics<parallel>], iteration_bounds = array<i64: 2>, scalar_prefetch = 0 : i64, scratch_operands = 0 : i64, tpu.core_type = #tpu.core_type<tc>, window_params = [{transform_indices = @transform_0, window_bounds = array<i64: 1, 16, 32>}, {pipeline_mode = #tpu.pipeline_mode<synchronous>, transform_indices = @transform_1, window_bounds = array<i64: 32, 96>}, {pipeline_mode = #tpu.pipeline_mode<synchronous>, transform_indices = @transform_2, window_bounds = array<i64: 1, 96>}, {pipeline_mode = #tpu.pipeline_mode<synchronous>, transform_indices = @transform_3, window_bounds = array<i64: 32, 32>}, {pipeline_mode = #tpu.pipeline_mode<synchronous>, transform_indices = @transform_4, window_bounds = array<i64: 1, 32>}, {pipeline_mode = #tpu.pipeline_mode<synchronous>, transform_indices = @transform_5, window_bounds = array<i64: 1, 32>}, {pipeline_mode = #tpu.pipeline_mode<synchronous>, transform_indices = @transform_6, window_bounds = array<i64: 1, 32>}, {pipeline_mode = #tpu.pipeline_mode<synchronous>, transform_indices = @transform_7, window_bounds = array<i64: 32, 64>}, {pipeline_mode = #tpu.pipeline_mode<synchronous>, transform_indices = @transform_8, window_bounds = array<i64: 1, 64>}, {pipeline_mode = #tpu.pipeline_mode<synchronous>, transform_indices = @transform_9, window_bounds = array<i64: 64, 32>}, {pipeline_mode = #tpu.pipeline_mode<synchronous>, transform_indices = @transform_10, window_bounds = array<i64: 1, 32>}, {pipeline_mode = #tpu.pipeline_mode<synchronous>, transform_indices = @transform_11, window_bounds = array<i64: 1, 32>}, {pipeline_mode = #tpu.pipeline_mode<synchronous>, transform_indices = @transform_12, window_bounds = array<i64: 1, 32>}, {pipeline_mode = #tpu.pipeline_mode<synchronous>, transform_indices = @transform_13, window_bounds = array<i64: 1, 32>}, {pipeline_mode = #tpu.pipeline_mode<synchronous>, transform_indices = @transform_14, window_bounds = array<i64: 1, 32>}, {transform_indices = @transform_15, window_bounds = array<i64: 1, 16, 32>}]} {
    %c0 = arith.constant 0 : index
    %c0_0 = arith.constant 0 : index
    %c0_1 = arith.constant 0 : index
    %0 = vector.load %arg1[%c0, %c0_0, %c0_1] : memref<1x16x32xbf16, #tpu.memory_space<vmem>>, vector<1x16x32xbf16>
    %1 = vector.shape_cast %0 : vector<1x16x32xbf16> to vector<16x32xbf16>
    %2 = arith.extf %1 : vector<16x32xbf16> to vector<16x32xf32>
    %c0_2 = arith.constant 0 : index
    %c0_3 = arith.constant 0 : index
    %3 = vector.load %arg2[%c0_2, %c0_3] : memref<32x96xbf16, #tpu.memory_space<vmem>>, vector<32x96xbf16>
    %cst = arith.constant dense<0.000000e+00> : vector<16x96xf32>
    %4 = tpu.matmul %1, %3, %cst {dimension_numbers = #tpu.dot_dimension_numbers<[1], [0], [0], [1], [0, 0, 1, 1], [], []>} : vector<16x32xbf16>, vector<32x96xbf16>, vector<16x96xf32> -> vector<16x96xf32>
    %c0_4 = arith.constant 0 : index
    %c0_5 = arith.constant 0 : index
    %5 = vector.load %arg3[%c0_4, %c0_5] : memref<1x96xf32, #tpu.memory_space<vmem>>, vector<1x96xf32>
    %6 = vector.broadcast %5 : vector<1x96xf32> to vector<16x96xf32>
    %7 = arith.addf %4, %6 : vector<16x96xf32>
    %8 = vector.extract_strided_slice %7 {offsets = [0, 0], sizes = [16, 32], strides = [1, 1]} : vector<16x96xf32> to vector<16x32xf32>
    %cst_6 = arith.constant 0.353553385 : f32
    %9 = vector.broadcast %cst_6 : f32 to vector<16x32xf32>
    %10 = arith.mulf %8, %9 : vector<16x32xf32>
    %11 = vector.extract_strided_slice %7 {offsets = [0, 32], sizes = [16, 32], strides = [1, 1]} : vector<16x96xf32> to vector<16x32xf32>
    %12 = vector.extract_strided_slice %7 {offsets = [0, 64], sizes = [16, 32], strides = [1, 1]} : vector<16x96xf32> to vector<16x32xf32>
    %c0_7 = arith.constant 0 : index
    %c0_8 = arith.constant 0 : index
    %13 = vector.load %arg4[%c0_7, %c0_8] : memref<32x32xbf16, #tpu.memory_space<vmem>>, vector<32x32xbf16>
    %14 = vector.extract_strided_slice %10 {offsets = [0, 0], sizes = [16, 8], strides = [1, 1]} : vector<16x32xf32> to vector<16x8xf32>
    %15 = arith.truncf %14 : vector<16x8xf32> to vector<16x8xbf16>
    %16 = vector.extract_strided_slice %11 {offsets = [0, 0], sizes = [16, 8], strides = [1, 1]} : vector<16x32xf32> to vector<16x8xf32>
    %17 = arith.truncf %16 : vector<16x8xf32> to vector<16x8xbf16>
    %18 = vector.extract_strided_slice %12 {offsets = [0, 0], sizes = [16, 8], strides = [1, 1]} : vector<16x32xf32> to vector<16x8xf32>
    %19 = arith.truncf %18 : vector<16x8xf32> to vector<16x8xbf16>
    %20 = tpu.transpose %17, [1, 0] : vector<16x8xbf16> -> vector<8x16xbf16>
    %cst_9 = arith.constant dense<0.000000e+00> : vector<16x16xf32>
    %21 = tpu.matmul %15, %20, %cst_9 {dimension_numbers = #tpu.dot_dimension_numbers<[1], [0], [0], [1], [0, 0, 1, 1], [], []>} : vector<16x8xbf16>, vector<8x16xbf16>, vector<16x16xf32> -> vector<16x16xf32>
    %cst_10 = arith.constant dense<0xFF800000> : vector<16xf32>
    %22 = vector.multi_reduction <maximumf>, %21, %cst_10 [1] : vector<16x16xf32> to vector<16xf32>
    %23 = vector.shape_cast %22 : vector<16xf32> to vector<16x1xf32>
    %24 = vector.broadcast %23 : vector<16x1xf32> to vector<16x16xf32>
    %25 = arith.subf %21, %24 : vector<16x16xf32>
    %26 = math.exp %25 : vector<16x16xf32>
    %cst_11 = arith.constant dense<0.000000e+00> : vector<16xf32>
    %27 = vector.multi_reduction <add>, %26, %cst_11 [1] : vector<16x16xf32> to vector<16xf32>
    %28 = vector.shape_cast %27 : vector<16xf32> to vector<16x1xf32>
    %29 = arith.truncf %26 : vector<16x16xf32> to vector<16x16xbf16>
    %cst_12 = arith.constant dense<0.000000e+00> : vector<16x8xf32>
    %30 = tpu.matmul %29, %19, %cst_12 {dimension_numbers = #tpu.dot_dimension_numbers<[1], [0], [0], [1], [0, 0, 1, 1], [], []>} : vector<16x16xbf16>, vector<16x8xbf16>, vector<16x8xf32> -> vector<16x8xf32>
    %31 = tpu.reciprocal %28 {approx = true} : vector<16x1xf32> -> vector<16x1xf32>
    %32 = vector.broadcast %31 : vector<16x1xf32> to vector<16x8xf32>
    %33 = arith.mulf %30, %32 : vector<16x8xf32>
    %34 = arith.truncf %33 : vector<16x8xf32> to vector<16x8xbf16>
    %35 = vector.extract_strided_slice %13 {offsets = [0, 0], sizes = [8, 32], strides = [1, 1]} : vector<32x32xbf16> to vector<8x32xbf16>
    %cst_13 = arith.constant dense<0.000000e+00> : vector<16x32xf32>
    %36 = tpu.matmul %34, %35, %cst_13 {dimension_numbers = #tpu.dot_dimension_numbers<[1], [0], [0], [1], [0, 0, 1, 1], [], []>} : vector<16x8xbf16>, vector<8x32xbf16>, vector<16x32xf32> -> vector<16x32xf32>
    %37 = vector.extract_strided_slice %10 {offsets = [0, 8], sizes = [16, 8], strides = [1, 1]} : vector<16x32xf32> to vector<16x8xf32>
    %38 = arith.truncf %37 : vector<16x8xf32> to vector<16x8xbf16>
    %39 = vector.extract_strided_slice %11 {offsets = [0, 8], sizes = [16, 8], strides = [1, 1]} : vector<16x32xf32> to vector<16x8xf32>
    %40 = arith.truncf %39 : vector<16x8xf32> to vector<16x8xbf16>
    %41 = vector.extract_strided_slice %12 {offsets = [0, 8], sizes = [16, 8], strides = [1, 1]} : vector<16x32xf32> to vector<16x8xf32>
    %42 = arith.truncf %41 : vector<16x8xf32> to vector<16x8xbf16>
    %43 = tpu.transpose %40, [1, 0] : vector<16x8xbf16> -> vector<8x16xbf16>
    %cst_14 = arith.constant dense<0.000000e+00> : vector<16x16xf32>
    %44 = tpu.matmul %38, %43, %cst_14 {dimension_numbers = #tpu.dot_dimension_numbers<[1], [0], [0], [1], [0, 0, 1, 1], [], []>} : vector<16x8xbf16>, vector<8x16xbf16>, vector<16x16xf32> -> vector<16x16xf32>
    %cst_15 = arith.constant dense<0xFF800000> : vector<16xf32>
    %45 = vector.multi_reduction <maximumf>, %44, %cst_15 [1] : vector<16x16xf32> to vector<16xf32>
    %46 = vector.shape_cast %45 : vector<16xf32> to vector<16x1xf32>
    %47 = vector.broadcast %46 : vector<16x1xf32> to vector<16x16xf32>
    %48 = arith.subf %44, %47 : vector<16x16xf32>
    %49 = math.exp %48 : vector<16x16xf32>
    %cst_16 = arith.constant dense<0.000000e+00> : vector<16xf32>
    %50 = vector.multi_reduction <add>, %49, %cst_16 [1] : vector<16x16xf32> to vector<16xf32>
    %51 = vector.shape_cast %50 : vector<16xf32> to vector<16x1xf32>
    %52 = arith.truncf %49 : vector<16x16xf32> to vector<16x16xbf16>
    %cst_17 = arith.constant dense<0.000000e+00> : vector<16x8xf32>
    %53 = tpu.matmul %52, %42, %cst_17 {dimension_numbers = #tpu.dot_dimension_numbers<[1], [0], [0], [1], [0, 0, 1, 1], [], []>} : vector<16x16xbf16>, vector<16x8xbf16>, vector<16x8xf32> -> vector<16x8xf32>
    %54 = tpu.reciprocal %51 {approx = true} : vector<16x1xf32> -> vector<16x1xf32>
    %55 = vector.broadcast %54 : vector<16x1xf32> to vector<16x8xf32>
    %56 = arith.mulf %53, %55 : vector<16x8xf32>
    %57 = arith.truncf %56 : vector<16x8xf32> to vector<16x8xbf16>
    %58 = vector.extract_strided_slice %13 {offsets = [8, 0], sizes = [8, 32], strides = [1, 1]} : vector<32x32xbf16> to vector<8x32xbf16>
    %cst_18 = arith.constant dense<0.000000e+00> : vector<16x32xf32>
    %59 = tpu.matmul %57, %58, %cst_18 {dimension_numbers = #tpu.dot_dimension_numbers<[1], [0], [0], [1], [0, 0, 1, 1], [], []>} : vector<16x8xbf16>, vector<8x32xbf16>, vector<16x32xf32> -> vector<16x32xf32>
    %60 = arith.addf %36, %59 : vector<16x32xf32>
    %61 = vector.extract_strided_slice %10 {offsets = [0, 16], sizes = [16, 8], strides = [1, 1]} : vector<16x32xf32> to vector<16x8xf32>
    %62 = arith.truncf %61 : vector<16x8xf32> to vector<16x8xbf16>
    %63 = vector.extract_strided_slice %11 {offsets = [0, 16], sizes = [16, 8], strides = [1, 1]} : vector<16x32xf32> to vector<16x8xf32>
    %64 = arith.truncf %63 : vector<16x8xf32> to vector<16x8xbf16>
    %65 = vector.extract_strided_slice %12 {offsets = [0, 16], sizes = [16, 8], strides = [1, 1]} : vector<16x32xf32> to vector<16x8xf32>
    %66 = arith.truncf %65 : vector<16x8xf32> to vector<16x8xbf16>
    %67 = tpu.transpose %64, [1, 0] : vector<16x8xbf16> -> vector<8x16xbf16>
    %cst_19 = arith.constant dense<0.000000e+00> : vector<16x16xf32>
    %68 = tpu.matmul %62, %67, %cst_19 {dimension_numbers = #tpu.dot_dimension_numbers<[1], [0], [0], [1], [0, 0, 1, 1], [], []>} : vector<16x8xbf16>, vector<8x16xbf16>, vector<16x16xf32> -> vector<16x16xf32>
    %cst_20 = arith.constant dense<0xFF800000> : vector<16xf32>
    %69 = vector.multi_reduction <maximumf>, %68, %cst_20 [1] : vector<16x16xf32> to vector<16xf32>
    %70 = vector.shape_cast %69 : vector<16xf32> to vector<16x1xf32>
    %71 = vector.broadcast %70 : vector<16x1xf32> to vector<16x16xf32>
    %72 = arith.subf %68, %71 : vector<16x16xf32>
    %73 = math.exp %72 : vector<16x16xf32>
    %cst_21 = arith.constant dense<0.000000e+00> : vector<16xf32>
    %74 = vector.multi_reduction <add>, %73, %cst_21 [1] : vector<16x16xf32> to vector<16xf32>
    %75 = vector.shape_cast %74 : vector<16xf32> to vector<16x1xf32>
    %76 = arith.truncf %73 : vector<16x16xf32> to vector<16x16xbf16>
    %cst_22 = arith.constant dense<0.000000e+00> : vector<16x8xf32>
    %77 = tpu.matmul %76, %66, %cst_22 {dimension_numbers = #tpu.dot_dimension_numbers<[1], [0], [0], [1], [0, 0, 1, 1], [], []>} : vector<16x16xbf16>, vector<16x8xbf16>, vector<16x8xf32> -> vector<16x8xf32>
    %78 = tpu.reciprocal %75 {approx = true} : vector<16x1xf32> -> vector<16x1xf32>
    %79 = vector.broadcast %78 : vector<16x1xf32> to vector<16x8xf32>
    %80 = arith.mulf %77, %79 : vector<16x8xf32>
    %81 = arith.truncf %80 : vector<16x8xf32> to vector<16x8xbf16>
    %82 = vector.extract_strided_slice %13 {offsets = [16, 0], sizes = [8, 32], strides = [1, 1]} : vector<32x32xbf16> to vector<8x32xbf16>
    %cst_23 = arith.constant dense<0.000000e+00> : vector<16x32xf32>
    %83 = tpu.matmul %81, %82, %cst_23 {dimension_numbers = #tpu.dot_dimension_numbers<[1], [0], [0], [1], [0, 0, 1, 1], [], []>} : vector<16x8xbf16>, vector<8x32xbf16>, vector<16x32xf32> -> vector<16x32xf32>
    %84 = arith.addf %60, %83 : vector<16x32xf32>
    %85 = vector.extract_strided_slice %10 {offsets = [0, 24], sizes = [16, 8], strides = [1, 1]} : vector<16x32xf32> to vector<16x8xf32>
    %86 = arith.truncf %85 : vector<16x8xf32> to vector<16x8xbf16>
    %87 = vector.extract_strided_slice %11 {offsets = [0, 24], sizes = [16, 8], strides = [1, 1]} : vector<16x32xf32> to vector<16x8xf32>
    %88 = arith.truncf %87 : vector<16x8xf32> to vector<16x8xbf16>
    %89 = vector.extract_strided_slice %12 {offsets = [0, 24], sizes = [16, 8], strides = [1, 1]} : vector<16x32xf32> to vector<16x8xf32>
    %90 = arith.truncf %89 : vector<16x8xf32> to vector<16x8xbf16>
    %91 = tpu.transpose %88, [1, 0] : vector<16x8xbf16> -> vector<8x16xbf16>
    %cst_24 = arith.constant dense<0.000000e+00> : vector<16x16xf32>
    %92 = tpu.matmul %86, %91, %cst_24 {dimension_numbers = #tpu.dot_dimension_numbers<[1], [0], [0], [1], [0, 0, 1, 1], [], []>} : vector<16x8xbf16>, vector<8x16xbf16>, vector<16x16xf32> -> vector<16x16xf32>
    %cst_25 = arith.constant dense<0xFF800000> : vector<16xf32>
    %93 = vector.multi_reduction <maximumf>, %92, %cst_25 [1] : vector<16x16xf32> to vector<16xf32>
    %94 = vector.shape_cast %93 : vector<16xf32> to vector<16x1xf32>
    %95 = vector.broadcast %94 : vector<16x1xf32> to vector<16x16xf32>
    %96 = arith.subf %92, %95 : vector<16x16xf32>
    %97 = math.exp %96 : vector<16x16xf32>
    %cst_26 = arith.constant dense<0.000000e+00> : vector<16xf32>
    %98 = vector.multi_reduction <add>, %97, %cst_26 [1] : vector<16x16xf32> to vector<16xf32>
    %99 = vector.shape_cast %98 : vector<16xf32> to vector<16x1xf32>
    %100 = arith.truncf %97 : vector<16x16xf32> to vector<16x16xbf16>
    %cst_27 = arith.constant dense<0.000000e+00> : vector<16x8xf32>
    %101 = tpu.matmul %100, %90, %cst_27 {dimension_numbers = #tpu.dot_dimension_numbers<[1], [0], [0], [1], [0, 0, 1, 1], [], []>} : vector<16x16xbf16>, vector<16x8xbf16>, vector<16x8xf32> -> vector<16x8xf32>
    %102 = tpu.reciprocal %99 {approx = true} : vector<16x1xf32> -> vector<16x1xf32>
    %103 = vector.broadcast %102 : vector<16x1xf32> to vector<16x8xf32>
    %104 = arith.mulf %101, %103 : vector<16x8xf32>
    %105 = arith.truncf %104 : vector<16x8xf32> to vector<16x8xbf16>
    %106 = vector.extract_strided_slice %13 {offsets = [24, 0], sizes = [8, 32], strides = [1, 1]} : vector<32x32xbf16> to vector<8x32xbf16>
    %cst_28 = arith.constant dense<0.000000e+00> : vector<16x32xf32>
    %107 = tpu.matmul %105, %106, %cst_28 {dimension_numbers = #tpu.dot_dimension_numbers<[1], [0], [0], [1], [0, 0, 1, 1], [], []>} : vector<16x8xbf16>, vector<8x32xbf16>, vector<16x32xf32> -> vector<16x32xf32>
    %108 = arith.addf %84, %107 : vector<16x32xf32>
    %109 = arith.addf %2, %108 : vector<16x32xf32>
    %c0_29 = arith.constant 0 : index
    %c0_30 = arith.constant 0 : index
    %110 = vector.load %arg5[%c0_29, %c0_30] : memref<1x32xf32, #tpu.memory_space<vmem>>, vector<1x32xf32>
    %111 = vector.broadcast %110 : vector<1x32xf32> to vector<16x32xf32>
    %112 = arith.addf %109, %111 : vector<16x32xf32>
    %c0_31 = arith.constant 0 : index
    %c0_32 = arith.constant 0 : index
    %113 = vector.load %arg6[%c0_31, %c0_32] : memref<1x32xf32, #tpu.memory_space<vmem>>, vector<1x32xf32>
    %c0_33 = arith.constant 0 : index
    %c0_34 = arith.constant 0 : index
    %114 = vector.load %arg7[%c0_33, %c0_34] : memref<1x32xf32, #tpu.memory_space<vmem>>, vector<1x32xf32>
    %cst_35 = arith.constant dense<0.000000e+00> : vector<16xf32>
    %115 = vector.multi_reduction <add>, %112, %cst_35 [1] : vector<16x32xf32> to vector<16xf32>
    %116 = vector.shape_cast %115 : vector<16xf32> to vector<16x1xf32>
    %cst_36 = arith.constant 3.200000e+01 : f32
    %117 = vector.broadcast %cst_36 : f32 to vector<16x1xf32>
    %118 = arith.divf %116, %117 : vector<16x1xf32>
    %119 = vector.broadcast %118 : vector<16x1xf32> to vector<16x32xf32>
    %120 = arith.subf %112, %119 : vector<16x32xf32>
    %121 = arith.mulf %120, %120 : vector<16x32xf32>
    %cst_37 = arith.constant dense<0.000000e+00> : vector<16xf32>
    %122 = vector.multi_reduction <add>, %121, %cst_37 [1] : vector<16x32xf32> to vector<16xf32>
    %123 = vector.shape_cast %122 : vector<16xf32> to vector<16x1xf32>
    %cst_38 = arith.constant 3.200000e+01 : f32
    %124 = vector.broadcast %cst_38 : f32 to vector<16x1xf32>
    %125 = arith.divf %123, %124 : vector<16x1xf32>
    %126 = vector.broadcast %118 : vector<16x1xf32> to vector<16x32xf32>
    %127 = arith.subf %112, %126 : vector<16x32xf32>
    %cst_39 = arith.constant 9.99999974E-6 : f32
    %128 = vector.broadcast %cst_39 : f32 to vector<16x1xf32>
    %129 = arith.addf %125, %128 : vector<16x1xf32>
    %130 = math.rsqrt %129 : vector<16x1xf32>
    %131 = vector.broadcast %130 : vector<16x1xf32> to vector<16x32xf32>
    %132 = arith.mulf %127, %131 : vector<16x32xf32>
    %133 = vector.broadcast %113 : vector<1x32xf32> to vector<16x32xf32>
    %134 = arith.mulf %132, %133 : vector<16x32xf32>
    %135 = vector.broadcast %114 : vector<1x32xf32> to vector<16x32xf32>
    %136 = arith.addf %134, %135 : vector<16x32xf32>
    %137 = arith.truncf %136 : vector<16x32xf32> to vector<16x32xbf16>
    %c0_40 = arith.constant 0 : index
    %c0_41 = arith.constant 0 : index
    %138 = vector.load %arg8[%c0_40, %c0_41] : memref<32x64xbf16, #tpu.memory_space<vmem>>, vector<32x64xbf16>
    %cst_42 = arith.constant dense<0.000000e+00> : vector<16x64xf32>
    %139 = tpu.matmul %137, %138, %cst_42 {dimension_numbers = #tpu.dot_dimension_numbers<[1], [0], [0], [1], [0, 0, 1, 1], [], []>} : vector<16x32xbf16>, vector<32x64xbf16>, vector<16x64xf32> -> vector<16x64xf32>
    %c0_43 = arith.constant 0 : index
    %c0_44 = arith.constant 0 : index
    %140 = vector.load %arg9[%c0_43, %c0_44] : memref<1x64xf32, #tpu.memory_space<vmem>>, vector<1x64xf32>
    %141 = vector.broadcast %140 : vector<1x64xf32> to vector<16x64xf32>
    %142 = arith.addf %139, %141 : vector<16x64xf32>
    %cst_45 = arith.constant 0.000000e+00 : f32
    %143 = vector.broadcast %cst_45 : f32 to vector<16x64xf32>
    %144 = arith.maximumf %142, %143 : vector<16x64xf32>
    %145 = arith.truncf %144 : vector<16x64xf32> to vector<16x64xbf16>
    %c0_46 = arith.constant 0 : index
    %c0_47 = arith.constant 0 : index
    %146 = vector.load %arg10[%c0_46, %c0_47] : memref<64x32xbf16, #tpu.memory_space<vmem>>, vector<64x32xbf16>
    %cst_48 = arith.constant dense<0.000000e+00> : vector<16x32xf32>
    %147 = tpu.matmul %145, %146, %cst_48 {dimension_numbers = #tpu.dot_dimension_numbers<[1], [0], [0], [1], [0, 0, 1, 1], [], []>} : vector<16x64xbf16>, vector<64x32xbf16>, vector<16x32xf32> -> vector<16x32xf32>
    %c0_49 = arith.constant 0 : index
    %c0_50 = arith.constant 0 : index
    %148 = vector.load %arg11[%c0_49, %c0_50] : memref<1x32xf32, #tpu.memory_space<vmem>>, vector<1x32xf32>
    %149 = vector.broadcast %148 : vector<1x32xf32> to vector<16x32xf32>
    %150 = arith.addf %147, %149 : vector<16x32xf32>
    %151 = arith.addf %136, %150 : vector<16x32xf32>
    %c0_51 = arith.constant 0 : index
    %c0_52 = arith.constant 0 : index
    %152 = vector.load %arg12[%c0_51, %c0_52] : memref<1x32xf32, #tpu.memory_space<vmem>>, vector<1x32xf32>
    %c0_53 = arith.constant 0 : index
    %c0_54 = arith.constant 0 : index
    %153 = vector.load %arg13[%c0_53, %c0_54] : memref<1x32xf32, #tpu.memory_space<vmem>>, vector<1x32xf32>
    %cst_55 = arith.constant dense<0.000000e+00> : vector<16xf32>
    %154 = vector.multi_reduction <add>, %151, %cst_55 [1] : vector<16x32xf32> to vector<16xf32>
    %155 = vector.shape_cast %154 : vector<16xf32> to vector<16x1xf32>
    %cst_56 = arith.constant 3.200000e+01 : f32
    %156 = vector.broadcast %cst_56 : f32 to vector<16x1xf32>
    %157 = arith.divf %155, %156 : vector<16x1xf32>
    %158 = vector.broadcast %157 : vector<16x1xf32> to vector<16x32xf32>
    %159 = arith.subf %151, %158 : vector<16x32xf32>
    %160 = arith.mulf %159, %159 : vector<16x32xf32>
    %cst_57 = arith.constant dense<0.000000e+00> : vector<16xf32>
    %161 = vector.multi_reduction <add>, %160, %cst_57 [1] : vector<16x32xf32> to vector<16xf32>
    %162 = vector.shape_cast %161 : vector<16xf32> to vector<16x1xf32>
    %cst_58 = arith.constant 3.200000e+01 : f32
    %163 = vector.broadcast %cst_58 : f32 to vector<16x1xf32>
    %164 = arith.divf %162, %163 : vector<16x1xf32>
    %165 = vector.broadcast %157 : vector<16x1xf32> to vector<16x32xf32>
    %166 = arith.subf %151, %165 : vector<16x32xf32>
    %cst_59 = arith.constant 9.99999974E-6 : f32
    %167 = vector.broadcast %cst_59 : f32 to vector<16x1xf32>
    %168 = arith.addf %164, %167 : vector<16x1xf32>
    %169 = math.rsqrt %168 : vector<16x1xf32>
    %170 = vector.broadcast %169 : vector<16x1xf32> to vector<16x32xf32>
    %171 = arith.mulf %166, %170 : vector<16x32xf32>
    %172 = vector.broadcast %152 : vector<1x32xf32> to vector<16x32xf32>
    %173 = arith.mulf %171, %172 : vector<16x32xf32>
    %174 = vector.broadcast %153 : vector<1x32xf32> to vector<16x32xf32>
    %175 = arith.addf %173, %174 : vector<16x32xf32>
    %c0_60 = arith.constant 0 : index
    %c0_61 = arith.constant 0 : index
    %176 = vector.load %arg14[%c0_60, %c0_61] : memref<1x32xf32, #tpu.memory_space<vmem>>, vector<1x32xf32>
    %c0_62 = arith.constant 0 : index
    %c0_63 = arith.constant 0 : index
    %177 = vector.load %arg15[%c0_62, %c0_63] : memref<1x32xf32, #tpu.memory_space<vmem>>, vector<1x32xf32>
    %cst_64 = arith.constant dense<0.000000e+00> : vector<16xf32>
    %178 = vector.multi_reduction <add>, %175, %cst_64 [1] : vector<16x32xf32> to vector<16xf32>
    %179 = vector.shape_cast %178 : vector<16xf32> to vector<16x1xf32>
    %cst_65 = arith.constant 3.200000e+01 : f32
    %180 = vector.broadcast %cst_65 : f32 to vector<16x1xf32>
    %181 = arith.divf %179, %180 : vector<16x1xf32>
    %182 = vector.broadcast %181 : vector<16x1xf32> to vector<16x32xf32>
    %183 = arith.subf %175, %182 : vector<16x32xf32>
    %184 = arith.mulf %183, %183 : vector<16x32xf32>
    %cst_66 = arith.constant dense<0.000000e+00> : vector<16xf32>
    %185 = vector.multi_reduction <add>, %184, %cst_66 [1] : vector<16x32xf32> to vector<16xf32>
    %186 = vector.shape_cast %185 : vector<16xf32> to vector<16x1xf32>
    %cst_67 = arith.constant 3.200000e+01 : f32
    %187 = vector.broadcast %cst_67 : f32 to vector<16x1xf32>
    %188 = arith.divf %186, %187 : vector<16x1xf32>
    %189 = vector.broadcast %181 : vector<16x1xf32> to vector<16x32xf32>
    %190 = arith.subf %175, %189 : vector<16x32xf32>
    %cst_68 = arith.constant 9.99999974E-6 : f32
    %191 = vector.broadcast %cst_68 : f32 to vector<16x1xf32>
    %192 = arith.addf %188, %191 : vector<16x1xf32>
    %193 = math.rsqrt %192 : vector<16x1xf32>
    %194 = vector.broadcast %193 : vector<16x1xf32> to vector<16x32xf32>
    %195 = arith.mulf %190, %194 : vector<16x32xf32>
    %196 = vector.broadcast %176 : vector<1x32xf32> to vector<16x32xf32>
    %197 = arith.mulf %195, %196 : vector<16x32xf32>
    %198 = vector.broadcast %177 : vector<1x32xf32> to vector<16x32xf32>
    %199 = arith.addf %197, %198 : vector<16x32xf32>
    %200 = arith.truncf %199 : vector<16x32xf32> to vector<16x32xbf16>
    %c0_69 = arith.constant 0 : index
    %c0_70 = arith.constant 0 : index
    %c0_71 = arith.constant 0 : index
    %201 = vector.load %arg16[%c0_69, %c0_70, %c0_71] : memref<1x16x32xbf16, #tpu.memory_space<vmem>>, vector<1x16x32xbf16>
    %202 = vector.shape_cast %201 : vector<1x16x32xbf16> to vector<16x32xbf16>
    %203 = vector.shape_cast %200 : vector<16x32xbf16> to vector<1x16x32xbf16>
    tpu.vector_store %arg16[%c0_69, %c0_70, %c0_71], %203 {strides = array<i32>} : memref<1x16x32xbf16, #tpu.memory_space<vmem>>, vector<1x16x32xbf16>,
    return
  }
  func.func @transform_0(%arg0: i32) -> (i32, i32, i32) {
    %c0_i32 = arith.constant 0 : i32
    %c0_i32_0 = arith.constant 0 : i32
    %c0_i32_1 = arith.constant 0 : i32
    return %arg0, %c0_i32, %c0_i32_0 : i32, i32, i32
  }
  func.func @transform_1(%arg0: i32) -> (i32, i32) {
    %c0_i32 = arith.constant 0 : i32
    %c0_i32_0 = arith.constant 0 : i32
    %c0_i32_1 = arith.constant 0 : i32
    return %c0_i32, %c0_i32_0 : i32, i32
  }
  func.func @transform_2(%arg0: i32) -> (i32, i32) {
    %c0_i32 = arith.constant 0 : i32
    %c0_i32_0 = arith.constant 0 : i32
    %c0_i32_1 = arith.constant 0 : i32
    return %c0_i32, %c0_i32_0 : i32, i32
  }
  func.func @transform_3(%arg0: i32) -> (i32, i32) {
    %c0_i32 = arith.constant 0 : i32
    %c0_i32_0 = arith.constant 0 : i32
    %c0_i32_1 = arith.constant 0 : i32
    return %c0_i32, %c0_i32_0 : i32, i32
  }
  func.func @transform_4(%arg0: i32) -> (i32, i32) {
    %c0_i32 = arith.constant 0 : i32
    %c0_i32_0 = arith.constant 0 : i32
    %c0_i32_1 = arith.constant 0 : i32
    return %c0_i32, %c0_i32_0 : i32, i32
  }
  func.func @transform_5(%arg0: i32) -> (i32, i32) {
    %c0_i32 = arith.constant 0 : i32
    %c0_i32_0 = arith.constant 0 : i32
    %c0_i32_1 = arith.constant 0 : i32
    return %c0_i32, %c0_i32_0 : i32, i32
  }
  func.func @transform_6(%arg0: i32) -> (i32, i32) {
    %c0_i32 = arith.constant 0 : i32
    %c0_i32_0 = arith.constant 0 : i32
    %c0_i32_1 = arith.constant 0 : i32
    return %c0_i32, %c0_i32_0 : i32, i32
  }
  func.func @transform_7(%arg0: i32) -> (i32, i32) {
    %c0_i32 = arith.constant 0 : i32
    %c0_i32_0 = arith.constant 0 : i32
    %c0_i32_1 = arith.constant 0 : i32
    return %c0_i32, %c0_i32_0 : i32, i32
  }
  func.func @transform_8(%arg0: i32) -> (i32, i32) {
    %c0_i32 = arith.constant 0 : i32
    %c0_i32_0 = arith.constant 0 : i32
    %c0_i32_1 = arith.constant 0 : i32
    return %c0_i32, %c0_i32_0 : i32, i32
  }
  func.func @transform_9(%arg0: i32) -> (i32, i32) {
    %c0_i32 = arith.constant 0 : i32
    %c0_i32_0 = arith.constant 0 : i32
    %c0_i32_1 = arith.constant 0 : i32
    return %c0_i32, %c0_i32_0 : i32, i32
  }
  func.func @transform_10(%arg0: i32) -> (i32, i32) {
    %c0_i32 = arith.constant 0 : i32
    %c0_i32_0 = arith.constant 0 : i32
    %c0_i32_1 = arith.constant 0 : i32
    return %c0_i32, %c0_i32_0 : i32, i32
  }
  func.func @transform_11(%arg0: i32) -> (i32, i32) {
    %c0_i32 = arith.constant 0 : i32
    %c0_i32_0 = arith.constant 0 : i32
    %c0_i32_1 = arith.constant 0 : i32
    return %c0_i32, %c0_i32_0 : i32, i32
  }
  func.func @transform_12(%arg0: i32) -> (i32, i32) {
    %c0_i32 = arith.constant 0 : i32
    %c0_i32_0 = arith.constant 0 : i32
    %c0_i32_1 = arith.constant 0 : i32
    return %c0_i32, %c0_i32_0 : i32, i32
  }
  func.func @transform_13(%arg0: i32) -> (i32, i32) {
    %c0_i32 = arith.constant 0 : i32
    %c0_i32_0 = arith.constant 0 : i32
    %c0_i32_1 = arith.constant 0 : i32
    return %c0_i32, %c0_i32_0 : i32, i32
  }
  func.func @transform_14(%arg0: i32) -> (i32, i32) {
    %c0_i32 = arith.constant 0 : i32
    %c0_i32_0 = arith.constant 0 : i32
    %c0_i32_1 = arith.constant 0 : i32
    return %c0_i32, %c0_i32_0 : i32, i32
  }
  func.func @transform_15(%arg0: i32) -> (i32, i32, i32) {
    %c0_i32 = arith.constant 0 : i32
    %c0_i32_0 = arith.constant 0 : i32
    %c0_i32_1 = arith.constant 0 : i32
    return %arg0, %c0_i32, %c0_i32_0 : i32, i32, i32
  }
}

module attributes {stable_mosaic.version = 11 : i64} {
  func.func @_decoder_layer_kernel(%arg0: i32, %arg1: memref<1x8x32xbf16, #tpu.memory_space<vmem>>, %arg2: memref<1x16x32xbf16, #tpu.memory_space<vmem>>, %arg3: memref<32x96xbf16, #tpu.memory_space<vmem>>, %arg4: memref<1x96xf32, #tpu.memory_space<vmem>>, %arg5: memref<32x32xbf16, #tpu.memory_space<vmem>>, %arg6: memref<1x32xf32, #tpu.memory_space<vmem>>, %arg7: memref<1x32xf32, #tpu.memory_space<vmem>>, %arg8: memref<1x32xf32, #tpu.memory_space<vmem>>, %arg9: memref<32x32xbf16, #tpu.memory_space<vmem>>, %arg10: memref<1x32xf32, #tpu.memory_space<vmem>>, %arg11: memref<32x64xbf16, #tpu.memory_space<vmem>>, %arg12: memref<1x64xf32, #tpu.memory_space<vmem>>, %arg13: memref<32x32xbf16, #tpu.memory_space<vmem>>, %arg14: memref<1x32xf32, #tpu.memory_space<vmem>>, %arg15: memref<1x32xf32, #tpu.memory_space<vmem>>, %arg16: memref<1x32xf32, #tpu.memory_space<vmem>>, %arg17: memref<32x64xbf16, #tpu.memory_space<vmem>>, %arg18: memref<1x64xf32, #tpu.memory_space<vmem>>, %arg19: memref<64x32xbf16, #tpu.memory_space<vmem>>, %arg20: memref<1x32xf32, #tpu.memory_space<vmem>>, %arg21: memref<1x32xf32, #tpu.memory_space<vmem>>, %arg22: memref<1x32xf32, #tpu.memory_space<vmem>>, %arg23: memref<1x8x32xbf16, #tpu.memory_space<vmem>>) attributes {dimension_semantics = [#tpu.dimension_semantics<parallel>], iteration_bounds = array<i64: 2>, scalar_prefetch = 0 : i64, scratch_operands = 0 : i64, tpu.core_type = #tpu.core_type<tc>, window_params = [{transform_indices = @transform_0, window_bounds = array<i64: 1, 8, 32>}, {transform_indices = @transform_1, window_bounds = array<i64: 1, 16, 32>}, {pipeline_mode = #tpu.pipeline_mode<synchronous>, transform_indices = @transform_2, window_bounds = array<i64: 32, 96>}, {pipeline_mode = #tpu.pipeline_mode<synchronous>, transform_indices = @transform_3, window_bounds = array<i64: 1, 96>}, {pipeline_mode = #tpu.pipeline_mode<synchronous>, transform_indices = @transform_4, window_bounds = array<i64: 32, 32>}, {pipeline_mode = #tpu.pipeline_mode<synchronous>, transform_indices = @transform_5, window_bounds = array<i64: 1, 32>}, {pipeline_mode = #tpu.pipeline_mode<synchronous>, transform_indices = @transform_6, window_bounds = array<i64: 1, 32>}, {pipeline_mode = #tpu.pipeline_mode<synchronous>, transform_indices = @transform_7, window_bounds = array<i64: 1, 32>}, {pipeline_mode = #tpu.pipeline_mode<synchronous>, transform_indices = @transform_8, window_bounds = array<i64: 32, 32>}, {pipeline_mode = #tpu.pipeline_mode<synchronous>, transform_indices = @transform_9, window_bounds = array<i64: 1, 32>}, {pipeline_mode = #tpu.pipeline_mode<synchronous>, transform_indices = @transform_10, window_bounds = array<i64: 32, 64>}, {pipeline_mode = #tpu.pipeline_mode<synchronous>, transform_indices = @transform_11, window_bounds = array<i64: 1, 64>}, {pipeline_mode = #tpu.pipeline_mode<synchronous>, transform_indices = @transform_12, window_bounds = array<i64: 32, 32>}, {pipeline_mode = #tpu.pipeline_mode<synchronous>, transform_indices = @transform_13, window_bounds = array<i64: 1, 32>}, {pipeline_mode = #tpu.pipeline_mode<synchronous>, transform_indices = @transform_14, window_bounds = array<i64: 1, 32>}, {pipeline_mode = #tpu.pipeline_mode<synchronous>, transform_indices = @transform_15, window_bounds = array<i64: 1, 32>}, {pipeline_mode = #tpu.pipeline_mode<synchronous>, transform_indices = @transform_16, window_bounds = array<i64: 32, 64>}, {pipeline_mode = #tpu.pipeline_mode<synchronous>, transform_indices = @transform_17, window_bounds = array<i64: 1, 64>}, {pipeline_mode = #tpu.pipeline_mode<synchronous>, transform_indices = @transform_18, window_bounds = array<i64: 64, 32>}, {pipeline_mode = #tpu.pipeline_mode<synchronous>, transform_indices = @transform_19, window_bounds = array<i64: 1, 32>}, {pipeline_mode = #tpu.pipeline_mode<synchronous>, transform_indices = @transform_20, window_bounds = array<i64: 1, 32>}, {pipeline_mode = #tpu.pipeline_mode<synchronous>, transform_indices = @transform_21, window_bounds = array<i64: 1, 32>}, {transform_indices = @transform_22, window_bounds = array<i64: 1, 8, 32>}]} {
    %c0 = arith.constant 0 : index
    %c0_0 = arith.constant 0 : index
    %c0_1 = arith.constant 0 : index
    %0 = vector.load %arg1[%c0, %c0_0, %c0_1] : memref<1x8x32xbf16, #tpu.memory_space<vmem>>, vector<1x8x32xbf16>
    %1 = vector.shape_cast %0 : vector<1x8x32xbf16> to vector<8x32xbf16>
    %2 = arith.extf %1 : vector<8x32xbf16> to vector<8x32xf32>
    %c0_2 = arith.constant 0 : index
    %c0_3 = arith.constant 0 : index
    %3 = vector.load %arg3[%c0_2, %c0_3] : memref<32x96xbf16, #tpu.memory_space<vmem>>, vector<32x96xbf16>
    %cst = arith.constant dense<0.000000e+00> : vector<8x96xf32>
    %4 = tpu.matmul %1, %3, %cst {dimension_numbers = #tpu.dot_dimension_numbers<[1], [0], [0], [1], [0, 0, 1, 1], [], []>} : vector<8x32xbf16>, vector<32x96xbf16>, vector<8x96xf32> -> vector<8x96xf32>
    %c0_4 = arith.constant 0 : index
    %c0_5 = arith.constant 0 : index
    %5 = vector.load %arg4[%c0_4, %c0_5] : memref<1x96xf32, #tpu.memory_space<vmem>>, vector<1x96xf32>
    %6 = vector.broadcast %5 : vector<1x96xf32> to vector<8x96xf32>
    %7 = arith.addf %4, %6 : vector<8x96xf32>
    %8 = vector.extract_strided_slice %7 {offsets = [0, 0], sizes = [8, 32], strides = [1, 1]} : vector<8x96xf32> to vector<8x32xf32>
    %cst_6 = arith.constant 0.353553385 : f32
    %9 = vector.broadcast %cst_6 : f32 to vector<8x32xf32>
    %10 = arith.mulf %8, %9 : vector<8x32xf32>
    %11 = vector.extract_strided_slice %7 {offsets = [0, 32], sizes = [8, 32], strides = [1, 1]} : vector<8x96xf32> to vector<8x32xf32>
    %12 = vector.extract_strided_slice %7 {offsets = [0, 64], sizes = [8, 32], strides = [1, 1]} : vector<8x96xf32> to vector<8x32xf32>
    %c0_7 = arith.constant 0 : index
    %c0_8 = arith.constant 0 : index
    %13 = vector.load %arg5[%c0_7, %c0_8] : memref<32x32xbf16, #tpu.memory_space<vmem>>, vector<32x32xbf16>
    %14 = vector.extract_strided_slice %10 {offsets = [0, 0], sizes = [8, 8], strides = [1, 1]} : vector<8x32xf32> to vector<8x8xf32>
    %15 = arith.truncf %14 : vector<8x8xf32> to vector<8x8xbf16>
    %16 = vector.extract_strided_slice %11 {offsets = [0, 0], sizes = [8, 8], strides = [1, 1]} : vector<8x32xf32> to vector<8x8xf32>
    %17 = arith.truncf %16 : vector<8x8xf32> to vector<8x8xbf16>
    %18 = vector.extract_strided_slice %12 {offsets = [0, 0], sizes = [8, 8], strides = [1, 1]} : vector<8x32xf32> to vector<8x8xf32>
    %19 = arith.truncf %18 : vector<8x8xf32> to vector<8x8xbf16>
    %20 = tpu.transpose %17, [1, 0] : vector<8x8xbf16> -> vector<8x8xbf16>
    %cst_9 = arith.constant dense<0.000000e+00> : vector<8x8xf32>
    %21 = tpu.matmul %15, %20, %cst_9 {dimension_numbers = #tpu.dot_dimension_numbers<[1], [0], [0], [1], [0, 0, 1, 1], [], []>} : vector<8x8xbf16>, vector<8x8xbf16>, vector<8x8xf32> -> vector<8x8xf32>
    %cst_10 = arith.constant dense<0xFF800000> : vector<8xf32>
    %22 = vector.multi_reduction <maximumf>, %21, %cst_10 [1] : vector<8x8xf32> to vector<8xf32>
    %23 = vector.shape_cast %22 : vector<8xf32> to vector<8x1xf32>
    %24 = vector.broadcast %23 : vector<8x1xf32> to vector<8x8xf32>
    %25 = arith.subf %21, %24 : vector<8x8xf32>
    %26 = math.exp %25 : vector<8x8xf32>
    %cst_11 = arith.constant dense<0.000000e+00> : vector<8xf32>
    %27 = vector.multi_reduction <add>, %26, %cst_11 [1] : vector<8x8xf32> to vector<8xf32>
    %28 = vector.shape_cast %27 : vector<8xf32> to vector<8x1xf32>
    %29 = arith.truncf %26 : vector<8x8xf32> to vector<8x8xbf16>
    %cst_12 = arith.constant dense<0.000000e+00> : vector<8x8xf32>
    %30 = tpu.matmul %29, %19, %cst_12 {dimension_numbers = #tpu.dot_dimension_numbers<[1], [0], [0], [1], [0, 0, 1, 1], [], []>} : vector<8x8xbf16>, vector<8x8xbf16>, vector<8x8xf32> -> vector<8x8xf32>
    %31 = tpu.reciprocal %28 {approx = true} : vector<8x1xf32> -> vector<8x1xf32>
    %32 = vector.broadcast %31 : vector<8x1xf32> to vector<8x8xf32>
    %33 = arith.mulf %30, %32 : vector<8x8xf32>
    %34 = arith.truncf %33 : vector<8x8xf32> to vector<8x8xbf16>
    %35 = vector.extract_strided_slice %13 {offsets = [0, 0], sizes = [8, 32], strides = [1, 1]} : vector<32x32xbf16> to vector<8x32xbf16>
    %cst_13 = arith.constant dense<0.000000e+00> : vector<8x32xf32>
    %36 = tpu.matmul %34, %35, %cst_13 {dimension_numbers = #tpu.dot_dimension_numbers<[1], [0], [0], [1], [0, 0, 1, 1], [], []>} : vector<8x8xbf16>, vector<8x32xbf16>, vector<8x32xf32> -> vector<8x32xf32>
    %37 = vector.extract_strided_slice %10 {offsets = [0, 8], sizes = [8, 8], strides = [1, 1]} : vector<8x32xf32> to vector<8x8xf32>
    %38 = arith.truncf %37 : vector<8x8xf32> to vector<8x8xbf16>
    %39 = vector.extract_strided_slice %11 {offsets = [0, 8], sizes = [8, 8], strides = [1, 1]} : vector<8x32xf32> to vector<8x8xf32>
    %40 = arith.truncf %39 : vector<8x8xf32> to vector<8x8xbf16>
    %41 = vector.extract_strided_slice %12 {offsets = [0, 8], sizes = [8, 8], strides = [1, 1]} : vector<8x32xf32> to vector<8x8xf32>
    %42 = arith.truncf %41 : vector<8x8xf32> to vector<8x8xbf16>
    %43 = tpu.transpose %40, [1, 0] : vector<8x8xbf16> -> vector<8x8xbf16>
    %cst_14 = arith.constant dense<0.000000e+00> : vector<8x8xf32>
    %44 = tpu.matmul %38, %43, %cst_14 {dimension_numbers = #tpu.dot_dimension_numbers<[1], [0], [0], [1], [0, 0, 1, 1], [], []>} : vector<8x8xbf16>, vector<8x8xbf16>, vector<8x8xf32> -> vector<8x8xf32>
    %cst_15 = arith.constant dense<0xFF800000> : vector<8xf32>
    %45 = vector.multi_reduction <maximumf>, %44, %cst_15 [1] : vector<8x8xf32> to vector<8xf32>
    %46 = vector.shape_cast %45 : vector<8xf32> to vector<8x1xf32>
    %47 = vector.broadcast %46 : vector<8x1xf32> to vector<8x8xf32>
    %48 = arith.subf %44, %47 : vector<8x8xf32>
    %49 = math.exp %48 : vector<8x8xf32>
    %cst_16 = arith.constant dense<0.000000e+00> : vector<8xf32>
    %50 = vector.multi_reduction <add>, %49, %cst_16 [1] : vector<8x8xf32> to vector<8xf32>
    %51 = vector.shape_cast %50 : vector<8xf32> to vector<8x1xf32>
    %52 = arith.truncf %49 : vector<8x8xf32> to vector<8x8xbf16>
    %cst_17 = arith.constant dense<0.000000e+00> : vector<8x8xf32>
    %53 = tpu.matmul %52, %42, %cst_17 {dimension_numbers = #tpu.dot_dimension_numbers<[1], [0], [0], [1], [0, 0, 1, 1], [], []>} : vector<8x8xbf16>, vector<8x8xbf16>, vector<8x8xf32> -> vector<8x8xf32>
    %54 = tpu.reciprocal %51 {approx = true} : vector<8x1xf32> -> vector<8x1xf32>
    %55 = vector.broadcast %54 : vector<8x1xf32> to vector<8x8xf32>
    %56 = arith.mulf %53, %55 : vector<8x8xf32>
    %57 = arith.truncf %56 : vector<8x8xf32> to vector<8x8xbf16>
    %58 = vector.extract_strided_slice %13 {offsets = [8, 0], sizes = [8, 32], strides = [1, 1]} : vector<32x32xbf16> to vector<8x32xbf16>
    %cst_18 = arith.constant dense<0.000000e+00> : vector<8x32xf32>
    %59 = tpu.matmul %57, %58, %cst_18 {dimension_numbers = #tpu.dot_dimension_numbers<[1], [0], [0], [1], [0, 0, 1, 1], [], []>} : vector<8x8xbf16>, vector<8x32xbf16>, vector<8x32xf32> -> vector<8x32xf32>
    %60 = arith.addf %36, %59 : vector<8x32xf32>
    %61 = vector.extract_strided_slice %10 {offsets = [0, 16], sizes = [8, 8], strides = [1, 1]} : vector<8x32xf32> to vector<8x8xf32>
    %62 = arith.truncf %61 : vector<8x8xf32> to vector<8x8xbf16>
    %63 = vector.extract_strided_slice %11 {offsets = [0, 16], sizes = [8, 8], strides = [1, 1]} : vector<8x32xf32> to vector<8x8xf32>
    %64 = arith.truncf %63 : vector<8x8xf32> to vector<8x8xbf16>
    %65 = vector.extract_strided_slice %12 {offsets = [0, 16], sizes = [8, 8], strides = [1, 1]} : vector<8x32xf32> to vector<8x8xf32>
    %66 = arith.truncf %65 : vector<8x8xf32> to vector<8x8xbf16>
    %67 = tpu.transpose %64, [1, 0] : vector<8x8xbf16> -> vector<8x8xbf16>
    %cst_19 = arith.constant dense<0.000000e+00> : vector<8x8xf32>
    %68 = tpu.matmul %62, %67, %cst_19 {dimension_numbers = #tpu.dot_dimension_numbers<[1], [0], [0], [1], [0, 0, 1, 1], [], []>} : vector<8x8xbf16>, vector<8x8xbf16>, vector<8x8xf32> -> vector<8x8xf32>
    %cst_20 = arith.constant dense<0xFF800000> : vector<8xf32>
    %69 = vector.multi_reduction <maximumf>, %68, %cst_20 [1] : vector<8x8xf32> to vector<8xf32>
    %70 = vector.shape_cast %69 : vector<8xf32> to vector<8x1xf32>
    %71 = vector.broadcast %70 : vector<8x1xf32> to vector<8x8xf32>
    %72 = arith.subf %68, %71 : vector<8x8xf32>
    %73 = math.exp %72 : vector<8x8xf32>
    %cst_21 = arith.constant dense<0.000000e+00> : vector<8xf32>
    %74 = vector.multi_reduction <add>, %73, %cst_21 [1] : vector<8x8xf32> to vector<8xf32>
    %75 = vector.shape_cast %74 : vector<8xf32> to vector<8x1xf32>
    %76 = arith.truncf %73 : vector<8x8xf32> to vector<8x8xbf16>
    %cst_22 = arith.constant dense<0.000000e+00> : vector<8x8xf32>
    %77 = tpu.matmul %76, %66, %cst_22 {dimension_numbers = #tpu.dot_dimension_numbers<[1], [0], [0], [1], [0, 0, 1, 1], [], []>} : vector<8x8xbf16>, vector<8x8xbf16>, vector<8x8xf32> -> vector<8x8xf32>
    %78 = tpu.reciprocal %75 {approx = true} : vector<8x1xf32> -> vector<8x1xf32>
    %79 = vector.broadcast %78 : vector<8x1xf32> to vector<8x8xf32>
    %80 = arith.mulf %77, %79 : vector<8x8xf32>
    %81 = arith.truncf %80 : vector<8x8xf32> to vector<8x8xbf16>
    %82 = vector.extract_strided_slice %13 {offsets = [16, 0], sizes = [8, 32], strides = [1, 1]} : vector<32x32xbf16> to vector<8x32xbf16>
    %cst_23 = arith.constant dense<0.000000e+00> : vector<8x32xf32>
    %83 = tpu.matmul %81, %82, %cst_23 {dimension_numbers = #tpu.dot_dimension_numbers<[1], [0], [0], [1], [0, 0, 1, 1], [], []>} : vector<8x8xbf16>, vector<8x32xbf16>, vector<8x32xf32> -> vector<8x32xf32>
    %84 = arith.addf %60, %83 : vector<8x32xf32>
    %85 = vector.extract_strided_slice %10 {offsets = [0, 24], sizes = [8, 8], strides = [1, 1]} : vector<8x32xf32> to vector<8x8xf32>
    %86 = arith.truncf %85 : vector<8x8xf32> to vector<8x8xbf16>
    %87 = vector.extract_strided_slice %11 {offsets = [0, 24], sizes = [8, 8], strides = [1, 1]} : vector<8x32xf32> to vector<8x8xf32>
    %88 = arith.truncf %87 : vector<8x8xf32> to vector<8x8xbf16>
    %89 = vector.extract_strided_slice %12 {offsets = [0, 24], sizes = [8, 8], strides = [1, 1]} : vector<8x32xf32> to vector<8x8xf32>
    %90 = arith.truncf %89 : vector<8x8xf32> to vector<8x8xbf16>
    %91 = tpu.transpose %88, [1, 0] : vector<8x8xbf16> -> vector<8x8xbf16>
    %cst_24 = arith.constant dense<0.000000e+00> : vector<8x8xf32>
    %92 = tpu.matmul %86, %91, %cst_24 {dimension_numbers = #tpu.dot_dimension_numbers<[1], [0], [0], [1], [0, 0, 1, 1], [], []>} : vector<8x8xbf16>, vector<8x8xbf16>, vector<8x8xf32> -> vector<8x8xf32>
    %cst_25 = arith.constant dense<0xFF800000> : vector<8xf32>
    %93 = vector.multi_reduction <maximumf>, %92, %cst_25 [1] : vector<8x8xf32> to vector<8xf32>
    %94 = vector.shape_cast %93 : vector<8xf32> to vector<8x1xf32>
    %95 = vector.broadcast %94 : vector<8x1xf32> to vector<8x8xf32>
    %96 = arith.subf %92, %95 : vector<8x8xf32>
    %97 = math.exp %96 : vector<8x8xf32>
    %cst_26 = arith.constant dense<0.000000e+00> : vector<8xf32>
    %98 = vector.multi_reduction <add>, %97, %cst_26 [1] : vector<8x8xf32> to vector<8xf32>
    %99 = vector.shape_cast %98 : vector<8xf32> to vector<8x1xf32>
    %100 = arith.truncf %97 : vector<8x8xf32> to vector<8x8xbf16>
    %cst_27 = arith.constant dense<0.000000e+00> : vector<8x8xf32>
    %101 = tpu.matmul %100, %90, %cst_27 {dimension_numbers = #tpu.dot_dimension_numbers<[1], [0], [0], [1], [0, 0, 1, 1], [], []>} : vector<8x8xbf16>, vector<8x8xbf16>, vector<8x8xf32> -> vector<8x8xf32>
    %102 = tpu.reciprocal %99 {approx = true} : vector<8x1xf32> -> vector<8x1xf32>
    %103 = vector.broadcast %102 : vector<8x1xf32> to vector<8x8xf32>
    %104 = arith.mulf %101, %103 : vector<8x8xf32>
    %105 = arith.truncf %104 : vector<8x8xf32> to vector<8x8xbf16>
    %106 = vector.extract_strided_slice %13 {offsets = [24, 0], sizes = [8, 32], strides = [1, 1]} : vector<32x32xbf16> to vector<8x32xbf16>
    %cst_28 = arith.constant dense<0.000000e+00> : vector<8x32xf32>
    %107 = tpu.matmul %105, %106, %cst_28 {dimension_numbers = #tpu.dot_dimension_numbers<[1], [0], [0], [1], [0, 0, 1, 1], [], []>} : vector<8x8xbf16>, vector<8x32xbf16>, vector<8x32xf32> -> vector<8x32xf32>
    %108 = arith.addf %84, %107 : vector<8x32xf32>
    %109 = arith.addf %2, %108 : vector<8x32xf32>
    %c0_29 = arith.constant 0 : index
    %c0_30 = arith.constant 0 : index
    %110 = vector.load %arg6[%c0_29, %c0_30] : memref<1x32xf32, #tpu.memory_space<vmem>>, vector<1x32xf32>
    %111 = vector.broadcast %110 : vector<1x32xf32> to vector<8x32xf32>
    %112 = arith.addf %109, %111 : vector<8x32xf32>
    %c0_31 = arith.constant 0 : index
    %c0_32 = arith.constant 0 : index
    %113 = vector.load %arg7[%c0_31, %c0_32] : memref<1x32xf32, #tpu.memory_space<vmem>>, vector<1x32xf32>
    %c0_33 = arith.constant 0 : index
    %c0_34 = arith.constant 0 : index
    %114 = vector.load %arg8[%c0_33, %c0_34] : memref<1x32xf32, #tpu.memory_space<vmem>>, vector<1x32xf32>
    %cst_35 = arith.constant dense<0.000000e+00> : vector<8xf32>
    %115 = vector.multi_reduction <add>, %112, %cst_35 [1] : vector<8x32xf32> to vector<8xf32>
    %116 = vector.shape_cast %115 : vector<8xf32> to vector<8x1xf32>
    %cst_36 = arith.constant 3.200000e+01 : f32
    %117 = vector.broadcast %cst_36 : f32 to vector<8x1xf32>
    %118 = arith.divf %116, %117 : vector<8x1xf32>
    %119 = vector.broadcast %118 : vector<8x1xf32> to vector<8x32xf32>
    %120 = arith.subf %112, %119 : vector<8x32xf32>
    %121 = arith.mulf %120, %120 : vector<8x32xf32>
    %cst_37 = arith.constant dense<0.000000e+00> : vector<8xf32>
    %122 = vector.multi_reduction <add>, %121, %cst_37 [1] : vector<8x32xf32> to vector<8xf32>
    %123 = vector.shape_cast %122 : vector<8xf32> to vector<8x1xf32>
    %cst_38 = arith.constant 3.200000e+01 : f32
    %124 = vector.broadcast %cst_38 : f32 to vector<8x1xf32>
    %125 = arith.divf %123, %124 : vector<8x1xf32>
    %126 = vector.broadcast %118 : vector<8x1xf32> to vector<8x32xf32>
    %127 = arith.subf %112, %126 : vector<8x32xf32>
    %cst_39 = arith.constant 9.99999974E-6 : f32
    %128 = vector.broadcast %cst_39 : f32 to vector<8x1xf32>
    %129 = arith.addf %125, %128 : vector<8x1xf32>
    %130 = math.rsqrt %129 : vector<8x1xf32>
    %131 = vector.broadcast %130 : vector<8x1xf32> to vector<8x32xf32>
    %132 = arith.mulf %127, %131 : vector<8x32xf32>
    %133 = vector.broadcast %113 : vector<1x32xf32> to vector<8x32xf32>
    %134 = arith.mulf %132, %133 : vector<8x32xf32>
    %135 = vector.broadcast %114 : vector<1x32xf32> to vector<8x32xf32>
    %136 = arith.addf %134, %135 : vector<8x32xf32>
    %c0_40 = arith.constant 0 : index
    %c0_41 = arith.constant 0 : index
    %c0_42 = arith.constant 0 : index
    %137 = vector.load %arg2[%c0_40, %c0_41, %c0_42] : memref<1x16x32xbf16, #tpu.memory_space<vmem>>, vector<1x16x32xbf16>
    %138 = vector.shape_cast %137 : vector<1x16x32xbf16> to vector<16x32xbf16>
    %139 = arith.truncf %136 : vector<8x32xf32> to vector<8x32xbf16>
    %c0_43 = arith.constant 0 : index
    %c0_44 = arith.constant 0 : index
    %140 = vector.load %arg9[%c0_43, %c0_44] : memref<32x32xbf16, #tpu.memory_space<vmem>>, vector<32x32xbf16>
    %cst_45 = arith.constant dense<0.000000e+00> : vector<8x32xf32>
    %141 = tpu.matmul %139, %140, %cst_45 {dimension_numbers = #tpu.dot_dimension_numbers<[1], [0], [0], [1], [0, 0, 1, 1], [], []>} : vector<8x32xbf16>, vector<32x32xbf16>, vector<8x32xf32> -> vector<8x32xf32>
    %c0_46 = arith.constant 0 : index
    %c0_47 = arith.constant 0 : index
    %142 = vector.load %arg10[%c0_46, %c0_47] : memref<1x32xf32, #tpu.memory_space<vmem>>, vector<1x32xf32>
    %143 = vector.broadcast %142 : vector<1x32xf32> to vector<8x32xf32>
    %144 = arith.addf %141, %143 : vector<8x32xf32>
    %c0_48 = arith.constant 0 : index
    %c0_49 = arith.constant 0 : index
    %145 = vector.load %arg11[%c0_48, %c0_49] : memref<32x64xbf16, #tpu.memory_space<vmem>>, vector<32x64xbf16>
    %cst_50 = arith.constant dense<0.000000e+00> : vector<16x64xf32>
    %146 = tpu.matmul %138, %145, %cst_50 {dimension_numbers = #tpu.dot_dimension_numbers<[1], [0], [0], [1], [0, 0, 1, 1], [], []>} : vector<16x32xbf16>, vector<32x64xbf16>, vector<16x64xf32> -> vector<16x64xf32>
    %c0_51 = arith.constant 0 : index
    %c0_52 = arith.constant 0 : index
    %147 = vector.load %arg12[%c0_51, %c0_52] : memref<1x64xf32, #tpu.memory_space<vmem>>, vector<1x64xf32>
    %148 = vector.broadcast %147 : vector<1x64xf32> to vector<16x64xf32>
    %149 = arith.addf %146, %148 : vector<16x64xf32>
    %cst_53 = arith.constant 0.353553385 : f32
    %150 = vector.broadcast %cst_53 : f32 to vector<8x32xf32>
    %151 = arith.mulf %144, %150 : vector<8x32xf32>
    %152 = vector.extract_strided_slice %149 {offsets = [0, 0], sizes = [16, 32], strides = [1, 1]} : vector<16x64xf32> to vector<16x32xf32>
    %153 = vector.extract_strided_slice %149 {offsets = [0, 32], sizes = [16, 32], strides = [1, 1]} : vector<16x64xf32> to vector<16x32xf32>
    %c0_54 = arith.constant 0 : index
    %c0_55 = arith.constant 0 : index
    %154 = vector.load %arg13[%c0_54, %c0_55] : memref<32x32xbf16, #tpu.memory_space<vmem>>, vector<32x32xbf16>
    %155 = vector.extract_strided_slice %151 {offsets = [0, 0], sizes = [8, 8], strides = [1, 1]} : vector<8x32xf32> to vector<8x8xf32>
    %156 = arith.truncf %155 : vector<8x8xf32> to vector<8x8xbf16>
    %157 = vector.extract_strided_slice %152 {offsets = [0, 0], sizes = [16, 8], strides = [1, 1]} : vector<16x32xf32> to vector<16x8xf32>
    %158 = arith.truncf %157 : vector<16x8xf32> to vector<16x8xbf16>
    %159 = vector.extract_strided_slice %153 {offsets = [0, 0], sizes = [16, 8], strides = [1, 1]} : vector<16x32xf32> to vector<16x8xf32>
    %160 = arith.truncf %159 : vector<16x8xf32> to vector<16x8xbf16>
    %161 = tpu.transpose %158, [1, 0] : vector<16x8xbf16> -> vector<8x16xbf16>
    %cst_56 = arith.constant dense<0.000000e+00> : vector<8x16xf32>
    %162 = tpu.matmul %156, %161, %cst_56 {dimension_numbers = #tpu.dot_dimension_numbers<[1], [0], [0], [1], [0, 0, 1, 1], [], []>} : vector<8x8xbf16>, vector<8x16xbf16>, vector<8x16xf32> -> vector<8x16xf32>
    %cst_57 = arith.constant dense<0xFF800000> : vector<8xf32>
    %163 = vector.multi_reduction <maximumf>, %162, %cst_57 [1] : vector<8x16xf32> to vector<8xf32>
    %164 = vector.shape_cast %163 : vector<8xf32> to vector<8x1xf32>
    %165 = vector.broadcast %164 : vector<8x1xf32> to vector<8x16xf32>
    %166 = arith.subf %162, %165 : vector<8x16xf32>
    %167 = math.exp %166 : vector<8x16xf32>
    %cst_58 = arith.constant dense<0.000000e+00> : vector<8xf32>
    %168 = vector.multi_reduction <add>, %167, %cst_58 [1] : vector<8x16xf32> to vector<8xf32>
    %169 = vector.shape_cast %168 : vector<8xf32> to vector<8x1xf32>
    %170 = arith.truncf %167 : vector<8x16xf32> to vector<8x16xbf16>
    %cst_59 = arith.constant dense<0.000000e+00> : vector<8x8xf32>
    %171 = tpu.matmul %170, %160, %cst_59 {dimension_numbers = #tpu.dot_dimension_numbers<[1], [0], [0], [1], [0, 0, 1, 1], [], []>} : vector<8x16xbf16>, vector<16x8xbf16>, vector<8x8xf32> -> vector<8x8xf32>
    %172 = tpu.reciprocal %169 {approx = true} : vector<8x1xf32> -> vector<8x1xf32>
    %173 = vector.broadcast %172 : vector<8x1xf32> to vector<8x8xf32>
    %174 = arith.mulf %171, %173 : vector<8x8xf32>
    %175 = arith.truncf %174 : vector<8x8xf32> to vector<8x8xbf16>
    %176 = vector.extract_strided_slice %154 {offsets = [0, 0], sizes = [8, 32], strides = [1, 1]} : vector<32x32xbf16> to vector<8x32xbf16>
    %cst_60 = arith.constant dense<0.000000e+00> : vector<8x32xf32>
    %177 = tpu.matmul %175, %176, %cst_60 {dimension_numbers = #tpu.dot_dimension_numbers<[1], [0], [0], [1], [0, 0, 1, 1], [], []>} : vector<8x8xbf16>, vector<8x32xbf16>, vector<8x32xf32> -> vector<8x32xf32>
    %178 = vector.extract_strided_slice %151 {offsets = [0, 8], sizes = [8, 8], strides = [1, 1]} : vector<8x32xf32> to vector<8x8xf32>
    %179 = arith.truncf %178 : vector<8x8xf32> to vector<8x8xbf16>
    %180 = vector.extract_strided_slice %152 {offsets = [0, 8], sizes = [16, 8], strides = [1, 1]} : vector<16x32xf32> to vector<16x8xf32>
    %181 = arith.truncf %180 : vector<16x8xf32> to vector<16x8xbf16>
    %182 = vector.extract_strided_slice %153 {offsets = [0, 8], sizes = [16, 8], strides = [1, 1]} : vector<16x32xf32> to vector<16x8xf32>
    %183 = arith.truncf %182 : vector<16x8xf32> to vector<16x8xbf16>
    %184 = tpu.transpose %181, [1, 0] : vector<16x8xbf16> -> vector<8x16xbf16>
    %cst_61 = arith.constant dense<0.000000e+00> : vector<8x16xf32>
    %185 = tpu.matmul %179, %184, %cst_61 {dimension_numbers = #tpu.dot_dimension_numbers<[1], [0], [0], [1], [0, 0, 1, 1], [], []>} : vector<8x8xbf16>, vector<8x16xbf16>, vector<8x16xf32> -> vector<8x16xf32>
    %cst_62 = arith.constant dense<0xFF800000> : vector<8xf32>
    %186 = vector.multi_reduction <maximumf>, %185, %cst_62 [1] : vector<8x16xf32> to vector<8xf32>
    %187 = vector.shape_cast %186 : vector<8xf32> to vector<8x1xf32>
    %188 = vector.broadcast %187 : vector<8x1xf32> to vector<8x16xf32>
    %189 = arith.subf %185, %188 : vector<8x16xf32>
    %190 = math.exp %189 : vector<8x16xf32>
    %cst_63 = arith.constant dense<0.000000e+00> : vector<8xf32>
    %191 = vector.multi_reduction <add>, %190, %cst_63 [1] : vector<8x16xf32> to vector<8xf32>
    %192 = vector.shape_cast %191 : vector<8xf32> to vector<8x1xf32>
    %193 = arith.truncf %190 : vector<8x16xf32> to vector<8x16xbf16>
    %cst_64 = arith.constant dense<0.000000e+00> : vector<8x8xf32>
    %194 = tpu.matmul %193, %183, %cst_64 {dimension_numbers = #tpu.dot_dimension_numbers<[1], [0], [0], [1], [0, 0, 1, 1], [], []>} : vector<8x16xbf16>, vector<16x8xbf16>, vector<8x8xf32> -> vector<8x8xf32>
    %195 = tpu.reciprocal %192 {approx = true} : vector<8x1xf32> -> vector<8x1xf32>
    %196 = vector.broadcast %195 : vector<8x1xf32> to vector<8x8xf32>
    %197 = arith.mulf %194, %196 : vector<8x8xf32>
    %198 = arith.truncf %197 : vector<8x8xf32> to vector<8x8xbf16>
    %199 = vector.extract_strided_slice %154 {offsets = [8, 0], sizes = [8, 32], strides = [1, 1]} : vector<32x32xbf16> to vector<8x32xbf16>
    %cst_65 = arith.constant dense<0.000000e+00> : vector<8x32xf32>
    %200 = tpu.matmul %198, %199, %cst_65 {dimension_numbers = #tpu.dot_dimension_numbers<[1], [0], [0], [1], [0, 0, 1, 1], [], []>} : vector<8x8xbf16>, vector<8x32xbf16>, vector<8x32xf32> -> vector<8x32xf32>
    %201 = arith.addf %177, %200 : vector<8x32xf32>
    %202 = vector.extract_strided_slice %151 {offsets = [0, 16], sizes = [8, 8], strides = [1, 1]} : vector<8x32xf32> to vector<8x8xf32>
    %203 = arith.truncf %202 : vector<8x8xf32> to vector<8x8xbf16>
    %204 = vector.extract_strided_slice %152 {offsets = [0, 16], sizes = [16, 8], strides = [1, 1]} : vector<16x32xf32> to vector<16x8xf32>
    %205 = arith.truncf %204 : vector<16x8xf32> to vector<16x8xbf16>
    %206 = vector.extract_strided_slice %153 {offsets = [0, 16], sizes = [16, 8], strides = [1, 1]} : vector<16x32xf32> to vector<16x8xf32>
    %207 = arith.truncf %206 : vector<16x8xf32> to vector<16x8xbf16>
    %208 = tpu.transpose %205, [1, 0] : vector<16x8xbf16> -> vector<8x16xbf16>
    %cst_66 = arith.constant dense<0.000000e+00> : vector<8x16xf32>
    %209 = tpu.matmul %203, %208, %cst_66 {dimension_numbers = #tpu.dot_dimension_numbers<[1], [0], [0], [1], [0, 0, 1, 1], [], []>} : vector<8x8xbf16>, vector<8x16xbf16>, vector<8x16xf32> -> vector<8x16xf32>
    %cst_67 = arith.constant dense<0xFF800000> : vector<8xf32>
    %210 = vector.multi_reduction <maximumf>, %209, %cst_67 [1] : vector<8x16xf32> to vector<8xf32>
    %211 = vector.shape_cast %210 : vector<8xf32> to vector<8x1xf32>
    %212 = vector.broadcast %211 : vector<8x1xf32> to vector<8x16xf32>
    %213 = arith.subf %209, %212 : vector<8x16xf32>
    %214 = math.exp %213 : vector<8x16xf32>
    %cst_68 = arith.constant dense<0.000000e+00> : vector<8xf32>
    %215 = vector.multi_reduction <add>, %214, %cst_68 [1] : vector<8x16xf32> to vector<8xf32>
    %216 = vector.shape_cast %215 : vector<8xf32> to vector<8x1xf32>
    %217 = arith.truncf %214 : vector<8x16xf32> to vector<8x16xbf16>
    %cst_69 = arith.constant dense<0.000000e+00> : vector<8x8xf32>
    %218 = tpu.matmul %217, %207, %cst_69 {dimension_numbers = #tpu.dot_dimension_numbers<[1], [0], [0], [1], [0, 0, 1, 1], [], []>} : vector<8x16xbf16>, vector<16x8xbf16>, vector<8x8xf32> -> vector<8x8xf32>
    %219 = tpu.reciprocal %216 {approx = true} : vector<8x1xf32> -> vector<8x1xf32>
    %220 = vector.broadcast %219 : vector<8x1xf32> to vector<8x8xf32>
    %221 = arith.mulf %218, %220 : vector<8x8xf32>
    %222 = arith.truncf %221 : vector<8x8xf32> to vector<8x8xbf16>
    %223 = vector.extract_strided_slice %154 {offsets = [16, 0], sizes = [8, 32], strides = [1, 1]} : vector<32x32xbf16> to vector<8x32xbf16>
    %cst_70 = arith.constant dense<0.000000e+00> : vector<8x32xf32>
    %224 = tpu.matmul %222, %223, %cst_70 {dimension_numbers = #tpu.dot_dimension_numbers<[1], [0], [0], [1], [0, 0, 1, 1], [], []>} : vector<8x8xbf16>, vector<8x32xbf16>, vector<8x32xf32> -> vector<8x32xf32>
    %225 = arith.addf %201, %224 : vector<8x32xf32>
    %226 = vector.extract_strided_slice %151 {offsets = [0, 24], sizes = [8, 8], strides = [1, 1]} : vector<8x32xf32> to vector<8x8xf32>
    %227 = arith.truncf %226 : vector<8x8xf32> to vector<8x8xbf16>
    %228 = vector.extract_strided_slice %152 {offsets = [0, 24], sizes = [16, 8], strides = [1, 1]} : vector<16x32xf32> to vector<16x8xf32>
    %229 = arith.truncf %228 : vector<16x8xf32> to vector<16x8xbf16>
    %230 = vector.extract_strided_slice %153 {offsets = [0, 24], sizes = [16, 8], strides = [1, 1]} : vector<16x32xf32> to vector<16x8xf32>
    %231 = arith.truncf %230 : vector<16x8xf32> to vector<16x8xbf16>
    %232 = tpu.transpose %229, [1, 0] : vector<16x8xbf16> -> vector<8x16xbf16>
    %cst_71 = arith.constant dense<0.000000e+00> : vector<8x16xf32>
    %233 = tpu.matmul %227, %232, %cst_71 {dimension_numbers = #tpu.dot_dimension_numbers<[1], [0], [0], [1], [0, 0, 1, 1], [], []>} : vector<8x8xbf16>, vector<8x16xbf16>, vector<8x16xf32> -> vector<8x16xf32>
    %cst_72 = arith.constant dense<0xFF800000> : vector<8xf32>
    %234 = vector.multi_reduction <maximumf>, %233, %cst_72 [1] : vector<8x16xf32> to vector<8xf32>
    %235 = vector.shape_cast %234 : vector<8xf32> to vector<8x1xf32>
    %236 = vector.broadcast %235 : vector<8x1xf32> to vector<8x16xf32>
    %237 = arith.subf %233, %236 : vector<8x16xf32>
    %238 = math.exp %237 : vector<8x16xf32>
    %cst_73 = arith.constant dense<0.000000e+00> : vector<8xf32>
    %239 = vector.multi_reduction <add>, %238, %cst_73 [1] : vector<8x16xf32> to vector<8xf32>
    %240 = vector.shape_cast %239 : vector<8xf32> to vector<8x1xf32>
    %241 = arith.truncf %238 : vector<8x16xf32> to vector<8x16xbf16>
    %cst_74 = arith.constant dense<0.000000e+00> : vector<8x8xf32>
    %242 = tpu.matmul %241, %231, %cst_74 {dimension_numbers = #tpu.dot_dimension_numbers<[1], [0], [0], [1], [0, 0, 1, 1], [], []>} : vector<8x16xbf16>, vector<16x8xbf16>, vector<8x8xf32> -> vector<8x8xf32>
    %243 = tpu.reciprocal %240 {approx = true} : vector<8x1xf32> -> vector<8x1xf32>
    %244 = vector.broadcast %243 : vector<8x1xf32> to vector<8x8xf32>
    %245 = arith.mulf %242, %244 : vector<8x8xf32>
    %246 = arith.truncf %245 : vector<8x8xf32> to vector<8x8xbf16>
    %247 = vector.extract_strided_slice %154 {offsets = [24, 0], sizes = [8, 32], strides = [1, 1]} : vector<32x32xbf16> to vector<8x32xbf16>
    %cst_75 = arith.constant dense<0.000000e+00> : vector<8x32xf32>
    %248 = tpu.matmul %246, %247, %cst_75 {dimension_numbers = #tpu.dot_dimension_numbers<[1], [0], [0], [1], [0, 0, 1, 1], [], []>} : vector<8x8xbf16>, vector<8x32xbf16>, vector<8x32xf32> -> vector<8x32xf32>
    %249 = arith.addf %225, %248 : vector<8x32xf32>
    %250 = arith.addf %136, %249 : vector<8x32xf32>
    %c0_76 = arith.constant 0 : index
    %c0_77 = arith.constant 0 : index
    %251 = vector.load %arg14[%c0_76, %c0_77] : memref<1x32xf32, #tpu.memory_space<vmem>>, vector<1x32xf32>
    %252 = vector.broadcast %251 : vector<1x32xf32> to vector<8x32xf32>
    %253 = arith.addf %250, %252 : vector<8x32xf32>
    %c0_78 = arith.constant 0 : index
    %c0_79 = arith.constant 0 : index
    %254 = vector.load %arg15[%c0_78, %c0_79] : memref<1x32xf32, #tpu.memory_space<vmem>>, vector<1x32xf32>
    %c0_80 = arith.constant 0 : index
    %c0_81 = arith.constant 0 : index
    %255 = vector.load %arg16[%c0_80, %c0_81] : memref<1x32xf32, #tpu.memory_space<vmem>>, vector<1x32xf32>
    %cst_82 = arith.constant dense<0.000000e+00> : vector<8xf32>
    %256 = vector.multi_reduction <add>, %253, %cst_82 [1] : vector<8x32xf32> to vector<8xf32>
    %257 = vector.shape_cast %256 : vector<8xf32> to vector<8x1xf32>
    %cst_83 = arith.constant 3.200000e+01 : f32
    %258 = vector.broadcast %cst_83 : f32 to vector<8x1xf32>
    %259 = arith.divf %257, %258 : vector<8x1xf32>
    %260 = vector.broadcast %259 : vector<8x1xf32> to vector<8x32xf32>
    %261 = arith.subf %253, %260 : vector<8x32xf32>
    %262 = arith.mulf %261, %261 : vector<8x32xf32>
    %cst_84 = arith.constant dense<0.000000e+00> : vector<8xf32>
    %263 = vector.multi_reduction <add>, %262, %cst_84 [1] : vector<8x32xf32> to vector<8xf32>
    %264 = vector.shape_cast %263 : vector<8xf32> to vector<8x1xf32>
    %cst_85 = arith.constant 3.200000e+01 : f32
    %265 = vector.broadcast %cst_85 : f32 to vector<8x1xf32>
    %266 = arith.divf %264, %265 : vector<8x1xf32>
    %267 = vector.broadcast %259 : vector<8x1xf32> to vector<8x32xf32>
    %268 = arith.subf %253, %267 : vector<8x32xf32>
    %cst_86 = arith.constant 9.99999974E-6 : f32
    %269 = vector.broadcast %cst_86 : f32 to vector<8x1xf32>
    %270 = arith.addf %266, %269 : vector<8x1xf32>
    %271 = math.rsqrt %270 : vector<8x1xf32>
    %272 = vector.broadcast %271 : vector<8x1xf32> to vector<8x32xf32>
    %273 = arith.mulf %268, %272 : vector<8x32xf32>
    %274 = vector.broadcast %254 : vector<1x32xf32> to vector<8x32xf32>
    %275 = arith.mulf %273, %274 : vector<8x32xf32>
    %276 = vector.broadcast %255 : vector<1x32xf32> to vector<8x32xf32>
    %277 = arith.addf %275, %276 : vector<8x32xf32>
    %278 = arith.truncf %277 : vector<8x32xf32> to vector<8x32xbf16>
    %c0_87 = arith.constant 0 : index
    %c0_88 = arith.constant 0 : index
    %279 = vector.load %arg17[%c0_87, %c0_88] : memref<32x64xbf16, #tpu.memory_space<vmem>>, vector<32x64xbf16>
    %cst_89 = arith.constant dense<0.000000e+00> : vector<8x64xf32>
    %280 = tpu.matmul %278, %279, %cst_89 {dimension_numbers = #tpu.dot_dimension_numbers<[1], [0], [0], [1], [0, 0, 1, 1], [], []>} : vector<8x32xbf16>, vector<32x64xbf16>, vector<8x64xf32> -> vector<8x64xf32>
    %c0_90 = arith.constant 0 : index
    %c0_91 = arith.constant 0 : index
    %281 = vector.load %arg18[%c0_90, %c0_91] : memref<1x64xf32, #tpu.memory_space<vmem>>, vector<1x64xf32>
    %282 = vector.broadcast %281 : vector<1x64xf32> to vector<8x64xf32>
    %283 = arith.addf %280, %282 : vector<8x64xf32>
    %cst_92 = arith.constant 0.000000e+00 : f32
    %284 = vector.broadcast %cst_92 : f32 to vector<8x64xf32>
    %285 = arith.maximumf %283, %284 : vector<8x64xf32>
    %286 = arith.truncf %285 : vector<8x64xf32> to vector<8x64xbf16>
    %c0_93 = arith.constant 0 : index
    %c0_94 = arith.constant 0 : index
    %287 = vector.load %arg19[%c0_93, %c0_94] : memref<64x32xbf16, #tpu.memory_space<vmem>>, vector<64x32xbf16>
    %cst_95 = arith.constant dense<0.000000e+00> : vector<8x32xf32>
    %288 = tpu.matmul %286, %287, %cst_95 {dimension_numbers = #tpu.dot_dimension_numbers<[1], [0], [0], [1], [0, 0, 1, 1], [], []>} : vector<8x64xbf16>, vector<64x32xbf16>, vector<8x32xf32> -> vector<8x32xf32>
    %c0_96 = arith.constant 0 : index
    %c0_97 = arith.constant 0 : index
    %289 = vector.load %arg20[%c0_96, %c0_97] : memref<1x32xf32, #tpu.memory_space<vmem>>, vector<1x32xf32>
    %290 = vector.broadcast %289 : vector<1x32xf32> to vector<8x32xf32>
    %291 = arith.addf %288, %290 : vector<8x32xf32>
    %292 = arith.addf %277, %291 : vector<8x32xf32>
    %c0_98 = arith.constant 0 : index
    %c0_99 = arith.constant 0 : index
    %293 = vector.load %arg21[%c0_98, %c0_99] : memref<1x32xf32, #tpu.memory_space<vmem>>, vector<1x32xf32>
    %c0_100 = arith.constant 0 : index
    %c0_101 = arith.constant 0 : index
    %294 = vector.load %arg22[%c0_100, %c0_101] : memref<1x32xf32, #tpu.memory_space<vmem>>, vector<1x32xf32>
    %cst_102 = arith.constant dense<0.000000e+00> : vector<8xf32>
    %295 = vector.multi_reduction <add>, %292, %cst_102 [1] : vector<8x32xf32> to vector<8xf32>
    %296 = vector.shape_cast %295 : vector<8xf32> to vector<8x1xf32>
    %cst_103 = arith.constant 3.200000e+01 : f32
    %297 = vector.broadcast %cst_103 : f32 to vector<8x1xf32>
    %298 = arith.divf %296, %297 : vector<8x1xf32>
    %299 = vector.broadcast %298 : vector<8x1xf32> to vector<8x32xf32>
    %300 = arith.subf %292, %299 : vector<8x32xf32>
    %301 = arith.mulf %300, %300 : vector<8x32xf32>
    %cst_104 = arith.constant dense<0.000000e+00> : vector<8xf32>
    %302 = vector.multi_reduction <add>, %301, %cst_104 [1] : vector<8x32xf32> to vector<8xf32>
    %303 = vector.shape_cast %302 : vector<8xf32> to vector<8x1xf32>
    %cst_105 = arith.constant 3.200000e+01 : f32
    %304 = vector.broadcast %cst_105 : f32 to vector<8x1xf32>
    %305 = arith.divf %303, %304 : vector<8x1xf32>
    %306 = vector.broadcast %298 : vector<8x1xf32> to vector<8x32xf32>
    %307 = arith.subf %292, %306 : vector<8x32xf32>
    %cst_106 = arith.constant 9.99999974E-6 : f32
    %308 = vector.broadcast %cst_106 : f32 to vector<8x1xf32>
    %309 = arith.addf %305, %308 : vector<8x1xf32>
    %310 = math.rsqrt %309 : vector<8x1xf32>
    %311 = vector.broadcast %310 : vector<8x1xf32> to vector<8x32xf32>
    %312 = arith.mulf %307, %311 : vector<8x32xf32>
    %313 = vector.broadcast %293 : vector<1x32xf32> to vector<8x32xf32>
    %314 = arith.mulf %312, %313 : vector<8x32xf32>
    %315 = vector.broadcast %294 : vector<1x32xf32> to vector<8x32xf32>
    %316 = arith.addf %314, %315 : vector<8x32xf32>
    %317 = arith.truncf %316 : vector<8x32xf32> to vector<8x32xbf16>
    %c0_107 = arith.constant 0 : index
    %c0_108 = arith.constant 0 : index
    %c0_109 = arith.constant 0 : index
    %318 = vector.load %arg23[%c0_107, %c0_108, %c0_109] : memref<1x8x32xbf16, #tpu.memory_space<vmem>>, vector<1x8x32xbf16>
    %319 = vector.shape_cast %318 : vector<1x8x32xbf16> to vector<8x32xbf16>
    %320 = vector.shape_cast %317 : vector<8x32xbf16> to vector<1x8x32xbf16>
    tpu.vector_store %arg23[%c0_107, %c0_108, %c0_109], %320 {strides = array<i32>} : memref<1x8x32xbf16, #tpu.memory_space<vmem>>, vector<1x8x32xbf16>,
    return
  }
  func.func @transform_0(%arg0: i32) -> (i32, i32, i32) {
    %c0_i32 = arith.constant 0 : i32
    %c0_i32_0 = arith.constant 0 : i32
    %c0_i32_1 = arith.constant 0 : i32
    return %arg0, %c0_i32, %c0_i32_0 : i32, i32, i32
  }
  func.func @transform_1(%arg0: i32) -> (i32, i32, i32) {
    %c0_i32 = arith.constant 0 : i32
    %c0_i32_0 = arith.constant 0 : i32
    %c0_i32_1 = arith.constant 0 : i32
    return %arg0, %c0_i32, %c0_i32_0 : i32, i32, i32
  }
  func.func @transform_2(%arg0: i32) -> (i32, i32) {
    %c0_i32 = arith.constant 0 : i32
    %c0_i32_0 = arith.constant 0 : i32
    %c0_i32_1 = arith.constant 0 : i32
    return %c0_i32, %c0_i32_0 : i32, i32
  }
  func.func @transform_3(%arg0: i32) -> (i32, i32) {
    %c0_i32 = arith.constant 0 : i32
    %c0_i32_0 = arith.constant 0 : i32
    %c0_i32_1 = arith.constant 0 : i32
    return %c0_i32, %c0_i32_0 : i32, i32
  }
  func.func @transform_4(%arg0: i32) -> (i32, i32) {
    %c0_i32 = arith.constant 0 : i32
    %c0_i32_0 = arith.constant 0 : i32
    %c0_i32_1 = arith.constant 0 : i32
    return %c0_i32, %c0_i32_0 : i32, i32
  }
  func.func @transform_5(%arg0: i32) -> (i32, i32) {
    %c0_i32 = arith.constant 0 : i32
    %c0_i32_0 = arith.constant 0 : i32
    %c0_i32_1 = arith.constant 0 : i32
    return %c0_i32, %c0_i32_0 : i32, i32
  }
  func.func @transform_6(%arg0: i32) -> (i32, i32) {
    %c0_i32 = arith.constant 0 : i32
    %c0_i32_0 = arith.constant 0 : i32
    %c0_i32_1 = arith.constant 0 : i32
    return %c0_i32, %c0_i32_0 : i32, i32
  }
  func.func @transform_7(%arg0: i32) -> (i32, i32) {
    %c0_i32 = arith.constant 0 : i32
    %c0_i32_0 = arith.constant 0 : i32
    %c0_i32_1 = arith.constant 0 : i32
    return %c0_i32, %c0_i32_0 : i32, i32
  }
  func.func @transform_8(%arg0: i32) -> (i32, i32) {
    %c0_i32 = arith.constant 0 : i32
    %c0_i32_0 = arith.constant 0 : i32
    %c0_i32_1 = arith.constant 0 : i32
    return %c0_i32, %c0_i32_0 : i32, i32
  }
  func.func @transform_9(%arg0: i32) -> (i32, i32) {
    %c0_i32 = arith.constant 0 : i32
    %c0_i32_0 = arith.constant 0 : i32
    %c0_i32_1 = arith.constant 0 : i32
    return %c0_i32, %c0_i32_0 : i32, i32
  }
  func.func @transform_10(%arg0: i32) -> (i32, i32) {
    %c0_i32 = arith.constant 0 : i32
    %c0_i32_0 = arith.constant 0 : i32
    %c0_i32_1 = arith.constant 0 : i32
    return %c0_i32, %c0_i32_0 : i32, i32
  }
  func.func @transform_11(%arg0: i32) -> (i32, i32) {
    %c0_i32 = arith.constant 0 : i32
    %c0_i32_0 = arith.constant 0 : i32
    %c0_i32_1 = arith.constant 0 : i32
    return %c0_i32, %c0_i32_0 : i32, i32
  }
  func.func @transform_12(%arg0: i32) -> (i32, i32) {
    %c0_i32 = arith.constant 0 : i32
    %c0_i32_0 = arith.constant 0 : i32
    %c0_i32_1 = arith.constant 0 : i32
    return %c0_i32, %c0_i32_0 : i32, i32
  }
  func.func @transform_13(%arg0: i32) -> (i32, i32) {
    %c0_i32 = arith.constant 0 : i32
    %c0_i32_0 = arith.constant 0 : i32
    %c0_i32_1 = arith.constant 0 : i32
    return %c0_i32, %c0_i32_0 : i32, i32
  }
  func.func @transform_14(%arg0: i32) -> (i32, i32) {
    %c0_i32 = arith.constant 0 : i32
    %c0_i32_0 = arith.constant 0 : i32
    %c0_i32_1 = arith.constant 0 : i32
    return %c0_i32, %c0_i32_0 : i32, i32
  }
  func.func @transform_15(%arg0: i32) -> (i32, i32) {
    %c0_i32 = arith.constant 0 : i32
    %c0_i32_0 = arith.constant 0 : i32
    %c0_i32_1 = arith.constant 0 : i32
    return %c0_i32, %c0_i32_0 : i32, i32
  }
  func.func @transform_16(%arg0: i32) -> (i32, i32) {
    %c0_i32 = arith.constant 0 : i32
    %c0_i32_0 = arith.constant 0 : i32
    %c0_i32_1 = arith.constant 0 : i32
    return %c0_i32, %c0_i32_0 : i32, i32
  }
  func.func @transform_17(%arg0: i32) -> (i32, i32) {
    %c0_i32 = arith.constant 0 : i32
    %c0_i32_0 = arith.constant 0 : i32
    %c0_i32_1 = arith.constant 0 : i32
    return %c0_i32, %c0_i32_0 : i32, i32
  }
  func.func @transform_18(%arg0: i32) -> (i32, i32) {
    %c0_i32 = arith.constant 0 : i32
    %c0_i32_0 = arith.constant 0 : i32
    %c0_i32_1 = arith.constant 0 : i32
    return %c0_i32, %c0_i32_0 : i32, i32
  }
  func.func @transform_19(%arg0: i32) -> (i32, i32) {
    %c0_i32 = arith.constant 0 : i32
    %c0_i32_0 = arith.constant 0 : i32
    %c0_i32_1 = arith.constant 0 : i32
    return %c0_i32, %c0_i32_0 : i32, i32
  }
  func.func @transform_20(%arg0: i32) -> (i32, i32) {
    %c0_i32 = arith.constant 0 : i32
    %c0_i32_0 = arith.constant 0 : i32
    %c0_i32_1 = arith.constant 0 : i32
    return %c0_i32, %c0_i32_0 : i32, i32
  }
  func.func @transform_21(%arg0: i32) -> (i32, i32) {
    %c0_i32 = arith.constant 0 : i32
    %c0_i32_0 = arith.constant 0 : i32
    %c0_i32_1 = arith.constant 0 : i32
    return %c0_i32, %c0_i32_0 : i32, i32
  }
  func.func @transform_22(%arg0: i32) -> (i32, i32, i32) {
    %c0_i32 = arith.constant 0 : i32
    %c0_i32_0 = arith.constant 0 : i32
    %c0_i32_1 = arith.constant 0 : i32
    return %arg0, %c0_i32, %c0_i32_0 : i32, i32, i32
  }
}

module attributes {stable_mosaic.version = 11 : i64} {
  func.func @_decoder_layer_kernel(%arg0: i32, %arg1: memref<1x8x32xbf16, #tpu.memory_space<vmem>>, %arg2: memref<1x16x32xbf16, #tpu.memory_space<vmem>>, %arg3: memref<32x96xbf16, #tpu.memory_space<vmem>>, %arg4: memref<1x96xf32, #tpu.memory_space<vmem>>, %arg5: memref<32x32xbf16, #tpu.memory_space<vmem>>, %arg6: memref<1x32xf32, #tpu.memory_space<vmem>>, %arg7: memref<1x32xf32, #tpu.memory_space<vmem>>, %arg8: memref<1x32xf32, #tpu.memory_space<vmem>>, %arg9: memref<32x32xbf16, #tpu.memory_space<vmem>>, %arg10: memref<1x32xf32, #tpu.memory_space<vmem>>, %arg11: memref<32x64xbf16, #tpu.memory_space<vmem>>, %arg12: memref<1x64xf32, #tpu.memory_space<vmem>>, %arg13: memref<32x32xbf16, #tpu.memory_space<vmem>>, %arg14: memref<1x32xf32, #tpu.memory_space<vmem>>, %arg15: memref<1x32xf32, #tpu.memory_space<vmem>>, %arg16: memref<1x32xf32, #tpu.memory_space<vmem>>, %arg17: memref<32x64xbf16, #tpu.memory_space<vmem>>, %arg18: memref<1x64xf32, #tpu.memory_space<vmem>>, %arg19: memref<64x32xbf16, #tpu.memory_space<vmem>>, %arg20: memref<1x32xf32, #tpu.memory_space<vmem>>, %arg21: memref<1x32xf32, #tpu.memory_space<vmem>>, %arg22: memref<1x32xf32, #tpu.memory_space<vmem>>, %arg23: memref<1x8x32xbf16, #tpu.memory_space<vmem>>) attributes {dimension_semantics = [#tpu.dimension_semantics<parallel>], iteration_bounds = array<i64: 2>, scalar_prefetch = 0 : i64, scratch_operands = 0 : i64, tpu.core_type = #tpu.core_type<tc>, window_params = [{transform_indices = @transform_0, window_bounds = array<i64: 1, 8, 32>}, {transform_indices = @transform_1, window_bounds = array<i64: 1, 16, 32>}, {pipeline_mode = #tpu.pipeline_mode<synchronous>, transform_indices = @transform_2, window_bounds = array<i64: 32, 96>}, {pipeline_mode = #tpu.pipeline_mode<synchronous>, transform_indices = @transform_3, window_bounds = array<i64: 1, 96>}, {pipeline_mode = #tpu.pipeline_mode<synchronous>, transform_indices = @transform_4, window_bounds = array<i64: 32, 32>}, {pipeline_mode = #tpu.pipeline_mode<synchronous>, transform_indices = @transform_5, window_bounds = array<i64: 1, 32>}, {pipeline_mode = #tpu.pipeline_mode<synchronous>, transform_indices = @transform_6, window_bounds = array<i64: 1, 32>}, {pipeline_mode = #tpu.pipeline_mode<synchronous>, transform_indices = @transform_7, window_bounds = array<i64: 1, 32>}, {pipeline_mode = #tpu.pipeline_mode<synchronous>, transform_indices = @transform_8, window_bounds = array<i64: 32, 32>}, {pipeline_mode = #tpu.pipeline_mode<synchronous>, transform_indices = @transform_9, window_bounds = array<i64: 1, 32>}, {pipeline_mode = #tpu.pipeline_mode<synchronous>, transform_indices = @transform_10, window_bounds = array<i64: 32, 64>}, {pipeline_mode = #tpu.pipeline_mode<synchronous>, transform_indices = @transform_11, window_bounds = array<i64: 1, 64>}, {pipeline_mode = #tpu.pipeline_mode<synchronous>, transform_indices = @transform_12, window_bounds = array<i64: 32, 32>}, {pipeline_mode = #tpu.pipeline_mode<synchronous>, transform_indices = @transform_13, window_bounds = array<i64: 1, 32>}, {pipeline_mode = #tpu.pipeline_mode<synchronous>, transform_indices = @transform_14, window_bounds = array<i64: 1, 32>}, {pipeline_mode = #tpu.pipeline_mode<synchronous>, transform_indices = @transform_15, window_bounds = array<i64: 1, 32>}, {pipeline_mode = #tpu.pipeline_mode<synchronous>, transform_indices = @transform_16, window_bounds = array<i64: 32, 64>}, {pipeline_mode = #tpu.pipeline_mode<synchronous>, transform_indices = @transform_17, window_bounds = array<i64: 1, 64>}, {pipeline_mode = #tpu.pipeline_mode<synchronous>, transform_indices = @transform_18, window_bounds = array<i64: 64, 32>}, {pipeline_mode = #tpu.pipeline_mode<synchronous>, transform_indices = @transform_19, window_bounds = array<i64: 1, 32>}, {pipeline_mode = #tpu.pipeline_mode<synchronous>, transform_indices = @transform_20, window_bounds = array<i64: 1, 32>}, {pipeline_mode = #tpu.pipeline_mode<synchronous>, transform_indices = @transform_21, window_bounds = array<i64: 1, 32>}, {transform_indices = @transform_22, window_bounds = array<i64: 1, 8, 32>}]} {
    %c0 = arith.constant 0 : index
    %c0_0 = arith.constant 0 : index
    %c0_1 = arith.constant 0 : index
    %0 = vector.load %arg1[%c0, %c0_0, %c0_1] : memref<1x8x32xbf16, #tpu.memory_space<vmem>>, vector<1x8x32xbf16>
    %1 = vector.shape_cast %0 : vector<1x8x32xbf16> to vector<8x32xbf16>
    %2 = arith.extf %1 : vector<8x32xbf16> to vector<8x32xf32>
    %c0_2 = arith.constant 0 : index
    %c0_3 = arith.constant 0 : index
    %3 = vector.load %arg3[%c0_2, %c0_3] : memref<32x96xbf16, #tpu.memory_space<vmem>>, vector<32x96xbf16>
    %cst = arith.constant dense<0.000000e+00> : vector<8x96xf32>
    %4 = tpu.matmul %1, %3, %cst {dimension_numbers = #tpu.dot_dimension_numbers<[1], [0], [0], [1], [0, 0, 1, 1], [], []>} : vector<8x32xbf16>, vector<32x96xbf16>, vector<8x96xf32> -> vector<8x96xf32>
    %c0_4 = arith.constant 0 : index
    %c0_5 = arith.constant 0 : index
    %5 = vector.load %arg4[%c0_4, %c0_5] : memref<1x96xf32, #tpu.memory_space<vmem>>, vector<1x96xf32>
    %6 = vector.broadcast %5 : vector<1x96xf32> to vector<8x96xf32>
    %7 = arith.addf %4, %6 : vector<8x96xf32>
    %8 = vector.extract_strided_slice %7 {offsets = [0, 0], sizes = [8, 32], strides = [1, 1]} : vector<8x96xf32> to vector<8x32xf32>
    %cst_6 = arith.constant 0.353553385 : f32
    %9 = vector.broadcast %cst_6 : f32 to vector<8x32xf32>
    %10 = arith.mulf %8, %9 : vector<8x32xf32>
    %11 = vector.extract_strided_slice %7 {offsets = [0, 32], sizes = [8, 32], strides = [1, 1]} : vector<8x96xf32> to vector<8x32xf32>
    %12 = vector.extract_strided_slice %7 {offsets = [0, 64], sizes = [8, 32], strides = [1, 1]} : vector<8x96xf32> to vector<8x32xf32>
    %c0_7 = arith.constant 0 : index
    %c0_8 = arith.constant 0 : index
    %13 = vector.load %arg5[%c0_7, %c0_8] : memref<32x32xbf16, #tpu.memory_space<vmem>>, vector<32x32xbf16>
    %14 = vector.extract_strided_slice %10 {offsets = [0, 0], sizes = [8, 8], strides = [1, 1]} : vector<8x32xf32> to vector<8x8xf32>
    %15 = arith.truncf %14 : vector<8x8xf32> to vector<8x8xbf16>
    %16 = vector.extract_strided_slice %11 {offsets = [0, 0], sizes = [8, 8], strides = [1, 1]} : vector<8x32xf32> to vector<8x8xf32>
    %17 = arith.truncf %16 : vector<8x8xf32> to vector<8x8xbf16>
    %18 = vector.extract_strided_slice %12 {offsets = [0, 0], sizes = [8, 8], strides = [1, 1]} : vector<8x32xf32> to vector<8x8xf32>
    %19 = arith.truncf %18 : vector<8x8xf32> to vector<8x8xbf16>
    %20 = tpu.transpose %17, [1, 0] : vector<8x8xbf16> -> vector<8x8xbf16>
    %cst_9 = arith.constant dense<0.000000e+00> : vector<8x8xf32>
    %21 = tpu.matmul %15, %20, %cst_9 {dimension_numbers = #tpu.dot_dimension_numbers<[1], [0], [0], [1], [0, 0, 1, 1], [], []>} : vector<8x8xbf16>, vector<8x8xbf16>, vector<8x8xf32> -> vector<8x8xf32>
    %cst_10 = arith.constant dense<0xFF800000> : vector<8xf32>
    %22 = vector.multi_reduction <maximumf>, %21, %cst_10 [1] : vector<8x8xf32> to vector<8xf32>
    %23 = vector.shape_cast %22 : vector<8xf32> to vector<8x1xf32>
    %24 = vector.broadcast %23 : vector<8x1xf32> to vector<8x8xf32>
    %25 = arith.subf %21, %24 : vector<8x8xf32>
    %26 = math.exp %25 : vector<8x8xf32>
    %cst_11 = arith.constant dense<0.000000e+00> : vector<8xf32>
    %27 = vector.multi_reduction <add>, %26, %cst_11 [1] : vector<8x8xf32> to vector<8xf32>
    %28 = vector.shape_cast %27 : vector<8xf32> to vector<8x1xf32>
    %29 = arith.truncf %26 : vector<8x8xf32> to vector<8x8xbf16>
    %cst_12 = arith.constant dense<0.000000e+00> : vector<8x8xf32>
    %30 = tpu.matmul %29, %19, %cst_12 {dimension_numbers = #tpu.dot_dimension_numbers<[1], [0], [0], [1], [0, 0, 1, 1], [], []>} : vector<8x8xbf16>, vector<8x8xbf16>, vector<8x8xf32> -> vector<8x8xf32>
    %31 = tpu.reciprocal %28 {approx = true} : vector<8x1xf32> -> vector<8x1xf32>
    %32 = vector.broadcast %31 : vector<8x1xf32> to vector<8x8xf32>
    %33 = arith.mulf %30, %32 : vector<8x8xf32>
    %34 = arith.truncf %33 : vector<8x8xf32> to vector<8x8xbf16>
    %35 = vector.extract_strided_slice %13 {offsets = [0, 0], sizes = [8, 32], strides = [1, 1]} : vector<32x32xbf16> to vector<8x32xbf16>
    %cst_13 = arith.constant dense<0.000000e+00> : vector<8x32xf32>
    %36 = tpu.matmul %34, %35, %cst_13 {dimension_numbers = #tpu.dot_dimension_numbers<[1], [0], [0], [1], [0, 0, 1, 1], [], []>} : vector<8x8xbf16>, vector<8x32xbf16>, vector<8x32xf32> -> vector<8x32xf32>
    %37 = vector.extract_strided_slice %10 {offsets = [0, 8], sizes = [8, 8], strides = [1, 1]} : vector<8x32xf32> to vector<8x8xf32>
    %38 = arith.truncf %37 : vector<8x8xf32> to vector<8x8xbf16>
    %39 = vector.extract_strided_slice %11 {offsets = [0, 8], sizes = [8, 8], strides = [1, 1]} : vector<8x32xf32> to vector<8x8xf32>
    %40 = arith.truncf %39 : vector<8x8xf32> to vector<8x8xbf16>
    %41 = vector.extract_strided_slice %12 {offsets = [0, 8], sizes = [8, 8], strides = [1, 1]} : vector<8x32xf32> to vector<8x8xf32>
    %42 = arith.truncf %41 : vector<8x8xf32> to vector<8x8xbf16>
    %43 = tpu.transpose %40, [1, 0] : vector<8x8xbf16> -> vector<8x8xbf16>
    %cst_14 = arith.constant dense<0.000000e+00> : vector<8x8xf32>
    %44 = tpu.matmul %38, %43, %cst_14 {dimension_numbers = #tpu.dot_dimension_numbers<[1], [0], [0], [1], [0, 0, 1, 1], [], []>} : vector<8x8xbf16>, vector<8x8xbf16>, vector<8x8xf32> -> vector<8x8xf32>
    %cst_15 = arith.constant dense<0xFF800000> : vector<8xf32>
    %45 = vector.multi_reduction <maximumf>, %44, %cst_15 [1] : vector<8x8xf32> to vector<8xf32>
    %46 = vector.shape_cast %45 : vector<8xf32> to vector<8x1xf32>
    %47 = vector.broadcast %46 : vector<8x1xf32> to vector<8x8xf32>
    %48 = arith.subf %44, %47 : vector<8x8xf32>
    %49 = math.exp %48 : vector<8x8xf32>
    %cst_16 = arith.constant dense<0.000000e+00> : vector<8xf32>
    %50 = vector.multi_reduction <add>, %49, %cst_16 [1] : vector<8x8xf32> to vector<8xf32>
    %51 = vector.shape_cast %50 : vector<8xf32> to vector<8x1xf32>
    %52 = arith.truncf %49 : vector<8x8xf32> to vector<8x8xbf16>
    %cst_17 = arith.constant dense<0.000000e+00> : vector<8x8xf32>
    %53 = tpu.matmul %52, %42, %cst_17 {dimension_numbers = #tpu.dot_dimension_numbers<[1], [0], [0], [1], [0, 0, 1, 1], [], []>} : vector<8x8xbf16>, vector<8x8xbf16>, vector<8x8xf32> -> vector<8x8xf32>
    %54 = tpu.reciprocal %51 {approx = true} : vector<8x1xf32> -> vector<8x1xf32>
    %55 = vector.broadcast %54 : vector<8x1xf32> to vector<8x8xf32>
    %56 = arith.mulf %53, %55 : vector<8x8xf32>
    %57 = arith.truncf %56 : vector<8x8xf32> to vector<8x8xbf16>
    %58 = vector.extract_strided_slice %13 {offsets = [8, 0], sizes = [8, 32], strides = [1, 1]} : vector<32x32xbf16> to vector<8x32xbf16>
    %cst_18 = arith.constant dense<0.000000e+00> : vector<8x32xf32>
    %59 = tpu.matmul %57, %58, %cst_18 {dimension_numbers = #tpu.dot_dimension_numbers<[1], [0], [0], [1], [0, 0, 1, 1], [], []>} : vector<8x8xbf16>, vector<8x32xbf16>, vector<8x32xf32> -> vector<8x32xf32>
    %60 = arith.addf %36, %59 : vector<8x32xf32>
    %61 = vector.extract_strided_slice %10 {offsets = [0, 16], sizes = [8, 8], strides = [1, 1]} : vector<8x32xf32> to vector<8x8xf32>
    %62 = arith.truncf %61 : vector<8x8xf32> to vector<8x8xbf16>
    %63 = vector.extract_strided_slice %11 {offsets = [0, 16], sizes = [8, 8], strides = [1, 1]} : vector<8x32xf32> to vector<8x8xf32>
    %64 = arith.truncf %63 : vector<8x8xf32> to vector<8x8xbf16>
    %65 = vector.extract_strided_slice %12 {offsets = [0, 16], sizes = [8, 8], strides = [1, 1]} : vector<8x32xf32> to vector<8x8xf32>
    %66 = arith.truncf %65 : vector<8x8xf32> to vector<8x8xbf16>
    %67 = tpu.transpose %64, [1, 0] : vector<8x8xbf16> -> vector<8x8xbf16>
    %cst_19 = arith.constant dense<0.000000e+00> : vector<8x8xf32>
    %68 = tpu.matmul %62, %67, %cst_19 {dimension_numbers = #tpu.dot_dimension_numbers<[1], [0], [0], [1], [0, 0, 1, 1], [], []>} : vector<8x8xbf16>, vector<8x8xbf16>, vector<8x8xf32> -> vector<8x8xf32>
    %cst_20 = arith.constant dense<0xFF800000> : vector<8xf32>
    %69 = vector.multi_reduction <maximumf>, %68, %cst_20 [1] : vector<8x8xf32> to vector<8xf32>
    %70 = vector.shape_cast %69 : vector<8xf32> to vector<8x1xf32>
    %71 = vector.broadcast %70 : vector<8x1xf32> to vector<8x8xf32>
    %72 = arith.subf %68, %71 : vector<8x8xf32>
    %73 = math.exp %72 : vector<8x8xf32>
    %cst_21 = arith.constant dense<0.000000e+00> : vector<8xf32>
    %74 = vector.multi_reduction <add>, %73, %cst_21 [1] : vector<8x8xf32> to vector<8xf32>
    %75 = vector.shape_cast %74 : vector<8xf32> to vector<8x1xf32>
    %76 = arith.truncf %73 : vector<8x8xf32> to vector<8x8xbf16>
    %cst_22 = arith.constant dense<0.000000e+00> : vector<8x8xf32>
    %77 = tpu.matmul %76, %66, %cst_22 {dimension_numbers = #tpu.dot_dimension_numbers<[1], [0], [0], [1], [0, 0, 1, 1], [], []>} : vector<8x8xbf16>, vector<8x8xbf16>, vector<8x8xf32> -> vector<8x8xf32>
    %78 = tpu.reciprocal %75 {approx = true} : vector<8x1xf32> -> vector<8x1xf32>
    %79 = vector.broadcast %78 : vector<8x1xf32> to vector<8x8xf32>
    %80 = arith.mulf %77, %79 : vector<8x8xf32>
    %81 = arith.truncf %80 : vector<8x8xf32> to vector<8x8xbf16>
    %82 = vector.extract_strided_slice %13 {offsets = [16, 0], sizes = [8, 32], strides = [1, 1]} : vector<32x32xbf16> to vector<8x32xbf16>
    %cst_23 = arith.constant dense<0.000000e+00> : vector<8x32xf32>
    %83 = tpu.matmul %81, %82, %cst_23 {dimension_numbers = #tpu.dot_dimension_numbers<[1], [0], [0], [1], [0, 0, 1, 1], [], []>} : vector<8x8xbf16>, vector<8x32xbf16>, vector<8x32xf32> -> vector<8x32xf32>
    %84 = arith.addf %60, %83 : vector<8x32xf32>
    %85 = vector.extract_strided_slice %10 {offsets = [0, 24], sizes = [8, 8], strides = [1, 1]} : vector<8x32xf32> to vector<8x8xf32>
    %86 = arith.truncf %85 : vector<8x8xf32> to vector<8x8xbf16>
    %87 = vector.extract_strided_slice %11 {offsets = [0, 24], sizes = [8, 8], strides = [1, 1]} : vector<8x32xf32> to vector<8x8xf32>
    %88 = arith.truncf %87 : vector<8x8xf32> to vector<8x8xbf16>
    %89 = vector.extract_strided_slice %12 {offsets = [0, 24], sizes = [8, 8], strides = [1, 1]} : vector<8x32xf32> to vector<8x8xf32>
    %90 = arith.truncf %89 : vector<8x8xf32> to vector<8x8xbf16>
    %91 = tpu.transpose %88, [1, 0] : vector<8x8xbf16> -> vector<8x8xbf16>
    %cst_24 = arith.constant dense<0.000000e+00> : vector<8x8xf32>
    %92 = tpu.matmul %86, %91, %cst_24 {dimension_numbers = #tpu.dot_dimension_numbers<[1], [0], [0], [1], [0, 0, 1, 1], [], []>} : vector<8x8xbf16>, vector<8x8xbf16>, vector<8x8xf32> -> vector<8x8xf32>
    %cst_25 = arith.constant dense<0xFF800000> : vector<8xf32>
    %93 = vector.multi_reduction <maximumf>, %92, %cst_25 [1] : vector<8x8xf32> to vector<8xf32>
    %94 = vector.shape_cast %93 : vector<8xf32> to vector<8x1xf32>
    %95 = vector.broadcast %94 : vector<8x1xf32> to vector<8x8xf32>
    %96 = arith.subf %92, %95 : vector<8x8xf32>
    %97 = math.exp %96 : vector<8x8xf32>
    %cst_26 = arith.constant dense<0.000000e+00> : vector<8xf32>
    %98 = vector.multi_reduction <add>, %97, %cst_26 [1] : vector<8x8xf32> to vector<8xf32>
    %99 = vector.shape_cast %98 : vector<8xf32> to vector<8x1xf32>
    %100 = arith.truncf %97 : vector<8x8xf32> to vector<8x8xbf16>
    %cst_27 = arith.constant dense<0.000000e+00> : vector<8x8xf32>
    %101 = tpu.matmul %100, %90, %cst_27 {dimension_numbers = #tpu.dot_dimension_numbers<[1], [0], [0], [1], [0, 0, 1, 1], [], []>} : vector<8x8xbf16>, vector<8x8xbf16>, vector<8x8xf32> -> vector<8x8xf32>
    %102 = tpu.reciprocal %99 {approx = true} : vector<8x1xf32> -> vector<8x1xf32>
    %103 = vector.broadcast %102 : vector<8x1xf32> to vector<8x8xf32>
    %104 = arith.mulf %101, %103 : vector<8x8xf32>
    %105 = arith.truncf %104 : vector<8x8xf32> to vector<8x8xbf16>
    %106 = vector.extract_strided_slice %13 {offsets = [24, 0], sizes = [8, 32], strides = [1, 1]} : vector<32x32xbf16> to vector<8x32xbf16>
    %cst_28 = arith.constant dense<0.000000e+00> : vector<8x32xf32>
    %107 = tpu.matmul %105, %106, %cst_28 {dimension_numbers = #tpu.dot_dimension_numbers<[1], [0], [0], [1], [0, 0, 1, 1], [], []>} : vector<8x8xbf16>, vector<8x32xbf16>, vector<8x32xf32> -> vector<8x32xf32>
    %108 = arith.addf %84, %107 : vector<8x32xf32>
    %109 = arith.addf %2, %108 : vector<8x32xf32>
    %c0_29 = arith.constant 0 : index
    %c0_30 = arith.constant 0 : index
    %110 = vector.load %arg6[%c0_29, %c0_30] : memref<1x32xf32, #tpu.memory_space<vmem>>, vector<1x32xf32>
    %111 = vector.broadcast %110 : vector<1x32xf32> to vector<8x32xf32>
    %112 = arith.addf %109, %111 : vector<8x32xf32>
    %c0_31 = arith.constant 0 : index
    %c0_32 = arith.constant 0 : index
    %113 = vector.load %arg7[%c0_31, %c0_32] : memref<1x32xf32, #tpu.memory_space<vmem>>, vector<1x32xf32>
    %c0_33 = arith.constant 0 : index
    %c0_34 = arith.constant 0 : index
    %114 = vector.load %arg8[%c0_33, %c0_34] : memref<1x32xf32, #tpu.memory_space<vmem>>, vector<1x32xf32>
    %cst_35 = arith.constant dense<0.000000e+00> : vector<8xf32>
    %115 = vector.multi_reduction <add>, %112, %cst_35 [1] : vector<8x32xf32> to vector<8xf32>
    %116 = vector.shape_cast %115 : vector<8xf32> to vector<8x1xf32>
    %cst_36 = arith.constant 3.200000e+01 : f32
    %117 = vector.broadcast %cst_36 : f32 to vector<8x1xf32>
    %118 = arith.divf %116, %117 : vector<8x1xf32>
    %119 = vector.broadcast %118 : vector<8x1xf32> to vector<8x32xf32>
    %120 = arith.subf %112, %119 : vector<8x32xf32>
    %121 = arith.mulf %120, %120 : vector<8x32xf32>
    %cst_37 = arith.constant dense<0.000000e+00> : vector<8xf32>
    %122 = vector.multi_reduction <add>, %121, %cst_37 [1] : vector<8x32xf32> to vector<8xf32>
    %123 = vector.shape_cast %122 : vector<8xf32> to vector<8x1xf32>
    %cst_38 = arith.constant 3.200000e+01 : f32
    %124 = vector.broadcast %cst_38 : f32 to vector<8x1xf32>
    %125 = arith.divf %123, %124 : vector<8x1xf32>
    %126 = vector.broadcast %118 : vector<8x1xf32> to vector<8x32xf32>
    %127 = arith.subf %112, %126 : vector<8x32xf32>
    %cst_39 = arith.constant 9.99999974E-6 : f32
    %128 = vector.broadcast %cst_39 : f32 to vector<8x1xf32>
    %129 = arith.addf %125, %128 : vector<8x1xf32>
    %130 = math.rsqrt %129 : vector<8x1xf32>
    %131 = vector.broadcast %130 : vector<8x1xf32> to vector<8x32xf32>
    %132 = arith.mulf %127, %131 : vector<8x32xf32>
    %133 = vector.broadcast %113 : vector<1x32xf32> to vector<8x32xf32>
    %134 = arith.mulf %132, %133 : vector<8x32xf32>
    %135 = vector.broadcast %114 : vector<1x32xf32> to vector<8x32xf32>
    %136 = arith.addf %134, %135 : vector<8x32xf32>
    %c0_40 = arith.constant 0 : index
    %c0_41 = arith.constant 0 : index
    %c0_42 = arith.constant 0 : index
    %137 = vector.load %arg2[%c0_40, %c0_41, %c0_42] : memref<1x16x32xbf16, #tpu.memory_space<vmem>>, vector<1x16x32xbf16>
    %138 = vector.shape_cast %137 : vector<1x16x32xbf16> to vector<16x32xbf16>
    %139 = arith.truncf %136 : vector<8x32xf32> to vector<8x32xbf16>
    %c0_43 = arith.constant 0 : index
    %c0_44 = arith.constant 0 : index
    %140 = vector.load %arg9[%c0_43, %c0_44] : memref<32x32xbf16, #tpu.memory_space<vmem>>, vector<32x32xbf16>
    %cst_45 = arith.constant dense<0.000000e+00> : vector<8x32xf32>
    %141 = tpu.matmul %139, %140, %cst_45 {dimension_numbers = #tpu.dot_dimension_numbers<[1], [0], [0], [1], [0, 0, 1, 1], [], []>} : vector<8x32xbf16>, vector<32x32xbf16>, vector<8x32xf32> -> vector<8x32xf32>
    %c0_46 = arith.constant 0 : index
    %c0_47 = arith.constant 0 : index
    %142 = vector.load %arg10[%c0_46, %c0_47] : memref<1x32xf32, #tpu.memory_space<vmem>>, vector<1x32xf32>
    %143 = vector.broadcast %142 : vector<1x32xf32> to vector<8x32xf32>
    %144 = arith.addf %141, %143 : vector<8x32xf32>
    %c0_48 = arith.constant 0 : index
    %c0_49 = arith.constant 0 : index
    %145 = vector.load %arg11[%c0_48, %c0_49] : memref<32x64xbf16, #tpu.memory_space<vmem>>, vector<32x64xbf16>
    %cst_50 = arith.constant dense<0.000000e+00> : vector<16x64xf32>
    %146 = tpu.matmul %138, %145, %cst_50 {dimension_numbers = #tpu.dot_dimension_numbers<[1], [0], [0], [1], [0, 0, 1, 1], [], []>} : vector<16x32xbf16>, vector<32x64xbf16>, vector<16x64xf32> -> vector<16x64xf32>
    %c0_51 = arith.constant 0 : index
    %c0_52 = arith.constant 0 : index
    %147 = vector.load %arg12[%c0_51, %c0_52] : memref<1x64xf32, #tpu.memory_space<vmem>>, vector<1x64xf32>
    %148 = vector.broadcast %147 : vector<1x64xf32> to vector<16x64xf32>
    %149 = arith.addf %146, %148 : vector<16x64xf32>
    %cst_53 = arith.constant 0.353553385 : f32
    %150 = vector.broadcast %cst_53 : f32 to vector<8x32xf32>
    %151 = arith.mulf %144, %150 : vector<8x32xf32>
    %152 = vector.extract_strided_slice %149 {offsets = [0, 0], sizes = [16, 32], strides = [1, 1]} : vector<16x64xf32> to vector<16x32xf32>
    %153 = vector.extract_strided_slice %149 {offsets = [0, 32], sizes = [16, 32], strides = [1, 1]} : vector<16x64xf32> to vector<16x32xf32>
    %c0_54 = arith.constant 0 : index
    %c0_55 = arith.constant 0 : index
    %154 = vector.load %arg13[%c0_54, %c0_55] : memref<32x32xbf16, #tpu.memory_space<vmem>>, vector<32x32xbf16>
    %155 = vector.extract_strided_slice %151 {offsets = [0, 0], sizes = [8, 8], strides = [1, 1]} : vector<8x32xf32> to vector<8x8xf32>
    %156 = arith.truncf %155 : vector<8x8xf32> to vector<8x8xbf16>
    %157 = vector.extract_strided_slice %152 {offsets = [0, 0], sizes = [16, 8], strides = [1, 1]} : vector<16x32xf32> to vector<16x8xf32>
    %158 = arith.truncf %157 : vector<16x8xf32> to vector<16x8xbf16>
    %159 = vector.extract_strided_slice %153 {offsets = [0, 0], sizes = [16, 8], strides = [1, 1]} : vector<16x32xf32> to vector<16x8xf32>
    %160 = arith.truncf %159 : vector<16x8xf32> to vector<16x8xbf16>
    %161 = tpu.transpose %158, [1, 0] : vector<16x8xbf16> -> vector<8x16xbf16>
    %cst_56 = arith.constant dense<0.000000e+00> : vector<8x16xf32>
    %162 = tpu.matmul %156, %161, %cst_56 {dimension_numbers = #tpu.dot_dimension_numbers<[1], [0], [0], [1], [0, 0, 1, 1], [], []>} : vector<8x8xbf16>, vector<8x16xbf16>, vector<8x16xf32> -> vector<8x16xf32>
    %cst_57 = arith.constant dense<0xFF800000> : vector<8xf32>
    %163 = vector.multi_reduction <maximumf>, %162, %cst_57 [1] : vector<8x16xf32> to vector<8xf32>
    %164 = vector.shape_cast %163 : vector<8xf32> to vector<8x1xf32>
    %165 = vector.broadcast %164 : vector<8x1xf32> to vector<8x16xf32>
    %166 = arith.subf %162, %165 : vector<8x16xf32>
    %167 = math.exp %166 : vector<8x16xf32>
    %cst_58 = arith.constant dense<0.000000e+00> : vector<8xf32>
    %168 = vector.multi_reduction <add>, %167, %cst_58 [1] : vector<8x16xf32> to vector<8xf32>
    %169 = vector.shape_cast %168 : vector<8xf32> to vector<8x1xf32>
    %170 = arith.truncf %167 : vector<8x16xf32> to vector<8x16xbf16>
    %cst_59 = arith.constant dense<0.000000e+00> : vector<8x8xf32>
    %171 = tpu.matmul %170, %160, %cst_59 {dimension_numbers = #tpu.dot_dimension_numbers<[1], [0], [0], [1], [0, 0, 1, 1], [], []>} : vector<8x16xbf16>, vector<16x8xbf16>, vector<8x8xf32> -> vector<8x8xf32>
    %172 = tpu.reciprocal %169 {approx = true} : vector<8x1xf32> -> vector<8x1xf32>
    %173 = vector.broadcast %172 : vector<8x1xf32> to vector<8x8xf32>
    %174 = arith.mulf %171, %173 : vector<8x8xf32>
    %175 = arith.truncf %174 : vector<8x8xf32> to vector<8x8xbf16>
    %176 = vector.extract_strided_slice %154 {offsets = [0, 0], sizes = [8, 32], strides = [1, 1]} : vector<32x32xbf16> to vector<8x32xbf16>
    %cst_60 = arith.constant dense<0.000000e+00> : vector<8x32xf32>
    %177 = tpu.matmul %175, %176, %cst_60 {dimension_numbers = #tpu.dot_dimension_numbers<[1], [0], [0], [1], [0, 0, 1, 1], [], []>} : vector<8x8xbf16>, vector<8x32xbf16>, vector<8x32xf32> -> vector<8x32xf32>
    %178 = vector.extract_strided_slice %151 {offsets = [0, 8], sizes = [8, 8], strides = [1, 1]} : vector<8x32xf32> to vector<8x8xf32>
    %179 = arith.truncf %178 : vector<8x8xf32> to vector<8x8xbf16>
    %180 = vector.extract_strided_slice %152 {offsets = [0, 8], sizes = [16, 8], strides = [1, 1]} : vector<16x32xf32> to vector<16x8xf32>
    %181 = arith.truncf %180 : vector<16x8xf32> to vector<16x8xbf16>
    %182 = vector.extract_strided_slice %153 {offsets = [0, 8], sizes = [16, 8], strides = [1, 1]} : vector<16x32xf32> to vector<16x8xf32>
    %183 = arith.truncf %182 : vector<16x8xf32> to vector<16x8xbf16>
    %184 = tpu.transpose %181, [1, 0] : vector<16x8xbf16> -> vector<8x16xbf16>
    %cst_61 = arith.constant dense<0.000000e+00> : vector<8x16xf32>
    %185 = tpu.matmul %179, %184, %cst_61 {dimension_numbers = #tpu.dot_dimension_numbers<[1], [0], [0], [1], [0, 0, 1, 1], [], []>} : vector<8x8xbf16>, vector<8x16xbf16>, vector<8x16xf32> -> vector<8x16xf32>
    %cst_62 = arith.constant dense<0xFF800000> : vector<8xf32>
    %186 = vector.multi_reduction <maximumf>, %185, %cst_62 [1] : vector<8x16xf32> to vector<8xf32>
    %187 = vector.shape_cast %186 : vector<8xf32> to vector<8x1xf32>
    %188 = vector.broadcast %187 : vector<8x1xf32> to vector<8x16xf32>
    %189 = arith.subf %185, %188 : vector<8x16xf32>
    %190 = math.exp %189 : vector<8x16xf32>
    %cst_63 = arith.constant dense<0.000000e+00> : vector<8xf32>
    %191 = vector.multi_reduction <add>, %190, %cst_63 [1] : vector<8x16xf32> to vector<8xf32>
    %192 = vector.shape_cast %191 : vector<8xf32> to vector<8x1xf32>
    %193 = arith.truncf %190 : vector<8x16xf32> to vector<8x16xbf16>
    %cst_64 = arith.constant dense<0.000000e+00> : vector<8x8xf32>
    %194 = tpu.matmul %193, %183, %cst_64 {dimension_numbers = #tpu.dot_dimension_numbers<[1], [0], [0], [1], [0, 0, 1, 1], [], []>} : vector<8x16xbf16>, vector<16x8xbf16>, vector<8x8xf32> -> vector<8x8xf32>
    %195 = tpu.reciprocal %192 {approx = true} : vector<8x1xf32> -> vector<8x1xf32>
    %196 = vector.broadcast %195 : vector<8x1xf32> to vector<8x8xf32>
    %197 = arith.mulf %194, %196 : vector<8x8xf32>
    %198 = arith.truncf %197 : vector<8x8xf32> to vector<8x8xbf16>
    %199 = vector.extract_strided_slice %154 {offsets = [8, 0], sizes = [8, 32], strides = [1, 1]} : vector<32x32xbf16> to vector<8x32xbf16>
    %cst_65 = arith.constant dense<0.000000e+00> : vector<8x32xf32>
    %200 = tpu.matmul %198, %199, %cst_65 {dimension_numbers = #tpu.dot_dimension_numbers<[1], [0], [0], [1], [0, 0, 1, 1], [], []>} : vector<8x8xbf16>, vector<8x32xbf16>, vector<8x32xf32> -> vector<8x32xf32>
    %201 = arith.addf %177, %200 : vector<8x32xf32>
    %202 = vector.extract_strided_slice %151 {offsets = [0, 16], sizes = [8, 8], strides = [1, 1]} : vector<8x32xf32> to vector<8x8xf32>
    %203 = arith.truncf %202 : vector<8x8xf32> to vector<8x8xbf16>
    %204 = vector.extract_strided_slice %152 {offsets = [0, 16], sizes = [16, 8], strides = [1, 1]} : vector<16x32xf32> to vector<16x8xf32>
    %205 = arith.truncf %204 : vector<16x8xf32> to vector<16x8xbf16>
    %206 = vector.extract_strided_slice %153 {offsets = [0, 16], sizes = [16, 8], strides = [1, 1]} : vector<16x32xf32> to vector<16x8xf32>
    %207 = arith.truncf %206 : vector<16x8xf32> to vector<16x8xbf16>
    %208 = tpu.transpose %205, [1, 0] : vector<16x8xbf16> -> vector<8x16xbf16>
    %cst_66 = arith.constant dense<0.000000e+00> : vector<8x16xf32>
    %209 = tpu.matmul %203, %208, %cst_66 {dimension_numbers = #tpu.dot_dimension_numbers<[1], [0], [0], [1], [0, 0, 1, 1], [], []>} : vector<8x8xbf16>, vector<8x16xbf16>, vector<8x16xf32> -> vector<8x16xf32>
    %cst_67 = arith.constant dense<0xFF800000> : vector<8xf32>
    %210 = vector.multi_reduction <maximumf>, %209, %cst_67 [1] : vector<8x16xf32> to vector<8xf32>
    %211 = vector.shape_cast %210 : vector<8xf32> to vector<8x1xf32>
    %212 = vector.broadcast %211 : vector<8x1xf32> to vector<8x16xf32>
    %213 = arith.subf %209, %212 : vector<8x16xf32>
    %214 = math.exp %213 : vector<8x16xf32>
    %cst_68 = arith.constant dense<0.000000e+00> : vector<8xf32>
    %215 = vector.multi_reduction <add>, %214, %cst_68 [1] : vector<8x16xf32> to vector<8xf32>
    %216 = vector.shape_cast %215 : vector<8xf32> to vector<8x1xf32>
    %217 = arith.truncf %214 : vector<8x16xf32> to vector<8x16xbf16>
    %cst_69 = arith.constant dense<0.000000e+00> : vector<8x8xf32>
    %218 = tpu.matmul %217, %207, %cst_69 {dimension_numbers = #tpu.dot_dimension_numbers<[1], [0], [0], [1], [0, 0, 1, 1], [], []>} : vector<8x16xbf16>, vector<16x8xbf16>, vector<8x8xf32> -> vector<8x8xf32>
    %219 = tpu.reciprocal %216 {approx = true} : vector<8x1xf32> -> vector<8x1xf32>
    %220 = vector.broadcast %219 : vector<8x1xf32> to vector<8x8xf32>
    %221 = arith.mulf %218, %220 : vector<8x8xf32>
    %222 = arith.truncf %221 : vector<8x8xf32> to vector<8x8xbf16>
    %223 = vector.extract_strided_slice %154 {offsets = [16, 0], sizes = [8, 32], strides = [1, 1]} : vector<32x32xbf16> to vector<8x32xbf16>
    %cst_70 = arith.constant dense<0.000000e+00> : vector<8x32xf32>
    %224 = tpu.matmul %222, %223, %cst_70 {dimension_numbers = #tpu.dot_dimension_numbers<[1], [0], [0], [1], [0, 0, 1, 1], [], []>} : vector<8x8xbf16>, vector<8x32xbf16>, vector<8x32xf32> -> vector<8x32xf32>
    %225 = arith.addf %201, %224 : vector<8x32xf32>
    %226 = vector.extract_strided_slice %151 {offsets = [0, 24], sizes = [8, 8], strides = [1, 1]} : vector<8x32xf32> to vector<8x8xf32>
    %227 = arith.truncf %226 : vector<8x8xf32> to vector<8x8xbf16>
    %228 = vector.extract_strided_slice %152 {offsets = [0, 24], sizes = [16, 8], strides = [1, 1]} : vector<16x32xf32> to vector<16x8xf32>
    %229 = arith.truncf %228 : vector<16x8xf32> to vector<16x8xbf16>
    %230 = vector.extract_strided_slice %153 {offsets = [0, 24], sizes = [16, 8], strides = [1, 1]} : vector<16x32xf32> to vector<16x8xf32>
    %231 = arith.truncf %230 : vector<16x8xf32> to vector<16x8xbf16>
    %232 = tpu.transpose %229, [1, 0] : vector<16x8xbf16> -> vector<8x16xbf16>
    %cst_71 = arith.constant dense<0.000000e+00> : vector<8x16xf32>
    %233 = tpu.matmul %227, %232, %cst_71 {dimension_numbers = #tpu.dot_dimension_numbers<[1], [0], [0], [1], [0, 0, 1, 1], [], []>} : vector<8x8xbf16>, vector<8x16xbf16>, vector<8x16xf32> -> vector<8x16xf32>
    %cst_72 = arith.constant dense<0xFF800000> : vector<8xf32>
    %234 = vector.multi_reduction <maximumf>, %233, %cst_72 [1] : vector<8x16xf32> to vector<8xf32>
    %235 = vector.shape_cast %234 : vector<8xf32> to vector<8x1xf32>
    %236 = vector.broadcast %235 : vector<8x1xf32> to vector<8x16xf32>
    %237 = arith.subf %233, %236 : vector<8x16xf32>
    %238 = math.exp %237 : vector<8x16xf32>
    %cst_73 = arith.constant dense<0.000000e+00> : vector<8xf32>
    %239 = vector.multi_reduction <add>, %238, %cst_73 [1] : vector<8x16xf32> to vector<8xf32>
    %240 = vector.shape_cast %239 : vector<8xf32> to vector<8x1xf32>
    %241 = arith.truncf %238 : vector<8x16xf32> to vector<8x16xbf16>
    %cst_74 = arith.constant dense<0.000000e+00> : vector<8x8xf32>
    %242 = tpu.matmul %241, %231, %cst_74 {dimension_numbers = #tpu.dot_dimension_numbers<[1], [0], [0], [1], [0, 0, 1, 1], [], []>} : vector<8x16xbf16>, vector<16x8xbf16>, vector<8x8xf32> -> vector<8x8xf32>
    %243 = tpu.reciprocal %240 {approx = true} : vector<8x1xf32> -> vector<8x1xf32>
    %244 = vector.broadcast %243 : vector<8x1xf32> to vector<8x8xf32>
    %245 = arith.mulf %242, %244 : vector<8x8xf32>
    %246 = arith.truncf %245 : vector<8x8xf32> to vector<8x8xbf16>
    %247 = vector.extract_strided_slice %154 {offsets = [24, 0], sizes = [8, 32], strides = [1, 1]} : vector<32x32xbf16> to vector<8x32xbf16>
    %cst_75 = arith.constant dense<0.000000e+00> : vector<8x32xf32>
    %248 = tpu.matmul %246, %247, %cst_75 {dimension_numbers = #tpu.dot_dimension_numbers<[1], [0], [0], [1], [0, 0, 1, 1], [], []>} : vector<8x8xbf16>, vector<8x32xbf16>, vector<8x32xf32> -> vector<8x32xf32>
    %249 = arith.addf %225, %248 : vector<8x32xf32>
    %250 = arith.addf %136, %249 : vector<8x32xf32>
    %c0_76 = arith.constant 0 : index
    %c0_77 = arith.constant 0 : index
    %251 = vector.load %arg14[%c0_76, %c0_77] : memref<1x32xf32, #tpu.memory_space<vmem>>, vector<1x32xf32>
    %252 = vector.broadcast %251 : vector<1x32xf32> to vector<8x32xf32>
    %253 = arith.addf %250, %252 : vector<8x32xf32>
    %c0_78 = arith.constant 0 : index
    %c0_79 = arith.constant 0 : index
    %254 = vector.load %arg15[%c0_78, %c0_79] : memref<1x32xf32, #tpu.memory_space<vmem>>, vector<1x32xf32>
    %c0_80 = arith.constant 0 : index
    %c0_81 = arith.constant 0 : index
    %255 = vector.load %arg16[%c0_80, %c0_81] : memref<1x32xf32, #tpu.memory_space<vmem>>, vector<1x32xf32>
    %cst_82 = arith.constant dense<0.000000e+00> : vector<8xf32>
    %256 = vector.multi_reduction <add>, %253, %cst_82 [1] : vector<8x32xf32> to vector<8xf32>
    %257 = vector.shape_cast %256 : vector<8xf32> to vector<8x1xf32>
    %cst_83 = arith.constant 3.200000e+01 : f32
    %258 = vector.broadcast %cst_83 : f32 to vector<8x1xf32>
    %259 = arith.divf %257, %258 : vector<8x1xf32>
    %260 = vector.broadcast %259 : vector<8x1xf32> to vector<8x32xf32>
    %261 = arith.subf %253, %260 : vector<8x32xf32>
    %262 = arith.mulf %261, %261 : vector<8x32xf32>
    %cst_84 = arith.constant dense<0.000000e+00> : vector<8xf32>
    %263 = vector.multi_reduction <add>, %262, %cst_84 [1] : vector<8x32xf32> to vector<8xf32>
    %264 = vector.shape_cast %263 : vector<8xf32> to vector<8x1xf32>
    %cst_85 = arith.constant 3.200000e+01 : f32
    %265 = vector.broadcast %cst_85 : f32 to vector<8x1xf32>
    %266 = arith.divf %264, %265 : vector<8x1xf32>
    %267 = vector.broadcast %259 : vector<8x1xf32> to vector<8x32xf32>
    %268 = arith.subf %253, %267 : vector<8x32xf32>
    %cst_86 = arith.constant 9.99999974E-6 : f32
    %269 = vector.broadcast %cst_86 : f32 to vector<8x1xf32>
    %270 = arith.addf %266, %269 : vector<8x1xf32>
    %271 = math.rsqrt %270 : vector<8x1xf32>
    %272 = vector.broadcast %271 : vector<8x1xf32> to vector<8x32xf32>
    %273 = arith.mulf %268, %272 : vector<8x32xf32>
    %274 = vector.broadcast %254 : vector<1x32xf32> to vector<8x32xf32>
    %275 = arith.mulf %273, %274 : vector<8x32xf32>
    %276 = vector.broadcast %255 : vector<1x32xf32> to vector<8x32xf32>
    %277 = arith.addf %275, %276 : vector<8x32xf32>
    %278 = arith.truncf %277 : vector<8x32xf32> to vector<8x32xbf16>
    %c0_87 = arith.constant 0 : index
    %c0_88 = arith.constant 0 : index
    %279 = vector.load %arg17[%c0_87, %c0_88] : memref<32x64xbf16, #tpu.memory_space<vmem>>, vector<32x64xbf16>
    %cst_89 = arith.constant dense<0.000000e+00> : vector<8x64xf32>
    %280 = tpu.matmul %278, %279, %cst_89 {dimension_numbers = #tpu.dot_dimension_numbers<[1], [0], [0], [1], [0, 0, 1, 1], [], []>} : vector<8x32xbf16>, vector<32x64xbf16>, vector<8x64xf32> -> vector<8x64xf32>
    %c0_90 = arith.constant 0 : index
    %c0_91 = arith.constant 0 : index
    %281 = vector.load %arg18[%c0_90, %c0_91] : memref<1x64xf32, #tpu.memory_space<vmem>>, vector<1x64xf32>
    %282 = vector.broadcast %281 : vector<1x64xf32> to vector<8x64xf32>
    %283 = arith.addf %280, %282 : vector<8x64xf32>
    %cst_92 = arith.constant 0.000000e+00 : f32
    %284 = vector.broadcast %cst_92 : f32 to vector<8x64xf32>
    %285 = arith.maximumf %283, %284 : vector<8x64xf32>
    %286 = arith.truncf %285 : vector<8x64xf32> to vector<8x64xbf16>
    %c0_93 = arith.constant 0 : index
    %c0_94 = arith.constant 0 : index
    %287 = vector.load %arg19[%c0_93, %c0_94] : memref<64x32xbf16, #tpu.memory_space<vmem>>, vector<64x32xbf16>
    %cst_95 = arith.constant dense<0.000000e+00> : vector<8x32xf32>
    %288 = tpu.matmul %286, %287, %cst_95 {dimension_numbers = #tpu.dot_dimension_numbers<[1], [0], [0], [1], [0, 0, 1, 1], [], []>} : vector<8x64xbf16>, vector<64x32xbf16>, vector<8x32xf32> -> vector<8x32xf32>
    %c0_96 = arith.constant 0 : index
    %c0_97 = arith.constant 0 : index
    %289 = vector.load %arg20[%c0_96, %c0_97] : memref<1x32xf32, #tpu.memory_space<vmem>>, vector<1x32xf32>
    %290 = vector.broadcast %289 : vector<1x32xf32> to vector<8x32xf32>
    %291 = arith.addf %288, %290 : vector<8x32xf32>
    %292 = arith.addf %277, %291 : vector<8x32xf32>
    %c0_98 = arith.constant 0 : index
    %c0_99 = arith.constant 0 : index
    %293 = vector.load %arg21[%c0_98, %c0_99] : memref<1x32xf32, #tpu.memory_space<vmem>>, vector<1x32xf32>
    %c0_100 = arith.constant 0 : index
    %c0_101 = arith.constant 0 : index
    %294 = vector.load %arg22[%c0_100, %c0_101] : memref<1x32xf32, #tpu.memory_space<vmem>>, vector<1x32xf32>
    %cst_102 = arith.constant dense<0.000000e+00> : vector<8xf32>
    %295 = vector.multi_reduction <add>, %292, %cst_102 [1] : vector<8x32xf32> to vector<8xf32>
    %296 = vector.shape_cast %295 : vector<8xf32> to vector<8x1xf32>
    %cst_103 = arith.constant 3.200000e+01 : f32
    %297 = vector.broadcast %cst_103 : f32 to vector<8x1xf32>
    %298 = arith.divf %296, %297 : vector<8x1xf32>
    %299 = vector.broadcast %298 : vector<8x1xf32> to vector<8x32xf32>
    %300 = arith.subf %292, %299 : vector<8x32xf32>
    %301 = arith.mulf %300, %300 : vector<8x32xf32>
    %cst_104 = arith.constant dense<0.000000e+00> : vector<8xf32>
    %302 = vector.multi_reduction <add>, %301, %cst_104 [1] : vector<8x32xf32> to vector<8xf32>
    %303 = vector.shape_cast %302 : vector<8xf32> to vector<8x1xf32>
    %cst_105 = arith.constant 3.200000e+01 : f32
    %304 = vector.broadcast %cst_105 : f32 to vector<8x1xf32>
    %305 = arith.divf %303, %304 : vector<8x1xf32>
    %306 = vector.broadcast %298 : vector<8x1xf32> to vector<8x32xf32>
    %307 = arith.subf %292, %306 : vector<8x32xf32>
    %cst_106 = arith.constant 9.99999974E-6 : f32
    %308 = vector.broadcast %cst_106 : f32 to vector<8x1xf32>
    %309 = arith.addf %305, %308 : vector<8x1xf32>
    %310 = math.rsqrt %309 : vector<8x1xf32>
    %311 = vector.broadcast %310 : vector<8x1xf32> to vector<8x32xf32>
    %312 = arith.mulf %307, %311 : vector<8x32xf32>
    %313 = vector.broadcast %293 : vector<1x32xf32> to vector<8x32xf32>
    %314 = arith.mulf %312, %313 : vector<8x32xf32>
    %315 = vector.broadcast %294 : vector<1x32xf32> to vector<8x32xf32>
    %316 = arith.addf %314, %315 : vector<8x32xf32>
    %317 = arith.truncf %316 : vector<8x32xf32> to vector<8x32xbf16>
    %c0_107 = arith.constant 0 : index
    %c0_108 = arith.constant 0 : index
    %c0_109 = arith.constant 0 : index
    %318 = vector.load %arg23[%c0_107, %c0_108, %c0_109] : memref<1x8x32xbf16, #tpu.memory_space<vmem>>, vector<1x8x32xbf16>
    %319 = vector.shape_cast %318 : vector<1x8x32xbf16> to vector<8x32xbf16>
    %320 = vector.shape_cast %317 : vector<8x32xbf16> to vector<1x8x32xbf16>
    tpu.vector_store %arg23[%c0_107, %c0_108, %c0_109], %320 {strides = array<i32>} : memref<1x8x32xbf16, #tpu.memory_space<vmem>>, vector<1x8x32xbf16>,
    return
  }
  func.func @transform_0(%arg0: i32) -> (i32, i32, i32) {
    %c0_i32 = arith.constant 0 : i32
    %c0_i32_0 = arith.constant 0 : i32
    %c0_i32_1 = arith.constant 0 : i32
    return %arg0, %c0_i32, %c0_i32_0 : i32, i32, i32
  }
  func.func @transform_1(%arg0: i32) -> (i32, i32, i32) {
    %c0_i32 = arith.constant 0 : i32
    %c0_i32_0 = arith.constant 0 : i32
    %c0_i32_1 = arith.constant 0 : i32
    return %arg0, %c0_i32, %c0_i32_0 : i32, i32, i32
  }
  func.func @transform_2(%arg0: i32) -> (i32, i32) {
    %c0_i32 = arith.constant 0 : i32
    %c0_i32_0 = arith.constant 0 : i32
    %c0_i32_1 = arith.constant 0 : i32
    return %c0_i32, %c0_i32_0 : i32, i32
  }
  func.func @transform_3(%arg0: i32) -> (i32, i32) {
    %c0_i32 = arith.constant 0 : i32
    %c0_i32_0 = arith.constant 0 : i32
    %c0_i32_1 = arith.constant 0 : i32
    return %c0_i32, %c0_i32_0 : i32, i32
  }
  func.func @transform_4(%arg0: i32) -> (i32, i32) {
    %c0_i32 = arith.constant 0 : i32
    %c0_i32_0 = arith.constant 0 : i32
    %c0_i32_1 = arith.constant 0 : i32
    return %c0_i32, %c0_i32_0 : i32, i32
  }
  func.func @transform_5(%arg0: i32) -> (i32, i32) {
    %c0_i32 = arith.constant 0 : i32
    %c0_i32_0 = arith.constant 0 : i32
    %c0_i32_1 = arith.constant 0 : i32
    return %c0_i32, %c0_i32_0 : i32, i32
  }
  func.func @transform_6(%arg0: i32) -> (i32, i32) {
    %c0_i32 = arith.constant 0 : i32
    %c0_i32_0 = arith.constant 0 : i32
    %c0_i32_1 = arith.constant 0 : i32
    return %c0_i32, %c0_i32_0 : i32, i32
  }
  func.func @transform_7(%arg0: i32) -> (i32, i32) {
    %c0_i32 = arith.constant 0 : i32
    %c0_i32_0 = arith.constant 0 : i32
    %c0_i32_1 = arith.constant 0 : i32
    return %c0_i32, %c0_i32_0 : i32, i32
  }
  func.func @transform_8(%arg0: i32) -> (i32, i32) {
    %c0_i32 = arith.constant 0 : i32
    %c0_i32_0 = arith.constant 0 : i32
    %c0_i32_1 = arith.constant 0 : i32
    return %c0_i32, %c0_i32_0 : i32, i32
  }
  func.func @transform_9(%arg0: i32) -> (i32, i32) {
    %c0_i32 = arith.constant 0 : i32
    %c0_i32_0 = arith.constant 0 : i32
    %c0_i32_1 = arith.constant 0 : i32
    return %c0_i32, %c0_i32_0 : i32, i32
  }
  func.func @transform_10(%arg0: i32) -> (i32, i32) {
    %c0_i32 = arith.constant 0 : i32
    %c0_i32_0 = arith.constant 0 : i32
    %c0_i32_1 = arith.constant 0 : i32
    return %c0_i32, %c0_i32_0 : i32, i32
  }
  func.func @transform_11(%arg0: i32) -> (i32, i32) {
    %c0_i32 = arith.constant 0 : i32
    %c0_i32_0 = arith.constant 0 : i32
    %c0_i32_1 = arith.constant 0 : i32
    return %c0_i32, %c0_i32_0 : i32, i32
  }
  func.func @transform_12(%arg0: i32) -> (i32, i32) {
    %c0_i32 = arith.constant 0 : i32
    %c0_i32_0 = arith.constant 0 : i32
    %c0_i32_1 = arith.constant 0 : i32
    return %c0_i32, %c0_i32_0 : i32, i32
  }
  func.func @transform_13(%arg0: i32) -> (i32, i32) {
    %c0_i32 = arith.constant 0 : i32
    %c0_i32_0 = arith.constant 0 : i32
    %c0_i32_1 = arith.constant 0 : i32
    return %c0_i32, %c0_i32_0 : i32, i32
  }
  func.func @transform_14(%arg0: i32) -> (i32, i32) {
    %c0_i32 = arith.constant 0 : i32
    %c0_i32_0 = arith.constant 0 : i32
    %c0_i32_1 = arith.constant 0 : i32
    return %c0_i32, %c0_i32_0 : i32, i32
  }
  func.func @transform_15(%arg0: i32) -> (i32, i32) {
    %c0_i32 = arith.constant 0 : i32
    %c0_i32_0 = arith.constant 0 : i32
    %c0_i32_1 = arith.constant 0 : i32
    return %c0_i32, %c0_i32_0 : i32, i32
  }
  func.func @transform_16(%arg0: i32) -> (i32, i32) {
    %c0_i32 = arith.constant 0 : i32
    %c0_i32_0 = arith.constant 0 : i32
    %c0_i32_1 = arith.constant 0 : i32
    return %c0_i32, %c0_i32_0 : i32, i32
  }
  func.func @transform_17(%arg0: i32) -> (i32, i32) {
    %c0_i32 = arith.constant 0 : i32
    %c0_i32_0 = arith.constant 0 : i32
    %c0_i32_1 = arith.constant 0 : i32
    return %c0_i32, %c0_i32_0 : i32, i32
  }
  func.func @transform_18(%arg0: i32) -> (i32, i32) {
    %c0_i32 = arith.constant 0 : i32
    %c0_i32_0 = arith.constant 0 : i32
    %c0_i32_1 = arith.constant 0 : i32
    return %c0_i32, %c0_i32_0 : i32, i32
  }
  func.func @transform_19(%arg0: i32) -> (i32, i32) {
    %c0_i32 = arith.constant 0 : i32
    %c0_i32_0 = arith.constant 0 : i32
    %c0_i32_1 = arith.constant 0 : i32
    return %c0_i32, %c0_i32_0 : i32, i32
  }
  func.func @transform_20(%arg0: i32) -> (i32, i32) {
    %c0_i32 = arith.constant 0 : i32
    %c0_i32_0 = arith.constant 0 : i32
    %c0_i32_1 = arith.constant 0 : i32
    return %c0_i32, %c0_i32_0 : i32, i32
  }
  func.func @transform_21(%arg0: i32) -> (i32, i32) {
    %c0_i32 = arith.constant 0 : i32
    %c0_i32_0 = arith.constant 0 : i32
    %c0_i32_1 = arith.constant 0 : i32
    return %c0_i32, %c0_i32_0 : i32, i32
  }
  func.func @transform_22(%arg0: i32) -> (i32, i32, i32) {
    %c0_i32 = arith.constant 0 : i32
    %c0_i32_0 = arith.constant 0 : i32
    %c0_i32_1 = arith.constant 0 : i32
    return %arg0, %c0_i32, %c0_i32_0 : i32, i32, i32
  }
}

module attributes {stable_mosaic.version = 11 : i64} {
  func.func @_final_ln_logits_kernel(%arg0: i32, %arg1: memref<1x8x32xbf16, #tpu.memory_space<vmem>>, %arg2: memref<1x32xf32, #tpu.memory_space<vmem>>, %arg3: memref<1x32xf32, #tpu.memory_space<vmem>>, %arg4: memref<32x128xbf16, #tpu.memory_space<vmem>>, %arg5: memref<1x128xf32, #tpu.memory_space<vmem>>, %arg6: memref<1x8x128xf32, #tpu.memory_space<vmem>>) attributes {dimension_semantics = [#tpu.dimension_semantics<parallel>], iteration_bounds = array<i64: 2>, scalar_prefetch = 0 : i64, scratch_operands = 0 : i64, tpu.core_type = #tpu.core_type<tc>, window_params = [{transform_indices = @transform_0, window_bounds = array<i64: 1, 8, 32>}, {pipeline_mode = #tpu.pipeline_mode<synchronous>, transform_indices = @transform_1, window_bounds = array<i64: 1, 32>}, {pipeline_mode = #tpu.pipeline_mode<synchronous>, transform_indices = @transform_2, window_bounds = array<i64: 1, 32>}, {pipeline_mode = #tpu.pipeline_mode<synchronous>, transform_indices = @transform_3, window_bounds = array<i64: 32, 128>}, {pipeline_mode = #tpu.pipeline_mode<synchronous>, transform_indices = @transform_4, window_bounds = array<i64: 1, 128>}, {transform_indices = @transform_5, window_bounds = array<i64: 1, 8, 128>}]} {
    %c0 = arith.constant 0 : index
    %c0_0 = arith.constant 0 : index
    %c0_1 = arith.constant 0 : index
    %0 = vector.load %arg1[%c0, %c0_0, %c0_1] : memref<1x8x32xbf16, #tpu.memory_space<vmem>>, vector<1x8x32xbf16>
    %1 = vector.shape_cast %0 : vector<1x8x32xbf16> to vector<8x32xbf16>
    %2 = arith.extf %1 : vector<8x32xbf16> to vector<8x32xf32>
    %c0_2 = arith.constant 0 : index
    %c0_3 = arith.constant 0 : index
    %3 = vector.load %arg2[%c0_2, %c0_3] : memref<1x32xf32, #tpu.memory_space<vmem>>, vector<1x32xf32>
    %c0_4 = arith.constant 0 : index
    %c0_5 = arith.constant 0 : index
    %4 = vector.load %arg3[%c0_4, %c0_5] : memref<1x32xf32, #tpu.memory_space<vmem>>, vector<1x32xf32>
    %cst = arith.constant dense<0.000000e+00> : vector<8xf32>
    %5 = vector.multi_reduction <add>, %2, %cst [1] : vector<8x32xf32> to vector<8xf32>
    %6 = vector.shape_cast %5 : vector<8xf32> to vector<8x1xf32>
    %cst_6 = arith.constant 3.200000e+01 : f32
    %7 = vector.broadcast %cst_6 : f32 to vector<8x1xf32>
    %8 = arith.divf %6, %7 : vector<8x1xf32>
    %9 = vector.broadcast %8 : vector<8x1xf32> to vector<8x32xf32>
    %10 = arith.subf %2, %9 : vector<8x32xf32>
    %11 = arith.mulf %10, %10 : vector<8x32xf32>
    %cst_7 = arith.constant dense<0.000000e+00> : vector<8xf32>
    %12 = vector.multi_reduction <add>, %11, %cst_7 [1] : vector<8x32xf32> to vector<8xf32>
    %13 = vector.shape_cast %12 : vector<8xf32> to vector<8x1xf32>
    %cst_8 = arith.constant 3.200000e+01 : f32
    %14 = vector.broadcast %cst_8 : f32 to vector<8x1xf32>
    %15 = arith.divf %13, %14 : vector<8x1xf32>
    %16 = vector.broadcast %8 : vector<8x1xf32> to vector<8x32xf32>
    %17 = arith.subf %2, %16 : vector<8x32xf32>
    %cst_9 = arith.constant 9.99999974E-6 : f32
    %18 = vector.broadcast %cst_9 : f32 to vector<8x1xf32>
    %19 = arith.addf %15, %18 : vector<8x1xf32>
    %20 = math.rsqrt %19 : vector<8x1xf32>
    %21 = vector.broadcast %20 : vector<8x1xf32> to vector<8x32xf32>
    %22 = arith.mulf %17, %21 : vector<8x32xf32>
    %23 = vector.broadcast %3 : vector<1x32xf32> to vector<8x32xf32>
    %24 = arith.mulf %22, %23 : vector<8x32xf32>
    %25 = vector.broadcast %4 : vector<1x32xf32> to vector<8x32xf32>
    %26 = arith.addf %24, %25 : vector<8x32xf32>
    %27 = arith.truncf %26 : vector<8x32xf32> to vector<8x32xbf16>
    %c0_10 = arith.constant 0 : index
    %c0_11 = arith.constant 0 : index
    %28 = vector.load %arg4[%c0_10, %c0_11] : memref<32x128xbf16, #tpu.memory_space<vmem>>, vector<32x128xbf16>
    %cst_12 = arith.constant dense<0.000000e+00> : vector<8x128xf32>
    %29 = tpu.matmul %27, %28, %cst_12 {dimension_numbers = #tpu.dot_dimension_numbers<[1], [0], [0], [1], [0, 0, 1, 1], [], []>} : vector<8x32xbf16>, vector<32x128xbf16>, vector<8x128xf32> -> vector<8x128xf32>
    %c0_13 = arith.constant 0 : index
    %c0_14 = arith.constant 0 : index
    %30 = vector.load %arg5[%c0_13, %c0_14] : memref<1x128xf32, #tpu.memory_space<vmem>>, vector<1x128xf32>
    %31 = vector.broadcast %30 : vector<1x128xf32> to vector<8x128xf32>
    %32 = arith.addf %29, %31 : vector<8x128xf32>
    %c0_15 = arith.constant 0 : index
    %c0_16 = arith.constant 0 : index
    %c0_17 = arith.constant 0 : index
    %33 = vector.load %arg6[%c0_15, %c0_16, %c0_17] : memref<1x8x128xf32, #tpu.memory_space<vmem>>, vector<1x8x128xf32>
    %34 = vector.shape_cast %33 : vector<1x8x128xf32> to vector<8x128xf32>
    %35 = vector.shape_cast %32 : vector<8x128xf32> to vector<1x8x128xf32>
    tpu.vector_store %arg6[%c0_15, %c0_16, %c0_17], %35 {strides = array<i32>} : memref<1x8x128xf32, #tpu.memory_space<vmem>>, vector<1x8x128xf32>,
    return
  }
  func.func @transform_0(%arg0: i32) -> (i32, i32, i32) {
    %c0_i32 = arith.constant 0 : i32
    %c0_i32_0 = arith.constant 0 : i32
    %c0_i32_1 = arith.constant 0 : i32
    return %arg0, %c0_i32, %c0_i32_0 : i32, i32, i32
  }
  func.func @transform_1(%arg0: i32) -> (i32, i32) {
    %c0_i32 = arith.constant 0 : i32
    %c0_i32_0 = arith.constant 0 : i32
    %c0_i32_1 = arith.constant 0 : i32
    return %c0_i32, %c0_i32_0 : i32, i32
  }
  func.func @transform_2(%arg0: i32) -> (i32, i32) {
    %c0_i32 = arith.constant 0 : i32
    %c0_i32_0 = arith.constant 0 : i32
    %c0_i32_1 = arith.constant 0 : i32
    return %c0_i32, %c0_i32_0 : i32, i32
  }
  func.func @transform_3(%arg0: i32) -> (i32, i32) {
    %c0_i32 = arith.constant 0 : i32
    %c0_i32_0 = arith.constant 0 : i32
    %c0_i32_1 = arith.constant 0 : i32
    return %c0_i32, %c0_i32_0 : i32, i32
  }
  func.func @transform_4(%arg0: i32) -> (i32, i32) {
    %c0_i32 = arith.constant 0 : i32
    %c0_i32_0 = arith.constant 0 : i32
    %c0_i32_1 = arith.constant 0 : i32
    return %c0_i32, %c0_i32_0 : i32, i32
  }
  func.func @transform_5(%arg0: i32) -> (i32, i32, i32) {
    %c0_i32 = arith.constant 0 : i32
    %c0_i32_0 = arith.constant 0 : i32
    %c0_i32_1 = arith.constant 0 : i32
    return %arg0, %c0_i32, %c0_i32_0 : i32, i32, i32
  }
}

</mosaic_0001>

<llo_original>
// kernel: transformer_forward.5
$region0: #{transformer_forward.5}
  #allocation0 [shape = 'u32[]', space=smem, size = 0x4, offset = 0x4, fixed_abs, tag = 'smem constant byte address 0x4 - core index']
  #allocation1 [shape = 'u32[72,128]{1,0:T(1,128)}', space=vmem, size = 0x9000, scoped, tag = 'internal scratch']
  %s0 = inlined_call_operand.vmem [shape: bf16[2,16,32], index: 0, kind: input, shape index: {}]
  %s1 = inlined_call_operand.vmem [shape: bf16[32,96], index: 1, kind: input, shape index: {}]
  %s2 = inlined_call_operand.vmem [shape: f32[1,96], index: 2, kind: input, shape index: {}]
  %s3 = inlined_call_operand.vmem [shape: bf16[32,32], index: 3, kind: input, shape index: {}]
  %s4 = inlined_call_operand.vmem [shape: f32[1,32], index: 4, kind: input, shape index: {}]
  %s5 = inlined_call_operand.vmem [shape: f32[1,32], index: 5, kind: input, shape index: {}]
  %s6 = inlined_call_operand.vmem [shape: f32[1,32], index: 6, kind: input, shape index: {}]
  %s7 = inlined_call_operand.vmem [shape: bf16[32,64], index: 7, kind: input, shape index: {}]
  %s8 = inlined_call_operand.vmem [shape: f32[1,64], index: 8, kind: input, shape index: {}]
  %s9 = inlined_call_operand.vmem [shape: bf16[64,32], index: 9, kind: input, shape index: {}]
  %s10 = inlined_call_operand.vmem [shape: f32[1,32], index: 10, kind: input, shape index: {}]
  %s11 = inlined_call_operand.vmem [shape: f32[1,32], index: 11, kind: input, shape index: {}]
  %s12 = inlined_call_operand.vmem [shape: f32[1,32], index: 12, kind: input, shape index: {}]
  %s13 = inlined_call_operand.vmem [shape: bf16[2,16,32], index: 13, kind: output, shape index: {}]
  %s14 = sld [smem:[#allocation0]]
  $region85: #{transformer_forward.5} parent=0
    _
  %s16 = ssub.s32 1, %s14
  %s17 = scalar_select 0, %s16, %s14
  loop: start=0, step=1, limit=4
  $region2: #{transformer_forward.5} parent=0 // loop_pre_header
    _
  $region3: #{transformer_forward.5} parent=0 // loop_header
    %s19 = sphi 0, %s23
    %p20 = scmp.ge.s32.totalorder %s19, 4
    %s29 = sphi 0, %s31
    %s32 = sphi 0, %s29
    %s33 = sphi 0, %s32
    %s49 = sphi 0, %s33
    %s53 = sphi 0, %s53
    %s55 = sphi 0, %s53
    %s56 = sphi 0, %s55
    %s70 = sphi 0, %s56
    %s74 = sphi 0, %s74
    %s76 = sphi 0, %s74
    %s77 = sphi 0, %s76
    %s91 = sphi 0, %s77
    %s95 = sphi 0, %s95
    %s97 = sphi 0, %s95
    %s98 = sphi 0, %s97
    %s112 = sphi 0, %s98
    %s116 = sphi 0, %s116
    %s118 = sphi 0, %s116
    %s119 = sphi 0, %s118
    %s133 = sphi 0, %s119
    %s137 = sphi 0, %s137
    %s139 = sphi 0, %s137
    %s140 = sphi 0, %s139
    %s154 = sphi 0, %s140
    %s158 = sphi 0, %s158
    %s160 = sphi 0, %s158
    %s161 = sphi 0, %s160
    %s175 = sphi 0, %s161
    %s179 = sphi 0, %s179
    %s181 = sphi 0, %s179
    %s182 = sphi 0, %s181
    %s196 = sphi 0, %s182
    %s200 = sphi 0, %s200
    %s202 = sphi 0, %s200
    %s203 = sphi 0, %s202
    %s217 = sphi 0, %s203
    %s221 = sphi 0, %s221
    %s223 = sphi 0, %s221
    %s224 = sphi 0, %s223
    %s238 = sphi 0, %s224
    %s242 = sphi 0, %s242
    %s244 = sphi 0, %s242
    %s245 = sphi 0, %s244
    %s259 = sphi 0, %s245
    %s263 = sphi 0, %s263
    %s265 = sphi 0, %s263
    %s266 = sphi 0, %s265
    %s280 = sphi 0, %s266
    %s284 = sphi 0, %s284
    %s286 = sphi 0, %s284
    %s287 = sphi 0, %s286
    %s301 = sphi 0, %s287
    %s307 = sphi 0, %s309
    %s310 = sphi 0, %s307
    %s311 = sphi 0, %s310
    %s327 = sphi 0, %s311
  $region4: #{transformer_forward.5} parent=0 // loop_header_branch
    %22 = sbr.rel (%p20) target = $region8
  $region5: #{transformer_forward.5} parent=0 // loop_body
    %s24 = ssub.s32 %s19, 1
    %s25 = ssub.s32 %s19, 2
    %s26 = sadd.s32 %s19, 1
    %s27 = ssub.s32 %s19, %s26
    %p28 = scmp.eq.s32.totalorder %s27, 0
    %s30 = sadd.s32 %s29, 1
    %s31 = scalar_select %p28, %s29, %s30
    %p34 = pneg %p28
    %p35 = scmp.eq.s32.totalorder %s19, 1
    %p36 = por %p34, %p35
    %p37 = scmp.ne.s32.totalorder %s29, %s32
    %p38 = scmp.eq.s32.totalorder %s19, 0
    %p39 = por %p37, %p38
    %p40 = scmp.ne.s32.totalorder %s29, %s32
    %p41 = scmp.eq.s32.totalorder %s24, 1
    %p42 = por %p40, %p41
    %p43 = scmp.ne.s32.totalorder %s32, %s33
    %p44 = scmp.eq.s32.totalorder %s24, 0
    %p45 = por %p43, %p44
    %p46 = scmp.ne.s32.totalorder %s32, %s33
    %p47 = scmp.eq.s32.totalorder %s25, 1
    %p48 = por %p46, %p47
    %p50 = scmp.ne.s32.totalorder %s33, %s49
    %p51 = scmp.eq.s32.totalorder %s25, 0
    %p52 = por %p50, %p51
    %s54 = sadd.s32 %s53, 1
    %p57 = scmp.eq.s32.totalorder %s19, 1
    %p58 = scmp.ne.s32.totalorder %s53, %s55
    %p59 = scmp.eq.s32.totalorder %s19, 0
    %p60 = por %p58, %p59
    %p61 = scmp.ne.s32.totalorder %s53, %s55
    %p62 = scmp.eq.s32.totalorder %s24, 1
    %p63 = por %p61, %p62
    %p64 = scmp.ne.s32.totalorder %s55, %s56
    %p65 = scmp.eq.s32.totalorder %s24, 0
    %p66 = por %p64, %p65
    %p67 = scmp.ne.s32.totalorder %s55, %s56
    %p68 = scmp.eq.s32.totalorder %s25, 1
    %p69 = por %p67, %p68
    %p71 = scmp.ne.s32.totalorder %s56, %s70
    %p72 = scmp.eq.s32.totalorder %s25, 0
    %p73 = por %p71, %p72
    %s75 = sadd.s32 %s74, 1
    %p78 = scmp.eq.s32.totalorder %s19, 1
    %p79 = scmp.ne.s32.totalorder %s74, %s76
    %p80 = scmp.eq.s32.totalorder %s19, 0
    %p81 = por %p79, %p80
    %p82 = scmp.ne.s32.totalorder %s74, %s76
    %p83 = scmp.eq.s32.totalorder %s24, 1
    %p84 = por %p82, %p83
    %p85 = scmp.ne.s32.totalorder %s76, %s77
    %p86 = scmp.eq.s32.totalorder %s24, 0
    %p87 = por %p85, %p86
    %p88 = scmp.ne.s32.totalorder %s76, %s77
    %p89 = scmp.eq.s32.totalorder %s25, 1
    %p90 = por %p88, %p89
    %p92 = scmp.ne.s32.totalorder %s77, %s91
    %p93 = scmp.eq.s32.totalorder %s25, 0
    %p94 = por %p92, %p93
    %s96 = sadd.s32 %s95, 1
    %p99 = scmp.eq.s32.totalorder %s19, 1
    %p100 = scmp.ne.s32.totalorder %s95, %s97
    %p101 = scmp.eq.s32.totalorder %s19, 0
    %p102 = por %p100, %p101
    %p103 = scmp.ne.s32.totalorder %s95, %s97
    %p104 = scmp.eq.s32.totalorder %s24, 1
    %p105 = por %p103, %p104
    %p106 = scmp.ne.s32.totalorder %s97, %s98
    %p107 = scmp.eq.s32.totalorder %s24, 0
    %p108 = por %p106, %p107
    %p109 = scmp.ne.s32.totalorder %s97, %s98
    %p110 = scmp.eq.s32.totalorder %s25, 1
    %p111 = por %p109, %p110
    %p113 = scmp.ne.s32.totalorder %s98, %s112
    %p114 = scmp.eq.s32.totalorder %s25, 0
    %p115 = por %p113, %p114
    %s117 = sadd.s32 %s116, 1
    %p120 = scmp.eq.s32.totalorder %s19, 1
    %p121 = scmp.ne.s32.totalorder %s116, %s118
    %p122 = scmp.eq.s32.totalorder %s19, 0
    %p123 = por %p121, %p122
    %p124 = scmp.ne.s32.totalorder %s116, %s118
    %p125 = scmp.eq.s32.totalorder %s24, 1
    %p126 = por %p124, %p125
    %p127 = scmp.ne.s32.totalorder %s118, %s119
    %p128 = scmp.eq.s32.totalorder %s24, 0
    %p129 = por %p127, %p128
    %p130 = scmp.ne.s32.totalorder %s118, %s119
    %p131 = scmp.eq.s32.totalorder %s25, 1
    %p132 = por %p130, %p131
    %p134 = scmp.ne.s32.totalorder %s119, %s133
    %p135 = scmp.eq.s32.totalorder %s25, 0
    %p136 = por %p134, %p135
    %s138 = sadd.s32 %s137, 1
    %p141 = scmp.eq.s32.totalorder %s19, 1
    %p142 = scmp.ne.s32.totalorder %s137, %s139
    %p143 = scmp.eq.s32.totalorder %s19, 0
    %p144 = por %p142, %p143
    %p145 = scmp.ne.s32.totalorder %s137, %s139
    %p146 = scmp.eq.s32.totalorder %s24, 1
    %p147 = por %p145, %p146
    %p148 = scmp.ne.s32.totalorder %s139, %s140
    %p149 = scmp.eq.s32.totalorder %s24, 0
    %p150 = por %p148, %p149
    %p151 = scmp.ne.s32.totalorder %s139, %s140
    %p152 = scmp.eq.s32.totalorder %s25, 1
    %p153 = por %p151, %p152
    %p155 = scmp.ne.s32.totalorder %s140, %s154
    %p156 = scmp.eq.s32.totalorder %s25, 0
    %p157 = por %p155, %p156
    %s159 = sadd.s32 %s158, 1
    %p162 = scmp.eq.s32.totalorder %s19, 1
    %p163 = scmp.ne.s32.totalorder %s158, %s160
    %p164 = scmp.eq.s32.totalorder %s19, 0
    %p165 = por %p163, %p164
    %p166 = scmp.ne.s32.totalorder %s158, %s160
    %p167 = scmp.eq.s32.totalorder %s24, 1
    %p168 = por %p166, %p167
    %p169 = scmp.ne.s32.totalorder %s160, %s161
    %p170 = scmp.eq.s32.totalorder %s24, 0
    %p171 = por %p169, %p170
    %p172 = scmp.ne.s32.totalorder %s160, %s161
    %p173 = scmp.eq.s32.totalorder %s25, 1
    %p174 = por %p172, %p173
    %p176 = scmp.ne.s32.totalorder %s161, %s175
    %p177 = scmp.eq.s32.totalorder %s25, 0
    %p178 = por %p176, %p177
    %s180 = sadd.s32 %s179, 1
    %p183 = scmp.eq.s32.totalorder %s19, 1
    %p184 = scmp.ne.s32.totalorder %s179, %s181
    %p185 = scmp.eq.s32.totalorder %s19, 0
    %p186 = por %p184, %p185
    %p187 = scmp.ne.s32.totalorder %s179, %s181
    %p188 = scmp.eq.s32.totalorder %s24, 1
    %p189 = por %p187, %p188
    %p190 = scmp.ne.s32.totalorder %s181, %s182
    %p191 = scmp.eq.s32.totalorder %s24, 0
    %p192 = por %p190, %p191
    %p193 = scmp.ne.s32.totalorder %s181, %s182
    %p194 = scmp.eq.s32.totalorder %s25, 1
    %p195 = por %p193, %p194
    %p197 = scmp.ne.s32.totalorder %s182, %s196
    %p198 = scmp.eq.s32.totalorder %s25, 0
    %p199 = por %p197, %p198
    %s201 = sadd.s32 %s200, 1
    %p204 = scmp.eq.s32.totalorder %s19, 1
    %p205 = scmp.ne.s32.totalorder %s200, %s202
    %p206 = scmp.eq.s32.totalorder %s19, 0
    %p207 = por %p205, %p206
    %p208 = scmp.ne.s32.totalorder %s200, %s202
    %p209 = scmp.eq.s32.totalorder %s24, 1
    %p210 = por %p208, %p209
    %p211 = scmp.ne.s32.totalorder %s202, %s203
    %p212 = scmp.eq.s32.totalorder %s24, 0
    %p213 = por %p211, %p212
    %p214 = scmp.ne.s32.totalorder %s202, %s203
    %p215 = scmp.eq.s32.totalorder %s25, 1
    %p216 = por %p214, %p215
    %p218 = scmp.ne.s32.totalorder %s203, %s217
    %p219 = scmp.eq.s32.totalorder %s25, 0
    %p220 = por %p218, %p219
    %s222 = sadd.s32 %s221, 1
    %p225 = scmp.eq.s32.totalorder %s19, 1
    %p226 = scmp.ne.s32.totalorder %s221, %s223
    %p227 = scmp.eq.s32.totalorder %s19, 0
    %p228 = por %p226, %p227
    %p229 = scmp.ne.s32.totalorder %s221, %s223
    %p230 = scmp.eq.s32.totalorder %s24, 1
    %p231 = por %p229, %p230
    %p232 = scmp.ne.s32.totalorder %s223, %s224
    %p233 = scmp.eq.s32.totalorder %s24, 0
    %p234 = por %p232, %p233
    %p235 = scmp.ne.s32.totalorder %s223, %s224
    %p236 = scmp.eq.s32.totalorder %s25, 1
    %p237 = por %p235, %p236
    %p239 = scmp.ne.s32.totalorder %s224, %s238
    %p240 = scmp.eq.s32.totalorder %s25, 0
    %p241 = por %p239, %p240
    %s243 = sadd.s32 %s242, 1
    %p246 = scmp.eq.s32.totalorder %s19, 1
    %p247 = scmp.ne.s32.totalorder %s242, %s244
    %p248 = scmp.eq.s32.totalorder %s19, 0
    %p249 = por %p247, %p248
    %p250 = scmp.ne.s32.totalorder %s242, %s244
    %p251 = scmp.eq.s32.totalorder %s24, 1
    %p252 = por %p250, %p251
    %p253 = scmp.ne.s32.totalorder %s244, %s245
    %p254 = scmp.eq.s32.totalorder %s24, 0
    %p255 = por %p253, %p254
    %p256 = scmp.ne.s32.totalorder %s244, %s245
    %p257 = scmp.eq.s32.totalorder %s25, 1
    %p258 = por %p256, %p257
    %p260 = scmp.ne.s32.totalorder %s245, %s259
    %p261 = scmp.eq.s32.totalorder %s25, 0
    %p262 = por %p260, %p261
    %s264 = sadd.s32 %s263, 1
    %p267 = scmp.eq.s32.totalorder %s19, 1
    %p268 = scmp.ne.s32.totalorder %s263, %s265
    %p269 = scmp.eq.s32.totalorder %s19, 0
    %p270 = por %p268, %p269
    %p271 = scmp.ne.s32.totalorder %s263, %s265
    %p272 = scmp.eq.s32.totalorder %s24, 1
    %p273 = por %p271, %p272
    %p274 = scmp.ne.s32.totalorder %s265, %s266
    %p275 = scmp.eq.s32.totalorder %s24, 0
    %p276 = por %p274, %p275
    %p277 = scmp.ne.s32.totalorder %s265, %s266
    %p278 = scmp.eq.s32.totalorder %s25, 1
    %p279 = por %p277, %p278
    %p281 = scmp.ne.s32.totalorder %s266, %s280
    %p282 = scmp.eq.s32.totalorder %s25, 0
    %p283 = por %p281, %p282
    %s285 = sadd.s32 %s284, 1
    %p288 = scmp.eq.s32.totalorder %s19, 1
    %p289 = scmp.ne.s32.totalorder %s284, %s286
    %p290 = scmp.eq.s32.totalorder %s19, 0
    %p291 = por %p289, %p290
    %p292 = scmp.ne.s32.totalorder %s284, %s286
    %p293 = scmp.eq.s32.totalorder %s24, 1
    %p294 = por %p292, %p293
    %p295 = scmp.ne.s32.totalorder %s286, %s287
    %p296 = scmp.eq.s32.totalorder %s24, 0
    %p297 = por %p295, %p296
    %p298 = scmp.ne.s32.totalorder %s286, %s287
    %p299 = scmp.eq.s32.totalorder %s25, 1
    %p300 = por %p298, %p299
    %p302 = scmp.ne.s32.totalorder %s287, %s301
    %p303 = scmp.eq.s32.totalorder %s25, 0
    %p304 = por %p302, %p303
    %s305 = ssub.s32 %s19, %s26
    %p306 = scmp.eq.s32.totalorder %s305, 0
    %s308 = sadd.s32 %s307, 1
    %s309 = scalar_select %p306, %s307, %s308
    %p312 = pneg %p306
    %p313 = scmp.eq.s32.totalorder %s19, 1
    %p314 = por %p312, %p313
    %p315 = scmp.ne.s32.totalorder %s307, %s310
    %p316 = scmp.eq.s32.totalorder %s19, 0
    %p317 = por %p315, %p316
    %p318 = scmp.ne.s32.totalorder %s307, %s310
    %p319 = scmp.eq.s32.totalorder %s24, 1
    %p320 = por %p318, %p319
    %p321 = scmp.ne.s32.totalorder %s310, %s311
    %p322 = scmp.eq.s32.totalorder %s24, 0
    %p323 = por %p321, %p322
    %p324 = scmp.ne.s32.totalorder %s310, %s311
    %p325 = scmp.eq.s32.totalorder %s25, 1
    %p326 = por %p324, %p325
    %p328 = scmp.ne.s32.totalorder %s311, %s327
    %p329 = scmp.eq.s32.totalorder %s25, 0
    %p330 = por %p328, %p329
    %p331 = scmp.le.s32.totalorder 1, %s19
    %p332 = scmp.lt.s32.totalorder %s19, 3
    %p333 = pnand %p331, %p332
    %p334 = pneg %p333
    // Predicated region
    $region9: #{transformer_forward.5} parent=5 // pred_check
      _
    $region10: #{transformer_forward.5} parent=5 // pred_check_branch
      %336 = sbr.rel (%p333) target = $region12
    $region11: #{transformer_forward.5} parent=5 // pred_region
      %s337 = ssub.s32 %s19, 1
      // Predicated region
      $region13: #{transformer_forward.5} parent=11 // pred_check
        %p338 = pneg %p66
      $region14: #{transformer_forward.5} parent=11 // pred_check_branch
        %340 = sbr.rel (%p338) target = $region16
      $region15: #{transformer_forward.5} parent=11 // pred_region
        _
      $region16: #{transformer_forward.5} parent=11 // pred_fallthru
        _
      // Predicated region
      $region17: #{transformer_forward.5} parent=11 // pred_check
        %p341 = pneg %p87
      $region18: #{transformer_forward.5} parent=11 // pred_check_branch
        %343 = sbr.rel (%p341) target = $region20
      $region19: #{transformer_forward.5} parent=11 // pred_region
        _
      $region20: #{transformer_forward.5} parent=11 // pred_fallthru
        _
      // Predicated region
      $region21: #{transformer_forward.5} parent=11 // pred_check
        %p344 = pneg %p108
      $region22: #{transformer_forward.5} parent=11 // pred_check_branch
        %346 = sbr.rel (%p344) target = $region24
      $region23: #{transformer_forward.5} parent=11 // pred_region
        _
      $region24: #{transformer_forward.5} parent=11 // pred_fallthru
        _
      // Predicated region
      $region25: #{transformer_forward.5} parent=11 // pred_check
        %p347 = pneg %p129
      $region26: #{transformer_forward.5} parent=11 // pred_check_branch
        %349 = sbr.rel (%p347) target = $region28
      $region27: #{transformer_forward.5} parent=11 // pred_region
        _
      $region28: #{transformer_forward.5} parent=11 // pred_fallthru
        _
      // Predicated region
      $region29: #{transformer_forward.5} parent=11 // pred_check
        %p350 = pneg %p150
      $region30: #{transformer_forward.5} parent=11 // pred_check_branch
        %352 = sbr.rel (%p350) target = $region32
      $region31: #{transformer_forward.5} parent=11 // pred_region
        _
      $region32: #{transformer_forward.5} parent=11 // pred_fallthru
        _
      // Predicated region
      $region33: #{transformer_forward.5} parent=11 // pred_check
        %p353 = pneg %p171
      $region34: #{transformer_forward.5} parent=11 // pred_check_branch
        %355 = sbr.rel (%p353) target = $region36
      $region35: #{transformer_forward.5} parent=11 // pred_region
        _
      $region36: #{transformer_forward.5} parent=11 // pred_fallthru
        _
      // Predicated region
      $region37: #{transformer_forward.5} parent=11 // pred_check
        %p356 = pneg %p192
      $region38: #{transformer_forward.5} parent=11 // pred_check_branch
        %358 = sbr.rel (%p356) target = $region40
      $region39: #{transformer_forward.5} parent=11 // pred_region
        _
      $region40: #{transformer_forward.5} parent=11 // pred_fallthru
        _
      // Predicated region
      $region41: #{transformer_forward.5} parent=11 // pred_check
        %p359 = pneg %p213
      $region42: #{transformer_forward.5} parent=11 // pred_check_branch
        %361 = sbr.rel (%p359) target = $region44
      $region43: #{transformer_forward.5} parent=11 // pred_region
        _
      $region44: #{transformer_forward.5} parent=11 // pred_fallthru
        _
      // Predicated region
      $region45: #{transformer_forward.5} parent=11 // pred_check
        %p362 = pneg %p234
      $region46: #{transformer_forward.5} parent=11 // pred_check_branch
        %364 = sbr.rel (%p362) target = $region48
      $region47: #{transformer_forward.5} parent=11 // pred_region
        _
      $region48: #{transformer_forward.5} parent=11 // pred_fallthru
        _
      // Predicated region
      $region49: #{transformer_forward.5} parent=11 // pred_check
        %p365 = pneg %p255
      $region50: #{transformer_forward.5} parent=11 // pred_check_branch
        %367 = sbr.rel (%p365) target = $region52
      $region51: #{transformer_forward.5} parent=11 // pred_region
        _
      $region52: #{transformer_forward.5} parent=11 // pred_fallthru
        _
      // Predicated region
      $region53: #{transformer_forward.5} parent=11 // pred_check
        %p368 = pneg %p276
      $region54: #{transformer_forward.5} parent=11 // pred_check_branch
        %370 = sbr.rel (%p368) target = $region56
      $region55: #{transformer_forward.5} parent=11 // pred_region
        _
      $region56: #{transformer_forward.5} parent=11 // pred_fallthru
        _
      // Predicated region
      $region57: #{transformer_forward.5} parent=11 // pred_check
        %p371 = pneg %p297
      $region58: #{transformer_forward.5} parent=11 // pred_check_branch
        %373 = sbr.rel (%p371) target = $region60
      $region59: #{transformer_forward.5} parent=11 // pred_region
        _
      $region60: #{transformer_forward.5} parent=11 // pred_fallthru
        _
    $region12: #{transformer_forward.5} parent=5 // pred_fallthru
      _
    %p374 = scmp.lt.s32.totalorder %s19, 2
    // Predicated region
    $region61: #{transformer_forward.5} parent=5 // pred_check
      %p375 = pneg %p374
    $region62: #{transformer_forward.5} parent=5 // pred_check_branch
      %377 = sbr.rel (%p375) target = $region64
    $region63: #{transformer_forward.5} parent=5 // pred_region
      // Predicated region
      $region65: #{transformer_forward.5} parent=63 // pred_check
        %p378 = pneg %p39
      $region66: #{transformer_forward.5} parent=63 // pred_check_branch
        %380 = sbr.rel (%p378) target = $region68
      $region67: #{transformer_forward.5} parent=63 // pred_region
        %p381 = scmp.lt.s32.totalorder %s19, 1
        %s382 = scalar_select %p381, %s19, 1
        %s383 = smul.addr %s382, 2
        %s384 = smul.addr %s383, 4
        %s385 = scalar_lea.vmem %s0, %s384
      $region68: #{transformer_forward.5} parent=63 // pred_fallthru
        _
    $region64: #{transformer_forward.5} parent=5 // pred_fallthru
      _
    %p386 = scmp.le.s32.totalorder 1, %s19
    %p387 = scmp.lt.s32.totalorder %s19, 3
    %p388 = pnand %p386, %p387
    %p389 = pneg %p388
    // Predicated region
    $region69: #{transformer_forward.5} parent=5 // pred_check
      _
    $region70: #{transformer_forward.5} parent=5 // pred_check_branch
      %391 = sbr.rel (%p388) target = $region72
    $region71: #{transformer_forward.5} parent=5 // pred_region
      %s392 = ssub.s32 %s19, 1
      %p393 = scmp.lt.s32.totalorder %s24, 1
      %s394 = scalar_select %p393, %s24, 1
      %s395 = smul.addr %s394, 2
      %s396 = smul.addr %s395, 4
      %s397 = scalar_lea.vmem %s0, %s396
      %p398 = pneg %p45
      %p399 = pneg %p42
      %p400 = pneg %p66
      %p401 = pneg %p63
      %p402 = pneg %p87
      %p403 = pneg %p84
      %p404 = pneg %p108
      %p405 = pneg %p105
      %p406 = pneg %p129
      %p407 = pneg %p126
      %p408 = pneg %p150
      %p409 = pneg %p147
      %p410 = pneg %p171
      %p411 = pneg %p168
      %p412 = pneg %p192
      %p413 = pneg %p189
      %p414 = pneg %p213
      %p415 = pneg %p210
      %p416 = pneg %p234
      %p417 = pneg %p231
      %p418 = pneg %p255
      %p419 = pneg %p252
      %p420 = pneg %p276
      %p421 = pneg %p273
      %p422 = pneg %p297
      %p423 = pneg %p294
      %p424 = pneg %p323
      %p425 = pneg %p320
      %p426 = scmp.lt.s32.totalorder %s24, 1
      %s427 = scalar_select %p426, %s24, 1
      %s428 = smul.addr %s427, 2
      %s429 = smul.addr %s428, 4
      %s430 = scalar_lea.vmem %s13, %s429
      %p431 = scmp.lt.s32.totalorder %s24, 1
      %s432 = scalar_select %p431, %s24, 1
      %s433 = smul.addr %s432, 2
      %s434 = smul.addr %s433, 4
      %s435 = scalar_lea.vmem %s0, %s434
      %p436 = scmp.lt.s32.totalorder %s24, 1
      %s437 = scalar_select %p436, %s24, 1
      %s438 = smul.addr %s437, 2
      %s439 = smul.addr %s438, 4
      %s440 = scalar_lea.vmem %s13, %s439
      %v442 = vld [vmem:[%s435] sm:$0xf]
      %v443 = vld [vmem:[%s435 + $0x4] sm:$0xf]
      %v444 = vunpack.c.l.bf16 %v442
      %v445 = vunpack.c.l.bf16 %v443
      %v446 = vld [vmem:[%s1] sm:$0xf]
      %v447 = vld [vmem:[%s1 + $0x4] sm:$0xf]
      %v448 = vld [vmem:[%s1 + $0x8] sm:$0xf]
      %v449 = vld [vmem:[%s1 + $0xc] sm:$0xf]
      %v450 = vld [vmem:[%s2] sm:$0x1]
      %v452 = vperm.slane %v450, 0
      %v456 = vunpack.c.l.b16 %v442
      %v457 = vunpack.c.l.b16 %v443
      %v458 = vpack.c.b16 %v457, %v456
      %v463 = vunpack.c.l.b16 %v446
      %v464 = vunpack.c.l.b16 %v447
      %v465 = vunpack.c.l.b16 %v448
      %v466 = vunpack.c.l.b16 %v449
      %v467 = vpack.c.b16 %v464, %v463
      %v468 = vpack.c.b16 %v466, %v465
      %vm471 = vcmask 261120
      %v473 = vsel %vm471, %v458, 0
      %475 = vmatpush.bf16.msra.mxu0 0
      %476 = vmatpush.bf16.msra.mxu0 0
      %477 = vmatpush.bf16.msra.mxu0 0
      %478 = vmatpush.bf16.msra.mxu0 0
      %479 = vmatpush.bf16.msra.mxu0 0
      %480 = vmatpush.bf16.msra.mxu0 0
      %481 = vmatpush.bf16.msra.mxu0 %v468
      %482 = vmatpush.bf16.msra.mxu0 %v467
      %483 = vmatmul.bf16.gmra.mxu0 %v473
      %v484 = vpop.f32.mrf.mxu0
      %v485 = vadd.f32 %v452, %v484
      %v486 = vpop.f32.mrf.mxu0
      %v487 = vadd.f32 %v452, %v486
      %488 = vdwg.mxu0
      %v489 = vmul.f32 %v485, 0.35355338
      %v490 = vmul.f32 %v487, 0.35355338
      %v491 = vld [vmem:[%s3] sm:$0xf]
      %v492 = vld [vmem:[%s3 + $0x4] sm:$0xf]
      %v493 = vld [vmem:[%s3 + $0x8] sm:$0xf]
      %v494 = vld [vmem:[%s3 + $0xc] sm:$0xf]
      %v495 = vpack.c.bf16 %v490, %v489
      %v496 = vpack.c.bf16 %v487, %v485
      %498 = vrot.lane.b32.xlu0 %v496, 96
      %v499 = vpop.permute.xlu0 %498
      %vm500 = vcmask 64512
      %v502 = vsel %vm500, %v495, 0
      %v505 = vsel %vm500, %v499, 0
      %507 = vmatpush.bf16.xpose.msra.mxu0 0
      %508 = vmatpush.bf16.xpose.msra.mxu0 0
      %509 = vmatpush.bf16.xpose.msra.mxu0 0
      %510 = vmatpush.bf16.xpose.msra.mxu0 0
      %511 = vmatpush.bf16.xpose.msra.mxu0 0
      %512 = vmatpush.bf16.xpose.msra.mxu0 0
      %513 = vmatpush.bf16.xpose.msra.mxu0 0
      %514 = vmatpush.bf16.xpose.msra.mxu0 %v505
      %515 = vmatmul.bf16.gmra.mxu0 %v502
      %v516 = vpop.f32.mrf.mxu0
      %v517 = vadd.f32 0.0, %v516
      %v518 = vpop.f32.mrf.mxu0
      %v519 = vadd.f32 0.0, %v518
      %520 = vdwg.mxu0
      %vm521 = vcmask 130048
      %v522 = vsel %vm521, %v517, -inf
      %523 = vmax.xlane.f32.xlu0 %v522
      %v524 = vpop.xlane.xlu0 %523
      %v525 = vsel %vm521, %v519, -inf
      %526 = vmax.xlane.f32.xlu0 %v525
      %v527 = vpop.xlane.xlu0 %526
      %v528 = vsub.f32 %v517, %v524
      %v529 = vsub.f32 %v519, %v527
      %v530 = vmul.f32 %v528, 1.442695
      %v531 = vpow.pop %v530
      %v532 = vmul.f32 %v529, 1.442695
      %v533 = vpow.pop %v532
      %v534 = vsel %vm521, %v531, 0.0
      %535 = vadd.xlane.f32.xlu0 %v534
      %v536 = vpop.xlane.xlu0 %535
      %v537 = vsel %vm521, %v533, 0.0
      %538 = vadd.xlane.f32.xlu0 %v537
      %v539 = vpop.xlane.xlu0 %538
      %v540 = vpack.c.bf16 %v533, %v531
      %541 = vrot.lane.b32.xlu0 %v496, 64
      %v542 = vpop.permute.xlu0 %541
      %v545 = vsel %vm521, %v540, 0
      %547 = vmatpush.bf16.msra.mxu0 0
      %548 = vmatpush.bf16.msra.mxu0 0
      %549 = vmatpush.bf16.msra.mxu0 0
      %550 = vmatpush.bf16.msra.mxu0 0
      %551 = vmatpush.bf16.msra.mxu0 0
      %552 = vmatpush.bf16.msra.mxu0 0
      %553 = vmatpush.bf16.msra.mxu0 0
      %554 = vmatpush.bf16.msra.mxu0 %v542
      %555 = vmatmul.bf16.gmra.mxu0 %v545
      %v556 = vpop.f32.mrf.mxu0
      %v557 = vadd.f32 0.0, %v556
      %v558 = vpop.f32.mrf.mxu0
      %v559 = vadd.f32 0.0, %v558
      %560 = vdwg.mxu0
      %v561 = vrcp.pop %v536
      %v562 = vrcp.pop %v539
      %v563 = vmul.f32 %v557, %v561
      %v564 = vmul.f32 %v559, %v562
      %v565 = vpack.c.bf16 %v564, %v563
      %567 = vrot.lane.b32.xlu0 %v495, 120
      %v568 = vpop.permute.xlu0 %567
      %569 = vrot.lane.b32.xlu0 %v496, 88
      %v570 = vpop.permute.xlu0 %569
      %v572 = vsel %vm500, %v568, 0
      %v575 = vsel %vm500, %v570, 0
      %577 = vmatpush.bf16.xpose.msra.mxu0 0
      %578 = vmatpush.bf16.xpose.msra.mxu0 0
      %579 = vmatpush.bf16.xpose.msra.mxu0 0
      %580 = vmatpush.bf16.xpose.msra.mxu0 0
      %581 = vmatpush.bf16.xpose.msra.mxu0 0
      %582 = vmatpush.bf16.xpose.msra.mxu0 0
      %583 = vmatpush.bf16.xpose.msra.mxu0 0
      %584 = vmatpush.bf16.xpose.msra.mxu0 %v575
      %585 = vmatmul.bf16.gmra.mxu0 %v572
      %v586 = vpop.f32.mrf.mxu0
      %v587 = vadd.f32 0.0, %v586
      %v588 = vpop.f32.mrf.mxu0
      %v589 = vadd.f32 0.0, %v588
      %590 = vdwg.mxu0
      %v591 = vsel %vm521, %v587, -inf
      %592 = vmax.xlane.f32.xlu0 %v591
      %v593 = vpop.xlane.xlu0 %592
      %v594 = vsel %vm521, %v589, -inf
      %595 = vmax.xlane.f32.xlu0 %v594
      %v596 = vpop.xlane.xlu0 %595
      %v597 = vsub.f32 %v587, %v593
      %v598 = vsub.f32 %v589, %v596
      %v599 = vmul.f32 %v597, 1.442695
      %v600 = vpow.pop %v599
      %v601 = vmul.f32 %v598, 1.442695
      %v602 = vpow.pop %v601
      %v603 = vsel %vm521, %v600, 0.0
      %604 = vadd.xlane.f32.xlu0 %v603
      %v605 = vpop.xlane.xlu0 %604
      %v606 = vsel %vm521, %v602, 0.0
      %607 = vadd.xlane.f32.xlu0 %v606
      %v608 = vpop.xlane.xlu0 %607
      %v609 = vpack.c.bf16 %v602, %v600
      %610 = vrot.lane.b32.xlu0 %v496, 56
      %v611 = vpop.permute.xlu0 %610
      %v614 = vsel %vm521, %v609, 0
      %616 = vmatpush.bf16.msra.mxu0 0
      %617 = vmatpush.bf16.msra.mxu0 0
      %618 = vmatpush.bf16.msra.mxu0 0
      %619 = vmatpush.bf16.msra.mxu0 0
      %620 = vmatpush.bf16.msra.mxu0 0
      %621 = vmatpush.bf16.msra.mxu0 0
      %622 = vmatpush.bf16.msra.mxu0 0
      %623 = vmatpush.bf16.msra.mxu0 %v611
      %624 = vmatmul.bf16.gmra.mxu0 %v614
      %v625 = vpop.f32.mrf.mxu0
      %v626 = vadd.f32 0.0, %v625
      %v627 = vpop.f32.mrf.mxu0
      %v628 = vadd.f32 0.0, %v627
      %629 = vdwg.mxu0
      %v630 = vrcp.pop %v605
      %v631 = vrcp.pop %v608
      %v632 = vmul.f32 %v626, %v630
      %v633 = vmul.f32 %v628, %v631
      %v634 = vpack.c.bf16 %v633, %v632
      %v636 = vsel %vm500, %v634, 0
      %vm638 = vcmask 1043456
      %v640 = vsel %vm638, %v492, 0
      %642 = vmatpush.bf16.msra.mxu0 0
      %643 = vmatpush.bf16.msra.mxu0 0
      %644 = vmatpush.bf16.msra.mxu0 0
      %645 = vmatpush.bf16.msra.mxu0 0
      %646 = vmatpush.bf16.msra.mxu0 0
      %647 = vmatpush.bf16.msra.mxu0 0
      %648 = vmatpush.bf16.msra.mxu0 0
      %649 = vmatpush.bf16.msra.mxu0 %v640
      %650 = vmatmul.bf16.gmra.mxu0 %v636
      %v651 = vpop.f32.mrf.mxu0
      %v652 = vadd.f32 0.0, %v651
      %v653 = vpop.f32.mrf.mxu0
      %v654 = vadd.f32 0.0, %v653
      %655 = vdwg.mxu0
      %v657 = vsel %vm500, %v565, 0
      %v660 = vsel %vm638, %v491, 0
      %662 = vmatpush.bf16.msra.mxu0 0
      %663 = vmatpush.bf16.msra.mxu0 0
      %664 = vmatpush.bf16.msra.mxu0 0
      %665 = vmatpush.bf16.msra.mxu0 0
      %666 = vmatpush.bf16.msra.mxu0 0
      %667 = vmatpush.bf16.msra.mxu0 0
      %668 = vmatpush.bf16.msra.mxu0 0
      %669 = vmatpush.bf16.msra.mxu0 %v660
      %670 = vmatmul.bf16.gmra.mxu0 %v657
      %v671 = vpop.f32.mrf.mxu0
      %v672 = vadd.f32 %v652, %v671
      %v673 = vpop.f32.mrf.mxu0
      %v674 = vadd.f32 %v654, %v673
      %675 = vdwg.mxu0
      %676 = vrot.lane.b32.xlu0 %v495, 112
      %v677 = vpop.permute.xlu0 %676
      %678 = vrot.lane.b32.xlu0 %v496, 80
      %v679 = vpop.permute.xlu0 %678
      %v681 = vsel %vm500, %v677, 0
      %v684 = vsel %vm500, %v679, 0
      %686 = vmatpush.bf16.xpose.msra.mxu0 0
      %687 = vmatpush.bf16.xpose.msra.mxu0 0
      %688 = vmatpush.bf16.xpose.msra.mxu0 0
      %689 = vmatpush.bf16.xpose.msra.mxu0 0
      %690 = vmatpush.bf16.xpose.msra.mxu0 0
      %691 = vmatpush.bf16.xpose.msra.mxu0 0
      %692 = vmatpush.bf16.xpose.msra.mxu0 0
      %693 = vmatpush.bf16.xpose.msra.mxu0 %v684
      %694 = vmatmul.bf16.gmra.mxu0 %v681
      %v695 = vpop.f32.mrf.mxu0
      %v696 = vadd.f32 0.0, %v695
      %v697 = vpop.f32.mrf.mxu0
      %v698 = vadd.f32 0.0, %v697
      %699 = vdwg.mxu0
      %v700 = vsel %vm521, %v696, -inf
      %701 = vmax.xlane.f32.xlu0 %v700
      %v702 = vpop.xlane.xlu0 %701
      %v703 = vsel %vm521, %v698, -inf
      %704 = vmax.xlane.f32.xlu0 %v703
      %v705 = vpop.xlane.xlu0 %704
      %v706 = vsub.f32 %v696, %v702
      %v707 = vsub.f32 %v698, %v705
      %v708 = vmul.f32 %v706, 1.442695
      %v709 = vpow.pop %v708
      %v710 = vmul.f32 %v707, 1.442695
      %v711 = vpow.pop %v710
      %v712 = vsel %vm521, %v709, 0.0
      %713 = vadd.xlane.f32.xlu0 %v712
      %v714 = vpop.xlane.xlu0 %713
      %v715 = vsel %vm521, %v711, 0.0
      %716 = vadd.xlane.f32.xlu0 %v715
      %v717 = vpop.xlane.xlu0 %716
      %v718 = vpack.c.bf16 %v711, %v709
      %719 = vrot.lane.b32.xlu0 %v496, 48
      %v720 = vpop.permute.xlu0 %719
      %v723 = vsel %vm521, %v718, 0
      %725 = vmatpush.bf16.msra.mxu0 0
      %726 = vmatpush.bf16.msra.mxu0 0
      %727 = vmatpush.bf16.msra.mxu0 0
      %728 = vmatpush.bf16.msra.mxu0 0
      %729 = vmatpush.bf16.msra.mxu0 0
      %730 = vmatpush.bf16.msra.mxu0 0
      %731 = vmatpush.bf16.msra.mxu0 0
      %732 = vmatpush.bf16.msra.mxu0 %v720
      %733 = vmatmul.bf16.gmra.mxu0 %v723
      %v734 = vpop.f32.mrf.mxu0
      %v735 = vadd.f32 0.0, %v734
      %v736 = vpop.f32.mrf.mxu0
      %v737 = vadd.f32 0.0, %v736
      %738 = vdwg.mxu0
      %v739 = vrcp.pop %v714
      %v740 = vrcp.pop %v717
      %v741 = vmul.f32 %v735, %v739
      %v742 = vmul.f32 %v737, %v740
      %v743 = vpack.c.bf16 %v742, %v741
      %v745 = vsel %vm500, %v743, 0
      %v748 = vsel %vm638, %v493, 0
      %750 = vmatpush.bf16.msra.mxu0 0
      %751 = vmatpush.bf16.msra.mxu0 0
      %752 = vmatpush.bf16.msra.mxu0 0
      %753 = vmatpush.bf16.msra.mxu0 0
      %754 = vmatpush.bf16.msra.mxu0 0
      %755 = vmatpush.bf16.msra.mxu0 0
      %756 = vmatpush.bf16.msra.mxu0 0
      %757 = vmatpush.bf16.msra.mxu0 %v748
      %758 = vmatmul.bf16.gmra.mxu0 %v745
      %v759 = vpop.f32.mrf.mxu0
      %v760 = vadd.f32 0.0, %v759
      %v761 = vpop.f32.mrf.mxu0
      %v762 = vadd.f32 0.0, %v761
      %763 = vdwg.mxu0
      %v764 = vadd.f32 %v672, %v760
      %v765 = vadd.f32 %v674, %v762
      %766 = vrot.lane.b32.xlu0 %v495, 104
      %v767 = vpop.permute.xlu0 %766
      %768 = vrot.lane.b32.xlu0 %v496, 72
      %v769 = vpop.permute.xlu0 %768
      %v771 = vsel %vm500, %v767, 0
      %v774 = vsel %vm500, %v769, 0
      %776 = vmatpush.bf16.xpose.msra.mxu0 0
      %777 = vmatpush.bf16.xpose.msra.mxu0 0
      %778 = vmatpush.bf16.xpose.msra.mxu0 0
      %779 = vmatpush.bf16.xpose.msra.mxu0 0
      %780 = vmatpush.bf16.xpose.msra.mxu0 0
      %781 = vmatpush.bf16.xpose.msra.mxu0 0
      %782 = vmatpush.bf16.xpose.msra.mxu0 0
      %783 = vmatpush.bf16.xpose.msra.mxu0 %v774
      %784 = vmatmul.bf16.gmra.mxu0 %v771
      %v785 = vpop.f32.mrf.mxu0
      %v786 = vadd.f32 0.0, %v785
      %v787 = vpop.f32.mrf.mxu0
      %v788 = vadd.f32 0.0, %v787
      %789 = vdwg.mxu0
      %v790 = vsel %vm521, %v786, -inf
      %791 = vmax.xlane.f32.xlu0 %v790
      %v792 = vpop.xlane.xlu0 %791
      %v793 = vsel %vm521, %v788, -inf
      %794 = vmax.xlane.f32.xlu0 %v793
      %v795 = vpop.xlane.xlu0 %794
      %v796 = vsub.f32 %v786, %v792
      %v797 = vsub.f32 %v788, %v795
      %v798 = vmul.f32 %v796, 1.442695
      %v799 = vpow.pop %v798
      %v800 = vmul.f32 %v797, 1.442695
      %v801 = vpow.pop %v800
      %v802 = vsel %vm521, %v799, 0.0
      %803 = vadd.xlane.f32.xlu0 %v802
      %v804 = vpop.xlane.xlu0 %803
      %v805 = vsel %vm521, %v801, 0.0
      %806 = vadd.xlane.f32.xlu0 %v805
      %v807 = vpop.xlane.xlu0 %806
      %v808 = vpack.c.bf16 %v801, %v799
      %809 = vrot.lane.b32.xlu0 %v496, 40
      %v810 = vpop.permute.xlu0 %809
      %v813 = vsel %vm521, %v808, 0
      %815 = vmatpush.bf16.msra.mxu0 0
      %816 = vmatpush.bf16.msra.mxu0 0
      %817 = vmatpush.bf16.msra.mxu0 0
      %818 = vmatpush.bf16.msra.mxu0 0
      %819 = vmatpush.bf16.msra.mxu0 0
      %820 = vmatpush.bf16.msra.mxu0 0
      %821 = vmatpush.bf16.msra.mxu0 0
      %822 = vmatpush.bf16.msra.mxu0 %v810
      %823 = vmatmul.bf16.gmra.mxu0 %v813
      %v824 = vpop.f32.mrf.mxu0
      %v825 = vadd.f32 0.0, %v824
      %v826 = vpop.f32.mrf.mxu0
      %v827 = vadd.f32 0.0, %v826
      %828 = vdwg.mxu0
      %v829 = vrcp.pop %v804
      %v830 = vrcp.pop %v807
      %v831 = vmul.f32 %v825, %v829
      %v832 = vmul.f32 %v827, %v830
      %v833 = vpack.c.bf16 %v832, %v831
      %v835 = vsel %vm500, %v833, 0
      %v838 = vsel %vm638, %v494, 0
      %840 = vmatpush.bf16.msra.mxu0 0
      %841 = vmatpush.bf16.msra.mxu0 0
      %842 = vmatpush.bf16.msra.mxu0 0
      %843 = vmatpush.bf16.msra.mxu0 0
      %844 = vmatpush.bf16.msra.mxu0 0
      %845 = vmatpush.bf16.msra.mxu0 0
      %846 = vmatpush.bf16.msra.mxu0 0
      %847 = vmatpush.bf16.msra.mxu0 %v838
      %848 = vmatmul.bf16.gmra.mxu0 %v835
      %v849 = vpop.f32.mrf.mxu0
      %v850 = vadd.f32 0.0, %v849
      %v851 = vpop.f32.mrf.mxu0
      %v852 = vadd.f32 0.0, %v851
      %853 = vdwg.mxu0
      %v854 = vadd.f32 %v764, %v850
      %v855 = vadd.f32 %v765, %v852
      %v856 = vadd.f32 %v444, %v854
      %v857 = vadd.f32 %v445, %v855
      %v858 = vld [vmem:[%s4] sm:$0x1]
      %v860 = vperm.slane %v858, 0
      %v862 = vadd.f32 %v856, %v860
      %v863 = vadd.f32 %v857, %v860
      %v864 = vld [vmem:[%s5] sm:$0x1]
      %v865 = vld [vmem:[%s6] sm:$0x1]
      %v866 = vsel %vm471, %v862, 0.0
      %867 = vadd.xlane.f32.xlu0 %v866
      %v868 = vpop.xlane.xlu0 %867
      %v869 = vsel %vm471, %v863, 0.0
      %870 = vadd.xlane.f32.xlu0 %v869
      %v871 = vpop.xlane.xlu0 %870
      %v872 = vrcp.pop 32.0
      %v873 = vmul.f32 32.0, %v872
      %v874 = vsub.f32 1.0, %v873
      %v875 = vmul.f32 %v872, %v874
      %v876 = vadd.f32 %v872, %v875
      %vm877 = vweird.f32 %v872
      %v878 = vsel %vm877, %v872, %v876
      %v879 = vmul.f32 %v868, %v878
      %v880 = vmul.f32 %v871, %v878
      %v881 = vsub.f32 %v862, %v879
      %v882 = vsub.f32 %v863, %v880
      %v883 = vmul.f32 %v881, %v881
      %v884 = vmul.f32 %v882, %v882
      %v885 = vsel %vm471, %v883, 0.0
      %886 = vadd.xlane.f32.xlu0 %v885
      %v887 = vpop.xlane.xlu0 %886
      %v888 = vsel %vm471, %v884, 0.0
      %889 = vadd.xlane.f32.xlu0 %v888
      %v890 = vpop.xlane.xlu0 %889
      %v891 = vmul.f32 %v887, %v878
      %v892 = vmul.f32 %v890, %v878
      %v893 = vadd.f32 %v891, 1e-05
      %v894 = vadd.f32 %v892, 1e-05
      %v895 = vrsqrt.pop %v893
      %v896 = vmul.f32 %v895, %v893
      %v897 = vmul.f32 %v896, %v895
      %v898 = vmul.f32 0.5, %v897
      %v899 = vsub.f32 1.5, %v898
      %v900 = vmul.f32 %v895, %v899
      %vm901 = vweird.f32 %v893
      %vm902 = vweird.f32 %v895
      %vm903 = vmor %vm901, %vm902
      %v904 = vsel %vm903, %v895, %v900
      %v905 = vrsqrt.pop %v894
      %v906 = vmul.f32 %v905, %v894
      %v907 = vmul.f32 %v906, %v905
      %v908 = vmul.f32 0.5, %v907
      %v909 = vsub.f32 1.5, %v908
      %v910 = vmul.f32 %v905, %v909
      %vm911 = vweird.f32 %v894
      %vm912 = vweird.f32 %v905
      %vm913 = vmor %vm911, %vm912
      %v914 = vsel %vm913, %v905, %v910
      %v915 = vmul.f32 %v881, %v904
      %v916 = vmul.f32 %v882, %v914
      %v918 = vperm.slane %v864, 0
      %v920 = vmul.f32 %v915, %v918
      %v921 = vmul.f32 %v916, %v918
      %v923 = vperm.slane %v865, 0
      %v925 = vadd.f32 %v920, %v923
      %v926 = vadd.f32 %v921, %v923
      %v927 = vpack.c.bf16 %v926, %v925
      %v928 = vld [vmem:[%s7] sm:$0xf]
      %v929 = vld [vmem:[%s7 + $0x4] sm:$0xf]
      %v930 = vld [vmem:[%s7 + $0x8] sm:$0xf]
      %v931 = vld [vmem:[%s7 + $0xc] sm:$0xf]
      %v932 = vld [vmem:[%s8] sm:$0x1]
      %v934 = vperm.slane %v932, 0
      %v940 = vunpack.c.l.b16 %v928
      %v941 = vunpack.c.l.b16 %v929
      %v942 = vunpack.c.l.b16 %v930
      %v943 = vunpack.c.l.b16 %v931
      %v944 = vpack.c.b16 %v941, %v940
      %v945 = vpack.c.b16 %v943, %v942
      %v949 = vsel %vm471, %v927, 0
      %951 = vmatpush.bf16.msra.mxu0 0
      %952 = vmatpush.bf16.msra.mxu0 0
      %953 = vmatpush.bf16.msra.mxu0 0
      %954 = vmatpush.bf16.msra.mxu0 0
      %955 = vmatpush.bf16.msra.mxu0 0
      %956 = vmatpush.bf16.msra.mxu0 0
      %957 = vmatpush.bf16.msra.mxu0 %v945
      %958 = vmatpush.bf16.msra.mxu0 %v944
      %959 = vmatmul.bf16.gmra.mxu0 %v949
      %v960 = vpop.f32.mrf.mxu0
      %v961 = vadd.f32 %v934, %v960
      %v962 = vpop.f32.mrf.mxu0
      %v963 = vadd.f32 %v934, %v962
      %964 = vdwg.mxu0
      %v965 = vmax.f32 %v961, 0.0
      %v966 = vmax.f32 %v963, 0.0
      %v967 = vpack.c.bf16 %v966, %v965
      %v968 = vld [vmem:[%s9] sm:$0xf]
      %v969 = vld [vmem:[%s9 + $0x4] sm:$0xf]
      %v970 = vld [vmem:[%s9 + $0x8] sm:$0xf]
      %v971 = vld [vmem:[%s9 + $0xc] sm:$0xf]
      %v972 = vld [vmem:[%s9 + $0x10] sm:$0xf]
      %v973 = vld [vmem:[%s9 + $0x14] sm:$0xf]
      %v974 = vld [vmem:[%s9 + $0x18] sm:$0xf]
      %v975 = vld [vmem:[%s9 + $0x1c] sm:$0xf]
      %v976 = vld [vmem:[%s10] sm:$0x1]
      %v978 = vperm.slane %v976, 0
      %v988 = vunpack.c.l.b16 %v968
      %v989 = vunpack.c.l.b16 %v969
      %v990 = vunpack.c.l.b16 %v970
      %v991 = vunpack.c.l.b16 %v971
      %v992 = vunpack.c.l.b16 %v972
      %v993 = vunpack.c.l.b16 %v973
      %v994 = vunpack.c.l.b16 %v974
      %v995 = vunpack.c.l.b16 %v975
      %v996 = vpack.c.b16 %v989, %v988
      %v997 = vpack.c.b16 %v991, %v990
      %v998 = vpack.c.b16 %v993, %v992
      %v999 = vpack.c.b16 %v995, %v994
      %vm1004 = vcmask 523264
      %v1006 = vsel %vm1004, %v967, 0
      %1008 = vmatpush.bf16.msra.mxu0 0
      %1009 = vmatpush.bf16.msra.mxu0 0
      %1010 = vmatpush.bf16.msra.mxu0 0
      %1011 = vmatpush.bf16.msra.mxu0 0
      %1012 = vmatpush.bf16.msra.mxu0 %v999
      %1013 = vmatpush.bf16.msra.mxu0 %v998
      %1014 = vmatpush.bf16.msra.mxu0 %v997
      %1015 = vmatpush.bf16.msra.mxu0 %v996
      %1016 = vmatmul.bf16.gmra.mxu0 %v1006
      %v1017 = vpop.f32.mrf.mxu0
      %v1018 = vadd.f32 %v978, %v1017
      %v1019 = vpop.f32.mrf.mxu0
      %v1020 = vadd.f32 %v978, %v1019
      %1021 = vdwg.mxu0
      %v1022 = vadd.f32 %v925, %v1018
      %v1023 = vadd.f32 %v926, %v1020
      %v1024 = vld [vmem:[%s11] sm:$0x1]
      %v1025 = vld [vmem:[%s12] sm:$0x1]
      %v1026 = vsel %vm471, %v1022, 0.0
      %1027 = vadd.xlane.f32.xlu0 %v1026
      %v1028 = vpop.xlane.xlu0 %1027
      %v1029 = vsel %vm471, %v1023, 0.0
      %1030 = vadd.xlane.f32.xlu0 %v1029
      %v1031 = vpop.xlane.xlu0 %1030
      %v1032 = vmul.f32 %v1028, %v878
      %v1033 = vmul.f32 %v1031, %v878
      %v1034 = vsub.f32 %v1022, %v1032
      %v1035 = vsub.f32 %v1023, %v1033
      %v1036 = vmul.f32 %v1034, %v1034
      %v1037 = vmul.f32 %v1035, %v1035
      %v1038 = vsel %vm471, %v1036, 0.0
      %1039 = vadd.xlane.f32.xlu0 %v1038
      %v1040 = vpop.xlane.xlu0 %1039
      %v1041 = vsel %vm471, %v1037, 0.0
      %1042 = vadd.xlane.f32.xlu0 %v1041
      %v1043 = vpop.xlane.xlu0 %1042
      %v1044 = vmul.f32 %v1040, %v878
      %v1045 = vmul.f32 %v1043, %v878
      %v1046 = vadd.f32 %v1044, 1e-05
      %v1047 = vadd.f32 %v1045, 1e-05
      %v1048 = vrsqrt.pop %v1046
      %v1049 = vmul.f32 %v1048, %v1046
      %v1050 = vmul.f32 %v1049, %v1048
      %v1051 = vmul.f32 0.5, %v1050
      %v1052 = vsub.f32 1.5, %v1051
      %v1053 = vmul.f32 %v1048, %v1052
      %vm1054 = vweird.f32 %v1046
      %vm1055 = vweird.f32 %v1048
      %vm1056 = vmor %vm1054, %vm1055
      %v1057 = vsel %vm1056, %v1048, %v1053
      %v1058 = vrsqrt.pop %v1047
      %v1059 = vmul.f32 %v1058, %v1047
      %v1060 = vmul.f32 %v1059, %v1058
      %v1061 = vmul.f32 0.5, %v1060
      %v1062 = vsub.f32 1.5, %v1061
      %v1063 = vmul.f32 %v1058, %v1062
      %vm1064 = vweird.f32 %v1047
      %vm1065 = vweird.f32 %v1058
      %vm1066 = vmor %vm1064, %vm1065
      %v1067 = vsel %vm1066, %v1058, %v1063
      %v1068 = vmul.f32 %v1034, %v1057
      %v1069 = vmul.f32 %v1035, %v1067
      %v1071 = vperm.slane %v1024, 0
      %v1073 = vmul.f32 %v1068, %v1071
      %v1074 = vmul.f32 %v1069, %v1071
      %v1076 = vperm.slane %v1025, 0
      %v1078 = vadd.f32 %v1073, %v1076
      %v1079 = vadd.f32 %v1074, %v1076
      %v1080 = vpack.c.bf16 %v1078, %v1078
      %v1081 = vpack.c.bf16 %v1079, %v1079
      %vm1082 = vcmask 257024
      %1083 = vst.msk [vmem:[%s440] sm:$0xf] %vm1082, %v1080
      %1084 = vst.msk [vmem:[%s440 + $0x4] sm:$0xf] %vm1082, %v1081
      %p1085 = scmp.lt.s32.totalorder %s24, 1
      %s1086 = scalar_select %p1085, %s24, 1
      %s1087 = smul.addr %s1086, 2
      %s1088 = smul.addr %s1087, 4
      %s1089 = scalar_lea.vmem %s13, %s1088
      // Predicated region
      $region73: #{transformer_forward.5} parent=71 // pred_check
        %p1090 = pneg %p320
      $region74: #{transformer_forward.5} parent=71 // pred_check_branch
        %1092 = sbr.rel (%p1090) target = $region76
      $region75: #{transformer_forward.5} parent=71 // pred_region
        _
      $region76: #{transformer_forward.5} parent=71 // pred_fallthru
        _
    $region72: #{transformer_forward.5} parent=5 // pred_fallthru
      _
    %p1093 = scmp.le.s32.totalorder 2, %s19
    // Predicated region
    $region77: #{transformer_forward.5} parent=5 // pred_check
      %p1094 = pneg %p1093
    $region78: #{transformer_forward.5} parent=5 // pred_check_branch
      %1096 = sbr.rel (%p1094) target = $region80
    $region79: #{transformer_forward.5} parent=5 // pred_region
      %s1097 = ssub.s32 %s19, 2
      // Predicated region
      $region81: #{transformer_forward.5} parent=79 // pred_check
        %p1098 = pneg %p326
      $region82: #{transformer_forward.5} parent=79 // pred_check_branch
        %1100 = sbr.rel (%p1098) target = $region84
      $region83: #{transformer_forward.5} parent=79 // pred_region
        %p1101 = scmp.lt.s32.totalorder %s25, 1
        %s1102 = scalar_select %p1101, %s25, 1
        %s1103 = smul.addr %s1102, 2
        %s1104 = smul.addr %s1103, 4
        %s1105 = scalar_lea.vmem %s13, %s1104
      $region84: #{transformer_forward.5} parent=79 // pred_fallthru
        _
    $region80: #{transformer_forward.5} parent=5 // pred_fallthru
      _
  $region6: #{transformer_forward.5} parent=0 // loop_footer
    %s23 = sadd.s32 1, %s19
  $region7: #{transformer_forward.5} parent=0 // loop_footer_branch
    %18 = sbr.rel target = $region3
  $region8: #{transformer_forward.5} parent=0 // loop_exit
    _

// kernel: transformer_forward.6
$region0: #{transformer_forward.6}
  #allocation0 [shape = 'u32[]', space=smem, size = 0x4, offset = 0x4, fixed_abs, tag = 'smem constant byte address 0x4 - core index']
  #allocation1 [shape = 'u32[72,128]{1,0:T(1,128)}', space=vmem, size = 0x9000, scoped, tag = 'internal scratch']
  %s0 = inlined_call_operand.vmem [shape: bf16[2,16,32], index: 0, kind: input, shape index: {}]
  %s1 = inlined_call_operand.vmem [shape: bf16[32,96], index: 1, kind: input, shape index: {}]
  %s2 = inlined_call_operand.vmem [shape: f32[1,96], index: 2, kind: input, shape index: {}]
  %s3 = inlined_call_operand.vmem [shape: bf16[32,32], index: 3, kind: input, shape index: {}]
  %s4 = inlined_call_operand.vmem [shape: f32[1,32], index: 4, kind: input, shape index: {}]
  %s5 = inlined_call_operand.vmem [shape: f32[1,32], index: 5, kind: input, shape index: {}]
  %s6 = inlined_call_operand.vmem [shape: f32[1,32], index: 6, kind: input, shape index: {}]
  %s7 = inlined_call_operand.vmem [shape: bf16[32,64], index: 7, kind: input, shape index: {}]
  %s8 = inlined_call_operand.vmem [shape: f32[1,64], index: 8, kind: input, shape index: {}]
  %s9 = inlined_call_operand.vmem [shape: bf16[64,32], index: 9, kind: input, shape index: {}]
  %s10 = inlined_call_operand.vmem [shape: f32[1,32], index: 10, kind: input, shape index: {}]
  %s11 = inlined_call_operand.vmem [shape: f32[1,32], index: 11, kind: input, shape index: {}]
  %s12 = inlined_call_operand.vmem [shape: f32[1,32], index: 12, kind: input, shape index: {}]
  %s13 = inlined_call_operand.vmem [shape: f32[1,32], index: 13, kind: input, shape index: {}]
  %s14 = inlined_call_operand.vmem [shape: f32[1,32], index: 14, kind: input, shape index: {}]
  %s15 = inlined_call_operand.vmem [shape: bf16[2,16,32], index: 15, kind: output, shape index: {}]
  %s16 = sld [smem:[#allocation0]]
  $region93: #{transformer_forward.6} parent=0
    _
  %s18 = ssub.s32 1, %s16
  %s19 = scalar_select 0, %s18, %s16
  loop: start=0, step=1, limit=4
  $region2: #{transformer_forward.6} parent=0 // loop_pre_header
    _
  $region3: #{transformer_forward.6} parent=0 // loop_header
    %s21 = sphi 0, %s25
    %p22 = scmp.ge.s32.totalorder %s21, 4
    %s31 = sphi 0, %s33
    %s34 = sphi 0, %s31
    %s35 = sphi 0, %s34
    %s51 = sphi 0, %s35
    %s55 = sphi 0, %s55
    %s57 = sphi 0, %s55
    %s58 = sphi 0, %s57
    %s72 = sphi 0, %s58
    %s76 = sphi 0, %s76
    %s78 = sphi 0, %s76
    %s79 = sphi 0, %s78
    %s93 = sphi 0, %s79
    %s97 = sphi 0, %s97
    %s99 = sphi 0, %s97
    %s100 = sphi 0, %s99
    %s114 = sphi 0, %s100
    %s118 = sphi 0, %s118
    %s120 = sphi 0, %s118
    %s121 = sphi 0, %s120
    %s135 = sphi 0, %s121
    %s139 = sphi 0, %s139
    %s141 = sphi 0, %s139
    %s142 = sphi 0, %s141
    %s156 = sphi 0, %s142
    %s160 = sphi 0, %s160
    %s162 = sphi 0, %s160
    %s163 = sphi 0, %s162
    %s177 = sphi 0, %s163
    %s181 = sphi 0, %s181
    %s183 = sphi 0, %s181
    %s184 = sphi 0, %s183
    %s198 = sphi 0, %s184
    %s202 = sphi 0, %s202
    %s204 = sphi 0, %s202
    %s205 = sphi 0, %s204
    %s219 = sphi 0, %s205
    %s223 = sphi 0, %s223
    %s225 = sphi 0, %s223
    %s226 = sphi 0, %s225
    %s240 = sphi 0, %s226
    %s244 = sphi 0, %s244
    %s246 = sphi 0, %s244
    %s247 = sphi 0, %s246
    %s261 = sphi 0, %s247
    %s265 = sphi 0, %s265
    %s267 = sphi 0, %s265
    %s268 = sphi 0, %s267
    %s282 = sphi 0, %s268
    %s286 = sphi 0, %s286
    %s288 = sphi 0, %s286
    %s289 = sphi 0, %s288
    %s303 = sphi 0, %s289
    %s307 = sphi 0, %s307
    %s309 = sphi 0, %s307
    %s310 = sphi 0, %s309
    %s324 = sphi 0, %s310
    %s328 = sphi 0, %s328
    %s330 = sphi 0, %s328
    %s331 = sphi 0, %s330
    %s345 = sphi 0, %s331
    %s351 = sphi 0, %s353
    %s354 = sphi 0, %s351
    %s355 = sphi 0, %s354
    %s371 = sphi 0, %s355
  $region4: #{transformer_forward.6} parent=0 // loop_header_branch
    %24 = sbr.rel (%p22) target = $region8
  $region5: #{transformer_forward.6} parent=0 // loop_body
    %s26 = ssub.s32 %s21, 1
    %s27 = ssub.s32 %s21, 2
    %s28 = sadd.s32 %s21, 1
    %s29 = ssub.s32 %s21, %s28
    %p30 = scmp.eq.s32.totalorder %s29, 0
    %s32 = sadd.s32 %s31, 1
    %s33 = scalar_select %p30, %s31, %s32
    %p36 = pneg %p30
    %p37 = scmp.eq.s32.totalorder %s21, 1
    %p38 = por %p36, %p37
    %p39 = scmp.ne.s32.totalorder %s31, %s34
    %p40 = scmp.eq.s32.totalorder %s21, 0
    %p41 = por %p39, %p40
    %p42 = scmp.ne.s32.totalorder %s31, %s34
    %p43 = scmp.eq.s32.totalorder %s26, 1
    %p44 = por %p42, %p43
    %p45 = scmp.ne.s32.totalorder %s34, %s35
    %p46 = scmp.eq.s32.totalorder %s26, 0
    %p47 = por %p45, %p46
    %p48 = scmp.ne.s32.totalorder %s34, %s35
    %p49 = scmp.eq.s32.totalorder %s27, 1
    %p50 = por %p48, %p49
    %p52 = scmp.ne.s32.totalorder %s35, %s51
    %p53 = scmp.eq.s32.totalorder %s27, 0
    %p54 = por %p52, %p53
    %s56 = sadd.s32 %s55, 1
    %p59 = scmp.eq.s32.totalorder %s21, 1
    %p60 = scmp.ne.s32.totalorder %s55, %s57
    %p61 = scmp.eq.s32.totalorder %s21, 0
    %p62 = por %p60, %p61
    %p63 = scmp.ne.s32.totalorder %s55, %s57
    %p64 = scmp.eq.s32.totalorder %s26, 1
    %p65 = por %p63, %p64
    %p66 = scmp.ne.s32.totalorder %s57, %s58
    %p67 = scmp.eq.s32.totalorder %s26, 0
    %p68 = por %p66, %p67
    %p69 = scmp.ne.s32.totalorder %s57, %s58
    %p70 = scmp.eq.s32.totalorder %s27, 1
    %p71 = por %p69, %p70
    %p73 = scmp.ne.s32.totalorder %s58, %s72
    %p74 = scmp.eq.s32.totalorder %s27, 0
    %p75 = por %p73, %p74
    %s77 = sadd.s32 %s76, 1
    %p80 = scmp.eq.s32.totalorder %s21, 1
    %p81 = scmp.ne.s32.totalorder %s76, %s78
    %p82 = scmp.eq.s32.totalorder %s21, 0
    %p83 = por %p81, %p82
    %p84 = scmp.ne.s32.totalorder %s76, %s78
    %p85 = scmp.eq.s32.totalorder %s26, 1
    %p86 = por %p84, %p85
    %p87 = scmp.ne.s32.totalorder %s78, %s79
    %p88 = scmp.eq.s32.totalorder %s26, 0
    %p89 = por %p87, %p88
    %p90 = scmp.ne.s32.totalorder %s78, %s79
    %p91 = scmp.eq.s32.totalorder %s27, 1
    %p92 = por %p90, %p91
    %p94 = scmp.ne.s32.totalorder %s79, %s93
    %p95 = scmp.eq.s32.totalorder %s27, 0
    %p96 = por %p94, %p95
    %s98 = sadd.s32 %s97, 1
    %p101 = scmp.eq.s32.totalorder %s21, 1
    %p102 = scmp.ne.s32.totalorder %s97, %s99
    %p103 = scmp.eq.s32.totalorder %s21, 0
    %p104 = por %p102, %p103
    %p105 = scmp.ne.s32.totalorder %s97, %s99
    %p106 = scmp.eq.s32.totalorder %s26, 1
    %p107 = por %p105, %p106
    %p108 = scmp.ne.s32.totalorder %s99, %s100
    %p109 = scmp.eq.s32.totalorder %s26, 0
    %p110 = por %p108, %p109
    %p111 = scmp.ne.s32.totalorder %s99, %s100
    %p112 = scmp.eq.s32.totalorder %s27, 1
    %p113 = por %p111, %p112
    %p115 = scmp.ne.s32.totalorder %s100, %s114
    %p116 = scmp.eq.s32.totalorder %s27, 0
    %p117 = por %p115, %p116
    %s119 = sadd.s32 %s118, 1
    %p122 = scmp.eq.s32.totalorder %s21, 1
    %p123 = scmp.ne.s32.totalorder %s118, %s120
    %p124 = scmp.eq.s32.totalorder %s21, 0
    %p125 = por %p123, %p124
    %p126 = scmp.ne.s32.totalorder %s118, %s120
    %p127 = scmp.eq.s32.totalorder %s26, 1
    %p128 = por %p126, %p127
    %p129 = scmp.ne.s32.totalorder %s120, %s121
    %p130 = scmp.eq.s32.totalorder %s26, 0
    %p131 = por %p129, %p130
    %p132 = scmp.ne.s32.totalorder %s120, %s121
    %p133 = scmp.eq.s32.totalorder %s27, 1
    %p134 = por %p132, %p133
    %p136 = scmp.ne.s32.totalorder %s121, %s135
    %p137 = scmp.eq.s32.totalorder %s27, 0
    %p138 = por %p136, %p137
    %s140 = sadd.s32 %s139, 1
    %p143 = scmp.eq.s32.totalorder %s21, 1
    %p144 = scmp.ne.s32.totalorder %s139, %s141
    %p145 = scmp.eq.s32.totalorder %s21, 0
    %p146 = por %p144, %p145
    %p147 = scmp.ne.s32.totalorder %s139, %s141
    %p148 = scmp.eq.s32.totalorder %s26, 1
    %p149 = por %p147, %p148
    %p150 = scmp.ne.s32.totalorder %s141, %s142
    %p151 = scmp.eq.s32.totalorder %s26, 0
    %p152 = por %p150, %p151
    %p153 = scmp.ne.s32.totalorder %s141, %s142
    %p154 = scmp.eq.s32.totalorder %s27, 1
    %p155 = por %p153, %p154
    %p157 = scmp.ne.s32.totalorder %s142, %s156
    %p158 = scmp.eq.s32.totalorder %s27, 0
    %p159 = por %p157, %p158
    %s161 = sadd.s32 %s160, 1
    %p164 = scmp.eq.s32.totalorder %s21, 1
    %p165 = scmp.ne.s32.totalorder %s160, %s162
    %p166 = scmp.eq.s32.totalorder %s21, 0
    %p167 = por %p165, %p166
    %p168 = scmp.ne.s32.totalorder %s160, %s162
    %p169 = scmp.eq.s32.totalorder %s26, 1
    %p170 = por %p168, %p169
    %p171 = scmp.ne.s32.totalorder %s162, %s163
    %p172 = scmp.eq.s32.totalorder %s26, 0
    %p173 = por %p171, %p172
    %p174 = scmp.ne.s32.totalorder %s162, %s163
    %p175 = scmp.eq.s32.totalorder %s27, 1
    %p176 = por %p174, %p175
    %p178 = scmp.ne.s32.totalorder %s163, %s177
    %p179 = scmp.eq.s32.totalorder %s27, 0
    %p180 = por %p178, %p179
    %s182 = sadd.s32 %s181, 1
    %p185 = scmp.eq.s32.totalorder %s21, 1
    %p186 = scmp.ne.s32.totalorder %s181, %s183
    %p187 = scmp.eq.s32.totalorder %s21, 0
    %p188 = por %p186, %p187
    %p189 = scmp.ne.s32.totalorder %s181, %s183
    %p190 = scmp.eq.s32.totalorder %s26, 1
    %p191 = por %p189, %p190
    %p192 = scmp.ne.s32.totalorder %s183, %s184
    %p193 = scmp.eq.s32.totalorder %s26, 0
    %p194 = por %p192, %p193
    %p195 = scmp.ne.s32.totalorder %s183, %s184
    %p196 = scmp.eq.s32.totalorder %s27, 1
    %p197 = por %p195, %p196
    %p199 = scmp.ne.s32.totalorder %s184, %s198
    %p200 = scmp.eq.s32.totalorder %s27, 0
    %p201 = por %p199, %p200
    %s203 = sadd.s32 %s202, 1
    %p206 = scmp.eq.s32.totalorder %s21, 1
    %p207 = scmp.ne.s32.totalorder %s202, %s204
    %p208 = scmp.eq.s32.totalorder %s21, 0
    %p209 = por %p207, %p208
    %p210 = scmp.ne.s32.totalorder %s202, %s204
    %p211 = scmp.eq.s32.totalorder %s26, 1
    %p212 = por %p210, %p211
    %p213 = scmp.ne.s32.totalorder %s204, %s205
    %p214 = scmp.eq.s32.totalorder %s26, 0
    %p215 = por %p213, %p214
    %p216 = scmp.ne.s32.totalorder %s204, %s205
    %p217 = scmp.eq.s32.totalorder %s27, 1
    %p218 = por %p216, %p217
    %p220 = scmp.ne.s32.totalorder %s205, %s219
    %p221 = scmp.eq.s32.totalorder %s27, 0
    %p222 = por %p220, %p221
    %s224 = sadd.s32 %s223, 1
    %p227 = scmp.eq.s32.totalorder %s21, 1
    %p228 = scmp.ne.s32.totalorder %s223, %s225
    %p229 = scmp.eq.s32.totalorder %s21, 0
    %p230 = por %p228, %p229
    %p231 = scmp.ne.s32.totalorder %s223, %s225
    %p232 = scmp.eq.s32.totalorder %s26, 1
    %p233 = por %p231, %p232
    %p234 = scmp.ne.s32.totalorder %s225, %s226
    %p235 = scmp.eq.s32.totalorder %s26, 0
    %p236 = por %p234, %p235
    %p237 = scmp.ne.s32.totalorder %s225, %s226
    %p238 = scmp.eq.s32.totalorder %s27, 1
    %p239 = por %p237, %p238
    %p241 = scmp.ne.s32.totalorder %s226, %s240
    %p242 = scmp.eq.s32.totalorder %s27, 0
    %p243 = por %p241, %p242
    %s245 = sadd.s32 %s244, 1
    %p248 = scmp.eq.s32.totalorder %s21, 1
    %p249 = scmp.ne.s32.totalorder %s244, %s246
    %p250 = scmp.eq.s32.totalorder %s21, 0
    %p251 = por %p249, %p250
    %p252 = scmp.ne.s32.totalorder %s244, %s246
    %p253 = scmp.eq.s32.totalorder %s26, 1
    %p254 = por %p252, %p253
    %p255 = scmp.ne.s32.totalorder %s246, %s247
    %p256 = scmp.eq.s32.totalorder %s26, 0
    %p257 = por %p255, %p256
    %p258 = scmp.ne.s32.totalorder %s246, %s247
    %p259 = scmp.eq.s32.totalorder %s27, 1
    %p260 = por %p258, %p259
    %p262 = scmp.ne.s32.totalorder %s247, %s261
    %p263 = scmp.eq.s32.totalorder %s27, 0
    %p264 = por %p262, %p263
    %s266 = sadd.s32 %s265, 1
    %p269 = scmp.eq.s32.totalorder %s21, 1
    %p270 = scmp.ne.s32.totalorder %s265, %s267
    %p271 = scmp.eq.s32.totalorder %s21, 0
    %p272 = por %p270, %p271
    %p273 = scmp.ne.s32.totalorder %s265, %s267
    %p274 = scmp.eq.s32.totalorder %s26, 1
    %p275 = por %p273, %p274
    %p276 = scmp.ne.s32.totalorder %s267, %s268
    %p277 = scmp.eq.s32.totalorder %s26, 0
    %p278 = por %p276, %p277
    %p279 = scmp.ne.s32.totalorder %s267, %s268
    %p280 = scmp.eq.s32.totalorder %s27, 1
    %p281 = por %p279, %p280
    %p283 = scmp.ne.s32.totalorder %s268, %s282
    %p284 = scmp.eq.s32.totalorder %s27, 0
    %p285 = por %p283, %p284
    %s287 = sadd.s32 %s286, 1
    %p290 = scmp.eq.s32.totalorder %s21, 1
    %p291 = scmp.ne.s32.totalorder %s286, %s288
    %p292 = scmp.eq.s32.totalorder %s21, 0
    %p293 = por %p291, %p292
    %p294 = scmp.ne.s32.totalorder %s286, %s288
    %p295 = scmp.eq.s32.totalorder %s26, 1
    %p296 = por %p294, %p295
    %p297 = scmp.ne.s32.totalorder %s288, %s289
    %p298 = scmp.eq.s32.totalorder %s26, 0
    %p299 = por %p297, %p298
    %p300 = scmp.ne.s32.totalorder %s288, %s289
    %p301 = scmp.eq.s32.totalorder %s27, 1
    %p302 = por %p300, %p301
    %p304 = scmp.ne.s32.totalorder %s289, %s303
    %p305 = scmp.eq.s32.totalorder %s27, 0
    %p306 = por %p304, %p305
    %s308 = sadd.s32 %s307, 1
    %p311 = scmp.eq.s32.totalorder %s21, 1
    %p312 = scmp.ne.s32.totalorder %s307, %s309
    %p313 = scmp.eq.s32.totalorder %s21, 0
    %p314 = por %p312, %p313
    %p315 = scmp.ne.s32.totalorder %s307, %s309
    %p316 = scmp.eq.s32.totalorder %s26, 1
    %p317 = por %p315, %p316
    %p318 = scmp.ne.s32.totalorder %s309, %s310
    %p319 = scmp.eq.s32.totalorder %s26, 0
    %p320 = por %p318, %p319
    %p321 = scmp.ne.s32.totalorder %s309, %s310
    %p322 = scmp.eq.s32.totalorder %s27, 1
    %p323 = por %p321, %p322
    %p325 = scmp.ne.s32.totalorder %s310, %s324
    %p326 = scmp.eq.s32.totalorder %s27, 0
    %p327 = por %p325, %p326
    %s329 = sadd.s32 %s328, 1
    %p332 = scmp.eq.s32.totalorder %s21, 1
    %p333 = scmp.ne.s32.totalorder %s328, %s330
    %p334 = scmp.eq.s32.totalorder %s21, 0
    %p335 = por %p333, %p334
    %p336 = scmp.ne.s32.totalorder %s328, %s330
    %p337 = scmp.eq.s32.totalorder %s26, 1
    %p338 = por %p336, %p337
    %p339 = scmp.ne.s32.totalorder %s330, %s331
    %p340 = scmp.eq.s32.totalorder %s26, 0
    %p341 = por %p339, %p340
    %p342 = scmp.ne.s32.totalorder %s330, %s331
    %p343 = scmp.eq.s32.totalorder %s27, 1
    %p344 = por %p342, %p343
    %p346 = scmp.ne.s32.totalorder %s331, %s345
    %p347 = scmp.eq.s32.totalorder %s27, 0
    %p348 = por %p346, %p347
    %s349 = ssub.s32 %s21, %s28
    %p350 = scmp.eq.s32.totalorder %s349, 0
    %s352 = sadd.s32 %s351, 1
    %s353 = scalar_select %p350, %s351, %s352
    %p356 = pneg %p350
    %p357 = scmp.eq.s32.totalorder %s21, 1
    %p358 = por %p356, %p357
    %p359 = scmp.ne.s32.totalorder %s351, %s354
    %p360 = scmp.eq.s32.totalorder %s21, 0
    %p361 = por %p359, %p360
    %p362 = scmp.ne.s32.totalorder %s351, %s354
    %p363 = scmp.eq.s32.totalorder %s26, 1
    %p364 = por %p362, %p363
    %p365 = scmp.ne.s32.totalorder %s354, %s355
    %p366 = scmp.eq.s32.totalorder %s26, 0
    %p367 = por %p365, %p366
    %p368 = scmp.ne.s32.totalorder %s354, %s355
    %p369 = scmp.eq.s32.totalorder %s27, 1
    %p370 = por %p368, %p369
    %p372 = scmp.ne.s32.totalorder %s355, %s371
    %p373 = scmp.eq.s32.totalorder %s27, 0
    %p374 = por %p372, %p373
    %p375 = scmp.le.s32.totalorder 1, %s21
    %p376 = scmp.lt.s32.totalorder %s21, 3
    %p377 = pnand %p375, %p376
    %p378 = pneg %p377
    // Predicated region
    $region9: #{transformer_forward.6} parent=5 // pred_check
      _
    $region10: #{transformer_forward.6} parent=5 // pred_check_branch
      %380 = sbr.rel (%p377) target = $region12
    $region11: #{transformer_forward.6} parent=5 // pred_region
      %s381 = ssub.s32 %s21, 1
      // Predicated region
      $region13: #{transformer_forward.6} parent=11 // pred_check
        %p382 = pneg %p68
      $region14: #{transformer_forward.6} parent=11 // pred_check_branch
        %384 = sbr.rel (%p382) target = $region16
      $region15: #{transformer_forward.6} parent=11 // pred_region
        _
      $region16: #{transformer_forward.6} parent=11 // pred_fallthru
        _
      // Predicated region
      $region17: #{transformer_forward.6} parent=11 // pred_check
        %p385 = pneg %p89
      $region18: #{transformer_forward.6} parent=11 // pred_check_branch
        %387 = sbr.rel (%p385) target = $region20
      $region19: #{transformer_forward.6} parent=11 // pred_region
        _
      $region20: #{transformer_forward.6} parent=11 // pred_fallthru
        _
      // Predicated region
      $region21: #{transformer_forward.6} parent=11 // pred_check
        %p388 = pneg %p110
      $region22: #{transformer_forward.6} parent=11 // pred_check_branch
        %390 = sbr.rel (%p388) target = $region24
      $region23: #{transformer_forward.6} parent=11 // pred_region
        _
      $region24: #{transformer_forward.6} parent=11 // pred_fallthru
        _
      // Predicated region
      $region25: #{transformer_forward.6} parent=11 // pred_check
        %p391 = pneg %p131
      $region26: #{transformer_forward.6} parent=11 // pred_check_branch
        %393 = sbr.rel (%p391) target = $region28
      $region27: #{transformer_forward.6} parent=11 // pred_region
        _
      $region28: #{transformer_forward.6} parent=11 // pred_fallthru
        _
      // Predicated region
      $region29: #{transformer_forward.6} parent=11 // pred_check
        %p394 = pneg %p152
      $region30: #{transformer_forward.6} parent=11 // pred_check_branch
        %396 = sbr.rel (%p394) target = $region32
      $region31: #{transformer_forward.6} parent=11 // pred_region
        _
      $region32: #{transformer_forward.6} parent=11 // pred_fallthru
        _
      // Predicated region
      $region33: #{transformer_forward.6} parent=11 // pred_check
        %p397 = pneg %p173
      $region34: #{transformer_forward.6} parent=11 // pred_check_branch
        %399 = sbr.rel (%p397) target = $region36
      $region35: #{transformer_forward.6} parent=11 // pred_region
        _
      $region36: #{transformer_forward.6} parent=11 // pred_fallthru
        _
      // Predicated region
      $region37: #{transformer_forward.6} parent=11 // pred_check
        %p400 = pneg %p194
      $region38: #{transformer_forward.6} parent=11 // pred_check_branch
        %402 = sbr.rel (%p400) target = $region40
      $region39: #{transformer_forward.6} parent=11 // pred_region
        _
      $region40: #{transformer_forward.6} parent=11 // pred_fallthru
        _
      // Predicated region
      $region41: #{transformer_forward.6} parent=11 // pred_check
        %p403 = pneg %p215
      $region42: #{transformer_forward.6} parent=11 // pred_check_branch
        %405 = sbr.rel (%p403) target = $region44
      $region43: #{transformer_forward.6} parent=11 // pred_region
        _
      $region44: #{transformer_forward.6} parent=11 // pred_fallthru
        _
      // Predicated region
      $region45: #{transformer_forward.6} parent=11 // pred_check
        %p406 = pneg %p236
      $region46: #{transformer_forward.6} parent=11 // pred_check_branch
        %408 = sbr.rel (%p406) target = $region48
      $region47: #{transformer_forward.6} parent=11 // pred_region
        _
      $region48: #{transformer_forward.6} parent=11 // pred_fallthru
        _
      // Predicated region
      $region49: #{transformer_forward.6} parent=11 // pred_check
        %p409 = pneg %p257
      $region50: #{transformer_forward.6} parent=11 // pred_check_branch
        %411 = sbr.rel (%p409) target = $region52
      $region51: #{transformer_forward.6} parent=11 // pred_region
        _
      $region52: #{transformer_forward.6} parent=11 // pred_fallthru
        _
      // Predicated region
      $region53: #{transformer_forward.6} parent=11 // pred_check
        %p412 = pneg %p278
      $region54: #{transformer_forward.6} parent=11 // pred_check_branch
        %414 = sbr.rel (%p412) target = $region56
      $region55: #{transformer_forward.6} parent=11 // pred_region
        _
      $region56: #{transformer_forward.6} parent=11 // pred_fallthru
        _
      // Predicated region
      $region57: #{transformer_forward.6} parent=11 // pred_check
        %p415 = pneg %p299
      $region58: #{transformer_forward.6} parent=11 // pred_check_branch
        %417 = sbr.rel (%p415) target = $region60
      $region59: #{transformer_forward.6} parent=11 // pred_region
        _
      $region60: #{transformer_forward.6} parent=11 // pred_fallthru
        _
      // Predicated region
      $region61: #{transformer_forward.6} parent=11 // pred_check
        %p418 = pneg %p320
      $region62: #{transformer_forward.6} parent=11 // pred_check_branch
        %420 = sbr.rel (%p418) target = $region64
      $region63: #{transformer_forward.6} parent=11 // pred_region
        _
      $region64: #{transformer_forward.6} parent=11 // pred_fallthru
        _
      // Predicated region
      $region65: #{transformer_forward.6} parent=11 // pred_check
        %p421 = pneg %p341
      $region66: #{transformer_forward.6} parent=11 // pred_check_branch
        %423 = sbr.rel (%p421) target = $region68
      $region67: #{transformer_forward.6} parent=11 // pred_region
        _
      $region68: #{transformer_forward.6} parent=11 // pred_fallthru
        _
    $region12: #{transformer_forward.6} parent=5 // pred_fallthru
      _
    %p424 = scmp.lt.s32.totalorder %s21, 2
    // Predicated region
    $region69: #{transformer_forward.6} parent=5 // pred_check
      %p425 = pneg %p424
    $region70: #{transformer_forward.6} parent=5 // pred_check_branch
      %427 = sbr.rel (%p425) target = $region72
    $region71: #{transformer_forward.6} parent=5 // pred_region
      // Predicated region
      $region73: #{transformer_forward.6} parent=71 // pred_check
        %p428 = pneg %p41
      $region74: #{transformer_forward.6} parent=71 // pred_check_branch
        %430 = sbr.rel (%p428) target = $region76
      $region75: #{transformer_forward.6} parent=71 // pred_region
        %p431 = scmp.lt.s32.totalorder %s21, 1
        %s432 = scalar_select %p431, %s21, 1
        %s433 = smul.addr %s432, 2
        %s434 = smul.addr %s433, 4
        %s435 = scalar_lea.vmem %s0, %s434
      $region76: #{transformer_forward.6} parent=71 // pred_fallthru
        _
    $region72: #{transformer_forward.6} parent=5 // pred_fallthru
      _
    %p436 = scmp.le.s32.totalorder 1, %s21
    %p437 = scmp.lt.s32.totalorder %s21, 3
    %p438 = pnand %p436, %p437
    %p439 = pneg %p438
    // Predicated region
    $region77: #{transformer_forward.6} parent=5 // pred_check
      _
    $region78: #{transformer_forward.6} parent=5 // pred_check_branch
      %441 = sbr.rel (%p438) target = $region80
    $region79: #{transformer_forward.6} parent=5 // pred_region
      %s442 = ssub.s32 %s21, 1
      %p443 = scmp.lt.s32.totalorder %s26, 1
      %s444 = scalar_select %p443, %s26, 1
      %s445 = smul.addr %s444, 2
      %s446 = smul.addr %s445, 4
      %s447 = scalar_lea.vmem %s0, %s446
      %p448 = pneg %p47
      %p449 = pneg %p44
      %p450 = pneg %p68
      %p451 = pneg %p65
      %p452 = pneg %p89
      %p453 = pneg %p86
      %p454 = pneg %p110
      %p455 = pneg %p107
      %p456 = pneg %p131
      %p457 = pneg %p128
      %p458 = pneg %p152
      %p459 = pneg %p149
      %p460 = pneg %p173
      %p461 = pneg %p170
      %p462 = pneg %p194
      %p463 = pneg %p191
      %p464 = pneg %p215
      %p465 = pneg %p212
      %p466 = pneg %p236
      %p467 = pneg %p233
      %p468 = pneg %p257
      %p469 = pneg %p254
      %p470 = pneg %p278
      %p471 = pneg %p275
      %p472 = pneg %p299
      %p473 = pneg %p296
      %p474 = pneg %p320
      %p475 = pneg %p317
      %p476 = pneg %p341
      %p477 = pneg %p338
      %p478 = pneg %p367
      %p479 = pneg %p364
      %p480 = scmp.lt.s32.totalorder %s26, 1
      %s481 = scalar_select %p480, %s26, 1
      %s482 = smul.addr %s481, 2
      %s483 = smul.addr %s482, 4
      %s484 = scalar_lea.vmem %s15, %s483
      %p485 = scmp.lt.s32.totalorder %s26, 1
      %s486 = scalar_select %p485, %s26, 1
      %s487 = smul.addr %s486, 2
      %s488 = smul.addr %s487, 4
      %s489 = scalar_lea.vmem %s0, %s488
      %p490 = scmp.lt.s32.totalorder %s26, 1
      %s491 = scalar_select %p490, %s26, 1
      %s492 = smul.addr %s491, 2
      %s493 = smul.addr %s492, 4
      %s494 = scalar_lea.vmem %s15, %s493
      %v496 = vld [vmem:[%s489] sm:$0xf]
      %v497 = vld [vmem:[%s489 + $0x4] sm:$0xf]
      %v498 = vunpack.c.l.bf16 %v496
      %v499 = vunpack.c.l.bf16 %v497
      %v500 = vld [vmem:[%s1] sm:$0xf]
      %v501 = vld [vmem:[%s1 + $0x4] sm:$0xf]
      %v502 = vld [vmem:[%s1 + $0x8] sm:$0xf]
      %v503 = vld [vmem:[%s1 + $0xc] sm:$0xf]
      %v504 = vld [vmem:[%s2] sm:$0x1]
      %v506 = vperm.slane %v504, 0
      %v510 = vunpack.c.l.b16 %v496
      %v511 = vunpack.c.l.b16 %v497
      %v512 = vpack.c.b16 %v511, %v510
      %v517 = vunpack.c.l.b16 %v500
      %v518 = vunpack.c.l.b16 %v501
      %v519 = vunpack.c.l.b16 %v502
      %v520 = vunpack.c.l.b16 %v503
      %v521 = vpack.c.b16 %v518, %v517
      %v522 = vpack.c.b16 %v520, %v519
      %vm525 = vcmask 261120
      %v527 = vsel %vm525, %v512, 0
      %529 = vmatpush.bf16.msra.mxu0 0
      %530 = vmatpush.bf16.msra.mxu0 0
      %531 = vmatpush.bf16.msra.mxu0 0
      %532 = vmatpush.bf16.msra.mxu0 0
      %533 = vmatpush.bf16.msra.mxu0 0
      %534 = vmatpush.bf16.msra.mxu0 0
      %535 = vmatpush.bf16.msra.mxu0 %v522
      %536 = vmatpush.bf16.msra.mxu0 %v521
      %537 = vmatmul.bf16.gmra.mxu0 %v527
      %v538 = vpop.f32.mrf.mxu0
      %v539 = vadd.f32 %v506, %v538
      %v540 = vpop.f32.mrf.mxu0
      %v541 = vadd.f32 %v506, %v540
      %542 = vdwg.mxu0
      %v543 = vmul.f32 %v539, 0.35355338
      %v544 = vmul.f32 %v541, 0.35355338
      %v545 = vld [vmem:[%s3] sm:$0xf]
      %v546 = vld [vmem:[%s3 + $0x4] sm:$0xf]
      %v547 = vld [vmem:[%s3 + $0x8] sm:$0xf]
      %v548 = vld [vmem:[%s3 + $0xc] sm:$0xf]
      %v549 = vpack.c.bf16 %v544, %v543
      %v550 = vpack.c.bf16 %v541, %v539
      %552 = vrot.lane.b32.xlu0 %v550, 96
      %v553 = vpop.permute.xlu0 %552
      %vm554 = vcmask 64512
      %v556 = vsel %vm554, %v549, 0
      %v559 = vsel %vm554, %v553, 0
      %561 = vmatpush.bf16.xpose.msra.mxu0 0
      %562 = vmatpush.bf16.xpose.msra.mxu0 0
      %563 = vmatpush.bf16.xpose.msra.mxu0 0
      %564 = vmatpush.bf16.xpose.msra.mxu0 0
      %565 = vmatpush.bf16.xpose.msra.mxu0 0
      %566 = vmatpush.bf16.xpose.msra.mxu0 0
      %567 = vmatpush.bf16.xpose.msra.mxu0 0
      %568 = vmatpush.bf16.xpose.msra.mxu0 %v559
      %569 = vmatmul.bf16.gmra.mxu0 %v556
      %v570 = vpop.f32.mrf.mxu0
      %v571 = vadd.f32 0.0, %v570
      %v572 = vpop.f32.mrf.mxu0
      %v573 = vadd.f32 0.0, %v572
      %574 = vdwg.mxu0
      %vm575 = vcmask 130048
      %v576 = vsel %vm575, %v571, -inf
      %577 = vmax.xlane.f32.xlu0 %v576
      %v578 = vpop.xlane.xlu0 %577
      %v579 = vsel %vm575, %v573, -inf
      %580 = vmax.xlane.f32.xlu0 %v579
      %v581 = vpop.xlane.xlu0 %580
      %v582 = vsub.f32 %v571, %v578
      %v583 = vsub.f32 %v573, %v581
      %v584 = vmul.f32 %v582, 1.442695
      %v585 = vpow.pop %v584
      %v586 = vmul.f32 %v583, 1.442695
      %v587 = vpow.pop %v586
      %v588 = vsel %vm575, %v585, 0.0
      %589 = vadd.xlane.f32.xlu0 %v588
      %v590 = vpop.xlane.xlu0 %589
      %v591 = vsel %vm575, %v587, 0.0
      %592 = vadd.xlane.f32.xlu0 %v591
      %v593 = vpop.xlane.xlu0 %592
      %v594 = vpack.c.bf16 %v587, %v585
      %595 = vrot.lane.b32.xlu0 %v550, 64
      %v596 = vpop.permute.xlu0 %595
      %v599 = vsel %vm575, %v594, 0
      %601 = vmatpush.bf16.msra.mxu0 0
      %602 = vmatpush.bf16.msra.mxu0 0
      %603 = vmatpush.bf16.msra.mxu0 0
      %604 = vmatpush.bf16.msra.mxu0 0
      %605 = vmatpush.bf16.msra.mxu0 0
      %606 = vmatpush.bf16.msra.mxu0 0
      %607 = vmatpush.bf16.msra.mxu0 0
      %608 = vmatpush.bf16.msra.mxu0 %v596
      %609 = vmatmul.bf16.gmra.mxu0 %v599
      %v610 = vpop.f32.mrf.mxu0
      %v611 = vadd.f32 0.0, %v610
      %v612 = vpop.f32.mrf.mxu0
      %v613 = vadd.f32 0.0, %v612
      %614 = vdwg.mxu0
      %v615 = vrcp.pop %v590
      %v616 = vrcp.pop %v593
      %v617 = vmul.f32 %v611, %v615
      %v618 = vmul.f32 %v613, %v616
      %v619 = vpack.c.bf16 %v618, %v617
      %621 = vrot.lane.b32.xlu0 %v549, 120
      %v622 = vpop.permute.xlu0 %621
      %623 = vrot.lane.b32.xlu0 %v550, 88
      %v624 = vpop.permute.xlu0 %623
      %v626 = vsel %vm554, %v622, 0
      %v629 = vsel %vm554, %v624, 0
      %631 = vmatpush.bf16.xpose.msra.mxu0 0
      %632 = vmatpush.bf16.xpose.msra.mxu0 0
      %633 = vmatpush.bf16.xpose.msra.mxu0 0
      %634 = vmatpush.bf16.xpose.msra.mxu0 0
      %635 = vmatpush.bf16.xpose.msra.mxu0 0
      %636 = vmatpush.bf16.xpose.msra.mxu0 0
      %637 = vmatpush.bf16.xpose.msra.mxu0 0
      %638 = vmatpush.bf16.xpose.msra.mxu0 %v629
      %639 = vmatmul.bf16.gmra.mxu0 %v626
      %v640 = vpop.f32.mrf.mxu0
      %v641 = vadd.f32 0.0, %v640
      %v642 = vpop.f32.mrf.mxu0
      %v643 = vadd.f32 0.0, %v642
      %644 = vdwg.mxu0
      %v645 = vsel %vm575, %v641, -inf
      %646 = vmax.xlane.f32.xlu0 %v645
      %v647 = vpop.xlane.xlu0 %646
      %v648 = vsel %vm575, %v643, -inf
      %649 = vmax.xlane.f32.xlu0 %v648
      %v650 = vpop.xlane.xlu0 %649
      %v651 = vsub.f32 %v641, %v647
      %v652 = vsub.f32 %v643, %v650
      %v653 = vmul.f32 %v651, 1.442695
      %v654 = vpow.pop %v653
      %v655 = vmul.f32 %v652, 1.442695
      %v656 = vpow.pop %v655
      %v657 = vsel %vm575, %v654, 0.0
      %658 = vadd.xlane.f32.xlu0 %v657
      %v659 = vpop.xlane.xlu0 %658
      %v660 = vsel %vm575, %v656, 0.0
      %661 = vadd.xlane.f32.xlu0 %v660
      %v662 = vpop.xlane.xlu0 %661
      %v663 = vpack.c.bf16 %v656, %v654
      %664 = vrot.lane.b32.xlu0 %v550, 56
      %v665 = vpop.permute.xlu0 %664
      %v668 = vsel %vm575, %v663, 0
      %670 = vmatpush.bf16.msra.mxu0 0
      %671 = vmatpush.bf16.msra.mxu0 0
      %672 = vmatpush.bf16.msra.mxu0 0
      %673 = vmatpush.bf16.msra.mxu0 0
      %674 = vmatpush.bf16.msra.mxu0 0
      %675 = vmatpush.bf16.msra.mxu0 0
      %676 = vmatpush.bf16.msra.mxu0 0
      %677 = vmatpush.bf16.msra.mxu0 %v665
      %678 = vmatmul.bf16.gmra.mxu0 %v668
      %v679 = vpop.f32.mrf.mxu0
      %v680 = vadd.f32 0.0, %v679
      %v681 = vpop.f32.mrf.mxu0
      %v682 = vadd.f32 0.0, %v681
      %683 = vdwg.mxu0
      %v684 = vrcp.pop %v659
      %v685 = vrcp.pop %v662
      %v686 = vmul.f32 %v680, %v684
      %v687 = vmul.f32 %v682, %v685
      %v688 = vpack.c.bf16 %v687, %v686
      %v690 = vsel %vm554, %v688, 0
      %vm692 = vcmask 1043456
      %v694 = vsel %vm692, %v546, 0
      %696 = vmatpush.bf16.msra.mxu0 0
      %697 = vmatpush.bf16.msra.mxu0 0
      %698 = vmatpush.bf16.msra.mxu0 0
      %699 = vmatpush.bf16.msra.mxu0 0
      %700 = vmatpush.bf16.msra.mxu0 0
      %701 = vmatpush.bf16.msra.mxu0 0
      %702 = vmatpush.bf16.msra.mxu0 0
      %703 = vmatpush.bf16.msra.mxu0 %v694
      %704 = vmatmul.bf16.gmra.mxu0 %v690
      %v705 = vpop.f32.mrf.mxu0
      %v706 = vadd.f32 0.0, %v705
      %v707 = vpop.f32.mrf.mxu0
      %v708 = vadd.f32 0.0, %v707
      %709 = vdwg.mxu0
      %v711 = vsel %vm554, %v619, 0
      %v714 = vsel %vm692, %v545, 0
      %716 = vmatpush.bf16.msra.mxu0 0
      %717 = vmatpush.bf16.msra.mxu0 0
      %718 = vmatpush.bf16.msra.mxu0 0
      %719 = vmatpush.bf16.msra.mxu0 0
      %720 = vmatpush.bf16.msra.mxu0 0
      %721 = vmatpush.bf16.msra.mxu0 0
      %722 = vmatpush.bf16.msra.mxu0 0
      %723 = vmatpush.bf16.msra.mxu0 %v714
      %724 = vmatmul.bf16.gmra.mxu0 %v711
      %v725 = vpop.f32.mrf.mxu0
      %v726 = vadd.f32 %v706, %v725
      %v727 = vpop.f32.mrf.mxu0
      %v728 = vadd.f32 %v708, %v727
      %729 = vdwg.mxu0
      %730 = vrot.lane.b32.xlu0 %v549, 112
      %v731 = vpop.permute.xlu0 %730
      %732 = vrot.lane.b32.xlu0 %v550, 80
      %v733 = vpop.permute.xlu0 %732
      %v735 = vsel %vm554, %v731, 0
      %v738 = vsel %vm554, %v733, 0
      %740 = vmatpush.bf16.xpose.msra.mxu0 0
      %741 = vmatpush.bf16.xpose.msra.mxu0 0
      %742 = vmatpush.bf16.xpose.msra.mxu0 0
      %743 = vmatpush.bf16.xpose.msra.mxu0 0
      %744 = vmatpush.bf16.xpose.msra.mxu0 0
      %745 = vmatpush.bf16.xpose.msra.mxu0 0
      %746 = vmatpush.bf16.xpose.msra.mxu0 0
      %747 = vmatpush.bf16.xpose.msra.mxu0 %v738
      %748 = vmatmul.bf16.gmra.mxu0 %v735
      %v749 = vpop.f32.mrf.mxu0
      %v750 = vadd.f32 0.0, %v749
      %v751 = vpop.f32.mrf.mxu0
      %v752 = vadd.f32 0.0, %v751
      %753 = vdwg.mxu0
      %v754 = vsel %vm575, %v750, -inf
      %755 = vmax.xlane.f32.xlu0 %v754
      %v756 = vpop.xlane.xlu0 %755
      %v757 = vsel %vm575, %v752, -inf
      %758 = vmax.xlane.f32.xlu0 %v757
      %v759 = vpop.xlane.xlu0 %758
      %v760 = vsub.f32 %v750, %v756
      %v761 = vsub.f32 %v752, %v759
      %v762 = vmul.f32 %v760, 1.442695
      %v763 = vpow.pop %v762
      %v764 = vmul.f32 %v761, 1.442695
      %v765 = vpow.pop %v764
      %v766 = vsel %vm575, %v763, 0.0
      %767 = vadd.xlane.f32.xlu0 %v766
      %v768 = vpop.xlane.xlu0 %767
      %v769 = vsel %vm575, %v765, 0.0
      %770 = vadd.xlane.f32.xlu0 %v769
      %v771 = vpop.xlane.xlu0 %770
      %v772 = vpack.c.bf16 %v765, %v763
      %773 = vrot.lane.b32.xlu0 %v550, 48
      %v774 = vpop.permute.xlu0 %773
      %v777 = vsel %vm575, %v772, 0
      %779 = vmatpush.bf16.msra.mxu0 0
      %780 = vmatpush.bf16.msra.mxu0 0
      %781 = vmatpush.bf16.msra.mxu0 0
      %782 = vmatpush.bf16.msra.mxu0 0
      %783 = vmatpush.bf16.msra.mxu0 0
      %784 = vmatpush.bf16.msra.mxu0 0
      %785 = vmatpush.bf16.msra.mxu0 0
      %786 = vmatpush.bf16.msra.mxu0 %v774
      %787 = vmatmul.bf16.gmra.mxu0 %v777
      %v788 = vpop.f32.mrf.mxu0
      %v789 = vadd.f32 0.0, %v788
      %v790 = vpop.f32.mrf.mxu0
      %v791 = vadd.f32 0.0, %v790
      %792 = vdwg.mxu0
      %v793 = vrcp.pop %v768
      %v794 = vrcp.pop %v771
      %v795 = vmul.f32 %v789, %v793
      %v796 = vmul.f32 %v791, %v794
      %v797 = vpack.c.bf16 %v796, %v795
      %v799 = vsel %vm554, %v797, 0
      %v802 = vsel %vm692, %v547, 0
      %804 = vmatpush.bf16.msra.mxu0 0
      %805 = vmatpush.bf16.msra.mxu0 0
      %806 = vmatpush.bf16.msra.mxu0 0
      %807 = vmatpush.bf16.msra.mxu0 0
      %808 = vmatpush.bf16.msra.mxu0 0
      %809 = vmatpush.bf16.msra.mxu0 0
      %810 = vmatpush.bf16.msra.mxu0 0
      %811 = vmatpush.bf16.msra.mxu0 %v802
      %812 = vmatmul.bf16.gmra.mxu0 %v799
      %v813 = vpop.f32.mrf.mxu0
      %v814 = vadd.f32 0.0, %v813
      %v815 = vpop.f32.mrf.mxu0
      %v816 = vadd.f32 0.0, %v815
      %817 = vdwg.mxu0
      %v818 = vadd.f32 %v726, %v814
      %v819 = vadd.f32 %v728, %v816
      %820 = vrot.lane.b32.xlu0 %v549, 104
      %v821 = vpop.permute.xlu0 %820
      %822 = vrot.lane.b32.xlu0 %v550, 72
      %v823 = vpop.permute.xlu0 %822
      %v825 = vsel %vm554, %v821, 0
      %v828 = vsel %vm554, %v823, 0
      %830 = vmatpush.bf16.xpose.msra.mxu0 0
      %831 = vmatpush.bf16.xpose.msra.mxu0 0
      %832 = vmatpush.bf16.xpose.msra.mxu0 0
      %833 = vmatpush.bf16.xpose.msra.mxu0 0
      %834 = vmatpush.bf16.xpose.msra.mxu0 0
      %835 = vmatpush.bf16.xpose.msra.mxu0 0
      %836 = vmatpush.bf16.xpose.msra.mxu0 0
      %837 = vmatpush.bf16.xpose.msra.mxu0 %v828
      %838 = vmatmul.bf16.gmra.mxu0 %v825
      %v839 = vpop.f32.mrf.mxu0
      %v840 = vadd.f32 0.0, %v839
      %v841 = vpop.f32.mrf.mxu0
      %v842 = vadd.f32 0.0, %v841
      %843 = vdwg.mxu0
      %v844 = vsel %vm575, %v840, -inf
      %845 = vmax.xlane.f32.xlu0 %v844
      %v846 = vpop.xlane.xlu0 %845
      %v847 = vsel %vm575, %v842, -inf
      %848 = vmax.xlane.f32.xlu0 %v847
      %v849 = vpop.xlane.xlu0 %848
      %v850 = vsub.f32 %v840, %v846
      %v851 = vsub.f32 %v842, %v849
      %v852 = vmul.f32 %v850, 1.442695
      %v853 = vpow.pop %v852
      %v854 = vmul.f32 %v851, 1.442695
      %v855 = vpow.pop %v854
      %v856 = vsel %vm575, %v853, 0.0
      %857 = vadd.xlane.f32.xlu0 %v856
      %v858 = vpop.xlane.xlu0 %857
      %v859 = vsel %vm575, %v855, 0.0
      %860 = vadd.xlane.f32.xlu0 %v859
      %v861 = vpop.xlane.xlu0 %860
      %v862 = vpack.c.bf16 %v855, %v853
      %863 = vrot.lane.b32.xlu0 %v550, 40
      %v864 = vpop.permute.xlu0 %863
      %v867 = vsel %vm575, %v862, 0
      %869 = vmatpush.bf16.msra.mxu0 0
      %870 = vmatpush.bf16.msra.mxu0 0
      %871 = vmatpush.bf16.msra.mxu0 0
      %872 = vmatpush.bf16.msra.mxu0 0
      %873 = vmatpush.bf16.msra.mxu0 0
      %874 = vmatpush.bf16.msra.mxu0 0
      %875 = vmatpush.bf16.msra.mxu0 0
      %876 = vmatpush.bf16.msra.mxu0 %v864
      %877 = vmatmul.bf16.gmra.mxu0 %v867
      %v878 = vpop.f32.mrf.mxu0
      %v879 = vadd.f32 0.0, %v878
      %v880 = vpop.f32.mrf.mxu0
      %v881 = vadd.f32 0.0, %v880
      %882 = vdwg.mxu0
      %v883 = vrcp.pop %v858
      %v884 = vrcp.pop %v861
      %v885 = vmul.f32 %v879, %v883
      %v886 = vmul.f32 %v881, %v884
      %v887 = vpack.c.bf16 %v886, %v885
      %v889 = vsel %vm554, %v887, 0
      %v892 = vsel %vm692, %v548, 0
      %894 = vmatpush.bf16.msra.mxu0 0
      %895 = vmatpush.bf16.msra.mxu0 0
      %896 = vmatpush.bf16.msra.mxu0 0
      %897 = vmatpush.bf16.msra.mxu0 0
      %898 = vmatpush.bf16.msra.mxu0 0
      %899 = vmatpush.bf16.msra.mxu0 0
      %900 = vmatpush.bf16.msra.mxu0 0
      %901 = vmatpush.bf16.msra.mxu0 %v892
      %902 = vmatmul.bf16.gmra.mxu0 %v889
      %v903 = vpop.f32.mrf.mxu0
      %v904 = vadd.f32 0.0, %v903
      %v905 = vpop.f32.mrf.mxu0
      %v906 = vadd.f32 0.0, %v905
      %907 = vdwg.mxu0
      %v908 = vadd.f32 %v818, %v904
      %v909 = vadd.f32 %v819, %v906
      %v910 = vadd.f32 %v498, %v908
      %v911 = vadd.f32 %v499, %v909
      %v912 = vld [vmem:[%s4] sm:$0x1]
      %v914 = vperm.slane %v912, 0
      %v916 = vadd.f32 %v910, %v914
      %v917 = vadd.f32 %v911, %v914
      %v918 = vld [vmem:[%s5] sm:$0x1]
      %v919 = vld [vmem:[%s6] sm:$0x1]
      %v920 = vsel %vm525, %v916, 0.0
      %921 = vadd.xlane.f32.xlu0 %v920
      %v922 = vpop.xlane.xlu0 %921
      %v923 = vsel %vm525, %v917, 0.0
      %924 = vadd.xlane.f32.xlu0 %v923
      %v925 = vpop.xlane.xlu0 %924
      %v926 = vrcp.pop 32.0
      %v927 = vmul.f32 32.0, %v926
      %v928 = vsub.f32 1.0, %v927
      %v929 = vmul.f32 %v926, %v928
      %v930 = vadd.f32 %v926, %v929
      %vm931 = vweird.f32 %v926
      %v932 = vsel %vm931, %v926, %v930
      %v933 = vmul.f32 %v922, %v932
      %v934 = vmul.f32 %v925, %v932
      %v935 = vsub.f32 %v916, %v933
      %v936 = vsub.f32 %v917, %v934
      %v937 = vmul.f32 %v935, %v935
      %v938 = vmul.f32 %v936, %v936
      %v939 = vsel %vm525, %v937, 0.0
      %940 = vadd.xlane.f32.xlu0 %v939
      %v941 = vpop.xlane.xlu0 %940
      %v942 = vsel %vm525, %v938, 0.0
      %943 = vadd.xlane.f32.xlu0 %v942
      %v944 = vpop.xlane.xlu0 %943
      %v945 = vmul.f32 %v941, %v932
      %v946 = vmul.f32 %v944, %v932
      %v947 = vadd.f32 %v945, 1e-05
      %v948 = vadd.f32 %v946, 1e-05
      %v949 = vrsqrt.pop %v947
      %v950 = vmul.f32 %v949, %v947
      %v951 = vmul.f32 %v950, %v949
      %v952 = vmul.f32 0.5, %v951
      %v953 = vsub.f32 1.5, %v952
      %v954 = vmul.f32 %v949, %v953
      %vm955 = vweird.f32 %v947
      %vm956 = vweird.f32 %v949
      %vm957 = vmor %vm955, %vm956
      %v958 = vsel %vm957, %v949, %v954
      %v959 = vrsqrt.pop %v948
      %v960 = vmul.f32 %v959, %v948
      %v961 = vmul.f32 %v960, %v959
      %v962 = vmul.f32 0.5, %v961
      %v963 = vsub.f32 1.5, %v962
      %v964 = vmul.f32 %v959, %v963
      %vm965 = vweird.f32 %v948
      %vm966 = vweird.f32 %v959
      %vm967 = vmor %vm965, %vm966
      %v968 = vsel %vm967, %v959, %v964
      %v969 = vmul.f32 %v935, %v958
      %v970 = vmul.f32 %v936, %v968
      %v972 = vperm.slane %v918, 0
      %v974 = vmul.f32 %v969, %v972
      %v975 = vmul.f32 %v970, %v972
      %v977 = vperm.slane %v919, 0
      %v979 = vadd.f32 %v974, %v977
      %v980 = vadd.f32 %v975, %v977
      %v981 = vpack.c.bf16 %v980, %v979
      %v982 = vld [vmem:[%s7] sm:$0xf]
      %v983 = vld [vmem:[%s7 + $0x4] sm:$0xf]
      %v984 = vld [vmem:[%s7 + $0x8] sm:$0xf]
      %v985 = vld [vmem:[%s7 + $0xc] sm:$0xf]
      %v986 = vld [vmem:[%s8] sm:$0x1]
      %v988 = vperm.slane %v986, 0
      %v994 = vunpack.c.l.b16 %v982
      %v995 = vunpack.c.l.b16 %v983
      %v996 = vunpack.c.l.b16 %v984
      %v997 = vunpack.c.l.b16 %v985
      %v998 = vpack.c.b16 %v995, %v994
      %v999 = vpack.c.b16 %v997, %v996
      %v1003 = vsel %vm525, %v981, 0
      %1005 = vmatpush.bf16.msra.mxu0 0
      %1006 = vmatpush.bf16.msra.mxu0 0
      %1007 = vmatpush.bf16.msra.mxu0 0
      %1008 = vmatpush.bf16.msra.mxu0 0
      %1009 = vmatpush.bf16.msra.mxu0 0
      %1010 = vmatpush.bf16.msra.mxu0 0
      %1011 = vmatpush.bf16.msra.mxu0 %v999
      %1012 = vmatpush.bf16.msra.mxu0 %v998
      %1013 = vmatmul.bf16.gmra.mxu0 %v1003
      %v1014 = vpop.f32.mrf.mxu0
      %v1015 = vadd.f32 %v988, %v1014
      %v1016 = vpop.f32.mrf.mxu0
      %v1017 = vadd.f32 %v988, %v1016
      %1018 = vdwg.mxu0
      %v1019 = vmax.f32 %v1015, 0.0
      %v1020 = vmax.f32 %v1017, 0.0
      %v1021 = vpack.c.bf16 %v1020, %v1019
      %v1022 = vld [vmem:[%s9] sm:$0xf]
      %v1023 = vld [vmem:[%s9 + $0x4] sm:$0xf]
      %v1024 = vld [vmem:[%s9 + $0x8] sm:$0xf]
      %v1025 = vld [vmem:[%s9 + $0xc] sm:$0xf]
      %v1026 = vld [vmem:[%s9 + $0x10] sm:$0xf]
      %v1027 = vld [vmem:[%s9 + $0x14] sm:$0xf]
      %v1028 = vld [vmem:[%s9 + $0x18] sm:$0xf]
      %v1029 = vld [vmem:[%s9 + $0x1c] sm:$0xf]
      %v1030 = vld [vmem:[%s10] sm:$0x1]
      %v1032 = vperm.slane %v1030, 0
      %v1042 = vunpack.c.l.b16 %v1022
      %v1043 = vunpack.c.l.b16 %v1023
      %v1044 = vunpack.c.l.b16 %v1024
      %v1045 = vunpack.c.l.b16 %v1025
      %v1046 = vunpack.c.l.b16 %v1026
      %v1047 = vunpack.c.l.b16 %v1027
      %v1048 = vunpack.c.l.b16 %v1028
      %v1049 = vunpack.c.l.b16 %v1029
      %v1050 = vpack.c.b16 %v1043, %v1042
      %v1051 = vpack.c.b16 %v1045, %v1044
      %v1052 = vpack.c.b16 %v1047, %v1046
      %v1053 = vpack.c.b16 %v1049, %v1048
      %vm1058 = vcmask 523264
      %v1060 = vsel %vm1058, %v1021, 0
      %1062 = vmatpush.bf16.msra.mxu0 0
      %1063 = vmatpush.bf16.msra.mxu0 0
      %1064 = vmatpush.bf16.msra.mxu0 0
      %1065 = vmatpush.bf16.msra.mxu0 0
      %1066 = vmatpush.bf16.msra.mxu0 %v1053
      %1067 = vmatpush.bf16.msra.mxu0 %v1052
      %1068 = vmatpush.bf16.msra.mxu0 %v1051
      %1069 = vmatpush.bf16.msra.mxu0 %v1050
      %1070 = vmatmul.bf16.gmra.mxu0 %v1060
      %v1071 = vpop.f32.mrf.mxu0
      %v1072 = vadd.f32 %v1032, %v1071
      %v1073 = vpop.f32.mrf.mxu0
      %v1074 = vadd.f32 %v1032, %v1073
      %1075 = vdwg.mxu0
      %v1076 = vadd.f32 %v979, %v1072
      %v1077 = vadd.f32 %v980, %v1074
      %v1078 = vld [vmem:[%s11] sm:$0x1]
      %v1079 = vld [vmem:[%s12] sm:$0x1]
      %v1080 = vsel %vm525, %v1076, 0.0
      %1081 = vadd.xlane.f32.xlu0 %v1080
      %v1082 = vpop.xlane.xlu0 %1081
      %v1083 = vsel %vm525, %v1077, 0.0
      %1084 = vadd.xlane.f32.xlu0 %v1083
      %v1085 = vpop.xlane.xlu0 %1084
      %v1086 = vmul.f32 %v1082, %v932
      %v1087 = vmul.f32 %v1085, %v932
      %v1088 = vsub.f32 %v1076, %v1086
      %v1089 = vsub.f32 %v1077, %v1087
      %v1090 = vmul.f32 %v1088, %v1088
      %v1091 = vmul.f32 %v1089, %v1089
      %v1092 = vsel %vm525, %v1090, 0.0
      %1093 = vadd.xlane.f32.xlu0 %v1092
      %v1094 = vpop.xlane.xlu0 %1093
      %v1095 = vsel %vm525, %v1091, 0.0
      %1096 = vadd.xlane.f32.xlu0 %v1095
      %v1097 = vpop.xlane.xlu0 %1096
      %v1098 = vmul.f32 %v1094, %v932
      %v1099 = vmul.f32 %v1097, %v932
      %v1100 = vadd.f32 %v1098, 1e-05
      %v1101 = vadd.f32 %v1099, 1e-05
      %v1102 = vrsqrt.pop %v1100
      %v1103 = vmul.f32 %v1102, %v1100
      %v1104 = vmul.f32 %v1103, %v1102
      %v1105 = vmul.f32 0.5, %v1104
      %v1106 = vsub.f32 1.5, %v1105
      %v1107 = vmul.f32 %v1102, %v1106
      %vm1108 = vweird.f32 %v1100
      %vm1109 = vweird.f32 %v1102
      %vm1110 = vmor %vm1108, %vm1109
      %v1111 = vsel %vm1110, %v1102, %v1107
      %v1112 = vrsqrt.pop %v1101
      %v1113 = vmul.f32 %v1112, %v1101
      %v1114 = vmul.f32 %v1113, %v1112
      %v1115 = vmul.f32 0.5, %v1114
      %v1116 = vsub.f32 1.5, %v1115
      %v1117 = vmul.f32 %v1112, %v1116
      %vm1118 = vweird.f32 %v1101
      %vm1119 = vweird.f32 %v1112
      %vm1120 = vmor %vm1118, %vm1119
      %v1121 = vsel %vm1120, %v1112, %v1117
      %v1122 = vmul.f32 %v1088, %v1111
      %v1123 = vmul.f32 %v1089, %v1121
      %v1125 = vperm.slane %v1078, 0
      %v1127 = vmul.f32 %v1122, %v1125
      %v1128 = vmul.f32 %v1123, %v1125
      %v1130 = vperm.slane %v1079, 0
      %v1132 = vadd.f32 %v1127, %v1130
      %v1133 = vadd.f32 %v1128, %v1130
      %v1134 = vld [vmem:[%s13] sm:$0x1]
      %v1135 = vld [vmem:[%s14] sm:$0x1]
      %v1136 = vsel %vm525, %v1132, 0.0
      %1137 = vadd.xlane.f32.xlu0 %v1136
      %v1138 = vpop.xlane.xlu0 %1137
      %v1139 = vsel %vm525, %v1133, 0.0
      %1140 = vadd.xlane.f32.xlu0 %v1139
      %v1141 = vpop.xlane.xlu0 %1140
      %v1142 = vmul.f32 %v1138, %v932
      %v1143 = vmul.f32 %v1141, %v932
      %v1144 = vsub.f32 %v1132, %v1142
      %v1145 = vsub.f32 %v1133, %v1143
      %v1146 = vmul.f32 %v1144, %v1144
      %v1147 = vmul.f32 %v1145, %v1145
      %v1148 = vsel %vm525, %v1146, 0.0
      %1149 = vadd.xlane.f32.xlu0 %v1148
      %v1150 = vpop.xlane.xlu0 %1149
      %v1151 = vsel %vm525, %v1147, 0.0
      %1152 = vadd.xlane.f32.xlu0 %v1151
      %v1153 = vpop.xlane.xlu0 %1152
      %v1154 = vmul.f32 %v1150, %v932
      %v1155 = vmul.f32 %v1153, %v932
      %v1156 = vadd.f32 %v1154, 1e-05
      %v1157 = vadd.f32 %v1155, 1e-05
      %v1158 = vrsqrt.pop %v1156
      %v1159 = vmul.f32 %v1158, %v1156
      %v1160 = vmul.f32 %v1159, %v1158
      %v1161 = vmul.f32 0.5, %v1160
      %v1162 = vsub.f32 1.5, %v1161
      %v1163 = vmul.f32 %v1158, %v1162
      %vm1164 = vweird.f32 %v1156
      %vm1165 = vweird.f32 %v1158
      %vm1166 = vmor %vm1164, %vm1165
      %v1167 = vsel %vm1166, %v1158, %v1163
      %v1168 = vrsqrt.pop %v1157
      %v1169 = vmul.f32 %v1168, %v1157
      %v1170 = vmul.f32 %v1169, %v1168
      %v1171 = vmul.f32 0.5, %v1170
      %v1172 = vsub.f32 1.5, %v1171
      %v1173 = vmul.f32 %v1168, %v1172
      %vm1174 = vweird.f32 %v1157
      %vm1175 = vweird.f32 %v1168
      %vm1176 = vmor %vm1174, %vm1175
      %v1177 = vsel %vm1176, %v1168, %v1173
      %v1178 = vmul.f32 %v1144, %v1167
      %v1179 = vmul.f32 %v1145, %v1177
      %v1181 = vperm.slane %v1134, 0
      %v1183 = vmul.f32 %v1178, %v1181
      %v1184 = vmul.f32 %v1179, %v1181
      %v1186 = vperm.slane %v1135, 0
      %v1188 = vadd.f32 %v1183, %v1186
      %v1189 = vadd.f32 %v1184, %v1186
      %v1190 = vpack.c.bf16 %v1188, %v1188
      %v1191 = vpack.c.bf16 %v1189, %v1189
      %vm1192 = vcmask 257024
      %1193 = vst.msk [vmem:[%s494] sm:$0xf] %vm1192, %v1190
      %1194 = vst.msk [vmem:[%s494 + $0x4] sm:$0xf] %vm1192, %v1191
      %p1195 = scmp.lt.s32.totalorder %s26, 1
      %s1196 = scalar_select %p1195, %s26, 1
      %s1197 = smul.addr %s1196, 2
      %s1198 = smul.addr %s1197, 4
      %s1199 = scalar_lea.vmem %s15, %s1198
      // Predicated region
      $region81: #{transformer_forward.6} parent=79 // pred_check
        %p1200 = pneg %p364
      $region82: #{transformer_forward.6} parent=79 // pred_check_branch
        %1202 = sbr.rel (%p1200) target = $region84
      $region83: #{transformer_forward.6} parent=79 // pred_region
        _
      $region84: #{transformer_forward.6} parent=79 // pred_fallthru
        _
    $region80: #{transformer_forward.6} parent=5 // pred_fallthru
      _
    %p1203 = scmp.le.s32.totalorder 2, %s21
    // Predicated region
    $region85: #{transformer_forward.6} parent=5 // pred_check
      %p1204 = pneg %p1203
    $region86: #{transformer_forward.6} parent=5 // pred_check_branch
      %1206 = sbr.rel (%p1204) target = $region88
    $region87: #{transformer_forward.6} parent=5 // pred_region
      %s1207 = ssub.s32 %s21, 2
      // Predicated region
      $region89: #{transformer_forward.6} parent=87 // pred_check
        %p1208 = pneg %p370
      $region90: #{transformer_forward.6} parent=87 // pred_check_branch
        %1210 = sbr.rel (%p1208) target = $region92
      $region91: #{transformer_forward.6} parent=87 // pred_region
        %p1211 = scmp.lt.s32.totalorder %s27, 1
        %s1212 = scalar_select %p1211, %s27, 1
        %s1213 = smul.addr %s1212, 2
        %s1214 = smul.addr %s1213, 4
        %s1215 = scalar_lea.vmem %s15, %s1214
      $region92: #{transformer_forward.6} parent=87 // pred_fallthru
        _
    $region88: #{transformer_forward.6} parent=5 // pred_fallthru
      _
  $region6: #{transformer_forward.6} parent=0 // loop_footer
    %s25 = sadd.s32 1, %s21
  $region7: #{transformer_forward.6} parent=0 // loop_footer_branch
    %20 = sbr.rel target = $region3
  $region8: #{transformer_forward.6} parent=0 // loop_exit
    _

// kernel: transformer_forward.7
$region0: #{transformer_forward.7}
  #allocation0 [shape = 'u32[]', space=smem, size = 0x4, offset = 0x4, fixed_abs, tag = 'smem constant byte address 0x4 - core index']
  #allocation1 [shape = 'u32[72,128]{1,0:T(1,128)}', space=vmem, size = 0x9000, scoped, tag = 'internal scratch']
  %s0 = inlined_call_operand.vmem [shape: bf16[2,8,32], index: 0, kind: input, shape index: {}]
  %s1 = inlined_call_operand.vmem [shape: bf16[2,16,32], index: 1, kind: input, shape index: {}]
  %s2 = inlined_call_operand.vmem [shape: bf16[32,96], index: 2, kind: input, shape index: {}]
  %s3 = inlined_call_operand.vmem [shape: f32[1,96], index: 3, kind: input, shape index: {}]
  %s4 = inlined_call_operand.vmem [shape: bf16[32,32], index: 4, kind: input, shape index: {}]
  %s5 = inlined_call_operand.vmem [shape: f32[1,32], index: 5, kind: input, shape index: {}]
  %s6 = inlined_call_operand.vmem [shape: f32[1,32], index: 6, kind: input, shape index: {}]
  %s7 = inlined_call_operand.vmem [shape: f32[1,32], index: 7, kind: input, shape index: {}]
  %s8 = inlined_call_operand.vmem [shape: bf16[32,32], index: 8, kind: input, shape index: {}]
  %s9 = inlined_call_operand.vmem [shape: f32[1,32], index: 9, kind: input, shape index: {}]
  %s10 = inlined_call_operand.vmem [shape: bf16[32,64], index: 10, kind: input, shape index: {}]
  %s11 = inlined_call_operand.vmem [shape: f32[1,64], index: 11, kind: input, shape index: {}]
  %s12 = inlined_call_operand.vmem [shape: bf16[32,32], index: 12, kind: input, shape index: {}]
  %s13 = inlined_call_operand.vmem [shape: f32[1,32], index: 13, kind: input, shape index: {}]
  %s14 = inlined_call_operand.vmem [shape: f32[1,32], index: 14, kind: input, shape index: {}]
  %s15 = inlined_call_operand.vmem [shape: f32[1,32], index: 15, kind: input, shape index: {}]
  %s16 = inlined_call_operand.vmem [shape: bf16[32,64], index: 16, kind: input, shape index: {}]
  %s17 = inlined_call_operand.vmem [shape: f32[1,64], index: 17, kind: input, shape index: {}]
  %s18 = inlined_call_operand.vmem [shape: bf16[64,32], index: 18, kind: input, shape index: {}]
  %s19 = inlined_call_operand.vmem [shape: f32[1,32], index: 19, kind: input, shape index: {}]
  %s20 = inlined_call_operand.vmem [shape: f32[1,32], index: 20, kind: input, shape index: {}]
  %s21 = inlined_call_operand.vmem [shape: f32[1,32], index: 21, kind: input, shape index: {}]
  %s22 = inlined_call_operand.vmem [shape: bf16[2,8,32], index: 22, kind: output, shape index: {}]
  %s23 = sld [smem:[#allocation0]]
  $region121: #{transformer_forward.7} parent=0
    _
  %s25 = ssub.s32 1, %s23
  %s26 = scalar_select 0, %s25, %s23
  loop: start=0, step=1, limit=4
  $region2: #{transformer_forward.7} parent=0 // loop_pre_header
    _
  $region3: #{transformer_forward.7} parent=0 // loop_header
    %s28 = sphi 0, %s32
    %p29 = scmp.ge.s32.totalorder %s28, 4
    %s38 = sphi 0, %s40
    %s41 = sphi 0, %s38
    %s42 = sphi 0, %s41
    %s58 = sphi 0, %s42
    %s64 = sphi 0, %s66
    %s67 = sphi 0, %s64
    %s68 = sphi 0, %s67
    %s84 = sphi 0, %s68
    %s88 = sphi 0, %s88
    %s90 = sphi 0, %s88
    %s91 = sphi 0, %s90
    %s105 = sphi 0, %s91
    %s109 = sphi 0, %s109
    %s111 = sphi 0, %s109
    %s112 = sphi 0, %s111
    %s126 = sphi 0, %s112
    %s130 = sphi 0, %s130
    %s132 = sphi 0, %s130
    %s133 = sphi 0, %s132
    %s147 = sphi 0, %s133
    %s151 = sphi 0, %s151
    %s153 = sphi 0, %s151
    %s154 = sphi 0, %s153
    %s168 = sphi 0, %s154
    %s172 = sphi 0, %s172
    %s174 = sphi 0, %s172
    %s175 = sphi 0, %s174
    %s189 = sphi 0, %s175
    %s193 = sphi 0, %s193
    %s195 = sphi 0, %s193
    %s196 = sphi 0, %s195
    %s210 = sphi 0, %s196
    %s214 = sphi 0, %s214
    %s216 = sphi 0, %s214
    %s217 = sphi 0, %s216
    %s231 = sphi 0, %s217
    %s235 = sphi 0, %s235
    %s237 = sphi 0, %s235
    %s238 = sphi 0, %s237
    %s252 = sphi 0, %s238
    %s256 = sphi 0, %s256
    %s258 = sphi 0, %s256
    %s259 = sphi 0, %s258
    %s273 = sphi 0, %s259
    %s277 = sphi 0, %s277
    %s279 = sphi 0, %s277
    %s280 = sphi 0, %s279
    %s294 = sphi 0, %s280
    %s298 = sphi 0, %s298
    %s300 = sphi 0, %s298
    %s301 = sphi 0, %s300
    %s315 = sphi 0, %s301
    %s319 = sphi 0, %s319
    %s321 = sphi 0, %s319
    %s322 = sphi 0, %s321
    %s336 = sphi 0, %s322
    %s340 = sphi 0, %s340
    %s342 = sphi 0, %s340
    %s343 = sphi 0, %s342
    %s357 = sphi 0, %s343
    %s361 = sphi 0, %s361
    %s363 = sphi 0, %s361
    %s364 = sphi 0, %s363
    %s378 = sphi 0, %s364
    %s382 = sphi 0, %s382
    %s384 = sphi 0, %s382
    %s385 = sphi 0, %s384
    %s399 = sphi 0, %s385
    %s403 = sphi 0, %s403
    %s405 = sphi 0, %s403
    %s406 = sphi 0, %s405
    %s420 = sphi 0, %s406
    %s424 = sphi 0, %s424
    %s426 = sphi 0, %s424
    %s427 = sphi 0, %s426
    %s441 = sphi 0, %s427
    %s445 = sphi 0, %s445
    %s447 = sphi 0, %s445
    %s448 = sphi 0, %s447
    %s462 = sphi 0, %s448
    %s466 = sphi 0, %s466
    %s468 = sphi 0, %s466
    %s469 = sphi 0, %s468
    %s483 = sphi 0, %s469
    %s487 = sphi 0, %s487
    %s489 = sphi 0, %s487
    %s490 = sphi 0, %s489
    %s504 = sphi 0, %s490
    %s510 = sphi 0, %s512
    %s513 = sphi 0, %s510
    %s514 = sphi 0, %s513
    %s530 = sphi 0, %s514
  $region4: #{transformer_forward.7} parent=0 // loop_header_branch
    %31 = sbr.rel (%p29) target = $region8
  $region5: #{transformer_forward.7} parent=0 // loop_body
    %s33 = ssub.s32 %s28, 1
    %s34 = ssub.s32 %s28, 2
    %s35 = sadd.s32 %s28, 1
    %s36 = ssub.s32 %s28, %s35
    %p37 = scmp.eq.s32.totalorder %s36, 0
    %s39 = sadd.s32 %s38, 1
    %s40 = scalar_select %p37, %s38, %s39
    %p43 = pneg %p37
    %p44 = scmp.eq.s32.totalorder %s28, 1
    %p45 = por %p43, %p44
    %p46 = scmp.ne.s32.totalorder %s38, %s41
    %p47 = scmp.eq.s32.totalorder %s28, 0
    %p48 = por %p46, %p47
    %p49 = scmp.ne.s32.totalorder %s38, %s41
    %p50 = scmp.eq.s32.totalorder %s33, 1
    %p51 = por %p49, %p50
    %p52 = scmp.ne.s32.totalorder %s41, %s42
    %p53 = scmp.eq.s32.totalorder %s33, 0
    %p54 = por %p52, %p53
    %p55 = scmp.ne.s32.totalorder %s41, %s42
    %p56 = scmp.eq.s32.totalorder %s34, 1
    %p57 = por %p55, %p56
    %p59 = scmp.ne.s32.totalorder %s42, %s58
    %p60 = scmp.eq.s32.totalorder %s34, 0
    %p61 = por %p59, %p60
    %s62 = ssub.s32 %s28, %s35
    %p63 = scmp.eq.s32.totalorder %s62, 0
    %s65 = sadd.s32 %s64, 1
    %s66 = scalar_select %p63, %s64, %s65
    %p69 = pneg %p63
    %p70 = scmp.eq.s32.totalorder %s28, 1
    %p71 = por %p69, %p70
    %p72 = scmp.ne.s32.totalorder %s64, %s67
    %p73 = scmp.eq.s32.totalorder %s28, 0
    %p74 = por %p72, %p73
    %p75 = scmp.ne.s32.totalorder %s64, %s67
    %p76 = scmp.eq.s32.totalorder %s33, 1
    %p77 = por %p75, %p76
    %p78 = scmp.ne.s32.totalorder %s67, %s68
    %p79 = scmp.eq.s32.totalorder %s33, 0
    %p80 = por %p78, %p79
    %p81 = scmp.ne.s32.totalorder %s67, %s68
    %p82 = scmp.eq.s32.totalorder %s34, 1
    %p83 = por %p81, %p82
    %p85 = scmp.ne.s32.totalorder %s68, %s84
    %p86 = scmp.eq.s32.totalorder %s34, 0
    %p87 = por %p85, %p86
    %s89 = sadd.s32 %s88, 1
    %p92 = scmp.eq.s32.totalorder %s28, 1
    %p93 = scmp.ne.s32.totalorder %s88, %s90
    %p94 = scmp.eq.s32.totalorder %s28, 0
    %p95 = por %p93, %p94
    %p96 = scmp.ne.s32.totalorder %s88, %s90
    %p97 = scmp.eq.s32.totalorder %s33, 1
    %p98 = por %p96, %p97
    %p99 = scmp.ne.s32.totalorder %s90, %s91
    %p100 = scmp.eq.s32.totalorder %s33, 0
    %p101 = por %p99, %p100
    %p102 = scmp.ne.s32.totalorder %s90, %s91
    %p103 = scmp.eq.s32.totalorder %s34, 1
    %p104 = por %p102, %p103
    %p106 = scmp.ne.s32.totalorder %s91, %s105
    %p107 = scmp.eq.s32.totalorder %s34, 0
    %p108 = por %p106, %p107
    %s110 = sadd.s32 %s109, 1
    %p113 = scmp.eq.s32.totalorder %s28, 1
    %p114 = scmp.ne.s32.totalorder %s109, %s111
    %p115 = scmp.eq.s32.totalorder %s28, 0
    %p116 = por %p114, %p115
    %p117 = scmp.ne.s32.totalorder %s109, %s111
    %p118 = scmp.eq.s32.totalorder %s33, 1
    %p119 = por %p117, %p118
    %p120 = scmp.ne.s32.totalorder %s111, %s112
    %p121 = scmp.eq.s32.totalorder %s33, 0
    %p122 = por %p120, %p121
    %p123 = scmp.ne.s32.totalorder %s111, %s112
    %p124 = scmp.eq.s32.totalorder %s34, 1
    %p125 = por %p123, %p124
    %p127 = scmp.ne.s32.totalorder %s112, %s126
    %p128 = scmp.eq.s32.totalorder %s34, 0
    %p129 = por %p127, %p128
    %s131 = sadd.s32 %s130, 1
    %p134 = scmp.eq.s32.totalorder %s28, 1
    %p135 = scmp.ne.s32.totalorder %s130, %s132
    %p136 = scmp.eq.s32.totalorder %s28, 0
    %p137 = por %p135, %p136
    %p138 = scmp.ne.s32.totalorder %s130, %s132
    %p139 = scmp.eq.s32.totalorder %s33, 1
    %p140 = por %p138, %p139
    %p141 = scmp.ne.s32.totalorder %s132, %s133
    %p142 = scmp.eq.s32.totalorder %s33, 0
    %p143 = por %p141, %p142
    %p144 = scmp.ne.s32.totalorder %s132, %s133
    %p145 = scmp.eq.s32.totalorder %s34, 1
    %p146 = por %p144, %p145
    %p148 = scmp.ne.s32.totalorder %s133, %s147
    %p149 = scmp.eq.s32.totalorder %s34, 0
    %p150 = por %p148, %p149
    %s152 = sadd.s32 %s151, 1
    %p155 = scmp.eq.s32.totalorder %s28, 1
    %p156 = scmp.ne.s32.totalorder %s151, %s153
    %p157 = scmp.eq.s32.totalorder %s28, 0
    %p158 = por %p156, %p157
    %p159 = scmp.ne.s32.totalorder %s151, %s153
    %p160 = scmp.eq.s32.totalorder %s33, 1
    %p161 = por %p159, %p160
    %p162 = scmp.ne.s32.totalorder %s153, %s154
    %p163 = scmp.eq.s32.totalorder %s33, 0
    %p164 = por %p162, %p163
    %p165 = scmp.ne.s32.totalorder %s153, %s154
    %p166 = scmp.eq.s32.totalorder %s34, 1
    %p167 = por %p165, %p166
    %p169 = scmp.ne.s32.totalorder %s154, %s168
    %p170 = scmp.eq.s32.totalorder %s34, 0
    %p171 = por %p169, %p170
    %s173 = sadd.s32 %s172, 1
    %p176 = scmp.eq.s32.totalorder %s28, 1
    %p177 = scmp.ne.s32.totalorder %s172, %s174
    %p178 = scmp.eq.s32.totalorder %s28, 0
    %p179 = por %p177, %p178
    %p180 = scmp.ne.s32.totalorder %s172, %s174
    %p181 = scmp.eq.s32.totalorder %s33, 1
    %p182 = por %p180, %p181
    %p183 = scmp.ne.s32.totalorder %s174, %s175
    %p184 = scmp.eq.s32.totalorder %s33, 0
    %p185 = por %p183, %p184
    %p186 = scmp.ne.s32.totalorder %s174, %s175
    %p187 = scmp.eq.s32.totalorder %s34, 1
    %p188 = por %p186, %p187
    %p190 = scmp.ne.s32.totalorder %s175, %s189
    %p191 = scmp.eq.s32.totalorder %s34, 0
    %p192 = por %p190, %p191
    %s194 = sadd.s32 %s193, 1
    %p197 = scmp.eq.s32.totalorder %s28, 1
    %p198 = scmp.ne.s32.totalorder %s193, %s195
    %p199 = scmp.eq.s32.totalorder %s28, 0
    %p200 = por %p198, %p199
    %p201 = scmp.ne.s32.totalorder %s193, %s195
    %p202 = scmp.eq.s32.totalorder %s33, 1
    %p203 = por %p201, %p202
    %p204 = scmp.ne.s32.totalorder %s195, %s196
    %p205 = scmp.eq.s32.totalorder %s33, 0
    %p206 = por %p204, %p205
    %p207 = scmp.ne.s32.totalorder %s195, %s196
    %p208 = scmp.eq.s32.totalorder %s34, 1
    %p209 = por %p207, %p208
    %p211 = scmp.ne.s32.totalorder %s196, %s210
    %p212 = scmp.eq.s32.totalorder %s34, 0
    %p213 = por %p211, %p212
    %s215 = sadd.s32 %s214, 1
    %p218 = scmp.eq.s32.totalorder %s28, 1
    %p219 = scmp.ne.s32.totalorder %s214, %s216
    %p220 = scmp.eq.s32.totalorder %s28, 0
    %p221 = por %p219, %p220
    %p222 = scmp.ne.s32.totalorder %s214, %s216
    %p223 = scmp.eq.s32.totalorder %s33, 1
    %p224 = por %p222, %p223
    %p225 = scmp.ne.s32.totalorder %s216, %s217
    %p226 = scmp.eq.s32.totalorder %s33, 0
    %p227 = por %p225, %p226
    %p228 = scmp.ne.s32.totalorder %s216, %s217
    %p229 = scmp.eq.s32.totalorder %s34, 1
    %p230 = por %p228, %p229
    %p232 = scmp.ne.s32.totalorder %s217, %s231
    %p233 = scmp.eq.s32.totalorder %s34, 0
    %p234 = por %p232, %p233
    %s236 = sadd.s32 %s235, 1
    %p239 = scmp.eq.s32.totalorder %s28, 1
    %p240 = scmp.ne.s32.totalorder %s235, %s237
    %p241 = scmp.eq.s32.totalorder %s28, 0
    %p242 = por %p240, %p241
    %p243 = scmp.ne.s32.totalorder %s235, %s237
    %p244 = scmp.eq.s32.totalorder %s33, 1
    %p245 = por %p243, %p244
    %p246 = scmp.ne.s32.totalorder %s237, %s238
    %p247 = scmp.eq.s32.totalorder %s33, 0
    %p248 = por %p246, %p247
    %p249 = scmp.ne.s32.totalorder %s237, %s238
    %p250 = scmp.eq.s32.totalorder %s34, 1
    %p251 = por %p249, %p250
    %p253 = scmp.ne.s32.totalorder %s238, %s252
    %p254 = scmp.eq.s32.totalorder %s34, 0
    %p255 = por %p253, %p254
    %s257 = sadd.s32 %s256, 1
    %p260 = scmp.eq.s32.totalorder %s28, 1
    %p261 = scmp.ne.s32.totalorder %s256, %s258
    %p262 = scmp.eq.s32.totalorder %s28, 0
    %p263 = por %p261, %p262
    %p264 = scmp.ne.s32.totalorder %s256, %s258
    %p265 = scmp.eq.s32.totalorder %s33, 1
    %p266 = por %p264, %p265
    %p267 = scmp.ne.s32.totalorder %s258, %s259
    %p268 = scmp.eq.s32.totalorder %s33, 0
    %p269 = por %p267, %p268
    %p270 = scmp.ne.s32.totalorder %s258, %s259
    %p271 = scmp.eq.s32.totalorder %s34, 1
    %p272 = por %p270, %p271
    %p274 = scmp.ne.s32.totalorder %s259, %s273
    %p275 = scmp.eq.s32.totalorder %s34, 0
    %p276 = por %p274, %p275
    %s278 = sadd.s32 %s277, 1
    %p281 = scmp.eq.s32.totalorder %s28, 1
    %p282 = scmp.ne.s32.totalorder %s277, %s279
    %p283 = scmp.eq.s32.totalorder %s28, 0
    %p284 = por %p282, %p283
    %p285 = scmp.ne.s32.totalorder %s277, %s279
    %p286 = scmp.eq.s32.totalorder %s33, 1
    %p287 = por %p285, %p286
    %p288 = scmp.ne.s32.totalorder %s279, %s280
    %p289 = scmp.eq.s32.totalorder %s33, 0
    %p290 = por %p288, %p289
    %p291 = scmp.ne.s32.totalorder %s279, %s280
    %p292 = scmp.eq.s32.totalorder %s34, 1
    %p293 = por %p291, %p292
    %p295 = scmp.ne.s32.totalorder %s280, %s294
    %p296 = scmp.eq.s32.totalorder %s34, 0
    %p297 = por %p295, %p296
    %s299 = sadd.s32 %s298, 1
    %p302 = scmp.eq.s32.totalorder %s28, 1
    %p303 = scmp.ne.s32.totalorder %s298, %s300
    %p304 = scmp.eq.s32.totalorder %s28, 0
    %p305 = por %p303, %p304
    %p306 = scmp.ne.s32.totalorder %s298, %s300
    %p307 = scmp.eq.s32.totalorder %s33, 1
    %p308 = por %p306, %p307
    %p309 = scmp.ne.s32.totalorder %s300, %s301
    %p310 = scmp.eq.s32.totalorder %s33, 0
    %p311 = por %p309, %p310
    %p312 = scmp.ne.s32.totalorder %s300, %s301
    %p313 = scmp.eq.s32.totalorder %s34, 1
    %p314 = por %p312, %p313
    %p316 = scmp.ne.s32.totalorder %s301, %s315
    %p317 = scmp.eq.s32.totalorder %s34, 0
    %p318 = por %p316, %p317
    %s320 = sadd.s32 %s319, 1
    %p323 = scmp.eq.s32.totalorder %s28, 1
    %p324 = scmp.ne.s32.totalorder %s319, %s321
    %p325 = scmp.eq.s32.totalorder %s28, 0
    %p326 = por %p324, %p325
    %p327 = scmp.ne.s32.totalorder %s319, %s321
    %p328 = scmp.eq.s32.totalorder %s33, 1
    %p329 = por %p327, %p328
    %p330 = scmp.ne.s32.totalorder %s321, %s322
    %p331 = scmp.eq.s32.totalorder %s33, 0
    %p332 = por %p330, %p331
    %p333 = scmp.ne.s32.totalorder %s321, %s322
    %p334 = scmp.eq.s32.totalorder %s34, 1
    %p335 = por %p333, %p334
    %p337 = scmp.ne.s32.totalorder %s322, %s336
    %p338 = scmp.eq.s32.totalorder %s34, 0
    %p339 = por %p337, %p338
    %s341 = sadd.s32 %s340, 1
    %p344 = scmp.eq.s32.totalorder %s28, 1
    %p345 = scmp.ne.s32.totalorder %s340, %s342
    %p346 = scmp.eq.s32.totalorder %s28, 0
    %p347 = por %p345, %p346
    %p348 = scmp.ne.s32.totalorder %s340, %s342
    %p349 = scmp.eq.s32.totalorder %s33, 1
    %p350 = por %p348, %p349
    %p351 = scmp.ne.s32.totalorder %s342, %s343
    %p352 = scmp.eq.s32.totalorder %s33, 0
    %p353 = por %p351, %p352
    %p354 = scmp.ne.s32.totalorder %s342, %s343
    %p355 = scmp.eq.s32.totalorder %s34, 1
    %p356 = por %p354, %p355
    %p358 = scmp.ne.s32.totalorder %s343, %s357
    %p359 = scmp.eq.s32.totalorder %s34, 0
    %p360 = por %p358, %p359
    %s362 = sadd.s32 %s361, 1
    %p365 = scmp.eq.s32.totalorder %s28, 1
    %p366 = scmp.ne.s32.totalorder %s361, %s363
    %p367 = scmp.eq.s32.totalorder %s28, 0
    %p368 = por %p366, %p367
    %p369 = scmp.ne.s32.totalorder %s361, %s363
    %p370 = scmp.eq.s32.totalorder %s33, 1
    %p371 = por %p369, %p370
    %p372 = scmp.ne.s32.totalorder %s363, %s364
    %p373 = scmp.eq.s32.totalorder %s33, 0
    %p374 = por %p372, %p373
    %p375 = scmp.ne.s32.totalorder %s363, %s364
    %p376 = scmp.eq.s32.totalorder %s34, 1
    %p377 = por %p375, %p376
    %p379 = scmp.ne.s32.totalorder %s364, %s378
    %p380 = scmp.eq.s32.totalorder %s34, 0
    %p381 = por %p379, %p380
    %s383 = sadd.s32 %s382, 1
    %p386 = scmp.eq.s32.totalorder %s28, 1
    %p387 = scmp.ne.s32.totalorder %s382, %s384
    %p388 = scmp.eq.s32.totalorder %s28, 0
    %p389 = por %p387, %p388
    %p390 = scmp.ne.s32.totalorder %s382, %s384
    %p391 = scmp.eq.s32.totalorder %s33, 1
    %p392 = por %p390, %p391
    %p393 = scmp.ne.s32.totalorder %s384, %s385
    %p394 = scmp.eq.s32.totalorder %s33, 0
    %p395 = por %p393, %p394
    %p396 = scmp.ne.s32.totalorder %s384, %s385
    %p397 = scmp.eq.s32.totalorder %s34, 1
    %p398 = por %p396, %p397
    %p400 = scmp.ne.s32.totalorder %s385, %s399
    %p401 = scmp.eq.s32.totalorder %s34, 0
    %p402 = por %p400, %p401
    %s404 = sadd.s32 %s403, 1
    %p407 = scmp.eq.s32.totalorder %s28, 1
    %p408 = scmp.ne.s32.totalorder %s403, %s405
    %p409 = scmp.eq.s32.totalorder %s28, 0
    %p410 = por %p408, %p409
    %p411 = scmp.ne.s32.totalorder %s403, %s405
    %p412 = scmp.eq.s32.totalorder %s33, 1
    %p413 = por %p411, %p412
    %p414 = scmp.ne.s32.totalorder %s405, %s406
    %p415 = scmp.eq.s32.totalorder %s33, 0
    %p416 = por %p414, %p415
    %p417 = scmp.ne.s32.totalorder %s405, %s406
    %p418 = scmp.eq.s32.totalorder %s34, 1
    %p419 = por %p417, %p418
    %p421 = scmp.ne.s32.totalorder %s406, %s420
    %p422 = scmp.eq.s32.totalorder %s34, 0
    %p423 = por %p421, %p422
    %s425 = sadd.s32 %s424, 1
    %p428 = scmp.eq.s32.totalorder %s28, 1
    %p429 = scmp.ne.s32.totalorder %s424, %s426
    %p430 = scmp.eq.s32.totalorder %s28, 0
    %p431 = por %p429, %p430
    %p432 = scmp.ne.s32.totalorder %s424, %s426
    %p433 = scmp.eq.s32.totalorder %s33, 1
    %p434 = por %p432, %p433
    %p435 = scmp.ne.s32.totalorder %s426, %s427
    %p436 = scmp.eq.s32.totalorder %s33, 0
    %p437 = por %p435, %p436
    %p438 = scmp.ne.s32.totalorder %s426, %s427
    %p439 = scmp.eq.s32.totalorder %s34, 1
    %p440 = por %p438, %p439
    %p442 = scmp.ne.s32.totalorder %s427, %s441
    %p443 = scmp.eq.s32.totalorder %s34, 0
    %p444 = por %p442, %p443
    %s446 = sadd.s32 %s445, 1
    %p449 = scmp.eq.s32.totalorder %s28, 1
    %p450 = scmp.ne.s32.totalorder %s445, %s447
    %p451 = scmp.eq.s32.totalorder %s28, 0
    %p452 = por %p450, %p451
    %p453 = scmp.ne.s32.totalorder %s445, %s447
    %p454 = scmp.eq.s32.totalorder %s33, 1
    %p455 = por %p453, %p454
    %p456 = scmp.ne.s32.totalorder %s447, %s448
    %p457 = scmp.eq.s32.totalorder %s33, 0
    %p458 = por %p456, %p457
    %p459 = scmp.ne.s32.totalorder %s447, %s448
    %p460 = scmp.eq.s32.totalorder %s34, 1
    %p461 = por %p459, %p460
    %p463 = scmp.ne.s32.totalorder %s448, %s462
    %p464 = scmp.eq.s32.totalorder %s34, 0
    %p465 = por %p463, %p464
    %s467 = sadd.s32 %s466, 1
    %p470 = scmp.eq.s32.totalorder %s28, 1
    %p471 = scmp.ne.s32.totalorder %s466, %s468
    %p472 = scmp.eq.s32.totalorder %s28, 0
    %p473 = por %p471, %p472
    %p474 = scmp.ne.s32.totalorder %s466, %s468
    %p475 = scmp.eq.s32.totalorder %s33, 1
    %p476 = por %p474, %p475
    %p477 = scmp.ne.s32.totalorder %s468, %s469
    %p478 = scmp.eq.s32.totalorder %s33, 0
    %p479 = por %p477, %p478
    %p480 = scmp.ne.s32.totalorder %s468, %s469
    %p481 = scmp.eq.s32.totalorder %s34, 1
    %p482 = por %p480, %p481
    %p484 = scmp.ne.s32.totalorder %s469, %s483
    %p485 = scmp.eq.s32.totalorder %s34, 0
    %p486 = por %p484, %p485
    %s488 = sadd.s32 %s487, 1
    %p491 = scmp.eq.s32.totalorder %s28, 1
    %p492 = scmp.ne.s32.totalorder %s487, %s489
    %p493 = scmp.eq.s32.totalorder %s28, 0
    %p494 = por %p492, %p493
    %p495 = scmp.ne.s32.totalorder %s487, %s489
    %p496 = scmp.eq.s32.totalorder %s33, 1
    %p497 = por %p495, %p496
    %p498 = scmp.ne.s32.totalorder %s489, %s490
    %p499 = scmp.eq.s32.totalorder %s33, 0
    %p500 = por %p498, %p499
    %p501 = scmp.ne.s32.totalorder %s489, %s490
    %p502 = scmp.eq.s32.totalorder %s34, 1
    %p503 = por %p501, %p502
    %p505 = scmp.ne.s32.totalorder %s490, %s504
    %p506 = scmp.eq.s32.totalorder %s34, 0
    %p507 = por %p505, %p506
    %s508 = ssub.s32 %s28, %s35
    %p509 = scmp.eq.s32.totalorder %s508, 0
    %s511 = sadd.s32 %s510, 1
    %s512 = scalar_select %p509, %s510, %s511
    %p515 = pneg %p509
    %p516 = scmp.eq.s32.totalorder %s28, 1
    %p517 = por %p515, %p516
    %p518 = scmp.ne.s32.totalorder %s510, %s513
    %p519 = scmp.eq.s32.totalorder %s28, 0
    %p520 = por %p518, %p519
    %p521 = scmp.ne.s32.totalorder %s510, %s513
    %p522 = scmp.eq.s32.totalorder %s33, 1
    %p523 = por %p521, %p522
    %p524 = scmp.ne.s32.totalorder %s513, %s514
    %p525 = scmp.eq.s32.totalorder %s33, 0
    %p526 = por %p524, %p525
    %p527 = scmp.ne.s32.totalorder %s513, %s514
    %p528 = scmp.eq.s32.totalorder %s34, 1
    %p529 = por %p527, %p528
    %p531 = scmp.ne.s32.totalorder %s514, %s530
    %p532 = scmp.eq.s32.totalorder %s34, 0
    %p533 = por %p531, %p532
    %p534 = scmp.le.s32.totalorder 1, %s28
    %p535 = scmp.lt.s32.totalorder %s28, 3
    %p536 = pnand %p534, %p535
    %p537 = pneg %p536
    // Predicated region
    $region9: #{transformer_forward.7} parent=5 // pred_check
      _
    $region10: #{transformer_forward.7} parent=5 // pred_check_branch
      %539 = sbr.rel (%p536) target = $region12
    $region11: #{transformer_forward.7} parent=5 // pred_region
      %s540 = ssub.s32 %s28, 1
      // Predicated region
      $region13: #{transformer_forward.7} parent=11 // pred_check
        %p541 = pneg %p101
      $region14: #{transformer_forward.7} parent=11 // pred_check_branch
        %543 = sbr.rel (%p541) target = $region16
      $region15: #{transformer_forward.7} parent=11 // pred_region
        _
      $region16: #{transformer_forward.7} parent=11 // pred_fallthru
        _
      // Predicated region
      $region17: #{transformer_forward.7} parent=11 // pred_check
        %p544 = pneg %p122
      $region18: #{transformer_forward.7} parent=11 // pred_check_branch
        %546 = sbr.rel (%p544) target = $region20
      $region19: #{transformer_forward.7} parent=11 // pred_region
        _
      $region20: #{transformer_forward.7} parent=11 // pred_fallthru
        _
      // Predicated region
      $region21: #{transformer_forward.7} parent=11 // pred_check
        %p547 = pneg %p143
      $region22: #{transformer_forward.7} parent=11 // pred_check_branch
        %549 = sbr.rel (%p547) target = $region24
      $region23: #{transformer_forward.7} parent=11 // pred_region
        _
      $region24: #{transformer_forward.7} parent=11 // pred_fallthru
        _
      // Predicated region
      $region25: #{transformer_forward.7} parent=11 // pred_check
        %p550 = pneg %p164
      $region26: #{transformer_forward.7} parent=11 // pred_check_branch
        %552 = sbr.rel (%p550) target = $region28
      $region27: #{transformer_forward.7} parent=11 // pred_region
        _
      $region28: #{transformer_forward.7} parent=11 // pred_fallthru
        _
      // Predicated region
      $region29: #{transformer_forward.7} parent=11 // pred_check
        %p553 = pneg %p185
      $region30: #{transformer_forward.7} parent=11 // pred_check_branch
        %555 = sbr.rel (%p553) target = $region32
      $region31: #{transformer_forward.7} parent=11 // pred_region
        _
      $region32: #{transformer_forward.7} parent=11 // pred_fallthru
        _
      // Predicated region
      $region33: #{transformer_forward.7} parent=11 // pred_check
        %p556 = pneg %p206
      $region34: #{transformer_forward.7} parent=11 // pred_check_branch
        %558 = sbr.rel (%p556) target = $region36
      $region35: #{transformer_forward.7} parent=11 // pred_region
        _
      $region36: #{transformer_forward.7} parent=11 // pred_fallthru
        _
      // Predicated region
      $region37: #{transformer_forward.7} parent=11 // pred_check
        %p559 = pneg %p227
      $region38: #{transformer_forward.7} parent=11 // pred_check_branch
        %561 = sbr.rel (%p559) target = $region40
      $region39: #{transformer_forward.7} parent=11 // pred_region
        _
      $region40: #{transformer_forward.7} parent=11 // pred_fallthru
        _
      // Predicated region
      $region41: #{transformer_forward.7} parent=11 // pred_check
        %p562 = pneg %p248
      $region42: #{transformer_forward.7} parent=11 // pred_check_branch
        %564 = sbr.rel (%p562) target = $region44
      $region43: #{transformer_forward.7} parent=11 // pred_region
        _
      $region44: #{transformer_forward.7} parent=11 // pred_fallthru
        _
      // Predicated region
      $region45: #{transformer_forward.7} parent=11 // pred_check
        %p565 = pneg %p269
      $region46: #{transformer_forward.7} parent=11 // pred_check_branch
        %567 = sbr.rel (%p565) target = $region48
      $region47: #{transformer_forward.7} parent=11 // pred_region
        _
      $region48: #{transformer_forward.7} parent=11 // pred_fallthru
        _
      // Predicated region
      $region49: #{transformer_forward.7} parent=11 // pred_check
        %p568 = pneg %p290
      $region50: #{transformer_forward.7} parent=11 // pred_check_branch
        %570 = sbr.rel (%p568) target = $region52
      $region51: #{transformer_forward.7} parent=11 // pred_region
        _
      $region52: #{transformer_forward.7} parent=11 // pred_fallthru
        _
      // Predicated region
      $region53: #{transformer_forward.7} parent=11 // pred_check
        %p571 = pneg %p311
      $region54: #{transformer_forward.7} parent=11 // pred_check_branch
        %573 = sbr.rel (%p571) target = $region56
      $region55: #{transformer_forward.7} parent=11 // pred_region
        _
      $region56: #{transformer_forward.7} parent=11 // pred_fallthru
        _
      // Predicated region
      $region57: #{transformer_forward.7} parent=11 // pred_check
        %p574 = pneg %p332
      $region58: #{transformer_forward.7} parent=11 // pred_check_branch
        %576 = sbr.rel (%p574) target = $region60
      $region59: #{transformer_forward.7} parent=11 // pred_region
        _
      $region60: #{transformer_forward.7} parent=11 // pred_fallthru
        _
      // Predicated region
      $region61: #{transformer_forward.7} parent=11 // pred_check
        %p577 = pneg %p353
      $region62: #{transformer_forward.7} parent=11 // pred_check_branch
        %579 = sbr.rel (%p577) target = $region64
      $region63: #{transformer_forward.7} parent=11 // pred_region
        _
      $region64: #{transformer_forward.7} parent=11 // pred_fallthru
        _
      // Predicated region
      $region65: #{transformer_forward.7} parent=11 // pred_check
        %p580 = pneg %p374
      $region66: #{transformer_forward.7} parent=11 // pred_check_branch
        %582 = sbr.rel (%p580) target = $region68
      $region67: #{transformer_forward.7} parent=11 // pred_region
        _
      $region68: #{transformer_forward.7} parent=11 // pred_fallthru
        _
      // Predicated region
      $region69: #{transformer_forward.7} parent=11 // pred_check
        %p583 = pneg %p395
      $region70: #{transformer_forward.7} parent=11 // pred_check_branch
        %585 = sbr.rel (%p583) target = $region72
      $region71: #{transformer_forward.7} parent=11 // pred_region
        _
      $region72: #{transformer_forward.7} parent=11 // pred_fallthru
        _
      // Predicated region
      $region73: #{transformer_forward.7} parent=11 // pred_check
        %p586 = pneg %p416
      $region74: #{transformer_forward.7} parent=11 // pred_check_branch
        %588 = sbr.rel (%p586) target = $region76
      $region75: #{transformer_forward.7} parent=11 // pred_region
        _
      $region76: #{transformer_forward.7} parent=11 // pred_fallthru
        _
      // Predicated region
      $region77: #{transformer_forward.7} parent=11 // pred_check
        %p589 = pneg %p437
      $region78: #{transformer_forward.7} parent=11 // pred_check_branch
        %591 = sbr.rel (%p589) target = $region80
      $region79: #{transformer_forward.7} parent=11 // pred_region
        _
      $region80: #{transformer_forward.7} parent=11 // pred_fallthru
        _
      // Predicated region
      $region81: #{transformer_forward.7} parent=11 // pred_check
        %p592 = pneg %p458
      $region82: #{transformer_forward.7} parent=11 // pred_check_branch
        %594 = sbr.rel (%p592) target = $region84
      $region83: #{transformer_forward.7} parent=11 // pred_region
        _
      $region84: #{transformer_forward.7} parent=11 // pred_fallthru
        _
      // Predicated region
      $region85: #{transformer_forward.7} parent=11 // pred_check
        %p595 = pneg %p479
      $region86: #{transformer_forward.7} parent=11 // pred_check_branch
        %597 = sbr.rel (%p595) target = $region88
      $region87: #{transformer_forward.7} parent=11 // pred_region
        _
      $region88: #{transformer_forward.7} parent=11 // pred_fallthru
        _
      // Predicated region
      $region89: #{transformer_forward.7} parent=11 // pred_check
        %p598 = pneg %p500
      $region90: #{transformer_forward.7} parent=11 // pred_check_branch
        %600 = sbr.rel (%p598) target = $region92
      $region91: #{transformer_forward.7} parent=11 // pred_region
        _
      $region92: #{transformer_forward.7} parent=11 // pred_fallthru
        _
    $region12: #{transformer_forward.7} parent=5 // pred_fallthru
      _
    %p601 = scmp.lt.s32.totalorder %s28, 2
    // Predicated region
    $region93: #{transformer_forward.7} parent=5 // pred_check
      %p602 = pneg %p601
    $region94: #{transformer_forward.7} parent=5 // pred_check_branch
      %604 = sbr.rel (%p602) target = $region96
    $region95: #{transformer_forward.7} parent=5 // pred_region
      // Predicated region
      $region97: #{transformer_forward.7} parent=95 // pred_check
        %p605 = pneg %p48
      $region98: #{transformer_forward.7} parent=95 // pred_check_branch
        %607 = sbr.rel (%p605) target = $region100
      $region99: #{transformer_forward.7} parent=95 // pred_region
        %p608 = scmp.lt.s32.totalorder %s28, 1
        %s609 = scalar_select %p608, %s28, 1
        %s610 = smul.addr %s609, 4
        %s611 = scalar_lea.vmem %s0, %s610
      $region100: #{transformer_forward.7} parent=95 // pred_fallthru
        _
      // Predicated region
      $region101: #{transformer_forward.7} parent=95 // pred_check
        %p612 = pneg %p74
      $region102: #{transformer_forward.7} parent=95 // pred_check_branch
        %614 = sbr.rel (%p612) target = $region104
      $region103: #{transformer_forward.7} parent=95 // pred_region
        %p615 = scmp.lt.s32.totalorder %s28, 1
        %s616 = scalar_select %p615, %s28, 1
        %s617 = smul.addr %s616, 2
        %s618 = smul.addr %s617, 4
        %s619 = scalar_lea.vmem %s1, %s618
      $region104: #{transformer_forward.7} parent=95 // pred_fallthru
        _
    $region96: #{transformer_forward.7} parent=5 // pred_fallthru
      _
    %p620 = scmp.le.s32.totalorder 1, %s28
    %p621 = scmp.lt.s32.totalorder %s28, 3
    %p622 = pnand %p620, %p621
    %p623 = pneg %p622
    // Predicated region
    $region105: #{transformer_forward.7} parent=5 // pred_check
      _
    $region106: #{transformer_forward.7} parent=5 // pred_check_branch
      %625 = sbr.rel (%p622) target = $region108
    $region107: #{transformer_forward.7} parent=5 // pred_region
      %s626 = ssub.s32 %s28, 1
      %p627 = scmp.lt.s32.totalorder %s33, 1
      %s628 = scalar_select %p627, %s33, 1
      %s629 = smul.addr %s628, 4
      %s630 = scalar_lea.vmem %s0, %s629
      %p631 = pneg %p54
      %p632 = pneg %p51
      %p633 = scmp.lt.s32.totalorder %s33, 1
      %s634 = scalar_select %p633, %s33, 1
      %s635 = smul.addr %s634, 2
      %s636 = smul.addr %s635, 4
      %s637 = scalar_lea.vmem %s1, %s636
      %p638 = pneg %p80
      %p639 = pneg %p77
      %p640 = pneg %p101
      %p641 = pneg %p98
      %p642 = pneg %p122
      %p643 = pneg %p119
      %p644 = pneg %p143
      %p645 = pneg %p140
      %p646 = pneg %p164
      %p647 = pneg %p161
      %p648 = pneg %p185
      %p649 = pneg %p182
      %p650 = pneg %p206
      %p651 = pneg %p203
      %p652 = pneg %p227
      %p653 = pneg %p224
      %p654 = pneg %p248
      %p655 = pneg %p245
      %p656 = pneg %p269
      %p657 = pneg %p266
      %p658 = pneg %p290
      %p659 = pneg %p287
      %p660 = pneg %p311
      %p661 = pneg %p308
      %p662 = pneg %p332
      %p663 = pneg %p329
      %p664 = pneg %p353
      %p665 = pneg %p350
      %p666 = pneg %p374
      %p667 = pneg %p371
      %p668 = pneg %p395
      %p669 = pneg %p392
      %p670 = pneg %p416
      %p671 = pneg %p413
      %p672 = pneg %p437
      %p673 = pneg %p434
      %p674 = pneg %p458
      %p675 = pneg %p455
      %p676 = pneg %p479
      %p677 = pneg %p476
      %p678 = pneg %p500
      %p679 = pneg %p497
      %p680 = pneg %p526
      %p681 = pneg %p523
      %p682 = scmp.lt.s32.totalorder %s33, 1
      %s683 = scalar_select %p682, %s33, 1
      %s684 = smul.addr %s683, 4
      %s685 = scalar_lea.vmem %s22, %s684
      %p686 = scmp.lt.s32.totalorder %s33, 1
      %s687 = scalar_select %p686, %s33, 1
      %s688 = smul.addr %s687, 4
      %s689 = scalar_lea.vmem %s0, %s688
      %p690 = scmp.lt.s32.totalorder %s33, 1
      %s691 = scalar_select %p690, %s33, 1
      %s692 = smul.addr %s691, 2
      %s693 = smul.addr %s692, 4
      %s694 = scalar_lea.vmem %s1, %s693
      %p695 = scmp.lt.s32.totalorder %s33, 1
      %s696 = scalar_select %p695, %s33, 1
      %s697 = smul.addr %s696, 4
      %s698 = scalar_lea.vmem %s22, %s697
      %v700 = vld [vmem:[%s689] sm:$0xf]
      %v701 = vunpack.c.l.bf16 %v700
      %v702 = vld [vmem:[%s2] sm:$0xf]
      %v703 = vld [vmem:[%s2 + $0x4] sm:$0xf]
      %v704 = vld [vmem:[%s2 + $0x8] sm:$0xf]
      %v705 = vld [vmem:[%s2 + $0xc] sm:$0xf]
      %v706 = vld [vmem:[%s3] sm:$0x1]
      %v708 = vperm.slane %v706, 0
      %v714 = vunpack.c.l.b16 %v702
      %v715 = vunpack.c.l.b16 %v703
      %v716 = vunpack.c.l.b16 %v704
      %v717 = vunpack.c.l.b16 %v705
      %v718 = vpack.c.b16 %v715, %v714
      %v719 = vpack.c.b16 %v717, %v716
      %vm722 = vcmask 261120
      %v724 = vsel %vm722, %v700, 0
      %726 = vmatpush.bf16.msra.mxu0 0
      %727 = vmatpush.bf16.msra.mxu0 0
      %728 = vmatpush.bf16.msra.mxu0 0
      %729 = vmatpush.bf16.msra.mxu0 0
      %730 = vmatpush.bf16.msra.mxu0 0
      %731 = vmatpush.bf16.msra.mxu0 0
      %732 = vmatpush.bf16.msra.mxu0 %v719
      %733 = vmatpush.bf16.msra.mxu0 %v718
      %734 = vmatmul.bf16.gmra.mxu0 %v724
      %v735 = vpop.f32.mrf.mxu0
      %v736 = vadd.f32 %v708, %v735
      %v737 = vpop.f32.mrf.mxu0
      %738 = vdwg.mxu0
      %v739 = vmul.f32 %v736, 0.35355338
      %v740 = vld [vmem:[%s4] sm:$0xf]
      %v741 = vld [vmem:[%s4 + $0x4] sm:$0xf]
      %v742 = vld [vmem:[%s4 + $0x8] sm:$0xf]
      %v743 = vld [vmem:[%s4 + $0xc] sm:$0xf]
      %v744 = vpack.c.bf16 %v739, %v739
      %v745 = vpack.c.bf16 %v736, %v736
      %747 = vrot.lane.b32.xlu0 %v745, 96
      %v748 = vpop.permute.xlu0 %747
      %vm749 = vcmask 64512
      %v751 = vsel %vm749, %v744, 0
      %v754 = vsel %vm749, %v748, 0
      %756 = vmatpush.bf16.xpose.msra.mxu0 0
      %757 = vmatpush.bf16.xpose.msra.mxu0 0
      %758 = vmatpush.bf16.xpose.msra.mxu0 0
      %759 = vmatpush.bf16.xpose.msra.mxu0 0
      %760 = vmatpush.bf16.xpose.msra.mxu0 0
      %761 = vmatpush.bf16.xpose.msra.mxu0 0
      %762 = vmatpush.bf16.xpose.msra.mxu0 0
      %763 = vmatpush.bf16.xpose.msra.mxu0 %v754
      %764 = vmatmul.bf16.gmra.mxu0 %v751
      %v765 = vpop.f32.mrf.mxu0
      %v766 = vadd.f32 0.0, %v765
      %v767 = vpop.f32.mrf.mxu0
      %768 = vdwg.mxu0
      %v769 = vsel %vm749, %v766, -inf
      %770 = vmax.xlane.f32.xlu0 %v769
      %v771 = vpop.xlane.xlu0 %770
      %v772 = vsub.f32 %v766, %v771
      %v773 = vmul.f32 %v772, 1.442695
      %v774 = vpow.pop %v773
      %v775 = vsel %vm749, %v774, 0.0
      %776 = vadd.xlane.f32.xlu0 %v775
      %v777 = vpop.xlane.xlu0 %776
      %v778 = vpack.c.bf16 %v774, %v774
      %779 = vrot.lane.b32.xlu0 %v745, 64
      %v780 = vpop.permute.xlu0 %779
      %v782 = vsel %vm749, %v778, 0
      %vm784 = vcmask 1043456
      %v786 = vsel %vm784, %v780, 0
      %788 = vmatpush.bf16.msra.mxu0 0
      %789 = vmatpush.bf16.msra.mxu0 0
      %790 = vmatpush.bf16.msra.mxu0 0
      %791 = vmatpush.bf16.msra.mxu0 0
      %792 = vmatpush.bf16.msra.mxu0 0
      %793 = vmatpush.bf16.msra.mxu0 0
      %794 = vmatpush.bf16.msra.mxu0 0
      %795 = vmatpush.bf16.msra.mxu0 %v786
      %796 = vmatmul.bf16.gmra.mxu0 %v782
      %v797 = vpop.f32.mrf.mxu0
      %v798 = vadd.f32 0.0, %v797
      %v799 = vpop.f32.mrf.mxu0
      %800 = vdwg.mxu0
      %v801 = vrcp.pop %v777
      %v802 = vmul.f32 %v798, %v801
      %v803 = vpack.c.bf16 %v802, %v802
      %805 = vrot.lane.b32.xlu0 %v744, 120
      %v806 = vpop.permute.xlu0 %805
      %807 = vrot.lane.b32.xlu0 %v745, 88
      %v808 = vpop.permute.xlu0 %807
      %v810 = vsel %vm749, %v806, 0
      %v813 = vsel %vm749, %v808, 0
      %815 = vmatpush.bf16.xpose.msra.mxu0 0
      %816 = vmatpush.bf16.xpose.msra.mxu0 0
      %817 = vmatpush.bf16.xpose.msra.mxu0 0
      %818 = vmatpush.bf16.xpose.msra.mxu0 0
      %819 = vmatpush.bf16.xpose.msra.mxu0 0
      %820 = vmatpush.bf16.xpose.msra.mxu0 0
      %821 = vmatpush.bf16.xpose.msra.mxu0 0
      %822 = vmatpush.bf16.xpose.msra.mxu0 %v813
      %823 = vmatmul.bf16.gmra.mxu0 %v810
      %v824 = vpop.f32.mrf.mxu0
      %v825 = vadd.f32 0.0, %v824
      %v826 = vpop.f32.mrf.mxu0
      %827 = vdwg.mxu0
      %v828 = vsel %vm749, %v825, -inf
      %829 = vmax.xlane.f32.xlu0 %v828
      %v830 = vpop.xlane.xlu0 %829
      %v831 = vsub.f32 %v825, %v830
      %v832 = vmul.f32 %v831, 1.442695
      %v833 = vpow.pop %v832
      %v834 = vsel %vm749, %v833, 0.0
      %835 = vadd.xlane.f32.xlu0 %v834
      %v836 = vpop.xlane.xlu0 %835
      %v837 = vpack.c.bf16 %v833, %v833
      %838 = vrot.lane.b32.xlu0 %v745, 56
      %v839 = vpop.permute.xlu0 %838
      %v841 = vsel %vm749, %v837, 0
      %v844 = vsel %vm784, %v839, 0
      %846 = vmatpush.bf16.msra.mxu0 0
      %847 = vmatpush.bf16.msra.mxu0 0
      %848 = vmatpush.bf16.msra.mxu0 0
      %849 = vmatpush.bf16.msra.mxu0 0
      %850 = vmatpush.bf16.msra.mxu0 0
      %851 = vmatpush.bf16.msra.mxu0 0
      %852 = vmatpush.bf16.msra.mxu0 0
      %853 = vmatpush.bf16.msra.mxu0 %v844
      %854 = vmatmul.bf16.gmra.mxu0 %v841
      %v855 = vpop.f32.mrf.mxu0
      %v856 = vadd.f32 0.0, %v855
      %v857 = vpop.f32.mrf.mxu0
      %858 = vdwg.mxu0
      %v859 = vrcp.pop %v836
      %v860 = vmul.f32 %v856, %v859
      %v861 = vpack.c.bf16 %v860, %v860
      %v863 = vsel %vm749, %v861, 0
      %v866 = vsel %vm784, %v741, 0
      %868 = vmatpush.bf16.msra.mxu0 0
      %869 = vmatpush.bf16.msra.mxu0 0
      %870 = vmatpush.bf16.msra.mxu0 0
      %871 = vmatpush.bf16.msra.mxu0 0
      %872 = vmatpush.bf16.msra.mxu0 0
      %873 = vmatpush.bf16.msra.mxu0 0
      %874 = vmatpush.bf16.msra.mxu0 0
      %875 = vmatpush.bf16.msra.mxu0 %v866
      %876 = vmatmul.bf16.gmra.mxu0 %v863
      %v877 = vpop.f32.mrf.mxu0
      %v878 = vadd.f32 0.0, %v877
      %v879 = vpop.f32.mrf.mxu0
      %880 = vdwg.mxu0
      %v882 = vsel %vm749, %v803, 0
      %v885 = vsel %vm784, %v740, 0
      %887 = vmatpush.bf16.msra.mxu0 0
      %888 = vmatpush.bf16.msra.mxu0 0
      %889 = vmatpush.bf16.msra.mxu0 0
      %890 = vmatpush.bf16.msra.mxu0 0
      %891 = vmatpush.bf16.msra.mxu0 0
      %892 = vmatpush.bf16.msra.mxu0 0
      %893 = vmatpush.bf16.msra.mxu0 0
      %894 = vmatpush.bf16.msra.mxu0 %v885
      %895 = vmatmul.bf16.gmra.mxu0 %v882
      %v896 = vpop.f32.mrf.mxu0
      %v897 = vadd.f32 %v878, %v896
      %v898 = vpop.f32.mrf.mxu0
      %899 = vdwg.mxu0
      %900 = vrot.lane.b32.xlu0 %v744, 112
      %v901 = vpop.permute.xlu0 %900
      %902 = vrot.lane.b32.xlu0 %v745, 80
      %v903 = vpop.permute.xlu0 %902
      %v905 = vsel %vm749, %v901, 0
      %v908 = vsel %vm749, %v903, 0
      %910 = vmatpush.bf16.xpose.msra.mxu0 0
      %911 = vmatpush.bf16.xpose.msra.mxu0 0
      %912 = vmatpush.bf16.xpose.msra.mxu0 0
      %913 = vmatpush.bf16.xpose.msra.mxu0 0
      %914 = vmatpush.bf16.xpose.msra.mxu0 0
      %915 = vmatpush.bf16.xpose.msra.mxu0 0
      %916 = vmatpush.bf16.xpose.msra.mxu0 0
      %917 = vmatpush.bf16.xpose.msra.mxu0 %v908
      %918 = vmatmul.bf16.gmra.mxu0 %v905
      %v919 = vpop.f32.mrf.mxu0
      %v920 = vadd.f32 0.0, %v919
      %v921 = vpop.f32.mrf.mxu0
      %922 = vdwg.mxu0
      %v923 = vsel %vm749, %v920, -inf
      %924 = vmax.xlane.f32.xlu0 %v923
      %v925 = vpop.xlane.xlu0 %924
      %v926 = vsub.f32 %v920, %v925
      %v927 = vmul.f32 %v926, 1.442695
      %v928 = vpow.pop %v927
      %v929 = vsel %vm749, %v928, 0.0
      %930 = vadd.xlane.f32.xlu0 %v929
      %v931 = vpop.xlane.xlu0 %930
      %v932 = vpack.c.bf16 %v928, %v928
      %933 = vrot.lane.b32.xlu0 %v745, 48
      %v934 = vpop.permute.xlu0 %933
      %v936 = vsel %vm749, %v932, 0
      %v939 = vsel %vm784, %v934, 0
      %941 = vmatpush.bf16.msra.mxu0 0
      %942 = vmatpush.bf16.msra.mxu0 0
      %943 = vmatpush.bf16.msra.mxu0 0
      %944 = vmatpush.bf16.msra.mxu0 0
      %945 = vmatpush.bf16.msra.mxu0 0
      %946 = vmatpush.bf16.msra.mxu0 0
      %947 = vmatpush.bf16.msra.mxu0 0
      %948 = vmatpush.bf16.msra.mxu0 %v939
      %949 = vmatmul.bf16.gmra.mxu0 %v936
      %v950 = vpop.f32.mrf.mxu0
      %v951 = vadd.f32 0.0, %v950
      %v952 = vpop.f32.mrf.mxu0
      %953 = vdwg.mxu0
      %v954 = vrcp.pop %v931
      %v955 = vmul.f32 %v951, %v954
      %v956 = vpack.c.bf16 %v955, %v955
      %v958 = vsel %vm749, %v956, 0
      %v961 = vsel %vm784, %v742, 0
      %963 = vmatpush.bf16.msra.mxu0 0
      %964 = vmatpush.bf16.msra.mxu0 0
      %965 = vmatpush.bf16.msra.mxu0 0
      %966 = vmatpush.bf16.msra.mxu0 0
      %967 = vmatpush.bf16.msra.mxu0 0
      %968 = vmatpush.bf16.msra.mxu0 0
      %969 = vmatpush.bf16.msra.mxu0 0
      %970 = vmatpush.bf16.msra.mxu0 %v961
      %971 = vmatmul.bf16.gmra.mxu0 %v958
      %v972 = vpop.f32.mrf.mxu0
      %v973 = vadd.f32 0.0, %v972
      %v974 = vpop.f32.mrf.mxu0
      %975 = vdwg.mxu0
      %v976 = vadd.f32 %v897, %v973
      %977 = vrot.lane.b32.xlu0 %v744, 104
      %v978 = vpop.permute.xlu0 %977
      %979 = vrot.lane.b32.xlu0 %v745, 72
      %v980 = vpop.permute.xlu0 %979
      %v982 = vsel %vm749, %v978, 0
      %v985 = vsel %vm749, %v980, 0
      %987 = vmatpush.bf16.xpose.msra.mxu0 0
      %988 = vmatpush.bf16.xpose.msra.mxu0 0
      %989 = vmatpush.bf16.xpose.msra.mxu0 0
      %990 = vmatpush.bf16.xpose.msra.mxu0 0
      %991 = vmatpush.bf16.xpose.msra.mxu0 0
      %992 = vmatpush.bf16.xpose.msra.mxu0 0
      %993 = vmatpush.bf16.xpose.msra.mxu0 0
      %994 = vmatpush.bf16.xpose.msra.mxu0 %v985
      %995 = vmatmul.bf16.gmra.mxu0 %v982
      %v996 = vpop.f32.mrf.mxu0
      %v997 = vadd.f32 0.0, %v996
      %v998 = vpop.f32.mrf.mxu0
      %999 = vdwg.mxu0
      %v1000 = vsel %vm749, %v997, -inf
      %1001 = vmax.xlane.f32.xlu0 %v1000
      %v1002 = vpop.xlane.xlu0 %1001
      %v1003 = vsub.f32 %v997, %v1002
      %v1004 = vmul.f32 %v1003, 1.442695
      %v1005 = vpow.pop %v1004
      %v1006 = vsel %vm749, %v1005, 0.0
      %1007 = vadd.xlane.f32.xlu0 %v1006
      %v1008 = vpop.xlane.xlu0 %1007
      %v1009 = vpack.c.bf16 %v1005, %v1005
      %1010 = vrot.lane.b32.xlu0 %v745, 40
      %v1011 = vpop.permute.xlu0 %1010
      %v1013 = vsel %vm749, %v1009, 0
      %v1016 = vsel %vm784, %v1011, 0
      %1018 = vmatpush.bf16.msra.mxu0 0
      %1019 = vmatpush.bf16.msra.mxu0 0
      %1020 = vmatpush.bf16.msra.mxu0 0
      %1021 = vmatpush.bf16.msra.mxu0 0
      %1022 = vmatpush.bf16.msra.mxu0 0
      %1023 = vmatpush.bf16.msra.mxu0 0
      %1024 = vmatpush.bf16.msra.mxu0 0
      %1025 = vmatpush.bf16.msra.mxu0 %v1016
      %1026 = vmatmul.bf16.gmra.mxu0 %v1013
      %v1027 = vpop.f32.mrf.mxu0
      %v1028 = vadd.f32 0.0, %v1027
      %v1029 = vpop.f32.mrf.mxu0
      %1030 = vdwg.mxu0
      %v1031 = vrcp.pop %v1008
      %v1032 = vmul.f32 %v1028, %v1031
      %v1033 = vpack.c.bf16 %v1032, %v1032
      %v1035 = vsel %vm749, %v1033, 0
      %v1038 = vsel %vm784, %v743, 0
      %1040 = vmatpush.bf16.msra.mxu0 0
      %1041 = vmatpush.bf16.msra.mxu0 0
      %1042 = vmatpush.bf16.msra.mxu0 0
      %1043 = vmatpush.bf16.msra.mxu0 0
      %1044 = vmatpush.bf16.msra.mxu0 0
      %1045 = vmatpush.bf16.msra.mxu0 0
      %1046 = vmatpush.bf16.msra.mxu0 0
      %1047 = vmatpush.bf16.msra.mxu0 %v1038
      %1048 = vmatmul.bf16.gmra.mxu0 %v1035
      %v1049 = vpop.f32.mrf.mxu0
      %v1050 = vadd.f32 0.0, %v1049
      %v1051 = vpop.f32.mrf.mxu0
      %1052 = vdwg.mxu0
      %v1053 = vadd.f32 %v976, %v1050
      %v1054 = vadd.f32 %v701, %v1053
      %v1055 = vld [vmem:[%s5] sm:$0x1]
      %v1057 = vperm.slane %v1055, 0
      %v1059 = vadd.f32 %v1054, %v1057
      %v1060 = vld [vmem:[%s6] sm:$0x1]
      %v1061 = vld [vmem:[%s7] sm:$0x1]
      %v1062 = vsel %vm722, %v1059, 0.0
      %1063 = vadd.xlane.f32.xlu0 %v1062
      %v1064 = vpop.xlane.xlu0 %1063
      %v1065 = vrcp.pop 32.0
      %v1066 = vmul.f32 32.0, %v1065
      %v1067 = vsub.f32 1.0, %v1066
      %v1068 = vmul.f32 %v1065, %v1067
      %v1069 = vadd.f32 %v1065, %v1068
      %vm1070 = vweird.f32 %v1065
      %v1071 = vsel %vm1070, %v1065, %v1069
      %v1072 = vmul.f32 %v1064, %v1071
      %v1073 = vsub.f32 %v1059, %v1072
      %v1074 = vmul.f32 %v1073, %v1073
      %v1075 = vsel %vm722, %v1074, 0.0
      %1076 = vadd.xlane.f32.xlu0 %v1075
      %v1077 = vpop.xlane.xlu0 %1076
      %v1078 = vmul.f32 %v1077, %v1071
      %v1079 = vadd.f32 %v1078, 1e-05
      %v1080 = vrsqrt.pop %v1079
      %v1081 = vmul.f32 %v1080, %v1079
      %v1082 = vmul.f32 %v1081, %v1080
      %v1083 = vmul.f32 0.5, %v1082
      %v1084 = vsub.f32 1.5, %v1083
      %v1085 = vmul.f32 %v1080, %v1084
      %vm1086 = vweird.f32 %v1079
      %vm1087 = vweird.f32 %v1080
      %vm1088 = vmor %vm1086, %vm1087
      %v1089 = vsel %vm1088, %v1080, %v1085
      %v1090 = vmul.f32 %v1073, %v1089
      %v1092 = vperm.slane %v1060, 0
      %v1094 = vmul.f32 %v1090, %v1092
      %v1096 = vperm.slane %v1061, 0
      %v1098 = vadd.f32 %v1094, %v1096
      %v1099 = vld [vmem:[%s694] sm:$0xf]
      %v1100 = vld [vmem:[%s694 + $0x4] sm:$0xf]
      %v1101 = vpack.c.bf16 %v1098, %v1098
      %v1102 = vld [vmem:[%s8] sm:$0xf]
      %v1103 = vld [vmem:[%s8 + $0x4] sm:$0xf]
      %v1104 = vld [vmem:[%s8 + $0x8] sm:$0xf]
      %v1105 = vld [vmem:[%s8 + $0xc] sm:$0xf]
      %v1106 = vld [vmem:[%s9] sm:$0x1]
      %v1108 = vperm.slane %v1106, 0
      %v1114 = vunpack.c.l.b16 %v1102
      %v1115 = vunpack.c.l.b16 %v1103
      %v1116 = vunpack.c.l.b16 %v1104
      %v1117 = vunpack.c.l.b16 %v1105
      %v1118 = vpack.c.b16 %v1115, %v1114
      %v1119 = vpack.c.b16 %v1117, %v1116
      %v1123 = vsel %vm722, %v1101, 0
      %1125 = vmatpush.bf16.msra.mxu0 0
      %1126 = vmatpush.bf16.msra.mxu0 0
      %1127 = vmatpush.bf16.msra.mxu0 0
      %1128 = vmatpush.bf16.msra.mxu0 0
      %1129 = vmatpush.bf16.msra.mxu0 0
      %1130 = vmatpush.bf16.msra.mxu0 0
      %1131 = vmatpush.bf16.msra.mxu0 %v1119
      %1132 = vmatpush.bf16.msra.mxu0 %v1118
      %1133 = vmatmul.bf16.gmra.mxu0 %v1123
      %v1134 = vpop.f32.mrf.mxu0
      %v1135 = vadd.f32 %v1108, %v1134
      %v1136 = vpop.f32.mrf.mxu0
      %1137 = vdwg.mxu0
      %v1138 = vld [vmem:[%s10] sm:$0xf]
      %v1139 = vld [vmem:[%s10 + $0x4] sm:$0xf]
      %v1140 = vld [vmem:[%s10 + $0x8] sm:$0xf]
      %v1141 = vld [vmem:[%s10 + $0xc] sm:$0xf]
      %v1142 = vld [vmem:[%s11] sm:$0x1]
      %v1144 = vperm.slane %v1142, 0
      %v1148 = vunpack.c.l.b16 %v1099
      %v1149 = vunpack.c.l.b16 %v1100
      %v1150 = vpack.c.b16 %v1149, %v1148
      %v1155 = vunpack.c.l.b16 %v1138
      %v1156 = vunpack.c.l.b16 %v1139
      %v1157 = vunpack.c.l.b16 %v1140
      %v1158 = vunpack.c.l.b16 %v1141
      %v1159 = vpack.c.b16 %v1156, %v1155
      %v1160 = vpack.c.b16 %v1158, %v1157
      %v1164 = vsel %vm722, %v1150, 0
      %1166 = vmatpush.bf16.msra.mxu0 0
      %1167 = vmatpush.bf16.msra.mxu0 0
      %1168 = vmatpush.bf16.msra.mxu0 0
      %1169 = vmatpush.bf16.msra.mxu0 0
      %1170 = vmatpush.bf16.msra.mxu0 0
      %1171 = vmatpush.bf16.msra.mxu0 0
      %1172 = vmatpush.bf16.msra.mxu0 %v1160
      %1173 = vmatpush.bf16.msra.mxu0 %v1159
      %1174 = vmatmul.bf16.gmra.mxu0 %v1164
      %v1175 = vpop.f32.mrf.mxu0
      %v1176 = vadd.f32 %v1144, %v1175
      %v1177 = vpop.f32.mrf.mxu0
      %v1178 = vadd.f32 %v1144, %v1177
      %1179 = vdwg.mxu0
      %v1180 = vmul.f32 %v1135, 0.35355338
      %v1181 = vld [vmem:[%s12] sm:$0xf]
      %v1182 = vld [vmem:[%s12 + $0x4] sm:$0xf]
      %v1183 = vld [vmem:[%s12 + $0x8] sm:$0xf]
      %v1184 = vld [vmem:[%s12 + $0xc] sm:$0xf]
      %v1185 = vpack.c.bf16 %v1180, %v1180
      %v1186 = vpack.c.bf16 %v1178, %v1176
      %v1188 = vsel %vm749, %v1185, 0
      %v1191 = vsel %vm749, %v1186, 0
      %1193 = vmatpush.bf16.xpose.msra.mxu0 0
      %1194 = vmatpush.bf16.xpose.msra.mxu0 0
      %1195 = vmatpush.bf16.xpose.msra.mxu0 0
      %1196 = vmatpush.bf16.xpose.msra.mxu0 0
      %1197 = vmatpush.bf16.xpose.msra.mxu0 0
      %1198 = vmatpush.bf16.xpose.msra.mxu0 0
      %1199 = vmatpush.bf16.xpose.msra.mxu0 0
      %1200 = vmatpush.bf16.xpose.msra.mxu0 %v1191
      %1201 = vmatmul.bf16.gmra.mxu0 %v1188
      %v1202 = vpop.f32.mrf.mxu0
      %v1203 = vadd.f32 0.0, %v1202
      %v1204 = vpop.f32.mrf.mxu0
      %1205 = vdwg.mxu0
      %vm1206 = vcmask 130048
      %v1207 = vsel %vm1206, %v1203, -inf
      %1208 = vmax.xlane.f32.xlu0 %v1207
      %v1209 = vpop.xlane.xlu0 %1208
      %v1210 = vsub.f32 %v1203, %v1209
      %v1211 = vmul.f32 %v1210, 1.442695
      %v1212 = vpow.pop %v1211
      %v1213 = vsel %vm1206, %v1212, 0.0
      %1214 = vadd.xlane.f32.xlu0 %v1213
      %v1215 = vpop.xlane.xlu0 %1214
      %v1216 = vpack.c.bf16 %v1212, %v1212
      %1218 = vrot.lane.b32.xlu0 %v1186, 96
      %v1219 = vpop.permute.xlu0 %1218
      %v1222 = vsel %vm1206, %v1216, 0
      %1224 = vmatpush.bf16.msra.mxu0 0
      %1225 = vmatpush.bf16.msra.mxu0 0
      %1226 = vmatpush.bf16.msra.mxu0 0
      %1227 = vmatpush.bf16.msra.mxu0 0
      %1228 = vmatpush.bf16.msra.mxu0 0
      %1229 = vmatpush.bf16.msra.mxu0 0
      %1230 = vmatpush.bf16.msra.mxu0 0
      %1231 = vmatpush.bf16.msra.mxu0 %v1219
      %1232 = vmatmul.bf16.gmra.mxu0 %v1222
      %v1233 = vpop.f32.mrf.mxu0
      %v1234 = vadd.f32 0.0, %v1233
      %v1235 = vpop.f32.mrf.mxu0
      %1236 = vdwg.mxu0
      %v1237 = vrcp.pop %v1215
      %v1238 = vmul.f32 %v1234, %v1237
      %v1239 = vpack.c.bf16 %v1238, %v1238
      %1241 = vrot.lane.b32.xlu0 %v1185, 120
      %v1242 = vpop.permute.xlu0 %1241
      %1243 = vrot.lane.b32.xlu0 %v1186, 120
      %v1244 = vpop.permute.xlu0 %1243
      %v1246 = vsel %vm749, %v1242, 0
      %v1249 = vsel %vm749, %v1244, 0
      %1251 = vmatpush.bf16.xpose.msra.mxu0 0
      %1252 = vmatpush.bf16.xpose.msra.mxu0 0
      %1253 = vmatpush.bf16.xpose.msra.mxu0 0
      %1254 = vmatpush.bf16.xpose.msra.mxu0 0
      %1255 = vmatpush.bf16.xpose.msra.mxu0 0
      %1256 = vmatpush.bf16.xpose.msra.mxu0 0
      %1257 = vmatpush.bf16.xpose.msra.mxu0 0
      %1258 = vmatpush.bf16.xpose.msra.mxu0 %v1249
      %1259 = vmatmul.bf16.gmra.mxu0 %v1246
      %v1260 = vpop.f32.mrf.mxu0
      %v1261 = vadd.f32 0.0, %v1260
      %v1262 = vpop.f32.mrf.mxu0
      %1263 = vdwg.mxu0
      %v1264 = vsel %vm1206, %v1261, -inf
      %1265 = vmax.xlane.f32.xlu0 %v1264
      %v1266 = vpop.xlane.xlu0 %1265
      %v1267 = vsub.f32 %v1261, %v1266
      %v1268 = vmul.f32 %v1267, 1.442695
      %v1269 = vpow.pop %v1268
      %v1270 = vsel %vm1206, %v1269, 0.0
      %1271 = vadd.xlane.f32.xlu0 %v1270
      %v1272 = vpop.xlane.xlu0 %1271
      %v1273 = vpack.c.bf16 %v1269, %v1269
      %1274 = vrot.lane.b32.xlu0 %v1186, 88
      %v1275 = vpop.permute.xlu0 %1274
      %v1278 = vsel %vm1206, %v1273, 0
      %1280 = vmatpush.bf16.msra.mxu0 0
      %1281 = vmatpush.bf16.msra.mxu0 0
      %1282 = vmatpush.bf16.msra.mxu0 0
      %1283 = vmatpush.bf16.msra.mxu0 0
      %1284 = vmatpush.bf16.msra.mxu0 0
      %1285 = vmatpush.bf16.msra.mxu0 0
      %1286 = vmatpush.bf16.msra.mxu0 0
      %1287 = vmatpush.bf16.msra.mxu0 %v1275
      %1288 = vmatmul.bf16.gmra.mxu0 %v1278
      %v1289 = vpop.f32.mrf.mxu0
      %v1290 = vadd.f32 0.0, %v1289
      %v1291 = vpop.f32.mrf.mxu0
      %1292 = vdwg.mxu0
      %v1293 = vrcp.pop %v1272
      %v1294 = vmul.f32 %v1290, %v1293
      %v1295 = vpack.c.bf16 %v1294, %v1294
      %v1297 = vsel %vm749, %v1295, 0
      %v1300 = vsel %vm784, %v1182, 0
      %1302 = vmatpush.bf16.msra.mxu0 0
      %1303 = vmatpush.bf16.msra.mxu0 0
      %1304 = vmatpush.bf16.msra.mxu0 0
      %1305 = vmatpush.bf16.msra.mxu0 0
      %1306 = vmatpush.bf16.msra.mxu0 0
      %1307 = vmatpush.bf16.msra.mxu0 0
      %1308 = vmatpush.bf16.msra.mxu0 0
      %1309 = vmatpush.bf16.msra.mxu0 %v1300
      %1310 = vmatmul.bf16.gmra.mxu0 %v1297
      %v1311 = vpop.f32.mrf.mxu0
      %v1312 = vadd.f32 0.0, %v1311
      %v1313 = vpop.f32.mrf.mxu0
      %1314 = vdwg.mxu0
      %v1316 = vsel %vm749, %v1239, 0
      %v1319 = vsel %vm784, %v1181, 0
      %1321 = vmatpush.bf16.msra.mxu0 0
      %1322 = vmatpush.bf16.msra.mxu0 0
      %1323 = vmatpush.bf16.msra.mxu0 0
      %1324 = vmatpush.bf16.msra.mxu0 0
      %1325 = vmatpush.bf16.msra.mxu0 0
      %1326 = vmatpush.bf16.msra.mxu0 0
      %1327 = vmatpush.bf16.msra.mxu0 0
      %1328 = vmatpush.bf16.msra.mxu0 %v1319
      %1329 = vmatmul.bf16.gmra.mxu0 %v1316
      %v1330 = vpop.f32.mrf.mxu0
      %v1331 = vadd.f32 %v1312, %v1330
      %v1332 = vpop.f32.mrf.mxu0
      %1333 = vdwg.mxu0
      %1334 = vrot.lane.b32.xlu0 %v1185, 112
      %v1335 = vpop.permute.xlu0 %1334
      %1336 = vrot.lane.b32.xlu0 %v1186, 112
      %v1337 = vpop.permute.xlu0 %1336
      %v1339 = vsel %vm749, %v1335, 0
      %v1342 = vsel %vm749, %v1337, 0
      %1344 = vmatpush.bf16.xpose.msra.mxu0 0
      %1345 = vmatpush.bf16.xpose.msra.mxu0 0
      %1346 = vmatpush.bf16.xpose.msra.mxu0 0
      %1347 = vmatpush.bf16.xpose.msra.mxu0 0
      %1348 = vmatpush.bf16.xpose.msra.mxu0 0
      %1349 = vmatpush.bf16.xpose.msra.mxu0 0
      %1350 = vmatpush.bf16.xpose.msra.mxu0 0
      %1351 = vmatpush.bf16.xpose.msra.mxu0 %v1342
      %1352 = vmatmul.bf16.gmra.mxu0 %v1339
      %v1353 = vpop.f32.mrf.mxu0
      %v1354 = vadd.f32 0.0, %v1353
      %v1355 = vpop.f32.mrf.mxu0
      %1356 = vdwg.mxu0
      %v1357 = vsel %vm1206, %v1354, -inf
      %1358 = vmax.xlane.f32.xlu0 %v1357
      %v1359 = vpop.xlane.xlu0 %1358
      %v1360 = vsub.f32 %v1354, %v1359
      %v1361 = vmul.f32 %v1360, 1.442695
      %v1362 = vpow.pop %v1361
      %v1363 = vsel %vm1206, %v1362, 0.0
      %1364 = vadd.xlane.f32.xlu0 %v1363
      %v1365 = vpop.xlane.xlu0 %1364
      %v1366 = vpack.c.bf16 %v1362, %v1362
      %1367 = vrot.lane.b32.xlu0 %v1186, 80
      %v1368 = vpop.permute.xlu0 %1367
      %v1371 = vsel %vm1206, %v1366, 0
      %1373 = vmatpush.bf16.msra.mxu0 0
      %1374 = vmatpush.bf16.msra.mxu0 0
      %1375 = vmatpush.bf16.msra.mxu0 0
      %1376 = vmatpush.bf16.msra.mxu0 0
      %1377 = vmatpush.bf16.msra.mxu0 0
      %1378 = vmatpush.bf16.msra.mxu0 0
      %1379 = vmatpush.bf16.msra.mxu0 0
      %1380 = vmatpush.bf16.msra.mxu0 %v1368
      %1381 = vmatmul.bf16.gmra.mxu0 %v1371
      %v1382 = vpop.f32.mrf.mxu0
      %v1383 = vadd.f32 0.0, %v1382
      %v1384 = vpop.f32.mrf.mxu0
      %1385 = vdwg.mxu0
      %v1386 = vrcp.pop %v1365
      %v1387 = vmul.f32 %v1383, %v1386
      %v1388 = vpack.c.bf16 %v1387, %v1387
      %v1390 = vsel %vm749, %v1388, 0
      %v1393 = vsel %vm784, %v1183, 0
      %1395 = vmatpush.bf16.msra.mxu0 0
      %1396 = vmatpush.bf16.msra.mxu0 0
      %1397 = vmatpush.bf16.msra.mxu0 0
      %1398 = vmatpush.bf16.msra.mxu0 0
      %1399 = vmatpush.bf16.msra.mxu0 0
      %1400 = vmatpush.bf16.msra.mxu0 0
      %1401 = vmatpush.bf16.msra.mxu0 0
      %1402 = vmatpush.bf16.msra.mxu0 %v1393
      %1403 = vmatmul.bf16.gmra.mxu0 %v1390
      %v1404 = vpop.f32.mrf.mxu0
      %v1405 = vadd.f32 0.0, %v1404
      %v1406 = vpop.f32.mrf.mxu0
      %1407 = vdwg.mxu0
      %v1408 = vadd.f32 %v1331, %v1405
      %1409 = vrot.lane.b32.xlu0 %v1185, 104
      %v1410 = vpop.permute.xlu0 %1409
      %1411 = vrot.lane.b32.xlu0 %v1186, 104
      %v1412 = vpop.permute.xlu0 %1411
      %v1414 = vsel %vm749, %v1410, 0
      %v1417 = vsel %vm749, %v1412, 0
      %1419 = vmatpush.bf16.xpose.msra.mxu0 0
      %1420 = vmatpush.bf16.xpose.msra.mxu0 0
      %1421 = vmatpush.bf16.xpose.msra.mxu0 0
      %1422 = vmatpush.bf16.xpose.msra.mxu0 0
      %1423 = vmatpush.bf16.xpose.msra.mxu0 0
      %1424 = vmatpush.bf16.xpose.msra.mxu0 0
      %1425 = vmatpush.bf16.xpose.msra.mxu0 0
      %1426 = vmatpush.bf16.xpose.msra.mxu0 %v1417
      %1427 = vmatmul.bf16.gmra.mxu0 %v1414
      %v1428 = vpop.f32.mrf.mxu0
      %v1429 = vadd.f32 0.0, %v1428
      %v1430 = vpop.f32.mrf.mxu0
      %1431 = vdwg.mxu0
      %v1432 = vsel %vm1206, %v1429, -inf
      %1433 = vmax.xlane.f32.xlu0 %v1432
      %v1434 = vpop.xlane.xlu0 %1433
      %v1435 = vsub.f32 %v1429, %v1434
      %v1436 = vmul.f32 %v1435, 1.442695
      %v1437 = vpow.pop %v1436
      %v1438 = vsel %vm1206, %v1437, 0.0
      %1439 = vadd.xlane.f32.xlu0 %v1438
      %v1440 = vpop.xlane.xlu0 %1439
      %v1441 = vpack.c.bf16 %v1437, %v1437
      %1442 = vrot.lane.b32.xlu0 %v1186, 72
      %v1443 = vpop.permute.xlu0 %1442
      %v1446 = vsel %vm1206, %v1441, 0
      %1448 = vmatpush.bf16.msra.mxu0 0
      %1449 = vmatpush.bf16.msra.mxu0 0
      %1450 = vmatpush.bf16.msra.mxu0 0
      %1451 = vmatpush.bf16.msra.mxu0 0
      %1452 = vmatpush.bf16.msra.mxu0 0
      %1453 = vmatpush.bf16.msra.mxu0 0
      %1454 = vmatpush.bf16.msra.mxu0 0
      %1455 = vmatpush.bf16.msra.mxu0 %v1443
      %1456 = vmatmul.bf16.gmra.mxu0 %v1446
      %v1457 = vpop.f32.mrf.mxu0
      %v1458 = vadd.f32 0.0, %v1457
      %v1459 = vpop.f32.mrf.mxu0
      %1460 = vdwg.mxu0
      %v1461 = vrcp.pop %v1440
      %v1462 = vmul.f32 %v1458, %v1461
      %v1463 = vpack.c.bf16 %v1462, %v1462
      %v1465 = vsel %vm749, %v1463, 0
      %v1468 = vsel %vm784, %v1184, 0
      %1470 = vmatpush.bf16.msra.mxu0 0
      %1471 = vmatpush.bf16.msra.mxu0 0
      %1472 = vmatpush.bf16.msra.mxu0 0
      %1473 = vmatpush.bf16.msra.mxu0 0
      %1474 = vmatpush.bf16.msra.mxu0 0
      %1475 = vmatpush.bf16.msra.mxu0 0
      %1476 = vmatpush.bf16.msra.mxu0 0
      %1477 = vmatpush.bf16.msra.mxu0 %v1468
      %1478 = vmatmul.bf16.gmra.mxu0 %v1465
      %v1479 = vpop.f32.mrf.mxu0
      %v1480 = vadd.f32 0.0, %v1479
      %v1481 = vpop.f32.mrf.mxu0
      %1482 = vdwg.mxu0
      %v1483 = vadd.f32 %v1408, %v1480
      %v1484 = vadd.f32 %v1098, %v1483
      %v1485 = vld [vmem:[%s13] sm:$0x1]
      %v1487 = vperm.slane %v1485, 0
      %v1489 = vadd.f32 %v1484, %v1487
      %v1490 = vld [vmem:[%s14] sm:$0x1]
      %v1491 = vld [vmem:[%s15] sm:$0x1]
      %v1492 = vsel %vm722, %v1489, 0.0
      %1493 = vadd.xlane.f32.xlu0 %v1492
      %v1494 = vpop.xlane.xlu0 %1493
      %v1495 = vmul.f32 %v1494, %v1071
      %v1496 = vsub.f32 %v1489, %v1495
      %v1497 = vmul.f32 %v1496, %v1496
      %v1498 = vsel %vm722, %v1497, 0.0
      %1499 = vadd.xlane.f32.xlu0 %v1498
      %v1500 = vpop.xlane.xlu0 %1499
      %v1501 = vmul.f32 %v1500, %v1071
      %v1502 = vadd.f32 %v1501, 1e-05
      %v1503 = vrsqrt.pop %v1502
      %v1504 = vmul.f32 %v1503, %v1502
      %v1505 = vmul.f32 %v1504, %v1503
      %v1506 = vmul.f32 0.5, %v1505
      %v1507 = vsub.f32 1.5, %v1506
      %v1508 = vmul.f32 %v1503, %v1507
      %vm1509 = vweird.f32 %v1502
      %vm1510 = vweird.f32 %v1503
      %vm1511 = vmor %vm1509, %vm1510
      %v1512 = vsel %vm1511, %v1503, %v1508
      %v1513 = vmul.f32 %v1496, %v1512
      %v1515 = vperm.slane %v1490, 0
      %v1517 = vmul.f32 %v1513, %v1515
      %v1519 = vperm.slane %v1491, 0
      %v1521 = vadd.f32 %v1517, %v1519
      %v1522 = vpack.c.bf16 %v1521, %v1521
      %v1523 = vld [vmem:[%s16] sm:$0xf]
      %v1524 = vld [vmem:[%s16 + $0x4] sm:$0xf]
      %v1525 = vld [vmem:[%s16 + $0x8] sm:$0xf]
      %v1526 = vld [vmem:[%s16 + $0xc] sm:$0xf]
      %v1527 = vld [vmem:[%s17] sm:$0x1]
      %v1529 = vperm.slane %v1527, 0
      %v1535 = vunpack.c.l.b16 %v1523
      %v1536 = vunpack.c.l.b16 %v1524
      %v1537 = vunpack.c.l.b16 %v1525
      %v1538 = vunpack.c.l.b16 %v1526
      %v1539 = vpack.c.b16 %v1536, %v1535
      %v1540 = vpack.c.b16 %v1538, %v1537
      %v1544 = vsel %vm722, %v1522, 0
      %1546 = vmatpush.bf16.msra.mxu0 0
      %1547 = vmatpush.bf16.msra.mxu0 0
      %1548 = vmatpush.bf16.msra.mxu0 0
      %1549 = vmatpush.bf16.msra.mxu0 0
      %1550 = vmatpush.bf16.msra.mxu0 0
      %1551 = vmatpush.bf16.msra.mxu0 0
      %1552 = vmatpush.bf16.msra.mxu0 %v1540
      %1553 = vmatpush.bf16.msra.mxu0 %v1539
      %1554 = vmatmul.bf16.gmra.mxu0 %v1544
      %v1555 = vpop.f32.mrf.mxu0
      %v1556 = vadd.f32 %v1529, %v1555
      %v1557 = vpop.f32.mrf.mxu0
      %1558 = vdwg.mxu0
      %v1559 = vmax.f32 %v1556, 0.0
      %v1560 = vpack.c.bf16 %v1559, %v1559
      %v1561 = vld [vmem:[%s18] sm:$0xf]
      %v1562 = vld [vmem:[%s18 + $0x4] sm:$0xf]
      %v1563 = vld [vmem:[%s18 + $0x8] sm:$0xf]
      %v1564 = vld [vmem:[%s18 + $0xc] sm:$0xf]
      %v1565 = vld [vmem:[%s18 + $0x10] sm:$0xf]
      %v1566 = vld [vmem:[%s18 + $0x14] sm:$0xf]
      %v1567 = vld [vmem:[%s18 + $0x18] sm:$0xf]
      %v1568 = vld [vmem:[%s18 + $0x1c] sm:$0xf]
      %v1569 = vld [vmem:[%s19] sm:$0x1]
      %v1571 = vperm.slane %v1569, 0
      %v1581 = vunpack.c.l.b16 %v1561
      %v1582 = vunpack.c.l.b16 %v1562
      %v1583 = vunpack.c.l.b16 %v1563
      %v1584 = vunpack.c.l.b16 %v1564
      %v1585 = vunpack.c.l.b16 %v1565
      %v1586 = vunpack.c.l.b16 %v1566
      %v1587 = vunpack.c.l.b16 %v1567
      %v1588 = vunpack.c.l.b16 %v1568
      %v1589 = vpack.c.b16 %v1582, %v1581
      %v1590 = vpack.c.b16 %v1584, %v1583
      %v1591 = vpack.c.b16 %v1586, %v1585
      %v1592 = vpack.c.b16 %v1588, %v1587
      %vm1597 = vcmask 523264
      %v1599 = vsel %vm1597, %v1560, 0
      %1601 = vmatpush.bf16.msra.mxu0 0
      %1602 = vmatpush.bf16.msra.mxu0 0
      %1603 = vmatpush.bf16.msra.mxu0 0
      %1604 = vmatpush.bf16.msra.mxu0 0
      %1605 = vmatpush.bf16.msra.mxu0 %v1592
      %1606 = vmatpush.bf16.msra.mxu0 %v1591
      %1607 = vmatpush.bf16.msra.mxu0 %v1590
      %1608 = vmatpush.bf16.msra.mxu0 %v1589
      %1609 = vmatmul.bf16.gmra.mxu0 %v1599
      %v1610 = vpop.f32.mrf.mxu0
      %v1611 = vadd.f32 %v1571, %v1610
      %v1612 = vpop.f32.mrf.mxu0
      %1613 = vdwg.mxu0
      %v1614 = vadd.f32 %v1521, %v1611
      %v1615 = vld [vmem:[%s20] sm:$0x1]
      %v1616 = vld [vmem:[%s21] sm:$0x1]
      %v1617 = vsel %vm722, %v1614, 0.0
      %1618 = vadd.xlane.f32.xlu0 %v1617
      %v1619 = vpop.xlane.xlu0 %1618
      %v1620 = vmul.f32 %v1619, %v1071
      %v1621 = vsub.f32 %v1614, %v1620
      %v1622 = vmul.f32 %v1621, %v1621
      %v1623 = vsel %vm722, %v1622, 0.0
      %1624 = vadd.xlane.f32.xlu0 %v1623
      %v1625 = vpop.xlane.xlu0 %1624
      %v1626 = vmul.f32 %v1625, %v1071
      %v1627 = vadd.f32 %v1626, 1e-05
      %v1628 = vrsqrt.pop %v1627
      %v1629 = vmul.f32 %v1628, %v1627
      %v1630 = vmul.f32 %v1629, %v1628
      %v1631 = vmul.f32 0.5, %v1630
      %v1632 = vsub.f32 1.5, %v1631
      %v1633 = vmul.f32 %v1628, %v1632
      %vm1634 = vweird.f32 %v1627
      %vm1635 = vweird.f32 %v1628
      %vm1636 = vmor %vm1634, %vm1635
      %v1637 = vsel %vm1636, %v1628, %v1633
      %v1638 = vmul.f32 %v1621, %v1637
      %v1640 = vperm.slane %v1615, 0
      %v1642 = vmul.f32 %v1638, %v1640
      %v1644 = vperm.slane %v1616, 0
      %v1646 = vadd.f32 %v1642, %v1644
      %v1647 = vpack.c.bf16 %v1646, %v1646
      %vm1648 = vcmask 257024
      %1649 = vst.msk [vmem:[%s698] sm:$0xf] %vm1648, %v1647
      %p1650 = scmp.lt.s32.totalorder %s33, 1
      %s1651 = scalar_select %p1650, %s33, 1
      %s1652 = smul.addr %s1651, 4
      %s1653 = scalar_lea.vmem %s22, %s1652
      // Predicated region
      $region109: #{transformer_forward.7} parent=107 // pred_check
        %p1654 = pneg %p523
      $region110: #{transformer_forward.7} parent=107 // pred_check_branch
        %1656 = sbr.rel (%p1654) target = $region112
      $region111: #{transformer_forward.7} parent=107 // pred_region
        _
      $region112: #{transformer_forward.7} parent=107 // pred_fallthru
        _
    $region108: #{transformer_forward.7} parent=5 // pred_fallthru
      _
    %p1657 = scmp.le.s32.totalorder 2, %s28
    // Predicated region
    $region113: #{transformer_forward.7} parent=5 // pred_check
      %p1658 = pneg %p1657
    $region114: #{transformer_forward.7} parent=5 // pred_check_branch
      %1660 = sbr.rel (%p1658) target = $region116
    $region115: #{transformer_forward.7} parent=5 // pred_region
      %s1661 = ssub.s32 %s28, 2
      // Predicated region
      $region117: #{transformer_forward.7} parent=115 // pred_check
        %p1662 = pneg %p529
      $region118: #{transformer_forward.7} parent=115 // pred_check_branch
        %1664 = sbr.rel (%p1662) target = $region120
      $region119: #{transformer_forward.7} parent=115 // pred_region
        %p1665 = scmp.lt.s32.totalorder %s34, 1
        %s1666 = scalar_select %p1665, %s34, 1
        %s1667 = smul.addr %s1666, 4
        %s1668 = scalar_lea.vmem %s22, %s1667
      $region120: #{transformer_forward.7} parent=115 // pred_fallthru
        _
    $region116: #{transformer_forward.7} parent=5 // pred_fallthru
      _
  $region6: #{transformer_forward.7} parent=0 // loop_footer
    %s32 = sadd.s32 1, %s28
  $region7: #{transformer_forward.7} parent=0 // loop_footer_branch
    %27 = sbr.rel target = $region3
  $region8: #{transformer_forward.7} parent=0 // loop_exit
    _

// kernel: transformer_forward.8
$region0: #{transformer_forward.8}
  #allocation0 [shape = 'u32[]', space=smem, size = 0x4, offset = 0x4, fixed_abs, tag = 'smem constant byte address 0x4 - core index']
  #allocation1 [shape = 'u32[72,128]{1,0:T(1,128)}', space=vmem, size = 0x9000, scoped, tag = 'internal scratch']
  %s0 = inlined_call_operand.vmem [shape: bf16[2,8,32], index: 0, kind: input, shape index: {}]
  %s1 = inlined_call_operand.vmem [shape: bf16[2,16,32], index: 1, kind: input, shape index: {}]
  %s2 = inlined_call_operand.vmem [shape: bf16[32,96], index: 2, kind: input, shape index: {}]
  %s3 = inlined_call_operand.vmem [shape: f32[1,96], index: 3, kind: input, shape index: {}]
  %s4 = inlined_call_operand.vmem [shape: bf16[32,32], index: 4, kind: input, shape index: {}]
  %s5 = inlined_call_operand.vmem [shape: f32[1,32], index: 5, kind: input, shape index: {}]
  %s6 = inlined_call_operand.vmem [shape: f32[1,32], index: 6, kind: input, shape index: {}]
  %s7 = inlined_call_operand.vmem [shape: f32[1,32], index: 7, kind: input, shape index: {}]
  %s8 = inlined_call_operand.vmem [shape: bf16[32,32], index: 8, kind: input, shape index: {}]
  %s9 = inlined_call_operand.vmem [shape: f32[1,32], index: 9, kind: input, shape index: {}]
  %s10 = inlined_call_operand.vmem [shape: bf16[32,64], index: 10, kind: input, shape index: {}]
  %s11 = inlined_call_operand.vmem [shape: f32[1,64], index: 11, kind: input, shape index: {}]
  %s12 = inlined_call_operand.vmem [shape: bf16[32,32], index: 12, kind: input, shape index: {}]
  %s13 = inlined_call_operand.vmem [shape: f32[1,32], index: 13, kind: input, shape index: {}]
  %s14 = inlined_call_operand.vmem [shape: f32[1,32], index: 14, kind: input, shape index: {}]
  %s15 = inlined_call_operand.vmem [shape: f32[1,32], index: 15, kind: input, shape index: {}]
  %s16 = inlined_call_operand.vmem [shape: bf16[32,64], index: 16, kind: input, shape index: {}]
  %s17 = inlined_call_operand.vmem [shape: f32[1,64], index: 17, kind: input, shape index: {}]
  %s18 = inlined_call_operand.vmem [shape: bf16[64,32], index: 18, kind: input, shape index: {}]
  %s19 = inlined_call_operand.vmem [shape: f32[1,32], index: 19, kind: input, shape index: {}]
  %s20 = inlined_call_operand.vmem [shape: f32[1,32], index: 20, kind: input, shape index: {}]
  %s21 = inlined_call_operand.hbm [shape: f32[1,32], index: 21, kind: input, shape index: {}]
  %s22 = inlined_call_operand.vmem [shape: bf16[2,8,32], index: 22, kind: output, shape index: {}]
  %s23 = sld [smem:[#allocation0]]
  $region125: #{transformer_forward.8} parent=0
    _
  %s25 = ssub.s32 1, %s23
  %s26 = scalar_select 0, %s25, %s23
  $region1: #{transformer_forward.8} parent=0
    #allocation2 [shape = 'u8[512]{0}', space=vmem, size = 0x400, scoped, tag = 'input window, operand 21, single buffered']
    #allocation3 [shape = 's32[2]{0}', space=sflag, size = 0x8, scoped, tag = 'scoped memory for transformer_forward.8']
    %27 = vsyncpa [#allocation3], 0
    loop: start=0, step=1, limit=4
    $region2: #{transformer_forward.8} parent=1 // loop_pre_header
      _
    $region3: #{transformer_forward.8} parent=1 // loop_header
      %s29 = sphi 0, %s33
      %p30 = scmp.ge.s32.totalorder %s29, 4
      %s39 = sphi 0, %s41
      %s42 = sphi 0, %s39
      %s43 = sphi 0, %s42
      %s59 = sphi 0, %s43
      %s65 = sphi 0, %s67
      %s68 = sphi 0, %s65
      %s69 = sphi 0, %s68
      %s85 = sphi 0, %s69
      %s89 = sphi 0, %s89
      %s91 = sphi 0, %s89
      %s92 = sphi 0, %s91
      %s106 = sphi 0, %s92
      %s110 = sphi 0, %s110
      %s112 = sphi 0, %s110
      %s113 = sphi 0, %s112
      %s127 = sphi 0, %s113
      %s131 = sphi 0, %s131
      %s133 = sphi 0, %s131
      %s134 = sphi 0, %s133
      %s148 = sphi 0, %s134
      %s152 = sphi 0, %s152
      %s154 = sphi 0, %s152
      %s155 = sphi 0, %s154
      %s169 = sphi 0, %s155
      %s173 = sphi 0, %s173
      %s175 = sphi 0, %s173
      %s176 = sphi 0, %s175
      %s190 = sphi 0, %s176
      %s194 = sphi 0, %s194
      %s196 = sphi 0, %s194
      %s197 = sphi 0, %s196
      %s211 = sphi 0, %s197
      %s215 = sphi 0, %s215
      %s217 = sphi 0, %s215
      %s218 = sphi 0, %s217
      %s232 = sphi 0, %s218
      %s236 = sphi 0, %s236
      %s238 = sphi 0, %s236
      %s239 = sphi 0, %s238
      %s253 = sphi 0, %s239
      %s257 = sphi 0, %s257
      %s259 = sphi 0, %s257
      %s260 = sphi 0, %s259
      %s274 = sphi 0, %s260
      %s278 = sphi 0, %s278
      %s280 = sphi 0, %s278
      %s281 = sphi 0, %s280
      %s295 = sphi 0, %s281
      %s299 = sphi 0, %s299
      %s301 = sphi 0, %s299
      %s302 = sphi 0, %s301
      %s316 = sphi 0, %s302
      %s320 = sphi 0, %s320
      %s322 = sphi 0, %s320
      %s323 = sphi 0, %s322
      %s337 = sphi 0, %s323
      %s341 = sphi 0, %s341
      %s343 = sphi 0, %s341
      %s344 = sphi 0, %s343
      %s358 = sphi 0, %s344
      %s362 = sphi 0, %s362
      %s364 = sphi 0, %s362
      %s365 = sphi 0, %s364
      %s379 = sphi 0, %s365
      %s383 = sphi 0, %s383
      %s385 = sphi 0, %s383
      %s386 = sphi 0, %s385
      %s400 = sphi 0, %s386
      %s404 = sphi 0, %s404
      %s406 = sphi 0, %s404
      %s407 = sphi 0, %s406
      %s421 = sphi 0, %s407
      %s425 = sphi 0, %s425
      %s427 = sphi 0, %s425
      %s428 = sphi 0, %s427
      %s442 = sphi 0, %s428
      %s446 = sphi 0, %s446
      %s448 = sphi 0, %s446
      %s449 = sphi 0, %s448
      %s463 = sphi 0, %s449
      %s467 = sphi 0, %s467
      %s469 = sphi 0, %s467
      %s470 = sphi 0, %s469
      %s484 = sphi 0, %s470
      %s488 = sphi 0, %s488
      %s490 = sphi 0, %s488
      %s491 = sphi 0, %s490
      %s505 = sphi 0, %s491
      %s511 = sphi 0, %s513
      %s514 = sphi 0, %s511
      %s515 = sphi 0, %s514
      %s531 = sphi 0, %s515
    $region4: #{transformer_forward.8} parent=1 // loop_header_branch
      %32 = sbr.rel (%p30) target = $region8
    $region5: #{transformer_forward.8} parent=1 // loop_body
      %s34 = ssub.s32 %s29, 1
      %s35 = ssub.s32 %s29, 2
      %s36 = sadd.s32 %s29, 1
      %s37 = ssub.s32 %s29, %s36
      %p38 = scmp.eq.s32.totalorder %s37, 0
      %s40 = sadd.s32 %s39, 1
      %s41 = scalar_select %p38, %s39, %s40
      %p44 = pneg %p38
      %p45 = scmp.eq.s32.totalorder %s29, 1
      %p46 = por %p44, %p45
      %p47 = scmp.ne.s32.totalorder %s39, %s42
      %p48 = scmp.eq.s32.totalorder %s29, 0
      %p49 = por %p47, %p48
      %p50 = scmp.ne.s32.totalorder %s39, %s42
      %p51 = scmp.eq.s32.totalorder %s34, 1
      %p52 = por %p50, %p51
      %p53 = scmp.ne.s32.totalorder %s42, %s43
      %p54 = scmp.eq.s32.totalorder %s34, 0
      %p55 = por %p53, %p54
      %p56 = scmp.ne.s32.totalorder %s42, %s43
      %p57 = scmp.eq.s32.totalorder %s35, 1
      %p58 = por %p56, %p57
      %p60 = scmp.ne.s32.totalorder %s43, %s59
      %p61 = scmp.eq.s32.totalorder %s35, 0
      %p62 = por %p60, %p61
      %s63 = ssub.s32 %s29, %s36
      %p64 = scmp.eq.s32.totalorder %s63, 0
      %s66 = sadd.s32 %s65, 1
      %s67 = scalar_select %p64, %s65, %s66
      %p70 = pneg %p64
      %p71 = scmp.eq.s32.totalorder %s29, 1
      %p72 = por %p70, %p71
      %p73 = scmp.ne.s32.totalorder %s65, %s68
      %p74 = scmp.eq.s32.totalorder %s29, 0
      %p75 = por %p73, %p74
      %p76 = scmp.ne.s32.totalorder %s65, %s68
      %p77 = scmp.eq.s32.totalorder %s34, 1
      %p78 = por %p76, %p77
      %p79 = scmp.ne.s32.totalorder %s68, %s69
      %p80 = scmp.eq.s32.totalorder %s34, 0
      %p81 = por %p79, %p80
      %p82 = scmp.ne.s32.totalorder %s68, %s69
      %p83 = scmp.eq.s32.totalorder %s35, 1
      %p84 = por %p82, %p83
      %p86 = scmp.ne.s32.totalorder %s69, %s85
      %p87 = scmp.eq.s32.totalorder %s35, 0
      %p88 = por %p86, %p87
      %s90 = sadd.s32 %s89, 1
      %p93 = scmp.eq.s32.totalorder %s29, 1
      %p94 = scmp.ne.s32.totalorder %s89, %s91
      %p95 = scmp.eq.s32.totalorder %s29, 0
      %p96 = por %p94, %p95
      %p97 = scmp.ne.s32.totalorder %s89, %s91
      %p98 = scmp.eq.s32.totalorder %s34, 1
      %p99 = por %p97, %p98
      %p100 = scmp.ne.s32.totalorder %s91, %s92
      %p101 = scmp.eq.s32.totalorder %s34, 0
      %p102 = por %p100, %p101
      %p103 = scmp.ne.s32.totalorder %s91, %s92
      %p104 = scmp.eq.s32.totalorder %s35, 1
      %p105 = por %p103, %p104
      %p107 = scmp.ne.s32.totalorder %s92, %s106
      %p108 = scmp.eq.s32.totalorder %s35, 0
      %p109 = por %p107, %p108
      %s111 = sadd.s32 %s110, 1
      %p114 = scmp.eq.s32.totalorder %s29, 1
      %p115 = scmp.ne.s32.totalorder %s110, %s112
      %p116 = scmp.eq.s32.totalorder %s29, 0
      %p117 = por %p115, %p116
      %p118 = scmp.ne.s32.totalorder %s110, %s112
      %p119 = scmp.eq.s32.totalorder %s34, 1
      %p120 = por %p118, %p119
      %p121 = scmp.ne.s32.totalorder %s112, %s113
      %p122 = scmp.eq.s32.totalorder %s34, 0
      %p123 = por %p121, %p122
      %p124 = scmp.ne.s32.totalorder %s112, %s113
      %p125 = scmp.eq.s32.totalorder %s35, 1
      %p126 = por %p124, %p125
      %p128 = scmp.ne.s32.totalorder %s113, %s127
      %p129 = scmp.eq.s32.totalorder %s35, 0
      %p130 = por %p128, %p129
      %s132 = sadd.s32 %s131, 1
      %p135 = scmp.eq.s32.totalorder %s29, 1
      %p136 = scmp.ne.s32.totalorder %s131, %s133
      %p137 = scmp.eq.s32.totalorder %s29, 0
      %p138 = por %p136, %p137
      %p139 = scmp.ne.s32.totalorder %s131, %s133
      %p140 = scmp.eq.s32.totalorder %s34, 1
      %p141 = por %p139, %p140
      %p142 = scmp.ne.s32.totalorder %s133, %s134
      %p143 = scmp.eq.s32.totalorder %s34, 0
      %p144 = por %p142, %p143
      %p145 = scmp.ne.s32.totalorder %s133, %s134
      %p146 = scmp.eq.s32.totalorder %s35, 1
      %p147 = por %p145, %p146
      %p149 = scmp.ne.s32.totalorder %s134, %s148
      %p150 = scmp.eq.s32.totalorder %s35, 0
      %p151 = por %p149, %p150
      %s153 = sadd.s32 %s152, 1
      %p156 = scmp.eq.s32.totalorder %s29, 1
      %p157 = scmp.ne.s32.totalorder %s152, %s154
      %p158 = scmp.eq.s32.totalorder %s29, 0
      %p159 = por %p157, %p158
      %p160 = scmp.ne.s32.totalorder %s152, %s154
      %p161 = scmp.eq.s32.totalorder %s34, 1
      %p162 = por %p160, %p161
      %p163 = scmp.ne.s32.totalorder %s154, %s155
      %p164 = scmp.eq.s32.totalorder %s34, 0
      %p165 = por %p163, %p164
      %p166 = scmp.ne.s32.totalorder %s154, %s155
      %p167 = scmp.eq.s32.totalorder %s35, 1
      %p168 = por %p166, %p167
      %p170 = scmp.ne.s32.totalorder %s155, %s169
      %p171 = scmp.eq.s32.totalorder %s35, 0
      %p172 = por %p170, %p171
      %s174 = sadd.s32 %s173, 1
      %p177 = scmp.eq.s32.totalorder %s29, 1
      %p178 = scmp.ne.s32.totalorder %s173, %s175
      %p179 = scmp.eq.s32.totalorder %s29, 0
      %p180 = por %p178, %p179
      %p181 = scmp.ne.s32.totalorder %s173, %s175
      %p182 = scmp.eq.s32.totalorder %s34, 1
      %p183 = por %p181, %p182
      %p184 = scmp.ne.s32.totalorder %s175, %s176
      %p185 = scmp.eq.s32.totalorder %s34, 0
      %p186 = por %p184, %p185
      %p187 = scmp.ne.s32.totalorder %s175, %s176
      %p188 = scmp.eq.s32.totalorder %s35, 1
      %p189 = por %p187, %p188
      %p191 = scmp.ne.s32.totalorder %s176, %s190
      %p192 = scmp.eq.s32.totalorder %s35, 0
      %p193 = por %p191, %p192
      %s195 = sadd.s32 %s194, 1
      %p198 = scmp.eq.s32.totalorder %s29, 1
      %p199 = scmp.ne.s32.totalorder %s194, %s196
      %p200 = scmp.eq.s32.totalorder %s29, 0
      %p201 = por %p199, %p200
      %p202 = scmp.ne.s32.totalorder %s194, %s196
      %p203 = scmp.eq.s32.totalorder %s34, 1
      %p204 = por %p202, %p203
      %p205 = scmp.ne.s32.totalorder %s196, %s197
      %p206 = scmp.eq.s32.totalorder %s34, 0
      %p207 = por %p205, %p206
      %p208 = scmp.ne.s32.totalorder %s196, %s197
      %p209 = scmp.eq.s32.totalorder %s35, 1
      %p210 = por %p208, %p209
      %p212 = scmp.ne.s32.totalorder %s197, %s211
      %p213 = scmp.eq.s32.totalorder %s35, 0
      %p214 = por %p212, %p213
      %s216 = sadd.s32 %s215, 1
      %p219 = scmp.eq.s32.totalorder %s29, 1
      %p220 = scmp.ne.s32.totalorder %s215, %s217
      %p221 = scmp.eq.s32.totalorder %s29, 0
      %p222 = por %p220, %p221
      %p223 = scmp.ne.s32.totalorder %s215, %s217
      %p224 = scmp.eq.s32.totalorder %s34, 1
      %p225 = por %p223, %p224
      %p226 = scmp.ne.s32.totalorder %s217, %s218
      %p227 = scmp.eq.s32.totalorder %s34, 0
      %p228 = por %p226, %p227
      %p229 = scmp.ne.s32.totalorder %s217, %s218
      %p230 = scmp.eq.s32.totalorder %s35, 1
      %p231 = por %p229, %p230
      %p233 = scmp.ne.s32.totalorder %s218, %s232
      %p234 = scmp.eq.s32.totalorder %s35, 0
      %p235 = por %p233, %p234
      %s237 = sadd.s32 %s236, 1
      %p240 = scmp.eq.s32.totalorder %s29, 1
      %p241 = scmp.ne.s32.totalorder %s236, %s238
      %p242 = scmp.eq.s32.totalorder %s29, 0
      %p243 = por %p241, %p242
      %p244 = scmp.ne.s32.totalorder %s236, %s238
      %p245 = scmp.eq.s32.totalorder %s34, 1
      %p246 = por %p244, %p245
      %p247 = scmp.ne.s32.totalorder %s238, %s239
      %p248 = scmp.eq.s32.totalorder %s34, 0
      %p249 = por %p247, %p248
      %p250 = scmp.ne.s32.totalorder %s238, %s239
      %p251 = scmp.eq.s32.totalorder %s35, 1
      %p252 = por %p250, %p251
      %p254 = scmp.ne.s32.totalorder %s239, %s253
      %p255 = scmp.eq.s32.totalorder %s35, 0
      %p256 = por %p254, %p255
      %s258 = sadd.s32 %s257, 1
      %p261 = scmp.eq.s32.totalorder %s29, 1
      %p262 = scmp.ne.s32.totalorder %s257, %s259
      %p263 = scmp.eq.s32.totalorder %s29, 0
      %p264 = por %p262, %p263
      %p265 = scmp.ne.s32.totalorder %s257, %s259
      %p266 = scmp.eq.s32.totalorder %s34, 1
      %p267 = por %p265, %p266
      %p268 = scmp.ne.s32.totalorder %s259, %s260
      %p269 = scmp.eq.s32.totalorder %s34, 0
      %p270 = por %p268, %p269
      %p271 = scmp.ne.s32.totalorder %s259, %s260
      %p272 = scmp.eq.s32.totalorder %s35, 1
      %p273 = por %p271, %p272
      %p275 = scmp.ne.s32.totalorder %s260, %s274
      %p276 = scmp.eq.s32.totalorder %s35, 0
      %p277 = por %p275, %p276
      %s279 = sadd.s32 %s278, 1
      %p282 = scmp.eq.s32.totalorder %s29, 1
      %p283 = scmp.ne.s32.totalorder %s278, %s280
      %p284 = scmp.eq.s32.totalorder %s29, 0
      %p285 = por %p283, %p284
      %p286 = scmp.ne.s32.totalorder %s278, %s280
      %p287 = scmp.eq.s32.totalorder %s34, 1
      %p288 = por %p286, %p287
      %p289 = scmp.ne.s32.totalorder %s280, %s281
      %p290 = scmp.eq.s32.totalorder %s34, 0
      %p291 = por %p289, %p290
      %p292 = scmp.ne.s32.totalorder %s280, %s281
      %p293 = scmp.eq.s32.totalorder %s35, 1
      %p294 = por %p292, %p293
      %p296 = scmp.ne.s32.totalorder %s281, %s295
      %p297 = scmp.eq.s32.totalorder %s35, 0
      %p298 = por %p296, %p297
      %s300 = sadd.s32 %s299, 1
      %p303 = scmp.eq.s32.totalorder %s29, 1
      %p304 = scmp.ne.s32.totalorder %s299, %s301
      %p305 = scmp.eq.s32.totalorder %s29, 0
      %p306 = por %p304, %p305
      %p307 = scmp.ne.s32.totalorder %s299, %s301
      %p308 = scmp.eq.s32.totalorder %s34, 1
      %p309 = por %p307, %p308
      %p310 = scmp.ne.s32.totalorder %s301, %s302
      %p311 = scmp.eq.s32.totalorder %s34, 0
      %p312 = por %p310, %p311
      %p313 = scmp.ne.s32.totalorder %s301, %s302
      %p314 = scmp.eq.s32.totalorder %s35, 1
      %p315 = por %p313, %p314
      %p317 = scmp.ne.s32.totalorder %s302, %s316
      %p318 = scmp.eq.s32.totalorder %s35, 0
      %p319 = por %p317, %p318
      %s321 = sadd.s32 %s320, 1
      %p324 = scmp.eq.s32.totalorder %s29, 1
      %p325 = scmp.ne.s32.totalorder %s320, %s322
      %p326 = scmp.eq.s32.totalorder %s29, 0
      %p327 = por %p325, %p326
      %p328 = scmp.ne.s32.totalorder %s320, %s322
      %p329 = scmp.eq.s32.totalorder %s34, 1
      %p330 = por %p328, %p329
      %p331 = scmp.ne.s32.totalorder %s322, %s323
      %p332 = scmp.eq.s32.totalorder %s34, 0
      %p333 = por %p331, %p332
      %p334 = scmp.ne.s32.totalorder %s322, %s323
      %p335 = scmp.eq.s32.totalorder %s35, 1
      %p336 = por %p334, %p335
      %p338 = scmp.ne.s32.totalorder %s323, %s337
      %p339 = scmp.eq.s32.totalorder %s35, 0
      %p340 = por %p338, %p339
      %s342 = sadd.s32 %s341, 1
      %p345 = scmp.eq.s32.totalorder %s29, 1
      %p346 = scmp.ne.s32.totalorder %s341, %s343
      %p347 = scmp.eq.s32.totalorder %s29, 0
      %p348 = por %p346, %p347
      %p349 = scmp.ne.s32.totalorder %s341, %s343
      %p350 = scmp.eq.s32.totalorder %s34, 1
      %p351 = por %p349, %p350
      %p352 = scmp.ne.s32.totalorder %s343, %s344
      %p353 = scmp.eq.s32.totalorder %s34, 0
      %p354 = por %p352, %p353
      %p355 = scmp.ne.s32.totalorder %s343, %s344
      %p356 = scmp.eq.s32.totalorder %s35, 1
      %p357 = por %p355, %p356
      %p359 = scmp.ne.s32.totalorder %s344, %s358
      %p360 = scmp.eq.s32.totalorder %s35, 0
      %p361 = por %p359, %p360
      %s363 = sadd.s32 %s362, 1
      %p366 = scmp.eq.s32.totalorder %s29, 1
      %p367 = scmp.ne.s32.totalorder %s362, %s364
      %p368 = scmp.eq.s32.totalorder %s29, 0
      %p369 = por %p367, %p368
      %p370 = scmp.ne.s32.totalorder %s362, %s364
      %p371 = scmp.eq.s32.totalorder %s34, 1
      %p372 = por %p370, %p371
      %p373 = scmp.ne.s32.totalorder %s364, %s365
      %p374 = scmp.eq.s32.totalorder %s34, 0
      %p375 = por %p373, %p374
      %p376 = scmp.ne.s32.totalorder %s364, %s365
      %p377 = scmp.eq.s32.totalorder %s35, 1
      %p378 = por %p376, %p377
      %p380 = scmp.ne.s32.totalorder %s365, %s379
      %p381 = scmp.eq.s32.totalorder %s35, 0
      %p382 = por %p380, %p381
      %s384 = sadd.s32 %s383, 1
      %p387 = scmp.eq.s32.totalorder %s29, 1
      %p388 = scmp.ne.s32.totalorder %s383, %s385
      %p389 = scmp.eq.s32.totalorder %s29, 0
      %p390 = por %p388, %p389
      %p391 = scmp.ne.s32.totalorder %s383, %s385
      %p392 = scmp.eq.s32.totalorder %s34, 1
      %p393 = por %p391, %p392
      %p394 = scmp.ne.s32.totalorder %s385, %s386
      %p395 = scmp.eq.s32.totalorder %s34, 0
      %p396 = por %p394, %p395
      %p397 = scmp.ne.s32.totalorder %s385, %s386
      %p398 = scmp.eq.s32.totalorder %s35, 1
      %p399 = por %p397, %p398
      %p401 = scmp.ne.s32.totalorder %s386, %s400
      %p402 = scmp.eq.s32.totalorder %s35, 0
      %p403 = por %p401, %p402
      %s405 = sadd.s32 %s404, 1
      %p408 = scmp.eq.s32.totalorder %s29, 1
      %p409 = scmp.ne.s32.totalorder %s404, %s406
      %p410 = scmp.eq.s32.totalorder %s29, 0
      %p411 = por %p409, %p410
      %p412 = scmp.ne.s32.totalorder %s404, %s406
      %p413 = scmp.eq.s32.totalorder %s34, 1
      %p414 = por %p412, %p413
      %p415 = scmp.ne.s32.totalorder %s406, %s407
      %p416 = scmp.eq.s32.totalorder %s34, 0
      %p417 = por %p415, %p416
      %p418 = scmp.ne.s32.totalorder %s406, %s407
      %p419 = scmp.eq.s32.totalorder %s35, 1
      %p420 = por %p418, %p419
      %p422 = scmp.ne.s32.totalorder %s407, %s421
      %p423 = scmp.eq.s32.totalorder %s35, 0
      %p424 = por %p422, %p423
      %s426 = sadd.s32 %s425, 1
      %p429 = scmp.eq.s32.totalorder %s29, 1
      %p430 = scmp.ne.s32.totalorder %s425, %s427
      %p431 = scmp.eq.s32.totalorder %s29, 0
      %p432 = por %p430, %p431
      %p433 = scmp.ne.s32.totalorder %s425, %s427
      %p434 = scmp.eq.s32.totalorder %s34, 1
      %p435 = por %p433, %p434
      %p436 = scmp.ne.s32.totalorder %s427, %s428
      %p437 = scmp.eq.s32.totalorder %s34, 0
      %p438 = por %p436, %p437
      %p439 = scmp.ne.s32.totalorder %s427, %s428
      %p440 = scmp.eq.s32.totalorder %s35, 1
      %p441 = por %p439, %p440
      %p443 = scmp.ne.s32.totalorder %s428, %s442
      %p444 = scmp.eq.s32.totalorder %s35, 0
      %p445 = por %p443, %p444
      %s447 = sadd.s32 %s446, 1
      %p450 = scmp.eq.s32.totalorder %s29, 1
      %p451 = scmp.ne.s32.totalorder %s446, %s448
      %p452 = scmp.eq.s32.totalorder %s29, 0
      %p453 = por %p451, %p452
      %p454 = scmp.ne.s32.totalorder %s446, %s448
      %p455 = scmp.eq.s32.totalorder %s34, 1
      %p456 = por %p454, %p455
      %p457 = scmp.ne.s32.totalorder %s448, %s449
      %p458 = scmp.eq.s32.totalorder %s34, 0
      %p459 = por %p457, %p458
      %p460 = scmp.ne.s32.totalorder %s448, %s449
      %p461 = scmp.eq.s32.totalorder %s35, 1
      %p462 = por %p460, %p461
      %p464 = scmp.ne.s32.totalorder %s449, %s463
      %p465 = scmp.eq.s32.totalorder %s35, 0
      %p466 = por %p464, %p465
      %s468 = sadd.s32 %s467, 1
      %p471 = scmp.eq.s32.totalorder %s29, 1
      %p472 = scmp.ne.s32.totalorder %s467, %s469
      %p473 = scmp.eq.s32.totalorder %s29, 0
      %p474 = por %p472, %p473
      %p475 = scmp.ne.s32.totalorder %s467, %s469
      %p476 = scmp.eq.s32.totalorder %s34, 1
      %p477 = por %p475, %p476
      %p478 = scmp.ne.s32.totalorder %s469, %s470
      %p479 = scmp.eq.s32.totalorder %s34, 0
      %p480 = por %p478, %p479
      %p481 = scmp.ne.s32.totalorder %s469, %s470
      %p482 = scmp.eq.s32.totalorder %s35, 1
      %p483 = por %p481, %p482
      %p485 = scmp.ne.s32.totalorder %s470, %s484
      %p486 = scmp.eq.s32.totalorder %s35, 0
      %p487 = por %p485, %p486
      %s489 = sadd.s32 %s488, 1
      %p492 = scmp.eq.s32.totalorder %s29, 1
      %p493 = scmp.ne.s32.totalorder %s488, %s490
      %p494 = scmp.eq.s32.totalorder %s29, 0
      %p495 = por %p493, %p494
      %p496 = scmp.ne.s32.totalorder %s488, %s490
      %p497 = scmp.eq.s32.totalorder %s34, 1
      %p498 = por %p496, %p497
      %p499 = scmp.ne.s32.totalorder %s490, %s491
      %p500 = scmp.eq.s32.totalorder %s34, 0
      %p501 = por %p499, %p500
      %p502 = scmp.ne.s32.totalorder %s490, %s491
      %p503 = scmp.eq.s32.totalorder %s35, 1
      %p504 = por %p502, %p503
      %p506 = scmp.ne.s32.totalorder %s491, %s505
      %p507 = scmp.eq.s32.totalorder %s35, 0
      %p508 = por %p506, %p507
      %s509 = ssub.s32 %s29, %s36
      %p510 = scmp.eq.s32.totalorder %s509, 0
      %s512 = sadd.s32 %s511, 1
      %s513 = scalar_select %p510, %s511, %s512
      %p516 = pneg %p510
      %p517 = scmp.eq.s32.totalorder %s29, 1
      %p518 = por %p516, %p517
      %p519 = scmp.ne.s32.totalorder %s511, %s514
      %p520 = scmp.eq.s32.totalorder %s29, 0
      %p521 = por %p519, %p520
      %p522 = scmp.ne.s32.totalorder %s511, %s514
      %p523 = scmp.eq.s32.totalorder %s34, 1
      %p524 = por %p522, %p523
      %p525 = scmp.ne.s32.totalorder %s514, %s515
      %p526 = scmp.eq.s32.totalorder %s34, 0
      %p527 = por %p525, %p526
      %p528 = scmp.ne.s32.totalorder %s514, %s515
      %p529 = scmp.eq.s32.totalorder %s35, 1
      %p530 = por %p528, %p529
      %p532 = scmp.ne.s32.totalorder %s515, %s531
      %p533 = scmp.eq.s32.totalorder %s35, 0
      %p534 = por %p532, %p533
      %p535 = scmp.le.s32.totalorder 1, %s29
      %p536 = scmp.lt.s32.totalorder %s29, 3
      %p537 = pnand %p535, %p536
      %p538 = pneg %p537
      // Predicated region
      $region9: #{transformer_forward.8} parent=5 // pred_check
        _
      $region10: #{transformer_forward.8} parent=5 // pred_check_branch
        %540 = sbr.rel (%p537) target = $region12
      $region11: #{transformer_forward.8} parent=5 // pred_region
        %s541 = ssub.s32 %s29, 1
        // Predicated region
        $region13: #{transformer_forward.8} parent=11 // pred_check
          %p542 = pneg %p102
        $region14: #{transformer_forward.8} parent=11 // pred_check_branch
          %544 = sbr.rel (%p542) target = $region16
        $region15: #{transformer_forward.8} parent=11 // pred_region
          _
        $region16: #{transformer_forward.8} parent=11 // pred_fallthru
          _
        // Predicated region
        $region17: #{transformer_forward.8} parent=11 // pred_check
          %p545 = pneg %p123
        $region18: #{transformer_forward.8} parent=11 // pred_check_branch
          %547 = sbr.rel (%p545) target = $region20
        $region19: #{transformer_forward.8} parent=11 // pred_region
          _
        $region20: #{transformer_forward.8} parent=11 // pred_fallthru
          _
        // Predicated region
        $region21: #{transformer_forward.8} parent=11 // pred_check
          %p548 = pneg %p144
        $region22: #{transformer_forward.8} parent=11 // pred_check_branch
          %550 = sbr.rel (%p548) target = $region24
        $region23: #{transformer_forward.8} parent=11 // pred_region
          _
        $region24: #{transformer_forward.8} parent=11 // pred_fallthru
          _
        // Predicated region
        $region25: #{transformer_forward.8} parent=11 // pred_check
          %p551 = pneg %p165
        $region26: #{transformer_forward.8} parent=11 // pred_check_branch
          %553 = sbr.rel (%p551) target = $region28
        $region27: #{transformer_forward.8} parent=11 // pred_region
          _
        $region28: #{transformer_forward.8} parent=11 // pred_fallthru
          _
        // Predicated region
        $region29: #{transformer_forward.8} parent=11 // pred_check
          %p554 = pneg %p186
        $region30: #{transformer_forward.8} parent=11 // pred_check_branch
          %556 = sbr.rel (%p554) target = $region32
        $region31: #{transformer_forward.8} parent=11 // pred_region
          _
        $region32: #{transformer_forward.8} parent=11 // pred_fallthru
          _
        // Predicated region
        $region33: #{transformer_forward.8} parent=11 // pred_check
          %p557 = pneg %p207
        $region34: #{transformer_forward.8} parent=11 // pred_check_branch
          %559 = sbr.rel (%p557) target = $region36
        $region35: #{transformer_forward.8} parent=11 // pred_region
          _
        $region36: #{transformer_forward.8} parent=11 // pred_fallthru
          _
        // Predicated region
        $region37: #{transformer_forward.8} parent=11 // pred_check
          %p560 = pneg %p228
        $region38: #{transformer_forward.8} parent=11 // pred_check_branch
          %562 = sbr.rel (%p560) target = $region40
        $region39: #{transformer_forward.8} parent=11 // pred_region
          _
        $region40: #{transformer_forward.8} parent=11 // pred_fallthru
          _
        // Predicated region
        $region41: #{transformer_forward.8} parent=11 // pred_check
          %p563 = pneg %p249
        $region42: #{transformer_forward.8} parent=11 // pred_check_branch
          %565 = sbr.rel (%p563) target = $region44
        $region43: #{transformer_forward.8} parent=11 // pred_region
          _
        $region44: #{transformer_forward.8} parent=11 // pred_fallthru
          _
        // Predicated region
        $region45: #{transformer_forward.8} parent=11 // pred_check
          %p566 = pneg %p270
        $region46: #{transformer_forward.8} parent=11 // pred_check_branch
          %568 = sbr.rel (%p566) target = $region48
        $region47: #{transformer_forward.8} parent=11 // pred_region
          _
        $region48: #{transformer_forward.8} parent=11 // pred_fallthru
          _
        // Predicated region
        $region49: #{transformer_forward.8} parent=11 // pred_check
          %p569 = pneg %p291
        $region50: #{transformer_forward.8} parent=11 // pred_check_branch
          %571 = sbr.rel (%p569) target = $region52
        $region51: #{transformer_forward.8} parent=11 // pred_region
          _
        $region52: #{transformer_forward.8} parent=11 // pred_fallthru
          _
        // Predicated region
        $region53: #{transformer_forward.8} parent=11 // pred_check
          %p572 = pneg %p312
        $region54: #{transformer_forward.8} parent=11 // pred_check_branch
          %574 = sbr.rel (%p572) target = $region56
        $region55: #{transformer_forward.8} parent=11 // pred_region
          _
        $region56: #{transformer_forward.8} parent=11 // pred_fallthru
          _
        // Predicated region
        $region57: #{transformer_forward.8} parent=11 // pred_check
          %p575 = pneg %p333
        $region58: #{transformer_forward.8} parent=11 // pred_check_branch
          %577 = sbr.rel (%p575) target = $region60
        $region59: #{transformer_forward.8} parent=11 // pred_region
          _
        $region60: #{transformer_forward.8} parent=11 // pred_fallthru
          _
        // Predicated region
        $region61: #{transformer_forward.8} parent=11 // pred_check
          %p578 = pneg %p354
        $region62: #{transformer_forward.8} parent=11 // pred_check_branch
          %580 = sbr.rel (%p578) target = $region64
        $region63: #{transformer_forward.8} parent=11 // pred_region
          _
        $region64: #{transformer_forward.8} parent=11 // pred_fallthru
          _
        // Predicated region
        $region65: #{transformer_forward.8} parent=11 // pred_check
          %p581 = pneg %p375
        $region66: #{transformer_forward.8} parent=11 // pred_check_branch
          %583 = sbr.rel (%p581) target = $region68
        $region67: #{transformer_forward.8} parent=11 // pred_region
          _
        $region68: #{transformer_forward.8} parent=11 // pred_fallthru
          _
        // Predicated region
        $region69: #{transformer_forward.8} parent=11 // pred_check
          %p584 = pneg %p396
        $region70: #{transformer_forward.8} parent=11 // pred_check_branch
          %586 = sbr.rel (%p584) target = $region72
        $region71: #{transformer_forward.8} parent=11 // pred_region
          _
        $region72: #{transformer_forward.8} parent=11 // pred_fallthru
          _
        // Predicated region
        $region73: #{transformer_forward.8} parent=11 // pred_check
          %p587 = pneg %p417
        $region74: #{transformer_forward.8} parent=11 // pred_check_branch
          %589 = sbr.rel (%p587) target = $region76
        $region75: #{transformer_forward.8} parent=11 // pred_region
          _
        $region76: #{transformer_forward.8} parent=11 // pred_fallthru
          _
        // Predicated region
        $region77: #{transformer_forward.8} parent=11 // pred_check
          %p590 = pneg %p438
        $region78: #{transformer_forward.8} parent=11 // pred_check_branch
          %592 = sbr.rel (%p590) target = $region80
        $region79: #{transformer_forward.8} parent=11 // pred_region
          _
        $region80: #{transformer_forward.8} parent=11 // pred_fallthru
          _
        // Predicated region
        $region81: #{transformer_forward.8} parent=11 // pred_check
          %p593 = pneg %p459
        $region82: #{transformer_forward.8} parent=11 // pred_check_branch
          %595 = sbr.rel (%p593) target = $region84
        $region83: #{transformer_forward.8} parent=11 // pred_region
          _
        $region84: #{transformer_forward.8} parent=11 // pred_fallthru
          _
        // Predicated region
        $region85: #{transformer_forward.8} parent=11 // pred_check
          %p596 = pneg %p480
        $region86: #{transformer_forward.8} parent=11 // pred_check_branch
          %598 = sbr.rel (%p596) target = $region88
        $region87: #{transformer_forward.8} parent=11 // pred_region
          _
        $region88: #{transformer_forward.8} parent=11 // pred_fallthru
          _
        // Predicated region
        $region89: #{transformer_forward.8} parent=11 // pred_check
          %p599 = pneg %p501
        $region90: #{transformer_forward.8} parent=11 // pred_check_branch
          %601 = sbr.rel (%p599) target = $region92
        $region91: #{transformer_forward.8} parent=11 // pred_region
          %603 = vsyncadd [#allocation3], 0
          %s605 = sshll.u32 %s21, 4
          %s606 = int_to_ptr.hbm [resolvable:$true] %s605
          %s607 = sshll.u32 [#allocation2], 4
          %s608 = int_to_ptr.vmem [resolvable:$true] %s607
          %610 = dma.hbm_to_vmem [thread:$0]  %s606, 16, %s608, [#allocation3]
        $region92: #{transformer_forward.8} parent=11 // pred_fallthru
          _
      $region12: #{transformer_forward.8} parent=5 // pred_fallthru
        _
      %p611 = scmp.lt.s32.totalorder %s29, 2
      // Predicated region
      $region93: #{transformer_forward.8} parent=5 // pred_check
        %p612 = pneg %p611
      $region94: #{transformer_forward.8} parent=5 // pred_check_branch
        %614 = sbr.rel (%p612) target = $region96
      $region95: #{transformer_forward.8} parent=5 // pred_region
        // Predicated region
        $region97: #{transformer_forward.8} parent=95 // pred_check
          %p615 = pneg %p49
        $region98: #{transformer_forward.8} parent=95 // pred_check_branch
          %617 = sbr.rel (%p615) target = $region100
        $region99: #{transformer_forward.8} parent=95 // pred_region
          %p618 = scmp.lt.s32.totalorder %s29, 1
          %s619 = scalar_select %p618, %s29, 1
          %s620 = smul.addr %s619, 4
          %s621 = scalar_lea.vmem %s0, %s620
        $region100: #{transformer_forward.8} parent=95 // pred_fallthru
          _
        // Predicated region
        $region101: #{transformer_forward.8} parent=95 // pred_check
          %p622 = pneg %p75
        $region102: #{transformer_forward.8} parent=95 // pred_check_branch
          %624 = sbr.rel (%p622) target = $region104
        $region103: #{transformer_forward.8} parent=95 // pred_region
          %p625 = scmp.lt.s32.totalorder %s29, 1
          %s626 = scalar_select %p625, %s29, 1
          %s627 = smul.addr %s626, 2
          %s628 = smul.addr %s627, 4
          %s629 = scalar_lea.vmem %s1, %s628
        $region104: #{transformer_forward.8} parent=95 // pred_fallthru
          _
      $region96: #{transformer_forward.8} parent=5 // pred_fallthru
        _
      %p630 = scmp.le.s32.totalorder 1, %s29
      %p631 = scmp.lt.s32.totalorder %s29, 3
      %p632 = pnand %p630, %p631
      %p633 = pneg %p632
      // Predicated region
      $region105: #{transformer_forward.8} parent=5 // pred_check
        _
      $region106: #{transformer_forward.8} parent=5 // pred_check_branch
        %635 = sbr.rel (%p632) target = $region108
      $region107: #{transformer_forward.8} parent=5 // pred_region
        %s636 = ssub.s32 %s29, 1
        // Predicated region
        $region109: #{transformer_forward.8} parent=107 // pred_check
          %p637 = pneg %p501
        $region110: #{transformer_forward.8} parent=107 // pred_check_branch
          %639 = sbr.rel (%p637) target = $region112
        $region111: #{transformer_forward.8} parent=107 // pred_region
          %641 = dma.done [#allocation3], 16
        $region112: #{transformer_forward.8} parent=107 // pred_fallthru
          _
        %p642 = scmp.lt.s32.totalorder %s34, 1
        %s643 = scalar_select %p642, %s34, 1
        %s644 = smul.addr %s643, 4
        %s645 = scalar_lea.vmem %s0, %s644
        %p646 = pneg %p55
        %p647 = pneg %p52
        %p648 = scmp.lt.s32.totalorder %s34, 1
        %s649 = scalar_select %p648, %s34, 1
        %s650 = smul.addr %s649, 2
        %s651 = smul.addr %s650, 4
        %s652 = scalar_lea.vmem %s1, %s651
        %p653 = pneg %p81
        %p654 = pneg %p78
        %p655 = pneg %p102
        %p656 = pneg %p99
        %p657 = pneg %p123
        %p658 = pneg %p120
        %p659 = pneg %p144
        %p660 = pneg %p141
        %p661 = pneg %p165
        %p662 = pneg %p162
        %p663 = pneg %p186
        %p664 = pneg %p183
        %p665 = pneg %p207
        %p666 = pneg %p204
        %p667 = pneg %p228
        %p668 = pneg %p225
        %p669 = pneg %p249
        %p670 = pneg %p246
        %p671 = pneg %p270
        %p672 = pneg %p267
        %p673 = pneg %p291
        %p674 = pneg %p288
        %p675 = pneg %p312
        %p676 = pneg %p309
        %p677 = pneg %p333
        %p678 = pneg %p330
        %p679 = pneg %p354
        %p680 = pneg %p351
        %p681 = pneg %p375
        %p682 = pneg %p372
        %p683 = pneg %p396
        %p684 = pneg %p393
        %p685 = pneg %p417
        %p686 = pneg %p414
        %p687 = pneg %p438
        %p688 = pneg %p435
        %p689 = pneg %p459
        %p690 = pneg %p456
        %p691 = pneg %p480
        %p692 = pneg %p477
        %p693 = pneg %p501
        %p694 = pneg %p498
        %p695 = pneg %p527
        %p696 = pneg %p524
        %p697 = scmp.lt.s32.totalorder %s34, 1
        %s698 = scalar_select %p697, %s34, 1
        %s699 = smul.addr %s698, 4
        %s700 = scalar_lea.vmem %s22, %s699
        %p701 = scmp.lt.s32.totalorder %s34, 1
        %s702 = scalar_select %p701, %s34, 1
        %s703 = smul.addr %s702, 4
        %s704 = scalar_lea.vmem %s0, %s703
        %p705 = scmp.lt.s32.totalorder %s34, 1
        %s706 = scalar_select %p705, %s34, 1
        %s707 = smul.addr %s706, 2
        %s708 = smul.addr %s707, 4
        %s709 = scalar_lea.vmem %s1, %s708
        %p710 = scmp.lt.s32.totalorder %s34, 1
        %s711 = scalar_select %p710, %s34, 1
        %s712 = smul.addr %s711, 4
        %s713 = scalar_lea.vmem %s22, %s712
        %v715 = vld [vmem:[%s704] sm:$0xf]
        %v716 = vunpack.c.l.bf16 %v715
        %v717 = vld [vmem:[%s2] sm:$0xf]
        %v718 = vld [vmem:[%s2 + $0x4] sm:$0xf]
        %v719 = vld [vmem:[%s2 + $0x8] sm:$0xf]
        %v720 = vld [vmem:[%s2 + $0xc] sm:$0xf]
        %v721 = vld [vmem:[%s3] sm:$0x1]
        %v723 = vperm.slane %v721, 0
        %v729 = vunpack.c.l.b16 %v717
        %v730 = vunpack.c.l.b16 %v718
        %v731 = vunpack.c.l.b16 %v719
        %v732 = vunpack.c.l.b16 %v720
        %v733 = vpack.c.b16 %v730, %v729
        %v734 = vpack.c.b16 %v732, %v731
        %vm737 = vcmask 261120
        %v739 = vsel %vm737, %v715, 0
        %741 = vmatpush.bf16.msra.mxu0 0
        %742 = vmatpush.bf16.msra.mxu0 0
        %743 = vmatpush.bf16.msra.mxu0 0
        %744 = vmatpush.bf16.msra.mxu0 0
        %745 = vmatpush.bf16.msra.mxu0 0
        %746 = vmatpush.bf16.msra.mxu0 0
        %747 = vmatpush.bf16.msra.mxu0 %v734
        %748 = vmatpush.bf16.msra.mxu0 %v733
        %749 = vmatmul.bf16.gmra.mxu0 %v739
        %v750 = vpop.f32.mrf.mxu0
        %v751 = vadd.f32 %v723, %v750
        %v752 = vpop.f32.mrf.mxu0
        %753 = vdwg.mxu0
        %v754 = vmul.f32 %v751, 0.35355338
        %v755 = vld [vmem:[%s4] sm:$0xf]
        %v756 = vld [vmem:[%s4 + $0x4] sm:$0xf]
        %v757 = vld [vmem:[%s4 + $0x8] sm:$0xf]
        %v758 = vld [vmem:[%s4 + $0xc] sm:$0xf]
        %v759 = vpack.c.bf16 %v754, %v754
        %v760 = vpack.c.bf16 %v751, %v751
        %762 = vrot.lane.b32.xlu0 %v760, 96
        %v763 = vpop.permute.xlu0 %762
        %vm764 = vcmask 64512
        %v766 = vsel %vm764, %v759, 0
        %v769 = vsel %vm764, %v763, 0
        %771 = vmatpush.bf16.xpose.msra.mxu0 0
        %772 = vmatpush.bf16.xpose.msra.mxu0 0
        %773 = vmatpush.bf16.xpose.msra.mxu0 0
        %774 = vmatpush.bf16.xpose.msra.mxu0 0
        %775 = vmatpush.bf16.xpose.msra.mxu0 0
        %776 = vmatpush.bf16.xpose.msra.mxu0 0
        %777 = vmatpush.bf16.xpose.msra.mxu0 0
        %778 = vmatpush.bf16.xpose.msra.mxu0 %v769
        %779 = vmatmul.bf16.gmra.mxu0 %v766
        %v780 = vpop.f32.mrf.mxu0
        %v781 = vadd.f32 0.0, %v780
        %v782 = vpop.f32.mrf.mxu0
        %783 = vdwg.mxu0
        %v784 = vsel %vm764, %v781, -inf
        %785 = vmax.xlane.f32.xlu0 %v784
        %v786 = vpop.xlane.xlu0 %785
        %v787 = vsub.f32 %v781, %v786
        %v788 = vmul.f32 %v787, 1.442695
        %v789 = vpow.pop %v788
        %v790 = vsel %vm764, %v789, 0.0
        %791 = vadd.xlane.f32.xlu0 %v790
        %v792 = vpop.xlane.xlu0 %791
        %v793 = vpack.c.bf16 %v789, %v789
        %794 = vrot.lane.b32.xlu0 %v760, 64
        %v795 = vpop.permute.xlu0 %794
        %v797 = vsel %vm764, %v793, 0
        %vm799 = vcmask 1043456
        %v801 = vsel %vm799, %v795, 0
        %803 = vmatpush.bf16.msra.mxu0 0
        %804 = vmatpush.bf16.msra.mxu0 0
        %805 = vmatpush.bf16.msra.mxu0 0
        %806 = vmatpush.bf16.msra.mxu0 0
        %807 = vmatpush.bf16.msra.mxu0 0
        %808 = vmatpush.bf16.msra.mxu0 0
        %809 = vmatpush.bf16.msra.mxu0 0
        %810 = vmatpush.bf16.msra.mxu0 %v801
        %811 = vmatmul.bf16.gmra.mxu0 %v797
        %v812 = vpop.f32.mrf.mxu0
        %v813 = vadd.f32 0.0, %v812
        %v814 = vpop.f32.mrf.mxu0
        %815 = vdwg.mxu0
        %v816 = vrcp.pop %v792
        %v817 = vmul.f32 %v813, %v816
        %v818 = vpack.c.bf16 %v817, %v817
        %820 = vrot.lane.b32.xlu0 %v759, 120
        %v821 = vpop.permute.xlu0 %820
        %822 = vrot.lane.b32.xlu0 %v760, 88
        %v823 = vpop.permute.xlu0 %822
        %v825 = vsel %vm764, %v821, 0
        %v828 = vsel %vm764, %v823, 0
        %830 = vmatpush.bf16.xpose.msra.mxu0 0
        %831 = vmatpush.bf16.xpose.msra.mxu0 0
        %832 = vmatpush.bf16.xpose.msra.mxu0 0
        %833 = vmatpush.bf16.xpose.msra.mxu0 0
        %834 = vmatpush.bf16.xpose.msra.mxu0 0
        %835 = vmatpush.bf16.xpose.msra.mxu0 0
        %836 = vmatpush.bf16.xpose.msra.mxu0 0
        %837 = vmatpush.bf16.xpose.msra.mxu0 %v828
        %838 = vmatmul.bf16.gmra.mxu0 %v825
        %v839 = vpop.f32.mrf.mxu0
        %v840 = vadd.f32 0.0, %v839
        %v841 = vpop.f32.mrf.mxu0
        %842 = vdwg.mxu0
        %v843 = vsel %vm764, %v840, -inf
        %844 = vmax.xlane.f32.xlu0 %v843
        %v845 = vpop.xlane.xlu0 %844
        %v846 = vsub.f32 %v840, %v845
        %v847 = vmul.f32 %v846, 1.442695
        %v848 = vpow.pop %v847
        %v849 = vsel %vm764, %v848, 0.0
        %850 = vadd.xlane.f32.xlu0 %v849
        %v851 = vpop.xlane.xlu0 %850
        %v852 = vpack.c.bf16 %v848, %v848
        %853 = vrot.lane.b32.xlu0 %v760, 56
        %v854 = vpop.permute.xlu0 %853
        %v856 = vsel %vm764, %v852, 0
        %v859 = vsel %vm799, %v854, 0
        %861 = vmatpush.bf16.msra.mxu0 0
        %862 = vmatpush.bf16.msra.mxu0 0
        %863 = vmatpush.bf16.msra.mxu0 0
        %864 = vmatpush.bf16.msra.mxu0 0
        %865 = vmatpush.bf16.msra.mxu0 0
        %866 = vmatpush.bf16.msra.mxu0 0
        %867 = vmatpush.bf16.msra.mxu0 0
        %868 = vmatpush.bf16.msra.mxu0 %v859
        %869 = vmatmul.bf16.gmra.mxu0 %v856
        %v870 = vpop.f32.mrf.mxu0
        %v871 = vadd.f32 0.0, %v870
        %v872 = vpop.f32.mrf.mxu0
        %873 = vdwg.mxu0
        %v874 = vrcp.pop %v851
        %v875 = vmul.f32 %v871, %v874
        %v876 = vpack.c.bf16 %v875, %v875
        %v878 = vsel %vm764, %v876, 0
        %v881 = vsel %vm799, %v756, 0
        %883 = vmatpush.bf16.msra.mxu0 0
        %884 = vmatpush.bf16.msra.mxu0 0
        %885 = vmatpush.bf16.msra.mxu0 0
        %886 = vmatpush.bf16.msra.mxu0 0
        %887 = vmatpush.bf16.msra.mxu0 0
        %888 = vmatpush.bf16.msra.mxu0 0
        %889 = vmatpush.bf16.msra.mxu0 0
        %890 = vmatpush.bf16.msra.mxu0 %v881
        %891 = vmatmul.bf16.gmra.mxu0 %v878
        %v892 = vpop.f32.mrf.mxu0
        %v893 = vadd.f32 0.0, %v892
        %v894 = vpop.f32.mrf.mxu0
        %895 = vdwg.mxu0
        %v897 = vsel %vm764, %v818, 0
        %v900 = vsel %vm799, %v755, 0
        %902 = vmatpush.bf16.msra.mxu0 0
        %903 = vmatpush.bf16.msra.mxu0 0
        %904 = vmatpush.bf16.msra.mxu0 0
        %905 = vmatpush.bf16.msra.mxu0 0
        %906 = vmatpush.bf16.msra.mxu0 0
        %907 = vmatpush.bf16.msra.mxu0 0
        %908 = vmatpush.bf16.msra.mxu0 0
        %909 = vmatpush.bf16.msra.mxu0 %v900
        %910 = vmatmul.bf16.gmra.mxu0 %v897
        %v911 = vpop.f32.mrf.mxu0
        %v912 = vadd.f32 %v893, %v911
        %v913 = vpop.f32.mrf.mxu0
        %914 = vdwg.mxu0
        %915 = vrot.lane.b32.xlu0 %v759, 112
        %v916 = vpop.permute.xlu0 %915
        %917 = vrot.lane.b32.xlu0 %v760, 80
        %v918 = vpop.permute.xlu0 %917
        %v920 = vsel %vm764, %v916, 0
        %v923 = vsel %vm764, %v918, 0
        %925 = vmatpush.bf16.xpose.msra.mxu0 0
        %926 = vmatpush.bf16.xpose.msra.mxu0 0
        %927 = vmatpush.bf16.xpose.msra.mxu0 0
        %928 = vmatpush.bf16.xpose.msra.mxu0 0
        %929 = vmatpush.bf16.xpose.msra.mxu0 0
        %930 = vmatpush.bf16.xpose.msra.mxu0 0
        %931 = vmatpush.bf16.xpose.msra.mxu0 0
        %932 = vmatpush.bf16.xpose.msra.mxu0 %v923
        %933 = vmatmul.bf16.gmra.mxu0 %v920
        %v934 = vpop.f32.mrf.mxu0
        %v935 = vadd.f32 0.0, %v934
        %v936 = vpop.f32.mrf.mxu0
        %937 = vdwg.mxu0
        %v938 = vsel %vm764, %v935, -inf
        %939 = vmax.xlane.f32.xlu0 %v938
        %v940 = vpop.xlane.xlu0 %939
        %v941 = vsub.f32 %v935, %v940
        %v942 = vmul.f32 %v941, 1.442695
        %v943 = vpow.pop %v942
        %v944 = vsel %vm764, %v943, 0.0
        %945 = vadd.xlane.f32.xlu0 %v944
        %v946 = vpop.xlane.xlu0 %945
        %v947 = vpack.c.bf16 %v943, %v943
        %948 = vrot.lane.b32.xlu0 %v760, 48
        %v949 = vpop.permute.xlu0 %948
        %v951 = vsel %vm764, %v947, 0
        %v954 = vsel %vm799, %v949, 0
        %956 = vmatpush.bf16.msra.mxu0 0
        %957 = vmatpush.bf16.msra.mxu0 0
        %958 = vmatpush.bf16.msra.mxu0 0
        %959 = vmatpush.bf16.msra.mxu0 0
        %960 = vmatpush.bf16.msra.mxu0 0
        %961 = vmatpush.bf16.msra.mxu0 0
        %962 = vmatpush.bf16.msra.mxu0 0
        %963 = vmatpush.bf16.msra.mxu0 %v954
        %964 = vmatmul.bf16.gmra.mxu0 %v951
        %v965 = vpop.f32.mrf.mxu0
        %v966 = vadd.f32 0.0, %v965
        %v967 = vpop.f32.mrf.mxu0
        %968 = vdwg.mxu0
        %v969 = vrcp.pop %v946
        %v970 = vmul.f32 %v966, %v969
        %v971 = vpack.c.bf16 %v970, %v970
        %v973 = vsel %vm764, %v971, 0
        %v976 = vsel %vm799, %v757, 0
        %978 = vmatpush.bf16.msra.mxu0 0
        %979 = vmatpush.bf16.msra.mxu0 0
        %980 = vmatpush.bf16.msra.mxu0 0
        %981 = vmatpush.bf16.msra.mxu0 0
        %982 = vmatpush.bf16.msra.mxu0 0
        %983 = vmatpush.bf16.msra.mxu0 0
        %984 = vmatpush.bf16.msra.mxu0 0
        %985 = vmatpush.bf16.msra.mxu0 %v976
        %986 = vmatmul.bf16.gmra.mxu0 %v973
        %v987 = vpop.f32.mrf.mxu0
        %v988 = vadd.f32 0.0, %v987
        %v989 = vpop.f32.mrf.mxu0
        %990 = vdwg.mxu0
        %v991 = vadd.f32 %v912, %v988
        %992 = vrot.lane.b32.xlu0 %v759, 104
        %v993 = vpop.permute.xlu0 %992
        %994 = vrot.lane.b32.xlu0 %v760, 72
        %v995 = vpop.permute.xlu0 %994
        %v997 = vsel %vm764, %v993, 0
        %v1000 = vsel %vm764, %v995, 0
        %1002 = vmatpush.bf16.xpose.msra.mxu0 0
        %1003 = vmatpush.bf16.xpose.msra.mxu0 0
        %1004 = vmatpush.bf16.xpose.msra.mxu0 0
        %1005 = vmatpush.bf16.xpose.msra.mxu0 0
        %1006 = vmatpush.bf16.xpose.msra.mxu0 0
        %1007 = vmatpush.bf16.xpose.msra.mxu0 0
        %1008 = vmatpush.bf16.xpose.msra.mxu0 0
        %1009 = vmatpush.bf16.xpose.msra.mxu0 %v1000
        %1010 = vmatmul.bf16.gmra.mxu0 %v997
        %v1011 = vpop.f32.mrf.mxu0
        %v1012 = vadd.f32 0.0, %v1011
        %v1013 = vpop.f32.mrf.mxu0
        %1014 = vdwg.mxu0
        %v1015 = vsel %vm764, %v1012, -inf
        %1016 = vmax.xlane.f32.xlu0 %v1015
        %v1017 = vpop.xlane.xlu0 %1016
        %v1018 = vsub.f32 %v1012, %v1017
        %v1019 = vmul.f32 %v1018, 1.442695
        %v1020 = vpow.pop %v1019
        %v1021 = vsel %vm764, %v1020, 0.0
        %1022 = vadd.xlane.f32.xlu0 %v1021
        %v1023 = vpop.xlane.xlu0 %1022
        %v1024 = vpack.c.bf16 %v1020, %v1020
        %1025 = vrot.lane.b32.xlu0 %v760, 40
        %v1026 = vpop.permute.xlu0 %1025
        %v1028 = vsel %vm764, %v1024, 0
        %v1031 = vsel %vm799, %v1026, 0
        %1033 = vmatpush.bf16.msra.mxu0 0
        %1034 = vmatpush.bf16.msra.mxu0 0
        %1035 = vmatpush.bf16.msra.mxu0 0
        %1036 = vmatpush.bf16.msra.mxu0 0
        %1037 = vmatpush.bf16.msra.mxu0 0
        %1038 = vmatpush.bf16.msra.mxu0 0
        %1039 = vmatpush.bf16.msra.mxu0 0
        %1040 = vmatpush.bf16.msra.mxu0 %v1031
        %1041 = vmatmul.bf16.gmra.mxu0 %v1028
        %v1042 = vpop.f32.mrf.mxu0
        %v1043 = vadd.f32 0.0, %v1042
        %v1044 = vpop.f32.mrf.mxu0
        %1045 = vdwg.mxu0
        %v1046 = vrcp.pop %v1023
        %v1047 = vmul.f32 %v1043, %v1046
        %v1048 = vpack.c.bf16 %v1047, %v1047
        %v1050 = vsel %vm764, %v1048, 0
        %v1053 = vsel %vm799, %v758, 0
        %1055 = vmatpush.bf16.msra.mxu0 0
        %1056 = vmatpush.bf16.msra.mxu0 0
        %1057 = vmatpush.bf16.msra.mxu0 0
        %1058 = vmatpush.bf16.msra.mxu0 0
        %1059 = vmatpush.bf16.msra.mxu0 0
        %1060 = vmatpush.bf16.msra.mxu0 0
        %1061 = vmatpush.bf16.msra.mxu0 0
        %1062 = vmatpush.bf16.msra.mxu0 %v1053
        %1063 = vmatmul.bf16.gmra.mxu0 %v1050
        %v1064 = vpop.f32.mrf.mxu0
        %v1065 = vadd.f32 0.0, %v1064
        %v1066 = vpop.f32.mrf.mxu0
        %1067 = vdwg.mxu0
        %v1068 = vadd.f32 %v991, %v1065
        %v1069 = vadd.f32 %v716, %v1068
        %v1070 = vld [vmem:[%s5] sm:$0x1]
        %v1072 = vperm.slane %v1070, 0
        %v1074 = vadd.f32 %v1069, %v1072
        %v1075 = vld [vmem:[%s6] sm:$0x1]
        %v1076 = vld [vmem:[%s7] sm:$0x1]
        %v1077 = vsel %vm737, %v1074, 0.0
        %1078 = vadd.xlane.f32.xlu0 %v1077
        %v1079 = vpop.xlane.xlu0 %1078
        %v1080 = vrcp.pop 32.0
        %v1081 = vmul.f32 32.0, %v1080
        %v1082 = vsub.f32 1.0, %v1081
        %v1083 = vmul.f32 %v1080, %v1082
        %v1084 = vadd.f32 %v1080, %v1083
        %vm1085 = vweird.f32 %v1080
        %v1086 = vsel %vm1085, %v1080, %v1084
        %v1087 = vmul.f32 %v1079, %v1086
        %v1088 = vsub.f32 %v1074, %v1087
        %v1089 = vmul.f32 %v1088, %v1088
        %v1090 = vsel %vm737, %v1089, 0.0
        %1091 = vadd.xlane.f32.xlu0 %v1090
        %v1092 = vpop.xlane.xlu0 %1091
        %v1093 = vmul.f32 %v1092, %v1086
        %v1094 = vadd.f32 %v1093, 1e-05
        %v1095 = vrsqrt.pop %v1094
        %v1096 = vmul.f32 %v1095, %v1094
        %v1097 = vmul.f32 %v1096, %v1095
        %v1098 = vmul.f32 0.5, %v1097
        %v1099 = vsub.f32 1.5, %v1098
        %v1100 = vmul.f32 %v1095, %v1099
        %vm1101 = vweird.f32 %v1094
        %vm1102 = vweird.f32 %v1095
        %vm1103 = vmor %vm1101, %vm1102
        %v1104 = vsel %vm1103, %v1095, %v1100
        %v1105 = vmul.f32 %v1088, %v1104
        %v1107 = vperm.slane %v1075, 0
        %v1109 = vmul.f32 %v1105, %v1107
        %v1111 = vperm.slane %v1076, 0
        %v1113 = vadd.f32 %v1109, %v1111
        %v1114 = vld [vmem:[%s709] sm:$0xf]
        %v1115 = vld [vmem:[%s709 + $0x4] sm:$0xf]
        %v1116 = vpack.c.bf16 %v1113, %v1113
        %v1117 = vld [vmem:[%s8] sm:$0xf]
        %v1118 = vld [vmem:[%s8 + $0x4] sm:$0xf]
        %v1119 = vld [vmem:[%s8 + $0x8] sm:$0xf]
        %v1120 = vld [vmem:[%s8 + $0xc] sm:$0xf]
        %v1121 = vld [vmem:[%s9] sm:$0x1]
        %v1123 = vperm.slane %v1121, 0
        %v1129 = vunpack.c.l.b16 %v1117
        %v1130 = vunpack.c.l.b16 %v1118
        %v1131 = vunpack.c.l.b16 %v1119
        %v1132 = vunpack.c.l.b16 %v1120
        %v1133 = vpack.c.b16 %v1130, %v1129
        %v1134 = vpack.c.b16 %v1132, %v1131
        %v1138 = vsel %vm737, %v1116, 0
        %1140 = vmatpush.bf16.msra.mxu0 0
        %1141 = vmatpush.bf16.msra.mxu0 0
        %1142 = vmatpush.bf16.msra.mxu0 0
        %1143 = vmatpush.bf16.msra.mxu0 0
        %1144 = vmatpush.bf16.msra.mxu0 0
        %1145 = vmatpush.bf16.msra.mxu0 0
        %1146 = vmatpush.bf16.msra.mxu0 %v1134
        %1147 = vmatpush.bf16.msra.mxu0 %v1133
        %1148 = vmatmul.bf16.gmra.mxu0 %v1138
        %v1149 = vpop.f32.mrf.mxu0
        %v1150 = vadd.f32 %v1123, %v1149
        %v1151 = vpop.f32.mrf.mxu0
        %1152 = vdwg.mxu0
        %v1153 = vld [vmem:[%s10] sm:$0xf]
        %v1154 = vld [vmem:[%s10 + $0x4] sm:$0xf]
        %v1155 = vld [vmem:[%s10 + $0x8] sm:$0xf]
        %v1156 = vld [vmem:[%s10 + $0xc] sm:$0xf]
        %v1157 = vld [vmem:[%s11] sm:$0x1]
        %v1159 = vperm.slane %v1157, 0
        %v1163 = vunpack.c.l.b16 %v1114
        %v1164 = vunpack.c.l.b16 %v1115
        %v1165 = vpack.c.b16 %v1164, %v1163
        %v1170 = vunpack.c.l.b16 %v1153
        %v1171 = vunpack.c.l.b16 %v1154
        %v1172 = vunpack.c.l.b16 %v1155
        %v1173 = vunpack.c.l.b16 %v1156
        %v1174 = vpack.c.b16 %v1171, %v1170
        %v1175 = vpack.c.b16 %v1173, %v1172
        %v1179 = vsel %vm737, %v1165, 0
        %1181 = vmatpush.bf16.msra.mxu0 0
        %1182 = vmatpush.bf16.msra.mxu0 0
        %1183 = vmatpush.bf16.msra.mxu0 0
        %1184 = vmatpush.bf16.msra.mxu0 0
        %1185 = vmatpush.bf16.msra.mxu0 0
        %1186 = vmatpush.bf16.msra.mxu0 0
        %1187 = vmatpush.bf16.msra.mxu0 %v1175
        %1188 = vmatpush.bf16.msra.mxu0 %v1174
        %1189 = vmatmul.bf16.gmra.mxu0 %v1179
        %v1190 = vpop.f32.mrf.mxu0
        %v1191 = vadd.f32 %v1159, %v1190
        %v1192 = vpop.f32.mrf.mxu0
        %v1193 = vadd.f32 %v1159, %v1192
        %1194 = vdwg.mxu0
        %v1195 = vmul.f32 %v1150, 0.35355338
        %v1196 = vld [vmem:[%s12] sm:$0xf]
        %v1197 = vld [vmem:[%s12 + $0x4] sm:$0xf]
        %v1198 = vld [vmem:[%s12 + $0x8] sm:$0xf]
        %v1199 = vld [vmem:[%s12 + $0xc] sm:$0xf]
        %v1200 = vpack.c.bf16 %v1195, %v1195
        %v1201 = vpack.c.bf16 %v1193, %v1191
        %v1203 = vsel %vm764, %v1200, 0
        %v1206 = vsel %vm764, %v1201, 0
        %1208 = vmatpush.bf16.xpose.msra.mxu0 0
        %1209 = vmatpush.bf16.xpose.msra.mxu0 0
        %1210 = vmatpush.bf16.xpose.msra.mxu0 0
        %1211 = vmatpush.bf16.xpose.msra.mxu0 0
        %1212 = vmatpush.bf16.xpose.msra.mxu0 0
        %1213 = vmatpush.bf16.xpose.msra.mxu0 0
        %1214 = vmatpush.bf16.xpose.msra.mxu0 0
        %1215 = vmatpush.bf16.xpose.msra.mxu0 %v1206
        %1216 = vmatmul.bf16.gmra.mxu0 %v1203
        %v1217 = vpop.f32.mrf.mxu0
        %v1218 = vadd.f32 0.0, %v1217
        %v1219 = vpop.f32.mrf.mxu0
        %1220 = vdwg.mxu0
        %vm1221 = vcmask 130048
        %v1222 = vsel %vm1221, %v1218, -inf
        %1223 = vmax.xlane.f32.xlu0 %v1222
        %v1224 = vpop.xlane.xlu0 %1223
        %v1225 = vsub.f32 %v1218, %v1224
        %v1226 = vmul.f32 %v1225, 1.442695
        %v1227 = vpow.pop %v1226
        %v1228 = vsel %vm1221, %v1227, 0.0
        %1229 = vadd.xlane.f32.xlu0 %v1228
        %v1230 = vpop.xlane.xlu0 %1229
        %v1231 = vpack.c.bf16 %v1227, %v1227
        %1233 = vrot.lane.b32.xlu0 %v1201, 96
        %v1234 = vpop.permute.xlu0 %1233
        %v1237 = vsel %vm1221, %v1231, 0
        %1239 = vmatpush.bf16.msra.mxu0 0
        %1240 = vmatpush.bf16.msra.mxu0 0
        %1241 = vmatpush.bf16.msra.mxu0 0
        %1242 = vmatpush.bf16.msra.mxu0 0
        %1243 = vmatpush.bf16.msra.mxu0 0
        %1244 = vmatpush.bf16.msra.mxu0 0
        %1245 = vmatpush.bf16.msra.mxu0 0
        %1246 = vmatpush.bf16.msra.mxu0 %v1234
        %1247 = vmatmul.bf16.gmra.mxu0 %v1237
        %v1248 = vpop.f32.mrf.mxu0
        %v1249 = vadd.f32 0.0, %v1248
        %v1250 = vpop.f32.mrf.mxu0
        %1251 = vdwg.mxu0
        %v1252 = vrcp.pop %v1230
        %v1253 = vmul.f32 %v1249, %v1252
        %v1254 = vpack.c.bf16 %v1253, %v1253
        %1256 = vrot.lane.b32.xlu0 %v1200, 120
        %v1257 = vpop.permute.xlu0 %1256
        %1258 = vrot.lane.b32.xlu0 %v1201, 120
        %v1259 = vpop.permute.xlu0 %1258
        %v1261 = vsel %vm764, %v1257, 0
        %v1264 = vsel %vm764, %v1259, 0
        %1266 = vmatpush.bf16.xpose.msra.mxu0 0
        %1267 = vmatpush.bf16.xpose.msra.mxu0 0
        %1268 = vmatpush.bf16.xpose.msra.mxu0 0
        %1269 = vmatpush.bf16.xpose.msra.mxu0 0
        %1270 = vmatpush.bf16.xpose.msra.mxu0 0
        %1271 = vmatpush.bf16.xpose.msra.mxu0 0
        %1272 = vmatpush.bf16.xpose.msra.mxu0 0
        %1273 = vmatpush.bf16.xpose.msra.mxu0 %v1264
        %1274 = vmatmul.bf16.gmra.mxu0 %v1261
        %v1275 = vpop.f32.mrf.mxu0
        %v1276 = vadd.f32 0.0, %v1275
        %v1277 = vpop.f32.mrf.mxu0
        %1278 = vdwg.mxu0
        %v1279 = vsel %vm1221, %v1276, -inf
        %1280 = vmax.xlane.f32.xlu0 %v1279
        %v1281 = vpop.xlane.xlu0 %1280
        %v1282 = vsub.f32 %v1276, %v1281
        %v1283 = vmul.f32 %v1282, 1.442695
        %v1284 = vpow.pop %v1283
        %v1285 = vsel %vm1221, %v1284, 0.0
        %1286 = vadd.xlane.f32.xlu0 %v1285
        %v1287 = vpop.xlane.xlu0 %1286
        %v1288 = vpack.c.bf16 %v1284, %v1284
        %1289 = vrot.lane.b32.xlu0 %v1201, 88
        %v1290 = vpop.permute.xlu0 %1289
        %v1293 = vsel %vm1221, %v1288, 0
        %1295 = vmatpush.bf16.msra.mxu0 0
        %1296 = vmatpush.bf16.msra.mxu0 0
        %1297 = vmatpush.bf16.msra.mxu0 0
        %1298 = vmatpush.bf16.msra.mxu0 0
        %1299 = vmatpush.bf16.msra.mxu0 0
        %1300 = vmatpush.bf16.msra.mxu0 0
        %1301 = vmatpush.bf16.msra.mxu0 0
        %1302 = vmatpush.bf16.msra.mxu0 %v1290
        %1303 = vmatmul.bf16.gmra.mxu0 %v1293
        %v1304 = vpop.f32.mrf.mxu0
        %v1305 = vadd.f32 0.0, %v1304
        %v1306 = vpop.f32.mrf.mxu0
        %1307 = vdwg.mxu0
        %v1308 = vrcp.pop %v1287
        %v1309 = vmul.f32 %v1305, %v1308
        %v1310 = vpack.c.bf16 %v1309, %v1309
        %v1312 = vsel %vm764, %v1310, 0
        %v1315 = vsel %vm799, %v1197, 0
        %1317 = vmatpush.bf16.msra.mxu0 0
        %1318 = vmatpush.bf16.msra.mxu0 0
        %1319 = vmatpush.bf16.msra.mxu0 0
        %1320 = vmatpush.bf16.msra.mxu0 0
        %1321 = vmatpush.bf16.msra.mxu0 0
        %1322 = vmatpush.bf16.msra.mxu0 0
        %1323 = vmatpush.bf16.msra.mxu0 0
        %1324 = vmatpush.bf16.msra.mxu0 %v1315
        %1325 = vmatmul.bf16.gmra.mxu0 %v1312
        %v1326 = vpop.f32.mrf.mxu0
        %v1327 = vadd.f32 0.0, %v1326
        %v1328 = vpop.f32.mrf.mxu0
        %1329 = vdwg.mxu0
        %v1331 = vsel %vm764, %v1254, 0
        %v1334 = vsel %vm799, %v1196, 0
        %1336 = vmatpush.bf16.msra.mxu0 0
        %1337 = vmatpush.bf16.msra.mxu0 0
        %1338 = vmatpush.bf16.msra.mxu0 0
        %1339 = vmatpush.bf16.msra.mxu0 0
        %1340 = vmatpush.bf16.msra.mxu0 0
        %1341 = vmatpush.bf16.msra.mxu0 0
        %1342 = vmatpush.bf16.msra.mxu0 0
        %1343 = vmatpush.bf16.msra.mxu0 %v1334
        %1344 = vmatmul.bf16.gmra.mxu0 %v1331
        %v1345 = vpop.f32.mrf.mxu0
        %v1346 = vadd.f32 %v1327, %v1345
        %v1347 = vpop.f32.mrf.mxu0
        %1348 = vdwg.mxu0
        %1349 = vrot.lane.b32.xlu0 %v1200, 112
        %v1350 = vpop.permute.xlu0 %1349
        %1351 = vrot.lane.b32.xlu0 %v1201, 112
        %v1352 = vpop.permute.xlu0 %1351
        %v1354 = vsel %vm764, %v1350, 0
        %v1357 = vsel %vm764, %v1352, 0
        %1359 = vmatpush.bf16.xpose.msra.mxu0 0
        %1360 = vmatpush.bf16.xpose.msra.mxu0 0
        %1361 = vmatpush.bf16.xpose.msra.mxu0 0
        %1362 = vmatpush.bf16.xpose.msra.mxu0 0
        %1363 = vmatpush.bf16.xpose.msra.mxu0 0
        %1364 = vmatpush.bf16.xpose.msra.mxu0 0
        %1365 = vmatpush.bf16.xpose.msra.mxu0 0
        %1366 = vmatpush.bf16.xpose.msra.mxu0 %v1357
        %1367 = vmatmul.bf16.gmra.mxu0 %v1354
        %v1368 = vpop.f32.mrf.mxu0
        %v1369 = vadd.f32 0.0, %v1368
        %v1370 = vpop.f32.mrf.mxu0
        %1371 = vdwg.mxu0
        %v1372 = vsel %vm1221, %v1369, -inf
        %1373 = vmax.xlane.f32.xlu0 %v1372
        %v1374 = vpop.xlane.xlu0 %1373
        %v1375 = vsub.f32 %v1369, %v1374
        %v1376 = vmul.f32 %v1375, 1.442695
        %v1377 = vpow.pop %v1376
        %v1378 = vsel %vm1221, %v1377, 0.0
        %1379 = vadd.xlane.f32.xlu0 %v1378
        %v1380 = vpop.xlane.xlu0 %1379
        %v1381 = vpack.c.bf16 %v1377, %v1377
        %1382 = vrot.lane.b32.xlu0 %v1201, 80
        %v1383 = vpop.permute.xlu0 %1382
        %v1386 = vsel %vm1221, %v1381, 0
        %1388 = vmatpush.bf16.msra.mxu0 0
        %1389 = vmatpush.bf16.msra.mxu0 0
        %1390 = vmatpush.bf16.msra.mxu0 0
        %1391 = vmatpush.bf16.msra.mxu0 0
        %1392 = vmatpush.bf16.msra.mxu0 0
        %1393 = vmatpush.bf16.msra.mxu0 0
        %1394 = vmatpush.bf16.msra.mxu0 0
        %1395 = vmatpush.bf16.msra.mxu0 %v1383
        %1396 = vmatmul.bf16.gmra.mxu0 %v1386
        %v1397 = vpop.f32.mrf.mxu0
        %v1398 = vadd.f32 0.0, %v1397
        %v1399 = vpop.f32.mrf.mxu0
        %1400 = vdwg.mxu0
        %v1401 = vrcp.pop %v1380
        %v1402 = vmul.f32 %v1398, %v1401
        %v1403 = vpack.c.bf16 %v1402, %v1402
        %v1405 = vsel %vm764, %v1403, 0
        %v1408 = vsel %vm799, %v1198, 0
        %1410 = vmatpush.bf16.msra.mxu0 0
        %1411 = vmatpush.bf16.msra.mxu0 0
        %1412 = vmatpush.bf16.msra.mxu0 0
        %1413 = vmatpush.bf16.msra.mxu0 0
        %1414 = vmatpush.bf16.msra.mxu0 0
        %1415 = vmatpush.bf16.msra.mxu0 0
        %1416 = vmatpush.bf16.msra.mxu0 0
        %1417 = vmatpush.bf16.msra.mxu0 %v1408
        %1418 = vmatmul.bf16.gmra.mxu0 %v1405
        %v1419 = vpop.f32.mrf.mxu0
        %v1420 = vadd.f32 0.0, %v1419
        %v1421 = vpop.f32.mrf.mxu0
        %1422 = vdwg.mxu0
        %v1423 = vadd.f32 %v1346, %v1420
        %1424 = vrot.lane.b32.xlu0 %v1200, 104
        %v1425 = vpop.permute.xlu0 %1424
        %1426 = vrot.lane.b32.xlu0 %v1201, 104
        %v1427 = vpop.permute.xlu0 %1426
        %v1429 = vsel %vm764, %v1425, 0
        %v1432 = vsel %vm764, %v1427, 0
        %1434 = vmatpush.bf16.xpose.msra.mxu0 0
        %1435 = vmatpush.bf16.xpose.msra.mxu0 0
        %1436 = vmatpush.bf16.xpose.msra.mxu0 0
        %1437 = vmatpush.bf16.xpose.msra.mxu0 0
        %1438 = vmatpush.bf16.xpose.msra.mxu0 0
        %1439 = vmatpush.bf16.xpose.msra.mxu0 0
        %1440 = vmatpush.bf16.xpose.msra.mxu0 0
        %1441 = vmatpush.bf16.xpose.msra.mxu0 %v1432
        %1442 = vmatmul.bf16.gmra.mxu0 %v1429
        %v1443 = vpop.f32.mrf.mxu0
        %v1444 = vadd.f32 0.0, %v1443
        %v1445 = vpop.f32.mrf.mxu0
        %1446 = vdwg.mxu0
        %v1447 = vsel %vm1221, %v1444, -inf
        %1448 = vmax.xlane.f32.xlu0 %v1447
        %v1449 = vpop.xlane.xlu0 %1448
        %v1450 = vsub.f32 %v1444, %v1449
        %v1451 = vmul.f32 %v1450, 1.442695
        %v1452 = vpow.pop %v1451
        %v1453 = vsel %vm1221, %v1452, 0.0
        %1454 = vadd.xlane.f32.xlu0 %v1453
        %v1455 = vpop.xlane.xlu0 %1454
        %v1456 = vpack.c.bf16 %v1452, %v1452
        %1457 = vrot.lane.b32.xlu0 %v1201, 72
        %v1458 = vpop.permute.xlu0 %1457
        %v1461 = vsel %vm1221, %v1456, 0
        %1463 = vmatpush.bf16.msra.mxu0 0
        %1464 = vmatpush.bf16.msra.mxu0 0
        %1465 = vmatpush.bf16.msra.mxu0 0
        %1466 = vmatpush.bf16.msra.mxu0 0
        %1467 = vmatpush.bf16.msra.mxu0 0
        %1468 = vmatpush.bf16.msra.mxu0 0
        %1469 = vmatpush.bf16.msra.mxu0 0
        %1470 = vmatpush.bf16.msra.mxu0 %v1458
        %1471 = vmatmul.bf16.gmra.mxu0 %v1461
        %v1472 = vpop.f32.mrf.mxu0
        %v1473 = vadd.f32 0.0, %v1472
        %v1474 = vpop.f32.mrf.mxu0
        %1475 = vdwg.mxu0
        %v1476 = vrcp.pop %v1455
        %v1477 = vmul.f32 %v1473, %v1476
        %v1478 = vpack.c.bf16 %v1477, %v1477
        %v1480 = vsel %vm764, %v1478, 0
        %v1483 = vsel %vm799, %v1199, 0
        %1485 = vmatpush.bf16.msra.mxu0 0
        %1486 = vmatpush.bf16.msra.mxu0 0
        %1487 = vmatpush.bf16.msra.mxu0 0
        %1488 = vmatpush.bf16.msra.mxu0 0
        %1489 = vmatpush.bf16.msra.mxu0 0
        %1490 = vmatpush.bf16.msra.mxu0 0
        %1491 = vmatpush.bf16.msra.mxu0 0
        %1492 = vmatpush.bf16.msra.mxu0 %v1483
        %1493 = vmatmul.bf16.gmra.mxu0 %v1480
        %v1494 = vpop.f32.mrf.mxu0
        %v1495 = vadd.f32 0.0, %v1494
        %v1496 = vpop.f32.mrf.mxu0
        %1497 = vdwg.mxu0
        %v1498 = vadd.f32 %v1423, %v1495
        %v1499 = vadd.f32 %v1113, %v1498
        %v1500 = vld [vmem:[%s13] sm:$0x1]
        %v1502 = vperm.slane %v1500, 0
        %v1504 = vadd.f32 %v1499, %v1502
        %v1505 = vld [vmem:[%s14] sm:$0x1]
        %v1506 = vld [vmem:[%s15] sm:$0x1]
        %v1507 = vsel %vm737, %v1504, 0.0
        %1508 = vadd.xlane.f32.xlu0 %v1507
        %v1509 = vpop.xlane.xlu0 %1508
        %v1510 = vmul.f32 %v1509, %v1086
        %v1511 = vsub.f32 %v1504, %v1510
        %v1512 = vmul.f32 %v1511, %v1511
        %v1513 = vsel %vm737, %v1512, 0.0
        %1514 = vadd.xlane.f32.xlu0 %v1513
        %v1515 = vpop.xlane.xlu0 %1514
        %v1516 = vmul.f32 %v1515, %v1086
        %v1517 = vadd.f32 %v1516, 1e-05
        %v1518 = vrsqrt.pop %v1517
        %v1519 = vmul.f32 %v1518, %v1517
        %v1520 = vmul.f32 %v1519, %v1518
        %v1521 = vmul.f32 0.5, %v1520
        %v1522 = vsub.f32 1.5, %v1521
        %v1523 = vmul.f32 %v1518, %v1522
        %vm1524 = vweird.f32 %v1517
        %vm1525 = vweird.f32 %v1518
        %vm1526 = vmor %vm1524, %vm1525
        %v1527 = vsel %vm1526, %v1518, %v1523
        %v1528 = vmul.f32 %v1511, %v1527
        %v1530 = vperm.slane %v1505, 0
        %v1532 = vmul.f32 %v1528, %v1530
        %v1534 = vperm.slane %v1506, 0
        %v1536 = vadd.f32 %v1532, %v1534
        %v1537 = vpack.c.bf16 %v1536, %v1536
        %v1538 = vld [vmem:[%s16] sm:$0xf]
        %v1539 = vld [vmem:[%s16 + $0x4] sm:$0xf]
        %v1540 = vld [vmem:[%s16 + $0x8] sm:$0xf]
        %v1541 = vld [vmem:[%s16 + $0xc] sm:$0xf]
        %v1542 = vld [vmem:[%s17] sm:$0x1]
        %v1544 = vperm.slane %v1542, 0
        %v1550 = vunpack.c.l.b16 %v1538
        %v1551 = vunpack.c.l.b16 %v1539
        %v1552 = vunpack.c.l.b16 %v1540
        %v1553 = vunpack.c.l.b16 %v1541
        %v1554 = vpack.c.b16 %v1551, %v1550
        %v1555 = vpack.c.b16 %v1553, %v1552
        %v1559 = vsel %vm737, %v1537, 0
        %1561 = vmatpush.bf16.msra.mxu0 0
        %1562 = vmatpush.bf16.msra.mxu0 0
        %1563 = vmatpush.bf16.msra.mxu0 0
        %1564 = vmatpush.bf16.msra.mxu0 0
        %1565 = vmatpush.bf16.msra.mxu0 0
        %1566 = vmatpush.bf16.msra.mxu0 0
        %1567 = vmatpush.bf16.msra.mxu0 %v1555
        %1568 = vmatpush.bf16.msra.mxu0 %v1554
        %1569 = vmatmul.bf16.gmra.mxu0 %v1559
        %v1570 = vpop.f32.mrf.mxu0
        %v1571 = vadd.f32 %v1544, %v1570
        %v1572 = vpop.f32.mrf.mxu0
        %1573 = vdwg.mxu0
        %v1574 = vmax.f32 %v1571, 0.0
        %v1575 = vpack.c.bf16 %v1574, %v1574
        %v1576 = vld [vmem:[%s18] sm:$0xf]
        %v1577 = vld [vmem:[%s18 + $0x4] sm:$0xf]
        %v1578 = vld [vmem:[%s18 + $0x8] sm:$0xf]
        %v1579 = vld [vmem:[%s18 + $0xc] sm:$0xf]
        %v1580 = vld [vmem:[%s18 + $0x10] sm:$0xf]
        %v1581 = vld [vmem:[%s18 + $0x14] sm:$0xf]
        %v1582 = vld [vmem:[%s18 + $0x18] sm:$0xf]
        %v1583 = vld [vmem:[%s18 + $0x1c] sm:$0xf]
        %v1584 = vld [vmem:[%s19] sm:$0x1]
        %v1586 = vperm.slane %v1584, 0
        %v1596 = vunpack.c.l.b16 %v1576
        %v1597 = vunpack.c.l.b16 %v1577
        %v1598 = vunpack.c.l.b16 %v1578
        %v1599 = vunpack.c.l.b16 %v1579
        %v1600 = vunpack.c.l.b16 %v1580
        %v1601 = vunpack.c.l.b16 %v1581
        %v1602 = vunpack.c.l.b16 %v1582
        %v1603 = vunpack.c.l.b16 %v1583
        %v1604 = vpack.c.b16 %v1597, %v1596
        %v1605 = vpack.c.b16 %v1599, %v1598
        %v1606 = vpack.c.b16 %v1601, %v1600
        %v1607 = vpack.c.b16 %v1603, %v1602
        %vm1612 = vcmask 523264
        %v1614 = vsel %vm1612, %v1575, 0
        %1616 = vmatpush.bf16.msra.mxu0 0
        %1617 = vmatpush.bf16.msra.mxu0 0
        %1618 = vmatpush.bf16.msra.mxu0 0
        %1619 = vmatpush.bf16.msra.mxu0 0
        %1620 = vmatpush.bf16.msra.mxu0 %v1607
        %1621 = vmatpush.bf16.msra.mxu0 %v1606
        %1622 = vmatpush.bf16.msra.mxu0 %v1605
        %1623 = vmatpush.bf16.msra.mxu0 %v1604
        %1624 = vmatmul.bf16.gmra.mxu0 %v1614
        %v1625 = vpop.f32.mrf.mxu0
        %v1626 = vadd.f32 %v1586, %v1625
        %v1627 = vpop.f32.mrf.mxu0
        %1628 = vdwg.mxu0
        %v1629 = vadd.f32 %v1536, %v1626
        %v1630 = vld [vmem:[%s20] sm:$0x1]
        %v1631 = vld [vmem:[#allocation2] sm:$0x1]
        %v1632 = vsel %vm737, %v1629, 0.0
        %1633 = vadd.xlane.f32.xlu0 %v1632
        %v1634 = vpop.xlane.xlu0 %1633
        %v1635 = vmul.f32 %v1634, %v1086
        %v1636 = vsub.f32 %v1629, %v1635
        %v1637 = vmul.f32 %v1636, %v1636
        %v1638 = vsel %vm737, %v1637, 0.0
        %1639 = vadd.xlane.f32.xlu0 %v1638
        %v1640 = vpop.xlane.xlu0 %1639
        %v1641 = vmul.f32 %v1640, %v1086
        %v1642 = vadd.f32 %v1641, 1e-05
        %v1643 = vrsqrt.pop %v1642
        %v1644 = vmul.f32 %v1643, %v1642
        %v1645 = vmul.f32 %v1644, %v1643
        %v1646 = vmul.f32 0.5, %v1645
        %v1647 = vsub.f32 1.5, %v1646
        %v1648 = vmul.f32 %v1643, %v1647
        %vm1649 = vweird.f32 %v1642
        %vm1650 = vweird.f32 %v1643
        %vm1651 = vmor %vm1649, %vm1650
        %v1652 = vsel %vm1651, %v1643, %v1648
        %v1653 = vmul.f32 %v1636, %v1652
        %v1655 = vperm.slane %v1630, 0
        %v1657 = vmul.f32 %v1653, %v1655
        %v1659 = vperm.slane %v1631, 0
        %v1661 = vadd.f32 %v1657, %v1659
        %v1662 = vpack.c.bf16 %v1661, %v1661
        %vm1663 = vcmask 257024
        %1664 = vst.msk [vmem:[%s713] sm:$0xf] %vm1663, %v1662
        %p1665 = scmp.lt.s32.totalorder %s34, 1
        %s1666 = scalar_select %p1665, %s34, 1
        %s1667 = smul.addr %s1666, 4
        %s1668 = scalar_lea.vmem %s22, %s1667
        // Predicated region
        $region113: #{transformer_forward.8} parent=107 // pred_check
          %p1669 = pneg %p524
        $region114: #{transformer_forward.8} parent=107 // pred_check_branch
          %1671 = sbr.rel (%p1669) target = $region116
        $region115: #{transformer_forward.8} parent=107 // pred_region
          _
        $region116: #{transformer_forward.8} parent=107 // pred_fallthru
          _
      $region108: #{transformer_forward.8} parent=5 // pred_fallthru
        _
      %p1672 = scmp.le.s32.totalorder 2, %s29
      // Predicated region
      $region117: #{transformer_forward.8} parent=5 // pred_check
        %p1673 = pneg %p1672
      $region118: #{transformer_forward.8} parent=5 // pred_check_branch
        %1675 = sbr.rel (%p1673) target = $region120
      $region119: #{transformer_forward.8} parent=5 // pred_region
        %s1676 = ssub.s32 %s29, 2
        // Predicated region
        $region121: #{transformer_forward.8} parent=119 // pred_check
          %p1677 = pneg %p530
        $region122: #{transformer_forward.8} parent=119 // pred_check_branch
          %1679 = sbr.rel (%p1677) target = $region124
        $region123: #{transformer_forward.8} parent=119 // pred_region
          %p1680 = scmp.lt.s32.totalorder %s35, 1
          %s1681 = scalar_select %p1680, %s35, 1
          %s1682 = smul.addr %s1681, 4
          %s1683 = scalar_lea.vmem %s22, %s1682
        $region124: #{transformer_forward.8} parent=119 // pred_fallthru
          _
      $region120: #{transformer_forward.8} parent=5 // pred_fallthru
        _
    $region6: #{transformer_forward.8} parent=1 // loop_footer
      %s33 = sadd.s32 1, %s29
    $region7: #{transformer_forward.8} parent=1 // loop_footer_branch
      %28 = sbr.rel target = $region3
    $region8: #{transformer_forward.8} parent=1 // loop_exit
      _
    %1684 = vsyncpa [#allocation3], 1
    %s1685 = scalar_lea.sflag [#allocation3], 1
    %1686 = vsyncpa %s1685, 1

// kernel: transformer_forward.9
$region0: #{transformer_forward.9}
  #allocation0 [shape = 'u32[]', space=smem, size = 0x4, offset = 0x4, fixed_abs, tag = 'smem constant byte address 0x4 - core index']
  #allocation1 [shape = 'u32[72,128]{1,0:T(1,128)}', space=vmem, size = 0x9000, scoped, tag = 'internal scratch']
  %s0 = inlined_call_operand.vmem [shape: bf16[2,8,32], index: 0, kind: input, shape index: {}]
  %s1 = inlined_call_operand.hbm [shape: f32[1,32], index: 1, kind: input, shape index: {}]
  %s2 = inlined_call_operand.hbm [shape: f32[1,32], index: 2, kind: input, shape index: {}]
  %s3 = inlined_call_operand.vmem [shape: bf16[32,128], index: 3, kind: input, shape index: {}]
  %s4 = inlined_call_operand.hbm [shape: f32[1,128], index: 4, kind: input, shape index: {}]
  %s5 = inlined_call_operand.vmem [shape: f32[2,8,128], index: 5, kind: output, shape index: {}]
  %s6 = sld [smem:[#allocation0]]
  $region65: #{transformer_forward.9} parent=0
    _
  %s8 = ssub.s32 1, %s6
  %s9 = scalar_select 0, %s8, %s6
  $region1: #{transformer_forward.9} parent=0
    #allocation2 [shape = 'u8[512]{0}', space=vmem, size = 0x400, scoped, tag = 'input window, operand 1, single buffered']
    #allocation3 [shape = 's32[2]{0}', space=sflag, size = 0x8, scoped, tag = 'scoped memory for transformer_forward.9']
    #allocation4 [shape = 'u8[512]{0}', space=vmem, size = 0x400, scoped, tag = 'input window, operand 2, single buffered']
    #allocation5 [shape = 's32[1]{0}', space=sflag, size = 0x4, scoped, tag = 'scoped memory for transformer_forward.9']
    #allocation6 [shape = 'u8[512]{0}', space=vmem, size = 0x400, scoped, tag = 'input window, operand 4, single buffered']
    %10 = vsyncpa [#allocation3], 0
    %11 = vsyncpa [#allocation5], 0
    loop: start=0, step=1, limit=4
    $region2: #{transformer_forward.9} parent=1 // loop_pre_header
      _
    $region3: #{transformer_forward.9} parent=1 // loop_header
      %s13 = sphi 0, %s17
      %p14 = scmp.ge.s32.totalorder %s13, 4
      %s23 = sphi 0, %s25
      %s26 = sphi 0, %s23
      %s27 = sphi 0, %s26
      %s43 = sphi 0, %s27
      %s47 = sphi 0, %s47
      %s49 = sphi 0, %s47
      %s50 = sphi 0, %s49
      %s64 = sphi 0, %s50
      %s68 = sphi 0, %s68
      %s70 = sphi 0, %s68
      %s71 = sphi 0, %s70
      %s85 = sphi 0, %s71
      %s89 = sphi 0, %s89
      %s91 = sphi 0, %s89
      %s92 = sphi 0, %s91
      %s106 = sphi 0, %s92
      %s110 = sphi 0, %s110
      %s112 = sphi 0, %s110
      %s113 = sphi 0, %s112
      %s127 = sphi 0, %s113
      %s133 = sphi 0, %s135
      %s136 = sphi 0, %s133
      %s137 = sphi 0, %s136
      %s153 = sphi 0, %s137
    $region4: #{transformer_forward.9} parent=1 // loop_header_branch
      %16 = sbr.rel (%p14) target = $region8
    $region5: #{transformer_forward.9} parent=1 // loop_body
      %s18 = ssub.s32 %s13, 1
      %s19 = ssub.s32 %s13, 2
      %s20 = sadd.s32 %s13, 1
      %s21 = ssub.s32 %s13, %s20
      %p22 = scmp.eq.s32.totalorder %s21, 0
      %s24 = sadd.s32 %s23, 1
      %s25 = scalar_select %p22, %s23, %s24
      %p28 = pneg %p22
      %p29 = scmp.eq.s32.totalorder %s13, 1
      %p30 = por %p28, %p29
      %p31 = scmp.ne.s32.totalorder %s23, %s26
      %p32 = scmp.eq.s32.totalorder %s13, 0
      %p33 = por %p31, %p32
      %p34 = scmp.ne.s32.totalorder %s23, %s26
      %p35 = scmp.eq.s32.totalorder %s18, 1
      %p36 = por %p34, %p35
      %p37 = scmp.ne.s32.totalorder %s26, %s27
      %p38 = scmp.eq.s32.totalorder %s18, 0
      %p39 = por %p37, %p38
      %p40 = scmp.ne.s32.totalorder %s26, %s27
      %p41 = scmp.eq.s32.totalorder %s19, 1
      %p42 = por %p40, %p41
      %p44 = scmp.ne.s32.totalorder %s27, %s43
      %p45 = scmp.eq.s32.totalorder %s19, 0
      %p46 = por %p44, %p45
      %s48 = sadd.s32 %s47, 1
      %p51 = scmp.eq.s32.totalorder %s13, 1
      %p52 = scmp.ne.s32.totalorder %s47, %s49
      %p53 = scmp.eq.s32.totalorder %s13, 0
      %p54 = por %p52, %p53
      %p55 = scmp.ne.s32.totalorder %s47, %s49
      %p56 = scmp.eq.s32.totalorder %s18, 1
      %p57 = por %p55, %p56
      %p58 = scmp.ne.s32.totalorder %s49, %s50
      %p59 = scmp.eq.s32.totalorder %s18, 0
      %p60 = por %p58, %p59
      %p61 = scmp.ne.s32.totalorder %s49, %s50
      %p62 = scmp.eq.s32.totalorder %s19, 1
      %p63 = por %p61, %p62
      %p65 = scmp.ne.s32.totalorder %s50, %s64
      %p66 = scmp.eq.s32.totalorder %s19, 0
      %p67 = por %p65, %p66
      %s69 = sadd.s32 %s68, 1
      %p72 = scmp.eq.s32.totalorder %s13, 1
      %p73 = scmp.ne.s32.totalorder %s68, %s70
      %p74 = scmp.eq.s32.totalorder %s13, 0
      %p75 = por %p73, %p74
      %p76 = scmp.ne.s32.totalorder %s68, %s70
      %p77 = scmp.eq.s32.totalorder %s18, 1
      %p78 = por %p76, %p77
      %p79 = scmp.ne.s32.totalorder %s70, %s71
      %p80 = scmp.eq.s32.totalorder %s18, 0
      %p81 = por %p79, %p80
      %p82 = scmp.ne.s32.totalorder %s70, %s71
      %p83 = scmp.eq.s32.totalorder %s19, 1
      %p84 = por %p82, %p83
      %p86 = scmp.ne.s32.totalorder %s71, %s85
      %p87 = scmp.eq.s32.totalorder %s19, 0
      %p88 = por %p86, %p87
      %s90 = sadd.s32 %s89, 1
      %p93 = scmp.eq.s32.totalorder %s13, 1
      %p94 = scmp.ne.s32.totalorder %s89, %s91
      %p95 = scmp.eq.s32.totalorder %s13, 0
      %p96 = por %p94, %p95
      %p97 = scmp.ne.s32.totalorder %s89, %s91
      %p98 = scmp.eq.s32.totalorder %s18, 1
      %p99 = por %p97, %p98
      %p100 = scmp.ne.s32.totalorder %s91, %s92
      %p101 = scmp.eq.s32.totalorder %s18, 0
      %p102 = por %p100, %p101
      %p103 = scmp.ne.s32.totalorder %s91, %s92
      %p104 = scmp.eq.s32.totalorder %s19, 1
      %p105 = por %p103, %p104
      %p107 = scmp.ne.s32.totalorder %s92, %s106
      %p108 = scmp.eq.s32.totalorder %s19, 0
      %p109 = por %p107, %p108
      %s111 = sadd.s32 %s110, 1
      %p114 = scmp.eq.s32.totalorder %s13, 1
      %p115 = scmp.ne.s32.totalorder %s110, %s112
      %p116 = scmp.eq.s32.totalorder %s13, 0
      %p117 = por %p115, %p116
      %p118 = scmp.ne.s32.totalorder %s110, %s112
      %p119 = scmp.eq.s32.totalorder %s18, 1
      %p120 = por %p118, %p119
      %p121 = scmp.ne.s32.totalorder %s112, %s113
      %p122 = scmp.eq.s32.totalorder %s18, 0
      %p123 = por %p121, %p122
      %p124 = scmp.ne.s32.totalorder %s112, %s113
      %p125 = scmp.eq.s32.totalorder %s19, 1
      %p126 = por %p124, %p125
      %p128 = scmp.ne.s32.totalorder %s113, %s127
      %p129 = scmp.eq.s32.totalorder %s19, 0
      %p130 = por %p128, %p129
      %s131 = ssub.s32 %s13, %s20
      %p132 = scmp.eq.s32.totalorder %s131, 0
      %s134 = sadd.s32 %s133, 1
      %s135 = scalar_select %p132, %s133, %s134
      %p138 = pneg %p132
      %p139 = scmp.eq.s32.totalorder %s13, 1
      %p140 = por %p138, %p139
      %p141 = scmp.ne.s32.totalorder %s133, %s136
      %p142 = scmp.eq.s32.totalorder %s13, 0
      %p143 = por %p141, %p142
      %p144 = scmp.ne.s32.totalorder %s133, %s136
      %p145 = scmp.eq.s32.totalorder %s18, 1
      %p146 = por %p144, %p145
      %p147 = scmp.ne.s32.totalorder %s136, %s137
      %p148 = scmp.eq.s32.totalorder %s18, 0
      %p149 = por %p147, %p148
      %p150 = scmp.ne.s32.totalorder %s136, %s137
      %p151 = scmp.eq.s32.totalorder %s19, 1
      %p152 = por %p150, %p151
      %p154 = scmp.ne.s32.totalorder %s137, %s153
      %p155 = scmp.eq.s32.totalorder %s19, 0
      %p156 = por %p154, %p155
      %p157 = scmp.le.s32.totalorder 1, %s13
      %p158 = scmp.lt.s32.totalorder %s13, 3
      %p159 = pnand %p157, %p158
      %p160 = pneg %p159
      // Predicated region
      $region9: #{transformer_forward.9} parent=5 // pred_check
        _
      $region10: #{transformer_forward.9} parent=5 // pred_check_branch
        %162 = sbr.rel (%p159) target = $region12
      $region11: #{transformer_forward.9} parent=5 // pred_region
        %s163 = ssub.s32 %s13, 1
        // Predicated region
        $region13: #{transformer_forward.9} parent=11 // pred_check
          %p164 = pneg %p60
        $region14: #{transformer_forward.9} parent=11 // pred_check_branch
          %166 = sbr.rel (%p164) target = $region16
        $region15: #{transformer_forward.9} parent=11 // pred_region
          %168 = vsyncadd [#allocation3], 0
          %s170 = sshll.u32 %s1, 4
          %s171 = int_to_ptr.hbm [resolvable:$true] %s170
          %s172 = sshll.u32 [#allocation2], 4
          %s173 = int_to_ptr.vmem [resolvable:$true] %s172
          %175 = dma.hbm_to_vmem [thread:$0]  %s171, 16, %s173, [#allocation3]
        $region16: #{transformer_forward.9} parent=11 // pred_fallthru
          _
        // Predicated region
        $region17: #{transformer_forward.9} parent=11 // pred_check
          %p176 = pneg %p81
        $region18: #{transformer_forward.9} parent=11 // pred_check_branch
          %178 = sbr.rel (%p176) target = $region20
        $region19: #{transformer_forward.9} parent=11 // pred_region
          %180 = vsyncadd [#allocation5], 0
          %s182 = sshll.u32 %s2, 4
          %s183 = int_to_ptr.hbm [resolvable:$true] %s182
          %s184 = sshll.u32 [#allocation4], 4
          %s185 = int_to_ptr.vmem [resolvable:$true] %s184
          %187 = dma.hbm_to_vmem [thread:$0]  %s183, 16, %s185, [#allocation5]
        $region20: #{transformer_forward.9} parent=11 // pred_fallthru
          _
        // Predicated region
        $region21: #{transformer_forward.9} parent=11 // pred_check
          %p188 = pneg %p102
        $region22: #{transformer_forward.9} parent=11 // pred_check_branch
          %190 = sbr.rel (%p188) target = $region24
        $region23: #{transformer_forward.9} parent=11 // pred_region
          _
        $region24: #{transformer_forward.9} parent=11 // pred_fallthru
          _
        // Predicated region
        $region25: #{transformer_forward.9} parent=11 // pred_check
          %p191 = pneg %p123
        $region26: #{transformer_forward.9} parent=11 // pred_check_branch
          %193 = sbr.rel (%p191) target = $region28
        $region27: #{transformer_forward.9} parent=11 // pred_region
          %195 = vsyncadd [#allocation5], 0
          %s197 = sshll.u32 %s4, 4
          %s198 = int_to_ptr.hbm [resolvable:$true] %s197
          %s199 = sshll.u32 [#allocation6], 4
          %s200 = int_to_ptr.vmem [resolvable:$true] %s199
          %202 = dma.hbm_to_vmem [thread:$0]  %s198, 16, %s200, [#allocation5]
        $region28: #{transformer_forward.9} parent=11 // pred_fallthru
          _
      $region12: #{transformer_forward.9} parent=5 // pred_fallthru
        _
      %p203 = scmp.lt.s32.totalorder %s13, 2
      // Predicated region
      $region29: #{transformer_forward.9} parent=5 // pred_check
        %p204 = pneg %p203
      $region30: #{transformer_forward.9} parent=5 // pred_check_branch
        %206 = sbr.rel (%p204) target = $region32
      $region31: #{transformer_forward.9} parent=5 // pred_region
        // Predicated region
        $region33: #{transformer_forward.9} parent=31 // pred_check
          %p207 = pneg %p33
        $region34: #{transformer_forward.9} parent=31 // pred_check_branch
          %209 = sbr.rel (%p207) target = $region36
        $region35: #{transformer_forward.9} parent=31 // pred_region
          %p210 = scmp.lt.s32.totalorder %s13, 1
          %s211 = scalar_select %p210, %s13, 1
          %s212 = smul.addr %s211, 4
          %s213 = scalar_lea.vmem %s0, %s212
        $region36: #{transformer_forward.9} parent=31 // pred_fallthru
          _
      $region32: #{transformer_forward.9} parent=5 // pred_fallthru
        _
      %p214 = scmp.le.s32.totalorder 1, %s13
      %p215 = scmp.lt.s32.totalorder %s13, 3
      %p216 = pnand %p214, %p215
      %p217 = pneg %p216
      // Predicated region
      $region37: #{transformer_forward.9} parent=5 // pred_check
        _
      $region38: #{transformer_forward.9} parent=5 // pred_check_branch
        %219 = sbr.rel (%p216) target = $region40
      $region39: #{transformer_forward.9} parent=5 // pred_region
        %s220 = ssub.s32 %s13, 1
        // Predicated region
        $region41: #{transformer_forward.9} parent=39 // pred_check
          %p221 = pneg %p60
        $region42: #{transformer_forward.9} parent=39 // pred_check_branch
          %223 = sbr.rel (%p221) target = $region44
        $region43: #{transformer_forward.9} parent=39 // pred_region
          %225 = dma.done [#allocation3], 16
        $region44: #{transformer_forward.9} parent=39 // pred_fallthru
          _
        // Predicated region
        $region45: #{transformer_forward.9} parent=39 // pred_check
          %p226 = pneg %p81
        $region46: #{transformer_forward.9} parent=39 // pred_check_branch
          %228 = sbr.rel (%p226) target = $region48
        $region47: #{transformer_forward.9} parent=39 // pred_region
          %230 = dma.done [#allocation5], 16
        $region48: #{transformer_forward.9} parent=39 // pred_fallthru
          _
        // Predicated region
        $region49: #{transformer_forward.9} parent=39 // pred_check
          %p231 = pneg %p123
        $region50: #{transformer_forward.9} parent=39 // pred_check_branch
          %233 = sbr.rel (%p231) target = $region52
        $region51: #{transformer_forward.9} parent=39 // pred_region
          %235 = dma.done [#allocation5], 16
        $region52: #{transformer_forward.9} parent=39 // pred_fallthru
          _
        %p236 = scmp.lt.s32.totalorder %s18, 1
        %s237 = scalar_select %p236, %s18, 1
        %s238 = smul.addr %s237, 4
        %s239 = scalar_lea.vmem %s0, %s238
        %p240 = pneg %p39
        %p241 = pneg %p36
        %p242 = pneg %p60
        %p243 = pneg %p57
        %p244 = pneg %p81
        %p245 = pneg %p78
        %p246 = pneg %p102
        %p247 = pneg %p99
        %p248 = pneg %p123
        %p249 = pneg %p120
        %p250 = pneg %p149
        %p251 = pneg %p146
        %p252 = scmp.lt.s32.totalorder %s18, 1
        %s253 = scalar_select %p252, %s18, 1
        %s254 = smul.addr %s253, 8
        %s255 = scalar_lea.vmem %s5, %s254
        %p256 = scmp.lt.s32.totalorder %s18, 1
        %s257 = scalar_select %p256, %s18, 1
        %s258 = smul.addr %s257, 4
        %s259 = scalar_lea.vmem %s0, %s258
        %p260 = scmp.lt.s32.totalorder %s18, 1
        %s261 = scalar_select %p260, %s18, 1
        %s262 = smul.addr %s261, 8
        %s263 = scalar_lea.vmem %s5, %s262
        %v265 = vld [vmem:[%s259] sm:$0xf]
        %v266 = vunpack.c.l.bf16 %v265
        %v267 = vld [vmem:[#allocation2] sm:$0x1]
        %v268 = vld [vmem:[#allocation4] sm:$0x1]
        %vm269 = vcmask 261120
        %v270 = vsel %vm269, %v266, 0.0
        %271 = vadd.xlane.f32.xlu0 %v270
        %v272 = vpop.xlane.xlu0 %271
        %v273 = vrcp.pop 32.0
        %v274 = vmul.f32 32.0, %v273
        %v275 = vsub.f32 1.0, %v274
        %v276 = vmul.f32 %v273, %v275
        %v277 = vadd.f32 %v273, %v276
        %vm278 = vweird.f32 %v273
        %v279 = vsel %vm278, %v273, %v277
        %v280 = vmul.f32 %v272, %v279
        %v281 = vsub.f32 %v266, %v280
        %v282 = vmul.f32 %v281, %v281
        %v283 = vsel %vm269, %v282, 0.0
        %284 = vadd.xlane.f32.xlu0 %v283
        %v285 = vpop.xlane.xlu0 %284
        %v286 = vmul.f32 %v285, %v279
        %v287 = vadd.f32 %v286, 1e-05
        %v288 = vrsqrt.pop %v287
        %v289 = vmul.f32 %v288, %v287
        %v290 = vmul.f32 %v289, %v288
        %v291 = vmul.f32 0.5, %v290
        %v292 = vsub.f32 1.5, %v291
        %v293 = vmul.f32 %v288, %v292
        %vm294 = vweird.f32 %v287
        %vm295 = vweird.f32 %v288
        %vm296 = vmor %vm294, %vm295
        %v297 = vsel %vm296, %v288, %v293
        %v298 = vmul.f32 %v281, %v297
        %v300 = vperm.slane %v267, 0
        %v302 = vmul.f32 %v298, %v300
        %v304 = vperm.slane %v268, 0
        %v306 = vadd.f32 %v302, %v304
        %v307 = vpack.c.bf16 %v306, %v306
        %v308 = vld [vmem:[%s3] sm:$0xf]
        %v309 = vld [vmem:[%s3 + $0x4] sm:$0xf]
        %v310 = vld [vmem:[%s3 + $0x8] sm:$0xf]
        %v311 = vld [vmem:[%s3 + $0xc] sm:$0xf]
        %v312 = vld [vmem:[#allocation6] sm:$0x1]
        %v314 = vperm.slane %v312, 0
        %v320 = vunpack.c.l.b16 %v308
        %v321 = vunpack.c.l.b16 %v309
        %v322 = vunpack.c.l.b16 %v310
        %v323 = vunpack.c.l.b16 %v311
        %v324 = vpack.c.b16 %v321, %v320
        %v325 = vpack.c.b16 %v323, %v322
        %v329 = vsel %vm269, %v307, 0
        %331 = vmatpush.bf16.msra.mxu0 0
        %332 = vmatpush.bf16.msra.mxu0 0
        %333 = vmatpush.bf16.msra.mxu0 0
        %334 = vmatpush.bf16.msra.mxu0 0
        %335 = vmatpush.bf16.msra.mxu0 0
        %336 = vmatpush.bf16.msra.mxu0 0
        %337 = vmatpush.bf16.msra.mxu0 %v325
        %338 = vmatpush.bf16.msra.mxu0 %v324
        %339 = vmatmul.bf16.gmra.mxu0 %v329
        %v340 = vpop.f32.mrf.mxu0
        %v341 = vadd.f32 %v314, %v340
        %v342 = vpop.f32.mrf.mxu0
        %343 = vdwg.mxu0
        %344 = vst [vmem:[%s263] sm:$0xff] %v341
        %p345 = scmp.lt.s32.totalorder %s18, 1
        %s346 = scalar_select %p345, %s18, 1
        %s347 = smul.addr %s346, 8
        %s348 = scalar_lea.vmem %s5, %s347
        // Predicated region
        $region53: #{transformer_forward.9} parent=39 // pred_check
          %p349 = pneg %p146
        $region54: #{transformer_forward.9} parent=39 // pred_check_branch
          %351 = sbr.rel (%p349) target = $region56
        $region55: #{transformer_forward.9} parent=39 // pred_region
          _
        $region56: #{transformer_forward.9} parent=39 // pred_fallthru
          _
      $region40: #{transformer_forward.9} parent=5 // pred_fallthru
        _
      %p352 = scmp.le.s32.totalorder 2, %s13
      // Predicated region
      $region57: #{transformer_forward.9} parent=5 // pred_check
        %p353 = pneg %p352
      $region58: #{transformer_forward.9} parent=5 // pred_check_branch
        %355 = sbr.rel (%p353) target = $region60
      $region59: #{transformer_forward.9} parent=5 // pred_region
        %s356 = ssub.s32 %s13, 2
        // Predicated region
        $region61: #{transformer_forward.9} parent=59 // pred_check
          %p357 = pneg %p152
        $region62: #{transformer_forward.9} parent=59 // pred_check_branch
          %359 = sbr.rel (%p357) target = $region64
        $region63: #{transformer_forward.9} parent=59 // pred_region
          %p360 = scmp.lt.s32.totalorder %s19, 1
          %s361 = scalar_select %p360, %s19, 1
          %s362 = smul.addr %s361, 8
          %s363 = scalar_lea.vmem %s5, %s362
        $region64: #{transformer_forward.9} parent=59 // pred_fallthru
          _
      $region60: #{transformer_forward.9} parent=5 // pred_fallthru
        _
    $region6: #{transformer_forward.9} parent=1 // loop_footer
      %s17 = sadd.s32 1, %s13
    $region7: #{transformer_forward.9} parent=1 // loop_footer_branch
      %12 = sbr.rel target = $region3
    $region8: #{transformer_forward.9} parent=1 // loop_exit
      _
    %364 = vsyncpa [#allocation3], 1
    %s365 = scalar_lea.sflag [#allocation3], 1
    %366 = vsyncpa %s365, 1
    %367 = vsyncpa [#allocation5], 1

</llo_original>
